<compile_context>
chip_gen: v6e
topology: v6e:2x2x1
jax: 0.10.0
libtpu: 0.0.40
codegen_flags: <defaults>
</compile_context>

<pallas_src>
import functools

import jax
import jax.numpy as jnp
from jax.experimental import pallas as pl
from jax.experimental.pallas import tpu as pltpu


def _stgcn_kernel(stride, k_t, t_out, has_res,
                  x_ref, wg_ref, a_ref, bmix_ref, wt_ref, bt_ref,
                  wr_ref, br_ref, o_ref, zpad_ref):
    f32 = jnp.float32
    bf16 = jnp.bfloat16
    x = x_ref[0]                                   # (T, V, Ci) f32
    T, V, Ci = x.shape
    Cp = wg_ref.shape[1]                           # channels padded to mult. of 128
    pad = (k_t - 1) // 2

    # ---- GraphConv 1x1 conv (BN1 scale pre-folded into wg): bf16 MXU matmul ----
    y = jnp.dot(x.reshape(T * V, Ci).astype(bf16), wg_ref[...],
                preferred_element_type=f32).reshape(T, V, Cp)

    # ---- adjacency mixing over V, then folded conv-bias/BN1 shift + ReLU (f32) ----
    z = jnp.einsum('tvc,vw->twc', y, a_ref[...], preferred_element_type=f32)
    z = jnp.maximum(z + bmix_ref[...], 0.0)        # (T, V, Cp) f32

    # ---- stage zero-padded activation in a bf16 VMEM scratch (no concat copy) ----
    zeros_pad = jnp.zeros((pad, V, Cp), bf16)
    zpad_ref[pl.ds(0, pad)] = zeros_pad
    zpad_ref[pl.ds(pad + T, pad)] = zeros_pad
    zpad_ref[pl.ds(pad, T)] = z.astype(bf16)

    # ---- TemporalConv: (k_t,1) conv, stride (stride,1), as k_t unrolled bf16
    # MXU taps with f32 accumulation (BN2 folded into wt/bt).
    # NOTE: with realistic Cout (>=128) these taps can be fused into one im2col
    # matmul of shape (t_out*V, k_t*Cp); kept unrolled here for robust lowering. ----
    span = stride * (t_out - 1) + 1

    def tap(k):
        if stride == 1:
            sl = zpad_ref[pl.ds(k, t_out)]
        else:
            sl = jax.lax.slice(zpad_ref[pl.ds(k, span)], (0, 0, 0),
                               (span, V, Cp), (stride, 1, 1))
        return sl.reshape(t_out * V, Cp)

    acc = jnp.dot(tap(0), wt_ref[0], preferred_element_type=f32)
    for k in range(1, k_t):
        acc = acc + jnp.dot(tap(k), wt_ref[k], preferred_element_type=f32)
    tcn = jnp.maximum(acc + bt_ref[...], 0.0)      # (t_out*V, Cp) f32

    # ---- residual branch (static Python switch) ----
    if stride == 1:
        xs = x
    else:
        xs = jax.lax.slice(x, (0, 0, 0), (span, V, Ci), (stride, 1, 1))
    if has_res:
        # strided 1x1 conv with folded BN
        res = jnp.dot(xs.reshape(t_out * V, Ci).astype(bf16), wr_ref[...],
                      preferred_element_type=f32) + br_ref[...]
    else:
        # identity: wrapper already padded x channels to Cp
        res = xs.reshape(t_out * V, Cp)

    # ---- final add + ReLU, lane-dense store (last dim = Cp, multiple of 128) ----
    o_ref[0] = jnp.maximum(tcn + res, 0.0).reshape(t_out, V, Cp)


def _const_spec(arr):
    nd = arr.ndim
    return pl.BlockSpec(arr.shape, lambda *_, _nd=nd: (0,) * _nd)


def stgcn_block(x_nchw, kparams, stride, out_channels, has_res_conv):
    """x_nchw: (N, Cin, T, V). Returns (N, Cout, T_out, V)."""
    (wg_f, A_f, bmix, wt_k, bt_f, wr_f, br_f) = kparams
    N, Cin, T, V = x_nchw.shape
    Cp = wg_f.shape[1]
    K = wt_k.shape[0]
    pad = (K - 1) // 2
    t_out = (T + 2 * pad - K) // stride + 1

    # Channels-last so channels sit on lanes.  (In a stacked network the
    # activations should stay channels-last end-to-end instead of transposing
    # per block; done here only because the spec interface is NCHW.)
    x = jnp.transpose(x_nchw, (0, 2, 3, 1))        # (N, T, V, Cin)
    if not has_res_conv:
        # identity residual: pre-pad channels so the kernel adds x directly
        x = jnp.pad(x, ((0, 0), (0, 0), (0, 0), (0, Cp - Cin)))
    Ck = x.shape[-1]

    kernel = functools.partial(_stgcn_kernel, stride, K, t_out, has_res_conv)

    out = pl.pallas_call(
        kernel,
        out_shape=jax.ShapeDtypeStruct((N, t_out, V, Cp), jnp.float32),
        grid_spec=pltpu.PrefetchScalarGridSpec(
            num_scalar_prefetch=0,
            grid=(N,),
            in_specs=[
                pl.BlockSpec((1, T, V, Ck), lambda n: (n, 0, 0, 0)),
                _const_spec(wg_f), _const_spec(A_f), _const_spec(bmix),
                _const_spec(wt_k), _const_spec(bt_f),
                _const_spec(wr_f), _const_spec(br_f),
            ],
            out_specs=pl.BlockSpec((1, t_out, V, Cp), lambda n: (n, 0, 0, 0)),
            scratch_shapes=[pltpu.VMEM((T + 2 * pad, V, Cp), jnp.bfloat16)],
        ),
        compiler_params=pltpu.CompilerParams(
            # independent batch samples -> shard across v7x's two TensorCores
            dimension_semantics=("parallel",),
            # ample headroom for these shapes; for realistic T (~300, C~256)
            # add a T-tiled grid axis with a pad-row halo so the working set
            # also fits v7x's 64 MiB VMEM.
            vmem_limit_bytes=32 * 1024 * 1024),
    )(x, wg_f, A_f, bmix, wt_k, bt_f, wr_f, br_f)

    out = out[:, :, :, :out_channels]              # drop channel lane-padding
    return jnp.transpose(out, (0, 3, 1, 2))        # NCHW (N, Cout, T_out, V)


# ------------------------- deterministic init & reference -------------------------

def init_params(key, Cin, Cout, V, K=9, stride=1, eps=1e-5):
    ks = jax.random.split(key, 10)
    wg = jax.random.normal(ks[0], (Cout, Cin), jnp.float32) * 0.2   # Conv2d 1x1 weight
    bg = jax.random.normal(ks[1], (Cout,), jnp.float32) * 0.1
    A_raw = jax.random.uniform(ks[2], (V, V), jnp.float32) + jnp.eye(V, dtype=jnp.float32)
    A = A_raw / jnp.sum(A_raw, axis=1, keepdims=True)               # adjacency

    def bn_params(k):
        k1, k2, k3, k4 = jax.random.split(k, 4)
        g = 1.0 + 0.1 * jax.random.normal(k1, (Cout,), jnp.float32)
        b = 0.1 * jax.random.normal(k2, (Cout,), jnp.float32)
        m = 0.1 * jax.random.normal(k3, (Cout,), jnp.float32)
        v = 0.5 + jax.random.uniform(k4, (Cout,), jnp.float32)
        return g, b, m, v

    bn1 = bn_params(ks[3])
    wt = jax.random.normal(ks[4], (Cout, Cout, K), jnp.float32) * 0.1   # (K,1) conv weight
    bt = jax.random.normal(ks[5], (Cout,), jnp.float32) * 0.1
    bn2 = bn_params(ks[6])

    def fold(bn):
        g, b, m, v = bn
        s = g / jnp.sqrt(v + eps)
        return s, b - m * s

    s1, h1 = fold(bn1)
    s2, h2 = fold(bn2)

    has_res_conv = (stride != 1) or (Cin != Cout)
    if has_res_conv:
        wr = jax.random.normal(ks[7], (Cout, Cin), jnp.float32) * 0.2
        br = jax.random.normal(ks[8], (Cout,), jnp.float32) * 0.1
        bnr = bn_params(ks[9])
        sr, hr = fold(bnr)
    else:
        wr = br = bnr = None

    # ---- kernel params: BN folded into weights/biases, channels padded to a
    # lane-dense multiple of 128, matmul weights pre-cast to bf16. ----
    Cp = ((Cout + 127) // 128) * 128

    def pad_last(a):
        pw = [(0, 0)] * (a.ndim - 1) + [(0, Cp - Cout)]
        return jnp.pad(a, pw)

    wg_f = pad_last(wg.T * s1[None, :])                              # (Cin, Cp)
    if not has_res_conv:
        wg_f = jnp.pad(wg_f, ((0, Cp - Cin), (0, 0)))                # (Cp, Cp)
    colsumA = jnp.sum(A, axis=0)                                     # (V,)
    bmix = pad_last(colsumA[:, None] * (bg * s1)[None, :] + h1[None, :])   # (V, Cp)

    wt_k = jnp.transpose(wt * s2[:, None, None], (2, 1, 0))          # (K, Cin_t, Cout)
    wt_k = jnp.pad(wt_k, ((0, 0), (0, Cp - Cout), (0, Cp - Cout)))   # (K, Cp, Cp)
    bt_f = pad_last((bt * s2 + h2)[None, :])                         # (1, Cp)

    if has_res_conv:
        wr_f = pad_last(wr.T * sr[None, :])                          # (Cin, Cp)
        br_f = pad_last((br * sr + hr)[None, :])                     # (1, Cp)
    else:
        wr_f = jnp.zeros((1, Cp), jnp.float32)                       # unused dummies
        br_f = jnp.zeros((1, Cp), jnp.float32)

    bf16 = jnp.bfloat16
    kparams = (wg_f.astype(bf16), A, bmix,
               wt_k.astype(bf16), bt_f, wr_f.astype(bf16), br_f)
    tparams = (wg, bg, A, bn1, wt, bt, bn2, wr, br, bnr, has_res_conv)
    return kparams, tparams, has_res_conv


def _bn_ref(x, g, b, m, v, eps=1e-5):
    g, b, m, v = (a[None, :, None, None] for a in (g, b, m, v))
    return (x - m) / jnp.sqrt(v + eps) * g + b


def reference(x, tparams, stride):
    wg, bg, A, bn1, wt, bt, bn2, wr, br, bnr, has_res_conv = tparams
    K = wt.shape[2]
    pad = (K - 1) // 2
    N, Cin, T, V = x.shape
    Cout = wg.shape[0]
    t_out = (T + 2 * pad - K) // stride + 1

    y = jnp.einsum('oc,nctv->notv', wg, x) + bg[None, :, None, None]
    z = jnp.einsum('nctv,vw->nctw', y, A)
    z = jax.nn.relu(_bn_ref(z, *bn1))

    zp = jnp.pad(z, ((0, 0), (0, 0), (pad, pad), (0, 0)))
    acc = jnp.zeros((N, Cout, t_out, V), jnp.float32)
    for k in range(K):
        sl = zp[:, :, k:k + stride * (t_out - 1) + 1:stride, :]
        acc = acc + jnp.einsum('oc,nctv->notv', wt[:, :, k], sl)
    tcn = jax.nn.relu(_bn_ref(acc + bt[None, :, None, None], *bn2))

    if has_res_conv:
        xs = x[:, :, ::stride, :]
        res = jnp.einsum('oc,nctv->notv', wr, xs) + br[None, :, None, None]
        res = _bn_ref(res, *bnr)
    else:
        res = x

    return jax.nn.relu(tcn + res)


if __name__ == "__main__":
    N, Cin, Cout, T, V, K, stride = 2, 4, 8, 16, 16, 9, 1
    key = jax.random.PRNGKey(0)
    kx, kp = jax.random.split(key)
    x = jax.random.normal(kx, (N, Cin, T, V), jnp.float32)   # NCHW = (N, C, T, V)

    kparams, tparams, has_res_conv = init_params(kp, Cin, Cout, V, K, stride)

    out = stgcn_block(x, kparams, stride, Cout, has_res_conv)
    out = jax.block_until_ready(out)

    ref = reference(x, tparams, stride)
    assert out.shape == ref.shape, (out.shape, ref.shape)
    err = float(jnp.max(jnp.abs(out - ref)))
    assert err < 3e-2, f"max abs err {err}"   # bf16 matmul operands, f32 accumulation
    print("KERNEL_OK")
</pallas_src>

<mosaic_0001>
module attributes {stable_mosaic.version = 11 : i64} {
  func.func @_stgcn_kernel(%arg0: i32, %arg1: memref<1x16x16x4xf32, #tpu.memory_space<vmem>>, %arg2: memref<4x128xbf16, #tpu.memory_space<vmem>>, %arg3: memref<16x16xf32, #tpu.memory_space<vmem>>, %arg4: memref<16x128xf32, #tpu.memory_space<vmem>>, %arg5: memref<9x128x128xbf16, #tpu.memory_space<vmem>>, %arg6: memref<1x128xf32, #tpu.memory_space<vmem>>, %arg7: memref<4x128xbf16, #tpu.memory_space<vmem>>, %arg8: memref<1x128xf32, #tpu.memory_space<vmem>>, %arg9: memref<1x16x16x128xf32, #tpu.memory_space<vmem>>, %arg10: memref<24x16x128xbf16, #tpu.memory_space<vmem>>) attributes {dimension_semantics = [#tpu.dimension_semantics<parallel>], iteration_bounds = array<i64: 2>, scalar_prefetch = 0 : i64, scratch_operands = 1 : i64, tpu.core_type = #tpu.core_type<tc>, window_params = [{transform_indices = @transform_0, window_bounds = array<i64: 1, 16, 16, 4>}, {pipeline_mode = #tpu.pipeline_mode<synchronous>, transform_indices = @transform_1, window_bounds = array<i64: 4, 128>}, {pipeline_mode = #tpu.pipeline_mode<synchronous>, transform_indices = @transform_2, window_bounds = array<i64: 16, 16>}, {pipeline_mode = #tpu.pipeline_mode<synchronous>, transform_indices = @transform_3, window_bounds = array<i64: 16, 128>}, {pipeline_mode = #tpu.pipeline_mode<synchronous>, transform_indices = @transform_4, window_bounds = array<i64: 9, 128, 128>}, {pipeline_mode = #tpu.pipeline_mode<synchronous>, transform_indices = @transform_5, window_bounds = array<i64: 1, 128>}, {pipeline_mode = #tpu.pipeline_mode<synchronous>, transform_indices = @transform_6, window_bounds = array<i64: 4, 128>}, {pipeline_mode = #tpu.pipeline_mode<synchronous>, transform_indices = @transform_7, window_bounds = array<i64: 1, 128>}, {transform_indices = @transform_8, window_bounds = array<i64: 1, 16, 16, 128>}]} {
    %c0 = arith.constant 0 : index
    %c0_0 = arith.constant 0 : index
    %c0_1 = arith.constant 0 : index
    %c0_2 = arith.constant 0 : index
    %0 = vector.load %arg1[%c0, %c0_0, %c0_1, %c0_2] : memref<1x16x16x4xf32, #tpu.memory_space<vmem>>, vector<1x16x16x4xf32>
    %1 = vector.shape_cast %0 : vector<1x16x16x4xf32> to vector<16x16x4xf32>
    %2 = vector.shape_cast %1 : vector<16x16x4xf32> to vector<256x4xf32>
    %3 = arith.truncf %2 : vector<256x4xf32> to vector<256x4xbf16>
    %c0_3 = arith.constant 0 : index
    %c0_4 = arith.constant 0 : index
    %4 = vector.load %arg2[%c0_3, %c0_4] : memref<4x128xbf16, #tpu.memory_space<vmem>>, vector<4x128xbf16>
    %cst = arith.constant dense<0.000000e+00> : vector<256x128xf32>
    %5 = tpu.matmul %3, %4, %cst {dimension_numbers = #tpu.dot_dimension_numbers<[1], [0], [0], [1], [0, 0, 1, 1], [], []>} : vector<256x4xbf16>, vector<4x128xbf16>, vector<256x128xf32> -> vector<256x128xf32>
    %6 = vector.shape_cast %5 : vector<256x128xf32> to vector<16x16x128xf32>
    %c0_5 = arith.constant 0 : index
    %c0_6 = arith.constant 0 : index
    %7 = vector.load %arg3[%c0_5, %c0_6] : memref<16x16xf32, #tpu.memory_space<vmem>>, vector<16x16xf32>
    "tpu.trace_start"() <{level = 10 : i32, message = "tvc,vw->twc"}> : () -> ()
    %cst_7 = arith.constant dense<0.000000e+00> : vector<16x16x128xf32>
    %8 = tpu.matmul %7, %6, %cst_7 {dimension_numbers = #tpu.dot_dimension_numbers<[0], [1], [1], [0, 2], [0, 1, 1, 0, 1, 2], [], []>} : vector<16x16xf32>, vector<16x16x128xf32>, vector<16x16x128xf32> -> vector<16x16x128xf32>
    %9 = tpu.transpose %8, [1, 0, 2] : vector<16x16x128xf32> -> vector<16x16x128xf32>
    "tpu.trace_stop"() : () -> ()
    %c0_8 = arith.constant 0 : index
    %c0_9 = arith.constant 0 : index
    %10 = vector.load %arg4[%c0_8, %c0_9] : memref<16x128xf32, #tpu.memory_space<vmem>>, vector<16x128xf32>
    %11 = vector.shape_cast %10 : vector<16x128xf32> to vector<1x16x128xf32>
    %12 = vector.broadcast %11 : vector<1x16x128xf32> to vector<16x16x128xf32>
    %13 = arith.addf %9, %12 : vector<16x16x128xf32>
    %cst_10 = arith.constant 0.000000e+00 : f32
    %14 = vector.broadcast %cst_10 : f32 to vector<16x16x128xf32>
    %15 = arith.maximumf %13, %14 : vector<16x16x128xf32>
    %cst_11 = arith.constant 0.000000e+00 : bf16
    %16 = vector.broadcast %cst_11 : bf16 to vector<4x16x128xbf16>
    %c0_12 = arith.constant 0 : index
    %c0_13 = arith.constant 0 : index
    %c0_14 = arith.constant 0 : index
    %17 = vector.load %arg10[%c0_12, %c0_13, %c0_14] : memref<24x16x128xbf16, #tpu.memory_space<vmem>>, vector<4x16x128xbf16>
    tpu.vector_store %arg10[%c0_12, %c0_13, %c0_14], %16 {strides = array<i32>} : memref<24x16x128xbf16, #tpu.memory_space<vmem>>, vector<4x16x128xbf16>,
    %c20 = arith.constant 20 : index
    %c0_15 = arith.constant 0 : index
    %c0_16 = arith.constant 0 : index
    %18 = vector.load %arg10[%c20, %c0_15, %c0_16] : memref<24x16x128xbf16, #tpu.memory_space<vmem>>, vector<4x16x128xbf16>
    tpu.vector_store %arg10[%c20, %c0_15, %c0_16], %16 {strides = array<i32>} : memref<24x16x128xbf16, #tpu.memory_space<vmem>>, vector<4x16x128xbf16>,
    %19 = arith.truncf %15 : vector<16x16x128xf32> to vector<16x16x128xbf16>
    %c4 = arith.constant 4 : index
    %c0_17 = arith.constant 0 : index
    %c0_18 = arith.constant 0 : index
    %20 = vector.load %arg10[%c4, %c0_17, %c0_18] : memref<24x16x128xbf16, #tpu.memory_space<vmem>>, vector<16x16x128xbf16>
    tpu.vector_store %arg10[%c4, %c0_17, %c0_18], %19 {strides = array<i32>} : memref<24x16x128xbf16, #tpu.memory_space<vmem>>, vector<16x16x128xbf16>,
    %c0_19 = arith.constant 0 : index
    %c0_20 = arith.constant 0 : index
    %c0_21 = arith.constant 0 : index
    %21 = vector.load %arg10[%c0_19, %c0_20, %c0_21] : memref<24x16x128xbf16, #tpu.memory_space<vmem>>, vector<16x16x128xbf16>
    %22 = vector.shape_cast %21 : vector<16x16x128xbf16> to vector<256x128xbf16>
    %c0_22 = arith.constant 0 : index
    %c0_23 = arith.constant 0 : index
    %c0_24 = arith.constant 0 : index
    %23 = vector.load %arg5[%c0_22, %c0_23, %c0_24] : memref<9x128x128xbf16, #tpu.memory_space<vmem>>, vector<1x128x128xbf16>
    %24 = vector.shape_cast %23 : vector<1x128x128xbf16> to vector<128x128xbf16>
    %cst_25 = arith.constant dense<0.000000e+00> : vector<256x128xf32>
    %25 = tpu.matmul %22, %24, %cst_25 {dimension_numbers = #tpu.dot_dimension_numbers<[1], [0], [0], [1], [0, 0, 1, 1], [], []>} : vector<256x128xbf16>, vector<128x128xbf16>, vector<256x128xf32> -> vector<256x128xf32>
    %c1 = arith.constant 1 : index
    %c0_26 = arith.constant 0 : index
    %c0_27 = arith.constant 0 : index
    %26 = vector.load %arg10[%c1, %c0_26, %c0_27] : memref<24x16x128xbf16, #tpu.memory_space<vmem>>, vector<16x16x128xbf16>
    %27 = vector.shape_cast %26 : vector<16x16x128xbf16> to vector<256x128xbf16>
    %c1_28 = arith.constant 1 : index
    %c0_29 = arith.constant 0 : index
    %c0_30 = arith.constant 0 : index
    %28 = vector.load %arg5[%c1_28, %c0_29, %c0_30] : memref<9x128x128xbf16, #tpu.memory_space<vmem>>, vector<1x128x128xbf16>
    %29 = vector.shape_cast %28 : vector<1x128x128xbf16> to vector<128x128xbf16>
    %cst_31 = arith.constant dense<0.000000e+00> : vector<256x128xf32>
    %30 = tpu.matmul %27, %29, %cst_31 {dimension_numbers = #tpu.dot_dimension_numbers<[1], [0], [0], [1], [0, 0, 1, 1], [], []>} : vector<256x128xbf16>, vector<128x128xbf16>, vector<256x128xf32> -> vector<256x128xf32>
    %31 = arith.addf %25, %30 : vector<256x128xf32>
    %c2 = arith.constant 2 : index
    %c0_32 = arith.constant 0 : index
    %c0_33 = arith.constant 0 : index
    %32 = vector.load %arg10[%c2, %c0_32, %c0_33] : memref<24x16x128xbf16, #tpu.memory_space<vmem>>, vector<16x16x128xbf16>
    %33 = vector.shape_cast %32 : vector<16x16x128xbf16> to vector<256x128xbf16>
    %c2_34 = arith.constant 2 : index
    %c0_35 = arith.constant 0 : index
    %c0_36 = arith.constant 0 : index
    %34 = vector.load %arg5[%c2_34, %c0_35, %c0_36] : memref<9x128x128xbf16, #tpu.memory_space<vmem>>, vector<1x128x128xbf16>
    %35 = vector.shape_cast %34 : vector<1x128x128xbf16> to vector<128x128xbf16>
    %cst_37 = arith.constant dense<0.000000e+00> : vector<256x128xf32>
    %36 = tpu.matmul %33, %35, %cst_37 {dimension_numbers = #tpu.dot_dimension_numbers<[1], [0], [0], [1], [0, 0, 1, 1], [], []>} : vector<256x128xbf16>, vector<128x128xbf16>, vector<256x128xf32> -> vector<256x128xf32>
    %37 = arith.addf %31, %36 : vector<256x128xf32>
    %c3 = arith.constant 3 : index
    %c0_38 = arith.constant 0 : index
    %c0_39 = arith.constant 0 : index
    %38 = vector.load %arg10[%c3, %c0_38, %c0_39] : memref<24x16x128xbf16, #tpu.memory_space<vmem>>, vector<16x16x128xbf16>
    %39 = vector.shape_cast %38 : vector<16x16x128xbf16> to vector<256x128xbf16>
    %c3_40 = arith.constant 3 : index
    %c0_41 = arith.constant 0 : index
    %c0_42 = arith.constant 0 : index
    %40 = vector.load %arg5[%c3_40, %c0_41, %c0_42] : memref<9x128x128xbf16, #tpu.memory_space<vmem>>, vector<1x128x128xbf16>
    %41 = vector.shape_cast %40 : vector<1x128x128xbf16> to vector<128x128xbf16>
    %cst_43 = arith.constant dense<0.000000e+00> : vector<256x128xf32>
    %42 = tpu.matmul %39, %41, %cst_43 {dimension_numbers = #tpu.dot_dimension_numbers<[1], [0], [0], [1], [0, 0, 1, 1], [], []>} : vector<256x128xbf16>, vector<128x128xbf16>, vector<256x128xf32> -> vector<256x128xf32>
    %43 = arith.addf %37, %42 : vector<256x128xf32>
    %c4_44 = arith.constant 4 : index
    %c0_45 = arith.constant 0 : index
    %c0_46 = arith.constant 0 : index
    %44 = vector.load %arg10[%c4_44, %c0_45, %c0_46] : memref<24x16x128xbf16, #tpu.memory_space<vmem>>, vector<16x16x128xbf16>
    %45 = vector.shape_cast %44 : vector<16x16x128xbf16> to vector<256x128xbf16>
    %c4_47 = arith.constant 4 : index
    %c0_48 = arith.constant 0 : index
    %c0_49 = arith.constant 0 : index
    %46 = vector.load %arg5[%c4_47, %c0_48, %c0_49] : memref<9x128x128xbf16, #tpu.memory_space<vmem>>, vector<1x128x128xbf16>
    %47 = vector.shape_cast %46 : vector<1x128x128xbf16> to vector<128x128xbf16>
    %cst_50 = arith.constant dense<0.000000e+00> : vector<256x128xf32>
    %48 = tpu.matmul %45, %47, %cst_50 {dimension_numbers = #tpu.dot_dimension_numbers<[1], [0], [0], [1], [0, 0, 1, 1], [], []>} : vector<256x128xbf16>, vector<128x128xbf16>, vector<256x128xf32> -> vector<256x128xf32>
    %49 = arith.addf %43, %48 : vector<256x128xf32>
    %c5 = arith.constant 5 : index
    %c0_51 = arith.constant 0 : index
    %c0_52 = arith.constant 0 : index
    %50 = vector.load %arg10[%c5, %c0_51, %c0_52] : memref<24x16x128xbf16, #tpu.memory_space<vmem>>, vector<16x16x128xbf16>
    %51 = vector.shape_cast %50 : vector<16x16x128xbf16> to vector<256x128xbf16>
    %c5_53 = arith.constant 5 : index
    %c0_54 = arith.constant 0 : index
    %c0_55 = arith.constant 0 : index
    %52 = vector.load %arg5[%c5_53, %c0_54, %c0_55] : memref<9x128x128xbf16, #tpu.memory_space<vmem>>, vector<1x128x128xbf16>
    %53 = vector.shape_cast %52 : vector<1x128x128xbf16> to vector<128x128xbf16>
    %cst_56 = arith.constant dense<0.000000e+00> : vector<256x128xf32>
    %54 = tpu.matmul %51, %53, %cst_56 {dimension_numbers = #tpu.dot_dimension_numbers<[1], [0], [0], [1], [0, 0, 1, 1], [], []>} : vector<256x128xbf16>, vector<128x128xbf16>, vector<256x128xf32> -> vector<256x128xf32>
    %55 = arith.addf %49, %54 : vector<256x128xf32>
    %c6 = arith.constant 6 : index
    %c0_57 = arith.constant 0 : index
    %c0_58 = arith.constant 0 : index
    %56 = vector.load %arg10[%c6, %c0_57, %c0_58] : memref<24x16x128xbf16, #tpu.memory_space<vmem>>, vector<16x16x128xbf16>
    %57 = vector.shape_cast %56 : vector<16x16x128xbf16> to vector<256x128xbf16>
    %c6_59 = arith.constant 6 : index
    %c0_60 = arith.constant 0 : index
    %c0_61 = arith.constant 0 : index
    %58 = vector.load %arg5[%c6_59, %c0_60, %c0_61] : memref<9x128x128xbf16, #tpu.memory_space<vmem>>, vector<1x128x128xbf16>
    %59 = vector.shape_cast %58 : vector<1x128x128xbf16> to vector<128x128xbf16>
    %cst_62 = arith.constant dense<0.000000e+00> : vector<256x128xf32>
    %60 = tpu.matmul %57, %59, %cst_62 {dimension_numbers = #tpu.dot_dimension_numbers<[1], [0], [0], [1], [0, 0, 1, 1], [], []>} : vector<256x128xbf16>, vector<128x128xbf16>, vector<256x128xf32> -> vector<256x128xf32>
    %61 = arith.addf %55, %60 : vector<256x128xf32>
    %c7 = arith.constant 7 : index
    %c0_63 = arith.constant 0 : index
    %c0_64 = arith.constant 0 : index
    %62 = vector.load %arg10[%c7, %c0_63, %c0_64] : memref<24x16x128xbf16, #tpu.memory_space<vmem>>, vector<16x16x128xbf16>
    %63 = vector.shape_cast %62 : vector<16x16x128xbf16> to vector<256x128xbf16>
    %c7_65 = arith.constant 7 : index
    %c0_66 = arith.constant 0 : index
    %c0_67 = arith.constant 0 : index
    %64 = vector.load %arg5[%c7_65, %c0_66, %c0_67] : memref<9x128x128xbf16, #tpu.memory_space<vmem>>, vector<1x128x128xbf16>
    %65 = vector.shape_cast %64 : vector<1x128x128xbf16> to vector<128x128xbf16>
    %cst_68 = arith.constant dense<0.000000e+00> : vector<256x128xf32>
    %66 = tpu.matmul %63, %65, %cst_68 {dimension_numbers = #tpu.dot_dimension_numbers<[1], [0], [0], [1], [0, 0, 1, 1], [], []>} : vector<256x128xbf16>, vector<128x128xbf16>, vector<256x128xf32> -> vector<256x128xf32>
    %67 = arith.addf %61, %66 : vector<256x128xf32>
    %c8 = arith.constant 8 : index
    %c0_69 = arith.constant 0 : index
    %c0_70 = arith.constant 0 : index
    %68 = vector.load %arg10[%c8, %c0_69, %c0_70] : memref<24x16x128xbf16, #tpu.memory_space<vmem>>, vector<16x16x128xbf16>
    %69 = vector.shape_cast %68 : vector<16x16x128xbf16> to vector<256x128xbf16>
    %c8_71 = arith.constant 8 : index
    %c0_72 = arith.constant 0 : index
    %c0_73 = arith.constant 0 : index
    %70 = vector.load %arg5[%c8_71, %c0_72, %c0_73] : memref<9x128x128xbf16, #tpu.memory_space<vmem>>, vector<1x128x128xbf16>
    %71 = vector.shape_cast %70 : vector<1x128x128xbf16> to vector<128x128xbf16>
    %cst_74 = arith.constant dense<0.000000e+00> : vector<256x128xf32>
    %72 = tpu.matmul %69, %71, %cst_74 {dimension_numbers = #tpu.dot_dimension_numbers<[1], [0], [0], [1], [0, 0, 1, 1], [], []>} : vector<256x128xbf16>, vector<128x128xbf16>, vector<256x128xf32> -> vector<256x128xf32>
    %73 = arith.addf %67, %72 : vector<256x128xf32>
    %c0_75 = arith.constant 0 : index
    %c0_76 = arith.constant 0 : index
    %74 = vector.load %arg6[%c0_75, %c0_76] : memref<1x128xf32, #tpu.memory_space<vmem>>, vector<1x128xf32>
    %75 = vector.broadcast %74 : vector<1x128xf32> to vector<256x128xf32>
    %76 = arith.addf %73, %75 : vector<256x128xf32>
    %cst_77 = arith.constant 0.000000e+00 : f32
    %77 = vector.broadcast %cst_77 : f32 to vector<256x128xf32>
    %78 = arith.maximumf %76, %77 : vector<256x128xf32>
    %79 = vector.shape_cast %1 : vector<16x16x4xf32> to vector<256x4xf32>
    %80 = arith.truncf %79 : vector<256x4xf32> to vector<256x4xbf16>
    %c0_78 = arith.constant 0 : index
    %c0_79 = arith.constant 0 : index
    %81 = vector.load %arg7[%c0_78, %c0_79] : memref<4x128xbf16, #tpu.memory_space<vmem>>, vector<4x128xbf16>
    %cst_80 = arith.constant dense<0.000000e+00> : vector<256x128xf32>
    %82 = tpu.matmul %80, %81, %cst_80 {dimension_numbers = #tpu.dot_dimension_numbers<[1], [0], [0], [1], [0, 0, 1, 1], [], []>} : vector<256x4xbf16>, vector<4x128xbf16>, vector<256x128xf32> -> vector<256x128xf32>
    %c0_81 = arith.constant 0 : index
    %c0_82 = arith.constant 0 : index
    %83 = vector.load %arg8[%c0_81, %c0_82] : memref<1x128xf32, #tpu.memory_space<vmem>>, vector<1x128xf32>
    %84 = vector.broadcast %83 : vector<1x128xf32> to vector<256x128xf32>
    %85 = arith.addf %82, %84 : vector<256x128xf32>
    %86 = arith.addf %78, %85 : vector<256x128xf32>
    %cst_83 = arith.constant 0.000000e+00 : f32
    %87 = vector.broadcast %cst_83 : f32 to vector<256x128xf32>
    %88 = arith.maximumf %86, %87 : vector<256x128xf32>
    %89 = vector.shape_cast %88 : vector<256x128xf32> to vector<16x16x128xf32>
    %c0_84 = arith.constant 0 : index
    %c0_85 = arith.constant 0 : index
    %c0_86 = arith.constant 0 : index
    %c0_87 = arith.constant 0 : index
    %90 = vector.load %arg9[%c0_84, %c0_85, %c0_86, %c0_87] : memref<1x16x16x128xf32, #tpu.memory_space<vmem>>, vector<1x16x16x128xf32>
    %91 = vector.shape_cast %90 : vector<1x16x16x128xf32> to vector<16x16x128xf32>
    %92 = vector.shape_cast %89 : vector<16x16x128xf32> to vector<1x16x16x128xf32>
    tpu.vector_store %arg9[%c0_84, %c0_85, %c0_86, %c0_87], %92 {strides = array<i32>} : memref<1x16x16x128xf32, #tpu.memory_space<vmem>>, vector<1x16x16x128xf32>,
    return
  }
  func.func @transform_0(%arg0: i32) -> (i32, i32, i32, i32) {
    %c0_i32 = arith.constant 0 : i32
    %c0_i32_0 = arith.constant 0 : i32
    %c0_i32_1 = arith.constant 0 : i32
    %c0_i32_2 = arith.constant 0 : i32
    return %arg0, %c0_i32, %c0_i32_0, %c0_i32_1 : i32, i32, i32, i32
  }
  func.func @transform_1(%arg0: i32) -> (i32, i32) {
    %c0_i32 = arith.constant 0 : i32
    %c0_i32_0 = arith.constant 0 : i32
    %c0_i32_1 = arith.constant 0 : i32
    return %c0_i32, %c0_i32_0 : i32, i32
  }
  func.func @transform_2(%arg0: i32) -> (i32, i32) {
    %c0_i32 = arith.constant 0 : i32
    %c0_i32_0 = arith.constant 0 : i32
    %c0_i32_1 = arith.constant 0 : i32
    return %c0_i32, %c0_i32_0 : i32, i32
  }
  func.func @transform_3(%arg0: i32) -> (i32, i32) {
    %c0_i32 = arith.constant 0 : i32
    %c0_i32_0 = arith.constant 0 : i32
    %c0_i32_1 = arith.constant 0 : i32
    return %c0_i32, %c0_i32_0 : i32, i32
  }
  func.func @transform_4(%arg0: i32) -> (i32, i32, i32) {
    %c0_i32 = arith.constant 0 : i32
    %c0_i32_0 = arith.constant 0 : i32
    %c0_i32_1 = arith.constant 0 : i32
    %c0_i32_2 = arith.constant 0 : i32
    return %c0_i32, %c0_i32_0, %c0_i32_1 : i32, i32, i32
  }
  func.func @transform_5(%arg0: i32) -> (i32, i32) {
    %c0_i32 = arith.constant 0 : i32
    %c0_i32_0 = arith.constant 0 : i32
    %c0_i32_1 = arith.constant 0 : i32
    return %c0_i32, %c0_i32_0 : i32, i32
  }
  func.func @transform_6(%arg0: i32) -> (i32, i32) {
    %c0_i32 = arith.constant 0 : i32
    %c0_i32_0 = arith.constant 0 : i32
    %c0_i32_1 = arith.constant 0 : i32
    return %c0_i32, %c0_i32_0 : i32, i32
  }
  func.func @transform_7(%arg0: i32) -> (i32, i32) {
    %c0_i32 = arith.constant 0 : i32
    %c0_i32_0 = arith.constant 0 : i32
    %c0_i32_1 = arith.constant 0 : i32
    return %c0_i32, %c0_i32_0 : i32, i32
  }
  func.func @transform_8(%arg0: i32) -> (i32, i32, i32, i32) {
    %c0_i32 = arith.constant 0 : i32
    %c0_i32_0 = arith.constant 0 : i32
    %c0_i32_1 = arith.constant 0 : i32
    %c0_i32_2 = arith.constant 0 : i32
    return %arg0, %c0_i32, %c0_i32_0, %c0_i32_1 : i32, i32, i32, i32
  }
}

</mosaic_0001>

<llo_original>
// kernel: tpu_custom_call.1
$region0: #{tpu_custom_call.1}
  #allocation0 [shape = 'u32[]', space=smem, size = 0x4, offset = 0x4, fixed_abs, tag = 'smem constant byte address 0x4 - core index']
  #allocation1 [shape = 'u32[144,128]{1,0:T(1,128)}', space=vmem, size = 0x12000, scoped, tag = 'internal scratch']
  #allocation2 [shape = 'bf16[24,16,128]{2,1,0:T(8,128)(2,1)}', space=vmem, size = 0x18000, scoped, tag = 'scratch operand']
  %s0 = inlined_call_operand.vmem [shape: f32[2,16,16,4], index: 0, kind: input, shape index: {}]
  %s1 = inlined_call_operand.vmem [shape: bf16[4,128], index: 1, kind: input, shape index: {}]
  %s2 = inlined_call_operand.vmem [shape: f32[16,16], index: 2, kind: input, shape index: {}]
  %s3 = inlined_call_operand.vmem [shape: f32[16,128], index: 3, kind: input, shape index: {}]
  %s4 = inlined_call_operand.vmem [shape: bf16[9,128,128], index: 4, kind: input, shape index: {}]
  %s5 = inlined_call_operand.vmem [shape: f32[1,128], index: 5, kind: input, shape index: {}]
  %s6 = inlined_call_operand.vmem [shape: bf16[4,128], index: 6, kind: input, shape index: {}]
  %s7 = inlined_call_operand.vmem [shape: f32[1,128], index: 7, kind: input, shape index: {}]
  %s8 = inlined_call_operand.hbm [shape: f32[2,16,16,128], index: 8, kind: output, shape index: {}]
  %s9 = sld [smem:[#allocation0]]
  $region65: #{tpu_custom_call.1} parent=0
    _
  %s11 = ssub.s32 1, %s9
  %s12 = scalar_select 0, %s11, %s9
  $region1: #{tpu_custom_call.1} parent=0
    #allocation3 [shape = 'u8[262144]{0}', space=vmem, size = 0x40000, scoped, tag = 'output window, operand 0']
    #allocation4 [shape = 's32[2]{0}', space=sflag, size = 0x8, scoped, tag = 'scoped memory for tpu_custom_call.1']
    %13 = vsyncpa [#allocation4], 0
    %s14 = scalar_lea.sflag [#allocation4], 1
    %15 = vsyncpa %s14, 0
    loop: start=0, step=1, limit=4
    $region2: #{tpu_custom_call.1} parent=1 // loop_pre_header
      _
    $region3: #{tpu_custom_call.1} parent=1 // loop_header
      %s17 = sphi 0, %s21
      %p18 = scmp.ge.s32.totalorder %s17, 4
      %s27 = sphi 0, %s29
      %s30 = sphi 0, %s27
      %s31 = sphi 0, %s30
      %s47 = sphi 0, %s31
      %s51 = sphi 0, %s51
      %s53 = sphi 0, %s51
      %s54 = sphi 0, %s53
      %s68 = sphi 0, %s54
      %s72 = sphi 0, %s72
      %s74 = sphi 0, %s72
      %s75 = sphi 0, %s74
      %s89 = sphi 0, %s75
      %s93 = sphi 0, %s93
      %s95 = sphi 0, %s93
      %s96 = sphi 0, %s95
      %s110 = sphi 0, %s96
      %s114 = sphi 0, %s114
      %s116 = sphi 0, %s114
      %s117 = sphi 0, %s116
      %s131 = sphi 0, %s117
      %s135 = sphi 0, %s135
      %s137 = sphi 0, %s135
      %s138 = sphi 0, %s137
      %s152 = sphi 0, %s138
      %s156 = sphi 0, %s156
      %s158 = sphi 0, %s156
      %s159 = sphi 0, %s158
      %s173 = sphi 0, %s159
      %s177 = sphi 0, %s177
      %s179 = sphi 0, %s177
      %s180 = sphi 0, %s179
      %s194 = sphi 0, %s180
      %s200 = sphi 0, %s202
      %s203 = sphi 0, %s200
      %s204 = sphi 0, %s203
      %s220 = sphi 0, %s204
    $region4: #{tpu_custom_call.1} parent=1 // loop_header_branch
      %20 = sbr.rel (%p18) target = $region8
    $region5: #{tpu_custom_call.1} parent=1 // loop_body
      %s22 = ssub.s32 %s17, 1
      %s23 = ssub.s32 %s17, 2
      %s24 = sadd.s32 %s17, 1
      %s25 = ssub.s32 %s17, %s24
      %p26 = scmp.eq.s32.totalorder %s25, 0
      %s28 = sadd.s32 %s27, 1
      %s29 = scalar_select %p26, %s27, %s28
      %p32 = pneg %p26
      %p33 = scmp.eq.s32.totalorder %s17, 1
      %p34 = por %p32, %p33
      %p35 = scmp.ne.s32.totalorder %s27, %s30
      %p36 = scmp.eq.s32.totalorder %s17, 0
      %p37 = por %p35, %p36
      %p38 = scmp.ne.s32.totalorder %s27, %s30
      %p39 = scmp.eq.s32.totalorder %s22, 1
      %p40 = por %p38, %p39
      %p41 = scmp.ne.s32.totalorder %s30, %s31
      %p42 = scmp.eq.s32.totalorder %s22, 0
      %p43 = por %p41, %p42
      %p44 = scmp.ne.s32.totalorder %s30, %s31
      %p45 = scmp.eq.s32.totalorder %s23, 1
      %p46 = por %p44, %p45
      %p48 = scmp.ne.s32.totalorder %s31, %s47
      %p49 = scmp.eq.s32.totalorder %s23, 0
      %p50 = por %p48, %p49
      %s52 = sadd.s32 %s51, 1
      %p55 = scmp.eq.s32.totalorder %s17, 1
      %p56 = scmp.ne.s32.totalorder %s51, %s53
      %p57 = scmp.eq.s32.totalorder %s17, 0
      %p58 = por %p56, %p57
      %p59 = scmp.ne.s32.totalorder %s51, %s53
      %p60 = scmp.eq.s32.totalorder %s22, 1
      %p61 = por %p59, %p60
      %p62 = scmp.ne.s32.totalorder %s53, %s54
      %p63 = scmp.eq.s32.totalorder %s22, 0
      %p64 = por %p62, %p63
      %p65 = scmp.ne.s32.totalorder %s53, %s54
      %p66 = scmp.eq.s32.totalorder %s23, 1
      %p67 = por %p65, %p66
      %p69 = scmp.ne.s32.totalorder %s54, %s68
      %p70 = scmp.eq.s32.totalorder %s23, 0
      %p71 = por %p69, %p70
      %s73 = sadd.s32 %s72, 1
      %p76 = scmp.eq.s32.totalorder %s17, 1
      %p77 = scmp.ne.s32.totalorder %s72, %s74
      %p78 = scmp.eq.s32.totalorder %s17, 0
      %p79 = por %p77, %p78
      %p80 = scmp.ne.s32.totalorder %s72, %s74
      %p81 = scmp.eq.s32.totalorder %s22, 1
      %p82 = por %p80, %p81
      %p83 = scmp.ne.s32.totalorder %s74, %s75
      %p84 = scmp.eq.s32.totalorder %s22, 0
      %p85 = por %p83, %p84
      %p86 = scmp.ne.s32.totalorder %s74, %s75
      %p87 = scmp.eq.s32.totalorder %s23, 1
      %p88 = por %p86, %p87
      %p90 = scmp.ne.s32.totalorder %s75, %s89
      %p91 = scmp.eq.s32.totalorder %s23, 0
      %p92 = por %p90, %p91
      %s94 = sadd.s32 %s93, 1
      %p97 = scmp.eq.s32.totalorder %s17, 1
      %p98 = scmp.ne.s32.totalorder %s93, %s95
      %p99 = scmp.eq.s32.totalorder %s17, 0
      %p100 = por %p98, %p99
      %p101 = scmp.ne.s32.totalorder %s93, %s95
      %p102 = scmp.eq.s32.totalorder %s22, 1
      %p103 = por %p101, %p102
      %p104 = scmp.ne.s32.totalorder %s95, %s96
      %p105 = scmp.eq.s32.totalorder %s22, 0
      %p106 = por %p104, %p105
      %p107 = scmp.ne.s32.totalorder %s95, %s96
      %p108 = scmp.eq.s32.totalorder %s23, 1
      %p109 = por %p107, %p108
      %p111 = scmp.ne.s32.totalorder %s96, %s110
      %p112 = scmp.eq.s32.totalorder %s23, 0
      %p113 = por %p111, %p112
      %s115 = sadd.s32 %s114, 1
      %p118 = scmp.eq.s32.totalorder %s17, 1
      %p119 = scmp.ne.s32.totalorder %s114, %s116
      %p120 = scmp.eq.s32.totalorder %s17, 0
      %p121 = por %p119, %p120
      %p122 = scmp.ne.s32.totalorder %s114, %s116
      %p123 = scmp.eq.s32.totalorder %s22, 1
      %p124 = por %p122, %p123
      %p125 = scmp.ne.s32.totalorder %s116, %s117
      %p126 = scmp.eq.s32.totalorder %s22, 0
      %p127 = por %p125, %p126
      %p128 = scmp.ne.s32.totalorder %s116, %s117
      %p129 = scmp.eq.s32.totalorder %s23, 1
      %p130 = por %p128, %p129
      %p132 = scmp.ne.s32.totalorder %s117, %s131
      %p133 = scmp.eq.s32.totalorder %s23, 0
      %p134 = por %p132, %p133
      %s136 = sadd.s32 %s135, 1
      %p139 = scmp.eq.s32.totalorder %s17, 1
      %p140 = scmp.ne.s32.totalorder %s135, %s137
      %p141 = scmp.eq.s32.totalorder %s17, 0
      %p142 = por %p140, %p141
      %p143 = scmp.ne.s32.totalorder %s135, %s137
      %p144 = scmp.eq.s32.totalorder %s22, 1
      %p145 = por %p143, %p144
      %p146 = scmp.ne.s32.totalorder %s137, %s138
      %p147 = scmp.eq.s32.totalorder %s22, 0
      %p148 = por %p146, %p147
      %p149 = scmp.ne.s32.totalorder %s137, %s138
      %p150 = scmp.eq.s32.totalorder %s23, 1
      %p151 = por %p149, %p150
      %p153 = scmp.ne.s32.totalorder %s138, %s152
      %p154 = scmp.eq.s32.totalorder %s23, 0
      %p155 = por %p153, %p154
      %s157 = sadd.s32 %s156, 1
      %p160 = scmp.eq.s32.totalorder %s17, 1
      %p161 = scmp.ne.s32.totalorder %s156, %s158
      %p162 = scmp.eq.s32.totalorder %s17, 0
      %p163 = por %p161, %p162
      %p164 = scmp.ne.s32.totalorder %s156, %s158
      %p165 = scmp.eq.s32.totalorder %s22, 1
      %p166 = por %p164, %p165
      %p167 = scmp.ne.s32.totalorder %s158, %s159
      %p168 = scmp.eq.s32.totalorder %s22, 0
      %p169 = por %p167, %p168
      %p170 = scmp.ne.s32.totalorder %s158, %s159
      %p171 = scmp.eq.s32.totalorder %s23, 1
      %p172 = por %p170, %p171
      %p174 = scmp.ne.s32.totalorder %s159, %s173
      %p175 = scmp.eq.s32.totalorder %s23, 0
      %p176 = por %p174, %p175
      %s178 = sadd.s32 %s177, 1
      %p181 = scmp.eq.s32.totalorder %s17, 1
      %p182 = scmp.ne.s32.totalorder %s177, %s179
      %p183 = scmp.eq.s32.totalorder %s17, 0
      %p184 = por %p182, %p183
      %p185 = scmp.ne.s32.totalorder %s177, %s179
      %p186 = scmp.eq.s32.totalorder %s22, 1
      %p187 = por %p185, %p186
      %p188 = scmp.ne.s32.totalorder %s179, %s180
      %p189 = scmp.eq.s32.totalorder %s22, 0
      %p190 = por %p188, %p189
      %p191 = scmp.ne.s32.totalorder %s179, %s180
      %p192 = scmp.eq.s32.totalorder %s23, 1
      %p193 = por %p191, %p192
      %p195 = scmp.ne.s32.totalorder %s180, %s194
      %p196 = scmp.eq.s32.totalorder %s23, 0
      %p197 = por %p195, %p196
      %s198 = ssub.s32 %s17, %s24
      %p199 = scmp.eq.s32.totalorder %s198, 0
      %s201 = sadd.s32 %s200, 1
      %s202 = scalar_select %p199, %s200, %s201
      %p205 = pneg %p199
      %p206 = scmp.eq.s32.totalorder %s17, 1
      %p207 = por %p205, %p206
      %p208 = scmp.ne.s32.totalorder %s200, %s203
      %p209 = scmp.eq.s32.totalorder %s17, 0
      %p210 = por %p208, %p209
      %p211 = scmp.ne.s32.totalorder %s200, %s203
      %p212 = scmp.eq.s32.totalorder %s22, 1
      %p213 = por %p211, %p212
      %p214 = scmp.ne.s32.totalorder %s203, %s204
      %p215 = scmp.eq.s32.totalorder %s22, 0
      %p216 = por %p214, %p215
      %p217 = scmp.ne.s32.totalorder %s203, %s204
      %p218 = scmp.eq.s32.totalorder %s23, 1
      %p219 = por %p217, %p218
      %p221 = scmp.ne.s32.totalorder %s204, %s220
      %p222 = scmp.eq.s32.totalorder %s23, 0
      %p223 = por %p221, %p222
      %p224 = scmp.le.s32.totalorder 1, %s17
      %p225 = scmp.lt.s32.totalorder %s17, 3
      %p226 = pnand %p224, %p225
      %p227 = pneg %p226
      // Predicated region
      $region9: #{tpu_custom_call.1} parent=5 // pred_check
        _
      $region10: #{tpu_custom_call.1} parent=5 // pred_check_branch
        %229 = sbr.rel (%p226) target = $region12
      $region11: #{tpu_custom_call.1} parent=5 // pred_region
        %s230 = ssub.s32 %s17, 1
        // Predicated region
        $region13: #{tpu_custom_call.1} parent=11 // pred_check
          %p231 = pneg %p64
        $region14: #{tpu_custom_call.1} parent=11 // pred_check_branch
          %233 = sbr.rel (%p231) target = $region16
        $region15: #{tpu_custom_call.1} parent=11 // pred_region
          _
        $region16: #{tpu_custom_call.1} parent=11 // pred_fallthru
          _
        // Predicated region
        $region17: #{tpu_custom_call.1} parent=11 // pred_check
          %p234 = pneg %p85
        $region18: #{tpu_custom_call.1} parent=11 // pred_check_branch
          %236 = sbr.rel (%p234) target = $region20
        $region19: #{tpu_custom_call.1} parent=11 // pred_region
          _
        $region20: #{tpu_custom_call.1} parent=11 // pred_fallthru
          _
        // Predicated region
        $region21: #{tpu_custom_call.1} parent=11 // pred_check
          %p237 = pneg %p106
        $region22: #{tpu_custom_call.1} parent=11 // pred_check_branch
          %239 = sbr.rel (%p237) target = $region24
        $region23: #{tpu_custom_call.1} parent=11 // pred_region
          _
        $region24: #{tpu_custom_call.1} parent=11 // pred_fallthru
          _
        // Predicated region
        $region25: #{tpu_custom_call.1} parent=11 // pred_check
          %p240 = pneg %p127
        $region26: #{tpu_custom_call.1} parent=11 // pred_check_branch
          %242 = sbr.rel (%p240) target = $region28
        $region27: #{tpu_custom_call.1} parent=11 // pred_region
          _
        $region28: #{tpu_custom_call.1} parent=11 // pred_fallthru
          _
        // Predicated region
        $region29: #{tpu_custom_call.1} parent=11 // pred_check
          %p243 = pneg %p148
        $region30: #{tpu_custom_call.1} parent=11 // pred_check_branch
          %245 = sbr.rel (%p243) target = $region32
        $region31: #{tpu_custom_call.1} parent=11 // pred_region
          _
        $region32: #{tpu_custom_call.1} parent=11 // pred_fallthru
          _
        // Predicated region
        $region33: #{tpu_custom_call.1} parent=11 // pred_check
          %p246 = pneg %p169
        $region34: #{tpu_custom_call.1} parent=11 // pred_check_branch
          %248 = sbr.rel (%p246) target = $region36
        $region35: #{tpu_custom_call.1} parent=11 // pred_region
          _
        $region36: #{tpu_custom_call.1} parent=11 // pred_fallthru
          _
        // Predicated region
        $region37: #{tpu_custom_call.1} parent=11 // pred_check
          %p249 = pneg %p190
        $region38: #{tpu_custom_call.1} parent=11 // pred_check_branch
          %251 = sbr.rel (%p249) target = $region40
        $region39: #{tpu_custom_call.1} parent=11 // pred_region
          _
        $region40: #{tpu_custom_call.1} parent=11 // pred_fallthru
          _
      $region12: #{tpu_custom_call.1} parent=5 // pred_fallthru
        _
      %p252 = scmp.lt.s32.totalorder %s17, 2
      // Predicated region
      $region41: #{tpu_custom_call.1} parent=5 // pred_check
        %p253 = pneg %p252
      $region42: #{tpu_custom_call.1} parent=5 // pred_check_branch
        %255 = sbr.rel (%p253) target = $region44
      $region43: #{tpu_custom_call.1} parent=5 // pred_region
        // Predicated region
        $region45: #{tpu_custom_call.1} parent=43 // pred_check
          %p256 = pneg %p37
        $region46: #{tpu_custom_call.1} parent=43 // pred_check_branch
          %258 = sbr.rel (%p256) target = $region48
        $region47: #{tpu_custom_call.1} parent=43 // pred_region
          %p259 = scmp.lt.s32.totalorder %s17, 1
          %s260 = scalar_select %p259, %s17, 1
          %s261 = smul.addr %s260, 32
          %s262 = smul.addr %s261, 8
          %s263 = scalar_lea.vmem %s0, %s262
        $region48: #{tpu_custom_call.1} parent=43 // pred_fallthru
          _
      $region44: #{tpu_custom_call.1} parent=5 // pred_fallthru
        _
      %p264 = scmp.le.s32.totalorder 1, %s17
      %p265 = scmp.lt.s32.totalorder %s17, 3
      %p266 = pnand %p264, %p265
      %p267 = pneg %p266
      // Predicated region
      $region49: #{tpu_custom_call.1} parent=5 // pred_check
        _
      $region50: #{tpu_custom_call.1} parent=5 // pred_check_branch
        %269 = sbr.rel (%p266) target = $region52
      $region51: #{tpu_custom_call.1} parent=5 // pred_region
        %s270 = ssub.s32 %s17, 1
        %p271 = scmp.lt.s32.totalorder %s22, 1
        %s272 = scalar_select %p271, %s22, 1
        %s273 = smul.addr %s272, 32
        %s274 = smul.addr %s273, 8
        %s275 = scalar_lea.vmem %s0, %s274
        %p276 = pneg %p43
        %p277 = pneg %p40
        %p278 = pneg %p64
        %p279 = pneg %p61
        %p280 = pneg %p85
        %p281 = pneg %p82
        %p282 = pneg %p106
        %p283 = pneg %p103
        %p284 = pneg %p127
        %p285 = pneg %p124
        %p286 = pneg %p148
        %p287 = pneg %p145
        %p288 = pneg %p169
        %p289 = pneg %p166
        %p290 = pneg %p190
        %p291 = pneg %p187
        %p292 = pneg %p216
        %p293 = pneg %p213
        %s294 = sand.u32 %s203, 1
        %s295 = scalar_lea.sflag [#allocation4], %s294
        %s296 = sand.u32 %s203, 1
        %s297 = smul.addr %s296, 256
        %s298 = scalar_lea.vmem [#allocation3], %s297
        %p299 = scmp.lt.s32.totalorder %s22, 1
        %s300 = scalar_select %p299, %s22, 1
        %s301 = smul.addr %s300, 32
        %s302 = smul.addr %s301, 8
        %s303 = scalar_lea.vmem %s0, %s302
        %v305 = vld [vmem:[%s303] sm:$0xff]
        %v306 = vld [vmem:[%s303 + $0x8] sm:$0xff]
        %v307 = vld [vmem:[%s303 + $0x10] sm:$0xff]
        %v308 = vld [vmem:[%s303 + $0x18] sm:$0xff]
        %v309 = vld [vmem:[%s303 + $0x20] sm:$0xff]
        %v310 = vld [vmem:[%s303 + $0x28] sm:$0xff]
        %v311 = vld [vmem:[%s303 + $0x30] sm:$0xff]
        %v312 = vld [vmem:[%s303 + $0x38] sm:$0xff]
        %v313 = vld [vmem:[%s303 + $0x40] sm:$0xff]
        %v314 = vld [vmem:[%s303 + $0x48] sm:$0xff]
        %v315 = vld [vmem:[%s303 + $0x50] sm:$0xff]
        %v316 = vld [vmem:[%s303 + $0x58] sm:$0xff]
        %v317 = vld [vmem:[%s303 + $0x60] sm:$0xff]
        %v318 = vld [vmem:[%s303 + $0x68] sm:$0xff]
        %v319 = vld [vmem:[%s303 + $0x70] sm:$0xff]
        %v320 = vld [vmem:[%s303 + $0x78] sm:$0xff]
        %v321 = vld [vmem:[%s303 + $0x80] sm:$0xff]
        %v322 = vld [vmem:[%s303 + $0x88] sm:$0xff]
        %v323 = vld [vmem:[%s303 + $0x90] sm:$0xff]
        %v324 = vld [vmem:[%s303 + $0x98] sm:$0xff]
        %v325 = vld [vmem:[%s303 + $0xa0] sm:$0xff]
        %v326 = vld [vmem:[%s303 + $0xa8] sm:$0xff]
        %v327 = vld [vmem:[%s303 + $0xb0] sm:$0xff]
        %v328 = vld [vmem:[%s303 + $0xb8] sm:$0xff]
        %v329 = vld [vmem:[%s303 + $0xc0] sm:$0xff]
        %v330 = vld [vmem:[%s303 + $0xc8] sm:$0xff]
        %v331 = vld [vmem:[%s303 + $0xd0] sm:$0xff]
        %v332 = vld [vmem:[%s303 + $0xd8] sm:$0xff]
        %v333 = vld [vmem:[%s303 + $0xe0] sm:$0xff]
        %v334 = vld [vmem:[%s303 + $0xe8] sm:$0xff]
        %v335 = vld [vmem:[%s303 + $0xf0] sm:$0xff]
        %v336 = vld [vmem:[%s303 + $0xf8] sm:$0xff]
        %v337 = vpack.c.bf16 %v306, %v305
        %v338 = vpack.c.bf16 %v308, %v307
        %v339 = vpack.c.bf16 %v310, %v309
        %v340 = vpack.c.bf16 %v312, %v311
        %v341 = vpack.c.bf16 %v314, %v313
        %v342 = vpack.c.bf16 %v316, %v315
        %v343 = vpack.c.bf16 %v318, %v317
        %v344 = vpack.c.bf16 %v320, %v319
        %v345 = vpack.c.bf16 %v322, %v321
        %v346 = vpack.c.bf16 %v324, %v323
        %v347 = vpack.c.bf16 %v326, %v325
        %v348 = vpack.c.bf16 %v328, %v327
        %v349 = vpack.c.bf16 %v330, %v329
        %v350 = vpack.c.bf16 %v332, %v331
        %v351 = vpack.c.bf16 %v334, %v333
        %v352 = vpack.c.bf16 %v336, %v335
        %v353 = vld [vmem:[%s1] sm:$0x3]
        %vm354 = vcmask 31744
        %v356 = vsel %vm354, %v337, 0
        %v359 = vsel %vm354, %v338, 0
        %v362 = vsel %vm354, %v339, 0
        %v365 = vsel %vm354, %v340, 0
        %v368 = vsel %vm354, %v341, 0
        %v371 = vsel %vm354, %v342, 0
        %v374 = vsel %vm354, %v343, 0
        %v377 = vsel %vm354, %v344, 0
        %v380 = vsel %vm354, %v345, 0
        %v383 = vsel %vm354, %v346, 0
        %v386 = vsel %vm354, %v347, 0
        %v389 = vsel %vm354, %v348, 0
        %v392 = vsel %vm354, %v349, 0
        %v395 = vsel %vm354, %v350, 0
        %v398 = vsel %vm354, %v351, 0
        %v401 = vsel %vm354, %v352, 0
        %vm403 = vcmask 1041408
        %v405 = vsel %vm403, %v353, 0
        %407 = vmatprep.subr.bf16.mxu0 0
        %408 = vmatpush1.bf16.msra.mxu0 0
        %409 = vmatprep.subr.bf16.mxu0 0
        %410 = vmatpush1.bf16.msra.mxu0 0
        %411 = vmatprep.subr.bf16.mxu0 0
        %412 = vmatpush1.bf16.msra.mxu0 0
        %413 = vmatprep.subr.bf16.mxu0 0
        %414 = vmatpush1.bf16.msra.mxu0 0
        %415 = vmatprep.subr.bf16.mxu0 0
        %416 = vmatpush1.bf16.msra.mxu0 0
        %417 = vmatprep.subr.bf16.mxu0 0
        %418 = vmatpush1.bf16.msra.mxu0 0
        %419 = vmatprep.subr.bf16.mxu0 0
        %420 = vmatpush1.bf16.msra.mxu0 0
        %421 = vmatprep.subr.bf16.mxu0 0
        %422 = vmatpush1.bf16.msra.mxu0 %v405
        %423 = vmatprep.subr.bf16.mxu0 0
        %424 = vmatpush2.bf16.msra.mxu0 0
        %425 = vmatprep.subr.bf16.mxu0 0
        %426 = vmatpush2.bf16.msra.mxu0 0
        %427 = vmatprep.subr.bf16.mxu0 0
        %428 = vmatpush2.bf16.msra.mxu0 0
        %429 = vmatprep.subr.bf16.mxu0 0
        %430 = vmatpush2.bf16.msra.mxu0 0
        %431 = vmatprep.subr.bf16.mxu0 0
        %432 = vmatpush2.bf16.msra.mxu0 0
        %433 = vmatprep.subr.bf16.mxu0 0
        %434 = vmatpush2.bf16.msra.mxu0 0
        %435 = vmatprep.subr.bf16.mxu0 0
        %436 = vmatpush2.bf16.msra.mxu0 0
        %437 = vmatprep.subr.bf16.mxu0 0
        %438 = vmatpush2.bf16.msra.mxu0 0
        %439 = vmatprep.mubr.bf16.mxu0 0
        %440 = vmatmul.mubr.bf16.gmra.mxu0 %v356
        %v441 = vpop.f32.mrf.mxu0
        %v442 = vadd.f32 0.0, %v441
        %v443 = vpop.f32.mrf.mxu0
        %v444 = vpop.f32.mrf.mxu0
        %v445 = vadd.f32 0.0, %v444
        %v446 = vpop.f32.mrf.mxu0
        %447 = vmatprep.mubr.bf16.mxu0 0
        %448 = vmatmul.mubr.bf16.gmra.mxu0 %v359
        %v449 = vpop.f32.mrf.mxu0
        %v450 = vadd.f32 0.0, %v449
        %v451 = vpop.f32.mrf.mxu0
        %v452 = vpop.f32.mrf.mxu0
        %v453 = vadd.f32 0.0, %v452
        %v454 = vpop.f32.mrf.mxu0
        %455 = vmatprep.mubr.bf16.mxu0 0
        %456 = vmatmul.mubr.bf16.gmra.mxu0 %v362
        %v457 = vpop.f32.mrf.mxu0
        %v458 = vadd.f32 0.0, %v457
        %v459 = vpop.f32.mrf.mxu0
        %v460 = vpop.f32.mrf.mxu0
        %v461 = vadd.f32 0.0, %v460
        %v462 = vpop.f32.mrf.mxu0
        %463 = vmatprep.mubr.bf16.mxu0 0
        %464 = vmatmul.mubr.bf16.gmra.mxu0 %v365
        %v465 = vpop.f32.mrf.mxu0
        %v466 = vadd.f32 0.0, %v465
        %v467 = vpop.f32.mrf.mxu0
        %v468 = vpop.f32.mrf.mxu0
        %v469 = vadd.f32 0.0, %v468
        %v470 = vpop.f32.mrf.mxu0
        %471 = vmatprep.mubr.bf16.mxu0 0
        %472 = vmatmul.mubr.bf16.gmra.mxu0 %v368
        %v473 = vpop.f32.mrf.mxu0
        %v474 = vadd.f32 0.0, %v473
        %v475 = vpop.f32.mrf.mxu0
        %v476 = vpop.f32.mrf.mxu0
        %v477 = vadd.f32 0.0, %v476
        %v478 = vpop.f32.mrf.mxu0
        %479 = vmatprep.mubr.bf16.mxu0 0
        %480 = vmatmul.mubr.bf16.gmra.mxu0 %v371
        %v481 = vpop.f32.mrf.mxu0
        %v482 = vadd.f32 0.0, %v481
        %v483 = vpop.f32.mrf.mxu0
        %v484 = vpop.f32.mrf.mxu0
        %v485 = vadd.f32 0.0, %v484
        %v486 = vpop.f32.mrf.mxu0
        %487 = vmatprep.mubr.bf16.mxu0 0
        %488 = vmatmul.mubr.bf16.gmra.mxu0 %v374
        %v489 = vpop.f32.mrf.mxu0
        %v490 = vadd.f32 0.0, %v489
        %v491 = vpop.f32.mrf.mxu0
        %v492 = vpop.f32.mrf.mxu0
        %v493 = vadd.f32 0.0, %v492
        %v494 = vpop.f32.mrf.mxu0
        %495 = vmatprep.mubr.bf16.mxu0 0
        %496 = vmatmul.mubr.bf16.gmra.mxu0 %v377
        %v497 = vpop.f32.mrf.mxu0
        %v498 = vadd.f32 0.0, %v497
        %v499 = vpop.f32.mrf.mxu0
        %v500 = vpop.f32.mrf.mxu0
        %v501 = vadd.f32 0.0, %v500
        %v502 = vpop.f32.mrf.mxu0
        %503 = vmatprep.mubr.bf16.mxu0 0
        %504 = vmatmul.mubr.bf16.gmra.mxu0 %v380
        %v505 = vpop.f32.mrf.mxu0
        %v506 = vadd.f32 0.0, %v505
        %v507 = vpop.f32.mrf.mxu0
        %v508 = vpop.f32.mrf.mxu0
        %v509 = vadd.f32 0.0, %v508
        %v510 = vpop.f32.mrf.mxu0
        %511 = vmatprep.mubr.bf16.mxu0 0
        %512 = vmatmul.mubr.bf16.gmra.mxu0 %v383
        %v513 = vpop.f32.mrf.mxu0
        %v514 = vadd.f32 0.0, %v513
        %v515 = vpop.f32.mrf.mxu0
        %v516 = vpop.f32.mrf.mxu0
        %v517 = vadd.f32 0.0, %v516
        %v518 = vpop.f32.mrf.mxu0
        %519 = vmatprep.mubr.bf16.mxu0 0
        %520 = vmatmul.mubr.bf16.gmra.mxu0 %v386
        %v521 = vpop.f32.mrf.mxu0
        %v522 = vadd.f32 0.0, %v521
        %v523 = vpop.f32.mrf.mxu0
        %v524 = vpop.f32.mrf.mxu0
        %v525 = vadd.f32 0.0, %v524
        %v526 = vpop.f32.mrf.mxu0
        %527 = vmatprep.mubr.bf16.mxu0 0
        %528 = vmatmul.mubr.bf16.gmra.mxu0 %v389
        %v529 = vpop.f32.mrf.mxu0
        %v530 = vadd.f32 0.0, %v529
        %v531 = vpop.f32.mrf.mxu0
        %v532 = vpop.f32.mrf.mxu0
        %v533 = vadd.f32 0.0, %v532
        %v534 = vpop.f32.mrf.mxu0
        %535 = vmatprep.mubr.bf16.mxu0 0
        %536 = vmatmul.mubr.bf16.gmra.mxu0 %v392
        %v537 = vpop.f32.mrf.mxu0
        %v538 = vadd.f32 0.0, %v537
        %v539 = vpop.f32.mrf.mxu0
        %v540 = vpop.f32.mrf.mxu0
        %v541 = vadd.f32 0.0, %v540
        %v542 = vpop.f32.mrf.mxu0
        %543 = vmatprep.mubr.bf16.mxu0 0
        %544 = vmatmul.mubr.bf16.gmra.mxu0 %v395
        %v545 = vpop.f32.mrf.mxu0
        %v546 = vadd.f32 0.0, %v545
        %v547 = vpop.f32.mrf.mxu0
        %v548 = vpop.f32.mrf.mxu0
        %v549 = vadd.f32 0.0, %v548
        %v550 = vpop.f32.mrf.mxu0
        %551 = vmatprep.mubr.bf16.mxu0 0
        %552 = vmatmul.mubr.bf16.gmra.mxu0 %v398
        %v553 = vpop.f32.mrf.mxu0
        %v554 = vadd.f32 0.0, %v553
        %v555 = vpop.f32.mrf.mxu0
        %v556 = vpop.f32.mrf.mxu0
        %v557 = vadd.f32 0.0, %v556
        %v558 = vpop.f32.mrf.mxu0
        %559 = vmatprep.mubr.bf16.mxu0 0
        %560 = vmatmul.mubr.bf16.gmra.mxu0 %v401
        %v561 = vpop.f32.mrf.mxu0
        %v562 = vadd.f32 0.0, %v561
        %v563 = vpop.f32.mrf.mxu0
        %v564 = vpop.f32.mrf.mxu0
        %v565 = vadd.f32 0.0, %v564
        %v566 = vpop.f32.mrf.mxu0
        %567 = vdwg.mxu0
        %v568 = vld [vmem:[%s2] sm:$0xff]
        %v569 = vld [vmem:[%s2 + $0x8] sm:$0xff]
        %v570 = vcombine.low %v442, %v458
        %v571 = vcombine.high %v442, %v458
        %v573 = vunpack.c.l.s4 1983009808
        %v574 = vunpack.c.0.s8 %v573
        %v575 = vlaneseq
        %v576 = vshrl.u32 %v575, 7
        %v577 = vsub.s32 %v574, %v576
        %v578 = vrot.slane %v570, %v577
        %v580 = vunpack.c.l.s4 1983009808
        %v581 = vunpack.c.0.s8 %v580
        %v582 = vlaneseq
        %v583 = vshrl.u32 %v582, 7
        %v584 = vsub.s32 %v581, %v583
        %v585 = vrot.slane %v571, %v584
        %v586 = vcombine.low %v450, %v466
        %v587 = vcombine.high %v450, %v466
        %v589 = vunpack.c.l.s4 1983009808
        %v590 = vunpack.c.0.s8 %v589
        %v591 = vlaneseq
        %v592 = vshrl.u32 %v591, 7
        %v593 = vsub.s32 %v590, %v592
        %v594 = vrot.slane %v586, %v593
        %v596 = vunpack.c.l.s4 1983009808
        %v597 = vunpack.c.0.s8 %v596
        %v598 = vlaneseq
        %v599 = vshrl.u32 %v598, 7
        %v600 = vsub.s32 %v597, %v599
        %v601 = vrot.slane %v587, %v600
        %v602 = vcombine.low %v474, %v490
        %v603 = vcombine.high %v474, %v490
        %v605 = vunpack.c.l.s4 1983009808
        %v606 = vunpack.c.0.s8 %v605
        %v607 = vlaneseq
        %v608 = vshrl.u32 %v607, 7
        %v609 = vsub.s32 %v606, %v608
        %v610 = vrot.slane %v602, %v609
        %v612 = vunpack.c.l.s4 1983009808
        %v613 = vunpack.c.0.s8 %v612
        %v614 = vlaneseq
        %v615 = vshrl.u32 %v614, 7
        %v616 = vsub.s32 %v613, %v615
        %v617 = vrot.slane %v603, %v616
        %v618 = vcombine.low %v482, %v498
        %v619 = vcombine.high %v482, %v498
        %v621 = vunpack.c.l.s4 1983009808
        %v622 = vunpack.c.0.s8 %v621
        %v623 = vlaneseq
        %v624 = vshrl.u32 %v623, 7
        %v625 = vsub.s32 %v622, %v624
        %v626 = vrot.slane %v618, %v625
        %v628 = vunpack.c.l.s4 1983009808
        %v629 = vunpack.c.0.s8 %v628
        %v630 = vlaneseq
        %v631 = vshrl.u32 %v630, 7
        %v632 = vsub.s32 %v629, %v631
        %v633 = vrot.slane %v619, %v632
        %v634 = vcombine.low %v578, %v594
        %v635 = vcombine.high %v578, %v594
        %v637 = vunpack.c.l.s4 1934713408
        %v638 = vunpack.c.0.s8 %v637
        %v639 = vlaneseq
        %v640 = vshrl.u32 %v639, 7
        %v641 = vsub.s32 %v638, %v640
        %v642 = vrot.slane %v634, %v641
        %v644 = vunpack.c.l.s4 1934713408
        %v645 = vunpack.c.0.s8 %v644
        %v646 = vlaneseq
        %v647 = vshrl.u32 %v646, 7
        %v648 = vsub.s32 %v645, %v647
        %v649 = vrot.slane %v635, %v648
        %v650 = vcombine.low %v585, %v601
        %v651 = vcombine.high %v585, %v601
        %v653 = vunpack.c.l.s4 1934713408
        %v654 = vunpack.c.0.s8 %v653
        %v655 = vlaneseq
        %v656 = vshrl.u32 %v655, 7
        %v657 = vsub.s32 %v654, %v656
        %v658 = vrot.slane %v650, %v657
        %v660 = vunpack.c.l.s4 1934713408
        %v661 = vunpack.c.0.s8 %v660
        %v662 = vlaneseq
        %v663 = vshrl.u32 %v662, 7
        %v664 = vsub.s32 %v661, %v663
        %v665 = vrot.slane %v651, %v664
        %v666 = vcombine.low %v610, %v626
        %v667 = vcombine.high %v610, %v626
        %v669 = vunpack.c.l.s4 1934713408
        %v670 = vunpack.c.0.s8 %v669
        %v671 = vlaneseq
        %v672 = vshrl.u32 %v671, 7
        %v673 = vsub.s32 %v670, %v672
        %v674 = vrot.slane %v666, %v673
        %v676 = vunpack.c.l.s4 1934713408
        %v677 = vunpack.c.0.s8 %v676
        %v678 = vlaneseq
        %v679 = vshrl.u32 %v678, 7
        %v680 = vsub.s32 %v677, %v679
        %v681 = vrot.slane %v667, %v680
        %v682 = vcombine.low %v617, %v633
        %v683 = vcombine.high %v617, %v633
        %v685 = vunpack.c.l.s4 1934713408
        %v686 = vunpack.c.0.s8 %v685
        %v687 = vlaneseq
        %v688 = vshrl.u32 %v687, 7
        %v689 = vsub.s32 %v686, %v688
        %v690 = vrot.slane %v682, %v689
        %v692 = vunpack.c.l.s4 1934713408
        %v693 = vunpack.c.0.s8 %v692
        %v694 = vlaneseq
        %v695 = vshrl.u32 %v694, 7
        %v696 = vsub.s32 %v693, %v695
        %v697 = vrot.slane %v683, %v696
        %v698 = vcombine.low %v642, %v674
        %v699 = vcombine.high %v642, %v674
        %v700 = vcombine.low %v649, %v681
        %v701 = vcombine.high %v649, %v681
        %v702 = vcombine.low %v658, %v690
        %v703 = vcombine.high %v658, %v690
        %v704 = vcombine.low %v665, %v697
        %v705 = vcombine.high %v665, %v697
        %v706 = vcombine.low %v506, %v522
        %v707 = vcombine.high %v506, %v522
        %v709 = vunpack.c.l.s4 1983009808
        %v710 = vunpack.c.0.s8 %v709
        %v711 = vlaneseq
        %v712 = vshrl.u32 %v711, 7
        %v713 = vsub.s32 %v710, %v712
        %v714 = vrot.slane %v706, %v713
        %v716 = vunpack.c.l.s4 1983009808
        %v717 = vunpack.c.0.s8 %v716
        %v718 = vlaneseq
        %v719 = vshrl.u32 %v718, 7
        %v720 = vsub.s32 %v717, %v719
        %v721 = vrot.slane %v707, %v720
        %v722 = vcombine.low %v514, %v530
        %v723 = vcombine.high %v514, %v530
        %v725 = vunpack.c.l.s4 1983009808
        %v726 = vunpack.c.0.s8 %v725
        %v727 = vlaneseq
        %v728 = vshrl.u32 %v727, 7
        %v729 = vsub.s32 %v726, %v728
        %v730 = vrot.slane %v722, %v729
        %v732 = vunpack.c.l.s4 1983009808
        %v733 = vunpack.c.0.s8 %v732
        %v734 = vlaneseq
        %v735 = vshrl.u32 %v734, 7
        %v736 = vsub.s32 %v733, %v735
        %v737 = vrot.slane %v723, %v736
        %v738 = vcombine.low %v538, %v554
        %v739 = vcombine.high %v538, %v554
        %v741 = vunpack.c.l.s4 1983009808
        %v742 = vunpack.c.0.s8 %v741
        %v743 = vlaneseq
        %v744 = vshrl.u32 %v743, 7
        %v745 = vsub.s32 %v742, %v744
        %v746 = vrot.slane %v738, %v745
        %v748 = vunpack.c.l.s4 1983009808
        %v749 = vunpack.c.0.s8 %v748
        %v750 = vlaneseq
        %v751 = vshrl.u32 %v750, 7
        %v752 = vsub.s32 %v749, %v751
        %v753 = vrot.slane %v739, %v752
        %v754 = vcombine.low %v546, %v562
        %v755 = vcombine.high %v546, %v562
        %v757 = vunpack.c.l.s4 1983009808
        %v758 = vunpack.c.0.s8 %v757
        %v759 = vlaneseq
        %v760 = vshrl.u32 %v759, 7
        %v761 = vsub.s32 %v758, %v760
        %v762 = vrot.slane %v754, %v761
        %v764 = vunpack.c.l.s4 1983009808
        %v765 = vunpack.c.0.s8 %v764
        %v766 = vlaneseq
        %v767 = vshrl.u32 %v766, 7
        %v768 = vsub.s32 %v765, %v767
        %v769 = vrot.slane %v755, %v768
        %v770 = vcombine.low %v714, %v730
        %v771 = vcombine.high %v714, %v730
        %v773 = vunpack.c.l.s4 1934713408
        %v774 = vunpack.c.0.s8 %v773
        %v775 = vlaneseq
        %v776 = vshrl.u32 %v775, 7
        %v777 = vsub.s32 %v774, %v776
        %v778 = vrot.slane %v770, %v777
        %v780 = vunpack.c.l.s4 1934713408
        %v781 = vunpack.c.0.s8 %v780
        %v782 = vlaneseq
        %v783 = vshrl.u32 %v782, 7
        %v784 = vsub.s32 %v781, %v783
        %v785 = vrot.slane %v771, %v784
        %v786 = vcombine.low %v721, %v737
        %v787 = vcombine.high %v721, %v737
        %v789 = vunpack.c.l.s4 1934713408
        %v790 = vunpack.c.0.s8 %v789
        %v791 = vlaneseq
        %v792 = vshrl.u32 %v791, 7
        %v793 = vsub.s32 %v790, %v792
        %v794 = vrot.slane %v786, %v793
        %v796 = vunpack.c.l.s4 1934713408
        %v797 = vunpack.c.0.s8 %v796
        %v798 = vlaneseq
        %v799 = vshrl.u32 %v798, 7
        %v800 = vsub.s32 %v797, %v799
        %v801 = vrot.slane %v787, %v800
        %v802 = vcombine.low %v746, %v762
        %v803 = vcombine.high %v746, %v762
        %v805 = vunpack.c.l.s4 1934713408
        %v806 = vunpack.c.0.s8 %v805
        %v807 = vlaneseq
        %v808 = vshrl.u32 %v807, 7
        %v809 = vsub.s32 %v806, %v808
        %v810 = vrot.slane %v802, %v809
        %v812 = vunpack.c.l.s4 1934713408
        %v813 = vunpack.c.0.s8 %v812
        %v814 = vlaneseq
        %v815 = vshrl.u32 %v814, 7
        %v816 = vsub.s32 %v813, %v815
        %v817 = vrot.slane %v803, %v816
        %v818 = vcombine.low %v753, %v769
        %v819 = vcombine.high %v753, %v769
        %v821 = vunpack.c.l.s4 1934713408
        %v822 = vunpack.c.0.s8 %v821
        %v823 = vlaneseq
        %v824 = vshrl.u32 %v823, 7
        %v825 = vsub.s32 %v822, %v824
        %v826 = vrot.slane %v818, %v825
        %v828 = vunpack.c.l.s4 1934713408
        %v829 = vunpack.c.0.s8 %v828
        %v830 = vlaneseq
        %v831 = vshrl.u32 %v830, 7
        %v832 = vsub.s32 %v829, %v831
        %v833 = vrot.slane %v819, %v832
        %v834 = vcombine.low %v778, %v810
        %v835 = vcombine.high %v778, %v810
        %v836 = vcombine.low %v785, %v817
        %v837 = vcombine.high %v785, %v817
        %v838 = vcombine.low %v794, %v826
        %v839 = vcombine.high %v794, %v826
        %v840 = vcombine.low %v801, %v833
        %v841 = vcombine.high %v801, %v833
        %v842 = vcombine.low %v445, %v461
        %v843 = vcombine.high %v445, %v461
        %v845 = vunpack.c.l.s4 1983009808
        %v846 = vunpack.c.0.s8 %v845
        %v847 = vlaneseq
        %v848 = vshrl.u32 %v847, 7
        %v849 = vsub.s32 %v846, %v848
        %v850 = vrot.slane %v842, %v849
        %v852 = vunpack.c.l.s4 1983009808
        %v853 = vunpack.c.0.s8 %v852
        %v854 = vlaneseq
        %v855 = vshrl.u32 %v854, 7
        %v856 = vsub.s32 %v853, %v855
        %v857 = vrot.slane %v843, %v856
        %v858 = vcombine.low %v453, %v469
        %v859 = vcombine.high %v453, %v469
        %v861 = vunpack.c.l.s4 1983009808
        %v862 = vunpack.c.0.s8 %v861
        %v863 = vlaneseq
        %v864 = vshrl.u32 %v863, 7
        %v865 = vsub.s32 %v862, %v864
        %v866 = vrot.slane %v858, %v865
        %v868 = vunpack.c.l.s4 1983009808
        %v869 = vunpack.c.0.s8 %v868
        %v870 = vlaneseq
        %v871 = vshrl.u32 %v870, 7
        %v872 = vsub.s32 %v869, %v871
        %v873 = vrot.slane %v859, %v872
        %v874 = vcombine.low %v477, %v493
        %v875 = vcombine.high %v477, %v493
        %v877 = vunpack.c.l.s4 1983009808
        %v878 = vunpack.c.0.s8 %v877
        %v879 = vlaneseq
        %v880 = vshrl.u32 %v879, 7
        %v881 = vsub.s32 %v878, %v880
        %v882 = vrot.slane %v874, %v881
        %v884 = vunpack.c.l.s4 1983009808
        %v885 = vunpack.c.0.s8 %v884
        %v886 = vlaneseq
        %v887 = vshrl.u32 %v886, 7
        %v888 = vsub.s32 %v885, %v887
        %v889 = vrot.slane %v875, %v888
        %v890 = vcombine.low %v485, %v501
        %v891 = vcombine.high %v485, %v501
        %v893 = vunpack.c.l.s4 1983009808
        %v894 = vunpack.c.0.s8 %v893
        %v895 = vlaneseq
        %v896 = vshrl.u32 %v895, 7
        %v897 = vsub.s32 %v894, %v896
        %v898 = vrot.slane %v890, %v897
        %v900 = vunpack.c.l.s4 1983009808
        %v901 = vunpack.c.0.s8 %v900
        %v902 = vlaneseq
        %v903 = vshrl.u32 %v902, 7
        %v904 = vsub.s32 %v901, %v903
        %v905 = vrot.slane %v891, %v904
        %v906 = vcombine.low %v850, %v866
        %v907 = vcombine.high %v850, %v866
        %v909 = vunpack.c.l.s4 1934713408
        %v910 = vunpack.c.0.s8 %v909
        %v911 = vlaneseq
        %v912 = vshrl.u32 %v911, 7
        %v913 = vsub.s32 %v910, %v912
        %v914 = vrot.slane %v906, %v913
        %v916 = vunpack.c.l.s4 1934713408
        %v917 = vunpack.c.0.s8 %v916
        %v918 = vlaneseq
        %v919 = vshrl.u32 %v918, 7
        %v920 = vsub.s32 %v917, %v919
        %v921 = vrot.slane %v907, %v920
        %v922 = vcombine.low %v857, %v873
        %v923 = vcombine.high %v857, %v873
        %v925 = vunpack.c.l.s4 1934713408
        %v926 = vunpack.c.0.s8 %v925
        %v927 = vlaneseq
        %v928 = vshrl.u32 %v927, 7
        %v929 = vsub.s32 %v926, %v928
        %v930 = vrot.slane %v922, %v929
        %v932 = vunpack.c.l.s4 1934713408
        %v933 = vunpack.c.0.s8 %v932
        %v934 = vlaneseq
        %v935 = vshrl.u32 %v934, 7
        %v936 = vsub.s32 %v933, %v935
        %v937 = vrot.slane %v923, %v936
        %v938 = vcombine.low %v882, %v898
        %v939 = vcombine.high %v882, %v898
        %v941 = vunpack.c.l.s4 1934713408
        %v942 = vunpack.c.0.s8 %v941
        %v943 = vlaneseq
        %v944 = vshrl.u32 %v943, 7
        %v945 = vsub.s32 %v942, %v944
        %v946 = vrot.slane %v938, %v945
        %v948 = vunpack.c.l.s4 1934713408
        %v949 = vunpack.c.0.s8 %v948
        %v950 = vlaneseq
        %v951 = vshrl.u32 %v950, 7
        %v952 = vsub.s32 %v949, %v951
        %v953 = vrot.slane %v939, %v952
        %v954 = vcombine.low %v889, %v905
        %v955 = vcombine.high %v889, %v905
        %v957 = vunpack.c.l.s4 1934713408
        %v958 = vunpack.c.0.s8 %v957
        %v959 = vlaneseq
        %v960 = vshrl.u32 %v959, 7
        %v961 = vsub.s32 %v958, %v960
        %v962 = vrot.slane %v954, %v961
        %v964 = vunpack.c.l.s4 1934713408
        %v965 = vunpack.c.0.s8 %v964
        %v966 = vlaneseq
        %v967 = vshrl.u32 %v966, 7
        %v968 = vsub.s32 %v965, %v967
        %v969 = vrot.slane %v955, %v968
        %v970 = vcombine.low %v914, %v946
        %v971 = vcombine.high %v914, %v946
        %v972 = vcombine.low %v921, %v953
        %v973 = vcombine.high %v921, %v953
        %v974 = vcombine.low %v930, %v962
        %v975 = vcombine.high %v930, %v962
        %v976 = vcombine.low %v937, %v969
        %v977 = vcombine.high %v937, %v969
        %v978 = vcombine.low %v509, %v525
        %v979 = vcombine.high %v509, %v525
        %v981 = vunpack.c.l.s4 1983009808
        %v982 = vunpack.c.0.s8 %v981
        %v983 = vlaneseq
        %v984 = vshrl.u32 %v983, 7
        %v985 = vsub.s32 %v982, %v984
        %v986 = vrot.slane %v978, %v985
        %v988 = vunpack.c.l.s4 1983009808
        %v989 = vunpack.c.0.s8 %v988
        %v990 = vlaneseq
        %v991 = vshrl.u32 %v990, 7
        %v992 = vsub.s32 %v989, %v991
        %v993 = vrot.slane %v979, %v992
        %v994 = vcombine.low %v517, %v533
        %v995 = vcombine.high %v517, %v533
        %v997 = vunpack.c.l.s4 1983009808
        %v998 = vunpack.c.0.s8 %v997
        %v999 = vlaneseq
        %v1000 = vshrl.u32 %v999, 7
        %v1001 = vsub.s32 %v998, %v1000
        %v1002 = vrot.slane %v994, %v1001
        %v1004 = vunpack.c.l.s4 1983009808
        %v1005 = vunpack.c.0.s8 %v1004
        %v1006 = vlaneseq
        %v1007 = vshrl.u32 %v1006, 7
        %v1008 = vsub.s32 %v1005, %v1007
        %v1009 = vrot.slane %v995, %v1008
        %v1010 = vcombine.low %v541, %v557
        %v1011 = vcombine.high %v541, %v557
        %v1013 = vunpack.c.l.s4 1983009808
        %v1014 = vunpack.c.0.s8 %v1013
        %v1015 = vlaneseq
        %v1016 = vshrl.u32 %v1015, 7
        %v1017 = vsub.s32 %v1014, %v1016
        %v1018 = vrot.slane %v1010, %v1017
        %v1020 = vunpack.c.l.s4 1983009808
        %v1021 = vunpack.c.0.s8 %v1020
        %v1022 = vlaneseq
        %v1023 = vshrl.u32 %v1022, 7
        %v1024 = vsub.s32 %v1021, %v1023
        %v1025 = vrot.slane %v1011, %v1024
        %v1026 = vcombine.low %v549, %v565
        %v1027 = vcombine.high %v549, %v565
        %v1029 = vunpack.c.l.s4 1983009808
        %v1030 = vunpack.c.0.s8 %v1029
        %v1031 = vlaneseq
        %v1032 = vshrl.u32 %v1031, 7
        %v1033 = vsub.s32 %v1030, %v1032
        %v1034 = vrot.slane %v1026, %v1033
        %v1036 = vunpack.c.l.s4 1983009808
        %v1037 = vunpack.c.0.s8 %v1036
        %v1038 = vlaneseq
        %v1039 = vshrl.u32 %v1038, 7
        %v1040 = vsub.s32 %v1037, %v1039
        %v1041 = vrot.slane %v1027, %v1040
        %v1042 = vcombine.low %v986, %v1002
        %v1043 = vcombine.high %v986, %v1002
        %v1045 = vunpack.c.l.s4 1934713408
        %v1046 = vunpack.c.0.s8 %v1045
        %v1047 = vlaneseq
        %v1048 = vshrl.u32 %v1047, 7
        %v1049 = vsub.s32 %v1046, %v1048
        %v1050 = vrot.slane %v1042, %v1049
        %v1052 = vunpack.c.l.s4 1934713408
        %v1053 = vunpack.c.0.s8 %v1052
        %v1054 = vlaneseq
        %v1055 = vshrl.u32 %v1054, 7
        %v1056 = vsub.s32 %v1053, %v1055
        %v1057 = vrot.slane %v1043, %v1056
        %v1058 = vcombine.low %v993, %v1009
        %v1059 = vcombine.high %v993, %v1009
        %v1061 = vunpack.c.l.s4 1934713408
        %v1062 = vunpack.c.0.s8 %v1061
        %v1063 = vlaneseq
        %v1064 = vshrl.u32 %v1063, 7
        %v1065 = vsub.s32 %v1062, %v1064
        %v1066 = vrot.slane %v1058, %v1065
        %v1068 = vunpack.c.l.s4 1934713408
        %v1069 = vunpack.c.0.s8 %v1068
        %v1070 = vlaneseq
        %v1071 = vshrl.u32 %v1070, 7
        %v1072 = vsub.s32 %v1069, %v1071
        %v1073 = vrot.slane %v1059, %v1072
        %v1074 = vcombine.low %v1018, %v1034
        %v1075 = vcombine.high %v1018, %v1034
        %v1077 = vunpack.c.l.s4 1934713408
        %v1078 = vunpack.c.0.s8 %v1077
        %v1079 = vlaneseq
        %v1080 = vshrl.u32 %v1079, 7
        %v1081 = vsub.s32 %v1078, %v1080
        %v1082 = vrot.slane %v1074, %v1081
        %v1084 = vunpack.c.l.s4 1934713408
        %v1085 = vunpack.c.0.s8 %v1084
        %v1086 = vlaneseq
        %v1087 = vshrl.u32 %v1086, 7
        %v1088 = vsub.s32 %v1085, %v1087
        %v1089 = vrot.slane %v1075, %v1088
        %v1090 = vcombine.low %v1025, %v1041
        %v1091 = vcombine.high %v1025, %v1041
        %v1093 = vunpack.c.l.s4 1934713408
        %v1094 = vunpack.c.0.s8 %v1093
        %v1095 = vlaneseq
        %v1096 = vshrl.u32 %v1095, 7
        %v1097 = vsub.s32 %v1094, %v1096
        %v1098 = vrot.slane %v1090, %v1097
        %v1100 = vunpack.c.l.s4 1934713408
        %v1101 = vunpack.c.0.s8 %v1100
        %v1102 = vlaneseq
        %v1103 = vshrl.u32 %v1102, 7
        %v1104 = vsub.s32 %v1101, %v1103
        %v1105 = vrot.slane %v1091, %v1104
        %v1106 = vcombine.low %v1050, %v1082
        %v1107 = vcombine.high %v1050, %v1082
        %v1108 = vcombine.low %v1057, %v1089
        %v1109 = vcombine.high %v1057, %v1089
        %v1110 = vcombine.low %v1066, %v1098
        %v1111 = vcombine.high %v1066, %v1098
        %v1112 = vcombine.low %v1073, %v1105
        %v1113 = vcombine.high %v1073, %v1105
        %v1114 = vcombine.low %v698, %v700
        %v1115 = vcombine.high %v698, %v700
        %v1117 = vunpack.c.l.s4 1983009808
        %v1118 = vunpack.c.0.s8 %v1117
        %v1119 = vlaneseq
        %v1120 = vshrl.u32 %v1119, 7
        %v1121 = vsub.s32 %v1118, %v1120
        %v1122 = vrot.slane %v1114, %v1121
        %v1124 = vunpack.c.l.s4 1983009808
        %v1125 = vunpack.c.0.s8 %v1124
        %v1126 = vlaneseq
        %v1127 = vshrl.u32 %v1126, 7
        %v1128 = vsub.s32 %v1125, %v1127
        %v1129 = vrot.slane %v1115, %v1128
        %v1130 = vcombine.low %v699, %v701
        %v1131 = vcombine.high %v699, %v701
        %v1133 = vunpack.c.l.s4 1983009808
        %v1134 = vunpack.c.0.s8 %v1133
        %v1135 = vlaneseq
        %v1136 = vshrl.u32 %v1135, 7
        %v1137 = vsub.s32 %v1134, %v1136
        %v1138 = vrot.slane %v1130, %v1137
        %v1140 = vunpack.c.l.s4 1983009808
        %v1141 = vunpack.c.0.s8 %v1140
        %v1142 = vlaneseq
        %v1143 = vshrl.u32 %v1142, 7
        %v1144 = vsub.s32 %v1141, %v1143
        %v1145 = vrot.slane %v1131, %v1144
        %v1146 = vcombine.low %v702, %v704
        %v1147 = vcombine.high %v702, %v704
        %v1149 = vunpack.c.l.s4 1983009808
        %v1150 = vunpack.c.0.s8 %v1149
        %v1151 = vlaneseq
        %v1152 = vshrl.u32 %v1151, 7
        %v1153 = vsub.s32 %v1150, %v1152
        %v1154 = vrot.slane %v1146, %v1153
        %v1156 = vunpack.c.l.s4 1983009808
        %v1157 = vunpack.c.0.s8 %v1156
        %v1158 = vlaneseq
        %v1159 = vshrl.u32 %v1158, 7
        %v1160 = vsub.s32 %v1157, %v1159
        %v1161 = vrot.slane %v1147, %v1160
        %v1162 = vcombine.low %v703, %v705
        %v1163 = vcombine.high %v703, %v705
        %v1165 = vunpack.c.l.s4 1983009808
        %v1166 = vunpack.c.0.s8 %v1165
        %v1167 = vlaneseq
        %v1168 = vshrl.u32 %v1167, 7
        %v1169 = vsub.s32 %v1166, %v1168
        %v1170 = vrot.slane %v1162, %v1169
        %v1172 = vunpack.c.l.s4 1983009808
        %v1173 = vunpack.c.0.s8 %v1172
        %v1174 = vlaneseq
        %v1175 = vshrl.u32 %v1174, 7
        %v1176 = vsub.s32 %v1173, %v1175
        %v1177 = vrot.slane %v1163, %v1176
        %v1178 = vcombine.low %v1122, %v1138
        %v1179 = vcombine.high %v1122, %v1138
        %v1181 = vunpack.c.l.s4 1934713408
        %v1182 = vunpack.c.0.s8 %v1181
        %v1183 = vlaneseq
        %v1184 = vshrl.u32 %v1183, 7
        %v1185 = vsub.s32 %v1182, %v1184
        %v1186 = vrot.slane %v1178, %v1185
        %v1188 = vunpack.c.l.s4 1934713408
        %v1189 = vunpack.c.0.s8 %v1188
        %v1190 = vlaneseq
        %v1191 = vshrl.u32 %v1190, 7
        %v1192 = vsub.s32 %v1189, %v1191
        %v1193 = vrot.slane %v1179, %v1192
        %v1194 = vcombine.low %v1129, %v1145
        %v1195 = vcombine.high %v1129, %v1145
        %v1197 = vunpack.c.l.s4 1934713408
        %v1198 = vunpack.c.0.s8 %v1197
        %v1199 = vlaneseq
        %v1200 = vshrl.u32 %v1199, 7
        %v1201 = vsub.s32 %v1198, %v1200
        %v1202 = vrot.slane %v1194, %v1201
        %v1204 = vunpack.c.l.s4 1934713408
        %v1205 = vunpack.c.0.s8 %v1204
        %v1206 = vlaneseq
        %v1207 = vshrl.u32 %v1206, 7
        %v1208 = vsub.s32 %v1205, %v1207
        %v1209 = vrot.slane %v1195, %v1208
        %v1210 = vcombine.low %v1154, %v1170
        %v1211 = vcombine.high %v1154, %v1170
        %v1213 = vunpack.c.l.s4 1934713408
        %v1214 = vunpack.c.0.s8 %v1213
        %v1215 = vlaneseq
        %v1216 = vshrl.u32 %v1215, 7
        %v1217 = vsub.s32 %v1214, %v1216
        %v1218 = vrot.slane %v1210, %v1217
        %v1220 = vunpack.c.l.s4 1934713408
        %v1221 = vunpack.c.0.s8 %v1220
        %v1222 = vlaneseq
        %v1223 = vshrl.u32 %v1222, 7
        %v1224 = vsub.s32 %v1221, %v1223
        %v1225 = vrot.slane %v1211, %v1224
        %v1226 = vcombine.low %v1161, %v1177
        %v1227 = vcombine.high %v1161, %v1177
        %v1229 = vunpack.c.l.s4 1934713408
        %v1230 = vunpack.c.0.s8 %v1229
        %v1231 = vlaneseq
        %v1232 = vshrl.u32 %v1231, 7
        %v1233 = vsub.s32 %v1230, %v1232
        %v1234 = vrot.slane %v1226, %v1233
        %v1236 = vunpack.c.l.s4 1934713408
        %v1237 = vunpack.c.0.s8 %v1236
        %v1238 = vlaneseq
        %v1239 = vshrl.u32 %v1238, 7
        %v1240 = vsub.s32 %v1237, %v1239
        %v1241 = vrot.slane %v1227, %v1240
        %v1242 = vcombine.low %v1186, %v1218
        %v1243 = vcombine.high %v1186, %v1218
        %v1244 = vcombine.low %v1193, %v1225
        %v1245 = vcombine.high %v1193, %v1225
        %v1246 = vcombine.low %v1202, %v1234
        %v1247 = vcombine.high %v1202, %v1234
        %v1248 = vcombine.low %v1209, %v1241
        %v1249 = vcombine.high %v1209, %v1241
        %v1250 = vcombine.low %v970, %v972
        %v1251 = vcombine.high %v970, %v972
        %v1253 = vunpack.c.l.s4 1983009808
        %v1254 = vunpack.c.0.s8 %v1253
        %v1255 = vlaneseq
        %v1256 = vshrl.u32 %v1255, 7
        %v1257 = vsub.s32 %v1254, %v1256
        %v1258 = vrot.slane %v1250, %v1257
        %v1260 = vunpack.c.l.s4 1983009808
        %v1261 = vunpack.c.0.s8 %v1260
        %v1262 = vlaneseq
        %v1263 = vshrl.u32 %v1262, 7
        %v1264 = vsub.s32 %v1261, %v1263
        %v1265 = vrot.slane %v1251, %v1264
        %v1266 = vcombine.low %v971, %v973
        %v1267 = vcombine.high %v971, %v973
        %v1269 = vunpack.c.l.s4 1983009808
        %v1270 = vunpack.c.0.s8 %v1269
        %v1271 = vlaneseq
        %v1272 = vshrl.u32 %v1271, 7
        %v1273 = vsub.s32 %v1270, %v1272
        %v1274 = vrot.slane %v1266, %v1273
        %v1276 = vunpack.c.l.s4 1983009808
        %v1277 = vunpack.c.0.s8 %v1276
        %v1278 = vlaneseq
        %v1279 = vshrl.u32 %v1278, 7
        %v1280 = vsub.s32 %v1277, %v1279
        %v1281 = vrot.slane %v1267, %v1280
        %v1282 = vcombine.low %v974, %v976
        %v1283 = vcombine.high %v974, %v976
        %v1285 = vunpack.c.l.s4 1983009808
        %v1286 = vunpack.c.0.s8 %v1285
        %v1287 = vlaneseq
        %v1288 = vshrl.u32 %v1287, 7
        %v1289 = vsub.s32 %v1286, %v1288
        %v1290 = vrot.slane %v1282, %v1289
        %v1292 = vunpack.c.l.s4 1983009808
        %v1293 = vunpack.c.0.s8 %v1292
        %v1294 = vlaneseq
        %v1295 = vshrl.u32 %v1294, 7
        %v1296 = vsub.s32 %v1293, %v1295
        %v1297 = vrot.slane %v1283, %v1296
        %v1298 = vcombine.low %v975, %v977
        %v1299 = vcombine.high %v975, %v977
        %v1301 = vunpack.c.l.s4 1983009808
        %v1302 = vunpack.c.0.s8 %v1301
        %v1303 = vlaneseq
        %v1304 = vshrl.u32 %v1303, 7
        %v1305 = vsub.s32 %v1302, %v1304
        %v1306 = vrot.slane %v1298, %v1305
        %v1308 = vunpack.c.l.s4 1983009808
        %v1309 = vunpack.c.0.s8 %v1308
        %v1310 = vlaneseq
        %v1311 = vshrl.u32 %v1310, 7
        %v1312 = vsub.s32 %v1309, %v1311
        %v1313 = vrot.slane %v1299, %v1312
        %v1314 = vcombine.low %v1258, %v1274
        %v1315 = vcombine.high %v1258, %v1274
        %v1317 = vunpack.c.l.s4 1934713408
        %v1318 = vunpack.c.0.s8 %v1317
        %v1319 = vlaneseq
        %v1320 = vshrl.u32 %v1319, 7
        %v1321 = vsub.s32 %v1318, %v1320
        %v1322 = vrot.slane %v1314, %v1321
        %v1324 = vunpack.c.l.s4 1934713408
        %v1325 = vunpack.c.0.s8 %v1324
        %v1326 = vlaneseq
        %v1327 = vshrl.u32 %v1326, 7
        %v1328 = vsub.s32 %v1325, %v1327
        %v1329 = vrot.slane %v1315, %v1328
        %v1330 = vcombine.low %v1265, %v1281
        %v1331 = vcombine.high %v1265, %v1281
        %v1333 = vunpack.c.l.s4 1934713408
        %v1334 = vunpack.c.0.s8 %v1333
        %v1335 = vlaneseq
        %v1336 = vshrl.u32 %v1335, 7
        %v1337 = vsub.s32 %v1334, %v1336
        %v1338 = vrot.slane %v1330, %v1337
        %v1340 = vunpack.c.l.s4 1934713408
        %v1341 = vunpack.c.0.s8 %v1340
        %v1342 = vlaneseq
        %v1343 = vshrl.u32 %v1342, 7
        %v1344 = vsub.s32 %v1341, %v1343
        %v1345 = vrot.slane %v1331, %v1344
        %v1346 = vcombine.low %v1290, %v1306
        %v1347 = vcombine.high %v1290, %v1306
        %v1349 = vunpack.c.l.s4 1934713408
        %v1350 = vunpack.c.0.s8 %v1349
        %v1351 = vlaneseq
        %v1352 = vshrl.u32 %v1351, 7
        %v1353 = vsub.s32 %v1350, %v1352
        %v1354 = vrot.slane %v1346, %v1353
        %v1356 = vunpack.c.l.s4 1934713408
        %v1357 = vunpack.c.0.s8 %v1356
        %v1358 = vlaneseq
        %v1359 = vshrl.u32 %v1358, 7
        %v1360 = vsub.s32 %v1357, %v1359
        %v1361 = vrot.slane %v1347, %v1360
        %v1362 = vcombine.low %v1297, %v1313
        %v1363 = vcombine.high %v1297, %v1313
        %v1365 = vunpack.c.l.s4 1934713408
        %v1366 = vunpack.c.0.s8 %v1365
        %v1367 = vlaneseq
        %v1368 = vshrl.u32 %v1367, 7
        %v1369 = vsub.s32 %v1366, %v1368
        %v1370 = vrot.slane %v1362, %v1369
        %v1372 = vunpack.c.l.s4 1934713408
        %v1373 = vunpack.c.0.s8 %v1372
        %v1374 = vlaneseq
        %v1375 = vshrl.u32 %v1374, 7
        %v1376 = vsub.s32 %v1373, %v1375
        %v1377 = vrot.slane %v1363, %v1376
        %v1378 = vcombine.low %v1322, %v1354
        %v1379 = vcombine.high %v1322, %v1354
        %v1380 = vcombine.low %v1329, %v1361
        %v1381 = vcombine.high %v1329, %v1361
        %v1382 = vcombine.low %v1338, %v1370
        %v1383 = vcombine.high %v1338, %v1370
        %v1384 = vcombine.low %v1345, %v1377
        %v1385 = vcombine.high %v1345, %v1377
        %v1386 = vcombine.low %v834, %v836
        %v1387 = vcombine.high %v834, %v836
        %v1389 = vunpack.c.l.s4 1983009808
        %v1390 = vunpack.c.0.s8 %v1389
        %v1391 = vlaneseq
        %v1392 = vshrl.u32 %v1391, 7
        %v1393 = vsub.s32 %v1390, %v1392
        %v1394 = vrot.slane %v1386, %v1393
        %v1396 = vunpack.c.l.s4 1983009808
        %v1397 = vunpack.c.0.s8 %v1396
        %v1398 = vlaneseq
        %v1399 = vshrl.u32 %v1398, 7
        %v1400 = vsub.s32 %v1397, %v1399
        %v1401 = vrot.slane %v1387, %v1400
        %v1402 = vcombine.low %v835, %v837
        %v1403 = vcombine.high %v835, %v837
        %v1405 = vunpack.c.l.s4 1983009808
        %v1406 = vunpack.c.0.s8 %v1405
        %v1407 = vlaneseq
        %v1408 = vshrl.u32 %v1407, 7
        %v1409 = vsub.s32 %v1406, %v1408
        %v1410 = vrot.slane %v1402, %v1409
        %v1412 = vunpack.c.l.s4 1983009808
        %v1413 = vunpack.c.0.s8 %v1412
        %v1414 = vlaneseq
        %v1415 = vshrl.u32 %v1414, 7
        %v1416 = vsub.s32 %v1413, %v1415
        %v1417 = vrot.slane %v1403, %v1416
        %v1418 = vcombine.low %v838, %v840
        %v1419 = vcombine.high %v838, %v840
        %v1421 = vunpack.c.l.s4 1983009808
        %v1422 = vunpack.c.0.s8 %v1421
        %v1423 = vlaneseq
        %v1424 = vshrl.u32 %v1423, 7
        %v1425 = vsub.s32 %v1422, %v1424
        %v1426 = vrot.slane %v1418, %v1425
        %v1428 = vunpack.c.l.s4 1983009808
        %v1429 = vunpack.c.0.s8 %v1428
        %v1430 = vlaneseq
        %v1431 = vshrl.u32 %v1430, 7
        %v1432 = vsub.s32 %v1429, %v1431
        %v1433 = vrot.slane %v1419, %v1432
        %v1434 = vcombine.low %v839, %v841
        %v1435 = vcombine.high %v839, %v841
        %v1437 = vunpack.c.l.s4 1983009808
        %v1438 = vunpack.c.0.s8 %v1437
        %v1439 = vlaneseq
        %v1440 = vshrl.u32 %v1439, 7
        %v1441 = vsub.s32 %v1438, %v1440
        %v1442 = vrot.slane %v1434, %v1441
        %v1444 = vunpack.c.l.s4 1983009808
        %v1445 = vunpack.c.0.s8 %v1444
        %v1446 = vlaneseq
        %v1447 = vshrl.u32 %v1446, 7
        %v1448 = vsub.s32 %v1445, %v1447
        %v1449 = vrot.slane %v1435, %v1448
        %v1450 = vcombine.low %v1394, %v1410
        %v1451 = vcombine.high %v1394, %v1410
        %v1453 = vunpack.c.l.s4 1934713408
        %v1454 = vunpack.c.0.s8 %v1453
        %v1455 = vlaneseq
        %v1456 = vshrl.u32 %v1455, 7
        %v1457 = vsub.s32 %v1454, %v1456
        %v1458 = vrot.slane %v1450, %v1457
        %v1460 = vunpack.c.l.s4 1934713408
        %v1461 = vunpack.c.0.s8 %v1460
        %v1462 = vlaneseq
        %v1463 = vshrl.u32 %v1462, 7
        %v1464 = vsub.s32 %v1461, %v1463
        %v1465 = vrot.slane %v1451, %v1464
        %v1466 = vcombine.low %v1401, %v1417
        %v1467 = vcombine.high %v1401, %v1417
        %v1469 = vunpack.c.l.s4 1934713408
        %v1470 = vunpack.c.0.s8 %v1469
        %v1471 = vlaneseq
        %v1472 = vshrl.u32 %v1471, 7
        %v1473 = vsub.s32 %v1470, %v1472
        %v1474 = vrot.slane %v1466, %v1473
        %v1476 = vunpack.c.l.s4 1934713408
        %v1477 = vunpack.c.0.s8 %v1476
        %v1478 = vlaneseq
        %v1479 = vshrl.u32 %v1478, 7
        %v1480 = vsub.s32 %v1477, %v1479
        %v1481 = vrot.slane %v1467, %v1480
        %v1482 = vcombine.low %v1426, %v1442
        %v1483 = vcombine.high %v1426, %v1442
        %v1485 = vunpack.c.l.s4 1934713408
        %v1486 = vunpack.c.0.s8 %v1485
        %v1487 = vlaneseq
        %v1488 = vshrl.u32 %v1487, 7
        %v1489 = vsub.s32 %v1486, %v1488
        %v1490 = vrot.slane %v1482, %v1489
        %v1492 = vunpack.c.l.s4 1934713408
        %v1493 = vunpack.c.0.s8 %v1492
        %v1494 = vlaneseq
        %v1495 = vshrl.u32 %v1494, 7
        %v1496 = vsub.s32 %v1493, %v1495
        %v1497 = vrot.slane %v1483, %v1496
        %v1498 = vcombine.low %v1433, %v1449
        %v1499 = vcombine.high %v1433, %v1449
        %v1501 = vunpack.c.l.s4 1934713408
        %v1502 = vunpack.c.0.s8 %v1501
        %v1503 = vlaneseq
        %v1504 = vshrl.u32 %v1503, 7
        %v1505 = vsub.s32 %v1502, %v1504
        %v1506 = vrot.slane %v1498, %v1505
        %v1508 = vunpack.c.l.s4 1934713408
        %v1509 = vunpack.c.0.s8 %v1508
        %v1510 = vlaneseq
        %v1511 = vshrl.u32 %v1510, 7
        %v1512 = vsub.s32 %v1509, %v1511
        %v1513 = vrot.slane %v1499, %v1512
        %v1514 = vcombine.low %v1458, %v1490
        %v1515 = vcombine.high %v1458, %v1490
        %v1516 = vcombine.low %v1465, %v1497
        %v1517 = vcombine.high %v1465, %v1497
        %v1518 = vcombine.low %v1474, %v1506
        %v1519 = vcombine.high %v1474, %v1506
        %v1520 = vcombine.low %v1481, %v1513
        %v1521 = vcombine.high %v1481, %v1513
        %v1522 = vcombine.low %v1106, %v1108
        %v1523 = vcombine.high %v1106, %v1108
        %v1525 = vunpack.c.l.s4 1983009808
        %v1526 = vunpack.c.0.s8 %v1525
        %v1527 = vlaneseq
        %v1528 = vshrl.u32 %v1527, 7
        %v1529 = vsub.s32 %v1526, %v1528
        %v1530 = vrot.slane %v1522, %v1529
        %v1532 = vunpack.c.l.s4 1983009808
        %v1533 = vunpack.c.0.s8 %v1532
        %v1534 = vlaneseq
        %v1535 = vshrl.u32 %v1534, 7
        %v1536 = vsub.s32 %v1533, %v1535
        %v1537 = vrot.slane %v1523, %v1536
        %v1538 = vcombine.low %v1107, %v1109
        %v1539 = vcombine.high %v1107, %v1109
        %v1541 = vunpack.c.l.s4 1983009808
        %v1542 = vunpack.c.0.s8 %v1541
        %v1543 = vlaneseq
        %v1544 = vshrl.u32 %v1543, 7
        %v1545 = vsub.s32 %v1542, %v1544
        %v1546 = vrot.slane %v1538, %v1545
        %v1548 = vunpack.c.l.s4 1983009808
        %v1549 = vunpack.c.0.s8 %v1548
        %v1550 = vlaneseq
        %v1551 = vshrl.u32 %v1550, 7
        %v1552 = vsub.s32 %v1549, %v1551
        %v1553 = vrot.slane %v1539, %v1552
        %v1554 = vcombine.low %v1110, %v1112
        %v1555 = vcombine.high %v1110, %v1112
        %v1557 = vunpack.c.l.s4 1983009808
        %v1558 = vunpack.c.0.s8 %v1557
        %v1559 = vlaneseq
        %v1560 = vshrl.u32 %v1559, 7
        %v1561 = vsub.s32 %v1558, %v1560
        %v1562 = vrot.slane %v1554, %v1561
        %v1564 = vunpack.c.l.s4 1983009808
        %v1565 = vunpack.c.0.s8 %v1564
        %v1566 = vlaneseq
        %v1567 = vshrl.u32 %v1566, 7
        %v1568 = vsub.s32 %v1565, %v1567
        %v1569 = vrot.slane %v1555, %v1568
        %v1570 = vcombine.low %v1111, %v1113
        %v1571 = vcombine.high %v1111, %v1113
        %v1573 = vunpack.c.l.s4 1983009808
        %v1574 = vunpack.c.0.s8 %v1573
        %v1575 = vlaneseq
        %v1576 = vshrl.u32 %v1575, 7
        %v1577 = vsub.s32 %v1574, %v1576
        %v1578 = vrot.slane %v1570, %v1577
        %v1580 = vunpack.c.l.s4 1983009808
        %v1581 = vunpack.c.0.s8 %v1580
        %v1582 = vlaneseq
        %v1583 = vshrl.u32 %v1582, 7
        %v1584 = vsub.s32 %v1581, %v1583
        %v1585 = vrot.slane %v1571, %v1584
        %v1586 = vcombine.low %v1530, %v1546
        %v1587 = vcombine.high %v1530, %v1546
        %v1589 = vunpack.c.l.s4 1934713408
        %v1590 = vunpack.c.0.s8 %v1589
        %v1591 = vlaneseq
        %v1592 = vshrl.u32 %v1591, 7
        %v1593 = vsub.s32 %v1590, %v1592
        %v1594 = vrot.slane %v1586, %v1593
        %v1596 = vunpack.c.l.s4 1934713408
        %v1597 = vunpack.c.0.s8 %v1596
        %v1598 = vlaneseq
        %v1599 = vshrl.u32 %v1598, 7
        %v1600 = vsub.s32 %v1597, %v1599
        %v1601 = vrot.slane %v1587, %v1600
        %v1602 = vcombine.low %v1537, %v1553
        %v1603 = vcombine.high %v1537, %v1553
        %v1605 = vunpack.c.l.s4 1934713408
        %v1606 = vunpack.c.0.s8 %v1605
        %v1607 = vlaneseq
        %v1608 = vshrl.u32 %v1607, 7
        %v1609 = vsub.s32 %v1606, %v1608
        %v1610 = vrot.slane %v1602, %v1609
        %v1612 = vunpack.c.l.s4 1934713408
        %v1613 = vunpack.c.0.s8 %v1612
        %v1614 = vlaneseq
        %v1615 = vshrl.u32 %v1614, 7
        %v1616 = vsub.s32 %v1613, %v1615
        %v1617 = vrot.slane %v1603, %v1616
        %v1618 = vcombine.low %v1562, %v1578
        %v1619 = vcombine.high %v1562, %v1578
        %v1621 = vunpack.c.l.s4 1934713408
        %v1622 = vunpack.c.0.s8 %v1621
        %v1623 = vlaneseq
        %v1624 = vshrl.u32 %v1623, 7
        %v1625 = vsub.s32 %v1622, %v1624
        %v1626 = vrot.slane %v1618, %v1625
        %v1628 = vunpack.c.l.s4 1934713408
        %v1629 = vunpack.c.0.s8 %v1628
        %v1630 = vlaneseq
        %v1631 = vshrl.u32 %v1630, 7
        %v1632 = vsub.s32 %v1629, %v1631
        %v1633 = vrot.slane %v1619, %v1632
        %v1634 = vcombine.low %v1569, %v1585
        %v1635 = vcombine.high %v1569, %v1585
        %v1637 = vunpack.c.l.s4 1934713408
        %v1638 = vunpack.c.0.s8 %v1637
        %v1639 = vlaneseq
        %v1640 = vshrl.u32 %v1639, 7
        %v1641 = vsub.s32 %v1638, %v1640
        %v1642 = vrot.slane %v1634, %v1641
        %v1644 = vunpack.c.l.s4 1934713408
        %v1645 = vunpack.c.0.s8 %v1644
        %v1646 = vlaneseq
        %v1647 = vshrl.u32 %v1646, 7
        %v1648 = vsub.s32 %v1645, %v1647
        %v1649 = vrot.slane %v1635, %v1648
        %v1650 = vcombine.low %v1594, %v1626
        %v1651 = vcombine.high %v1594, %v1626
        %v1652 = vcombine.low %v1601, %v1633
        %v1653 = vcombine.high %v1601, %v1633
        %v1654 = vcombine.low %v1610, %v1642
        %v1655 = vcombine.high %v1610, %v1642
        %v1656 = vcombine.low %v1617, %v1649
        %v1657 = vcombine.high %v1617, %v1649
        %v1658 = vcombine.low 0.0, 0.0
        %v1659 = vcombine.high 0.0, 0.0
        %v1661 = vunpack.c.l.s4 1983009808
        %v1662 = vunpack.c.0.s8 %v1661
        %v1663 = vlaneseq
        %v1664 = vshrl.u32 %v1663, 7
        %v1665 = vsub.s32 %v1662, %v1664
        %v1666 = vrot.slane %v1658, %v1665
        %v1668 = vunpack.c.l.s4 1983009808
        %v1669 = vunpack.c.0.s8 %v1668
        %v1670 = vlaneseq
        %v1671 = vshrl.u32 %v1670, 7
        %v1672 = vsub.s32 %v1669, %v1671
        %v1673 = vrot.slane %v1659, %v1672
        %v1674 = vcombine.low %v1666, %v1666
        %v1675 = vcombine.high %v1666, %v1666
        %v1677 = vunpack.c.l.s4 1934713408
        %v1678 = vunpack.c.0.s8 %v1677
        %v1679 = vlaneseq
        %v1680 = vshrl.u32 %v1679, 7
        %v1681 = vsub.s32 %v1678, %v1680
        %v1682 = vrot.slane %v1674, %v1681
        %v1684 = vunpack.c.l.s4 1934713408
        %v1685 = vunpack.c.0.s8 %v1684
        %v1686 = vlaneseq
        %v1687 = vshrl.u32 %v1686, 7
        %v1688 = vsub.s32 %v1685, %v1687
        %v1689 = vrot.slane %v1675, %v1688
        %v1690 = vcombine.low %v1673, %v1673
        %v1691 = vcombine.high %v1673, %v1673
        %v1693 = vunpack.c.l.s4 1934713408
        %v1694 = vunpack.c.0.s8 %v1693
        %v1695 = vlaneseq
        %v1696 = vshrl.u32 %v1695, 7
        %v1697 = vsub.s32 %v1694, %v1696
        %v1698 = vrot.slane %v1690, %v1697
        %v1700 = vunpack.c.l.s4 1934713408
        %v1701 = vunpack.c.0.s8 %v1700
        %v1702 = vlaneseq
        %v1703 = vshrl.u32 %v1702, 7
        %v1704 = vsub.s32 %v1701, %v1703
        %v1705 = vrot.slane %v1691, %v1704
        %v1706 = vcombine.low %v1682, %v1682
        %v1707 = vcombine.high %v1682, %v1682
        %v1708 = vcombine.low %v1689, %v1689
        %v1709 = vcombine.high %v1689, %v1689
        %v1710 = vcombine.low %v1698, %v1698
        %v1711 = vcombine.high %v1698, %v1698
        %v1712 = vcombine.low %v1705, %v1705
        %v1713 = vcombine.high %v1705, %v1705
        %1714 = vxpose.xlu0.b32.start [1/16] %v568, 128
        %1715 = vxpose.xlu0.b32.cont [2/16] %v569, 128
        %1716 = vxpose.xlu0.b32.cont [3/16] 0.0, 128
        %1717 = vxpose.xlu0.b32.cont [4/16] 0.0, 128
        %1718 = vxpose.xlu0.b32.cont [5/16] 0.0, 128
        %1719 = vxpose.xlu0.b32.cont [6/16] 0.0, 128
        %1720 = vxpose.xlu0.b32.cont [7/16] 0.0, 128
        %1721 = vxpose.xlu0.b32.cont [8/16] 0.0, 128
        %1722 = vxpose.xlu0.b32.cont [9/16] 0.0, 128
        %1723 = vxpose.xlu0.b32.cont [10/16] 0.0, 128
        %1724 = vxpose.xlu0.b32.cont [11/16] 0.0, 128
        %1725 = vxpose.xlu0.b32.cont [12/16] 0.0, 128
        %1726 = vxpose.xlu0.b32.cont [13/16] 0.0, 128
        %1727 = vxpose.xlu0.b32.cont [14/16] 0.0, 128
        %1728 = vxpose.xlu0.b32.cont [15/16] 0.0, 128
        %1729 = vxpose.xlu0.b32.end [16/16] 0.0, 128
        %v1730 = vpop.trf.xlu0
        %v1731 = vpop.trf.xlu0
        %v1732 = vpop.trf.xlu0
        %v1733 = vpop.trf.xlu0
        %v1734 = vpop.trf.xlu0
        %v1735 = vpop.trf.xlu0
        %v1736 = vpop.trf.xlu0
        %v1737 = vpop.trf.xlu0
        %v1738 = vpop.trf.xlu0
        %v1739 = vpop.trf.xlu0
        %v1740 = vpop.trf.xlu0
        %v1741 = vpop.trf.xlu0
        %v1742 = vpop.trf.xlu0
        %v1743 = vpop.trf.xlu0
        %v1744 = vpop.trf.xlu0
        %v1745 = vpop.trf.xlu0
        %vm1746 = vcmask 130048
        %v1748 = vsel %vm1746, %v1730, 0
        %v1751 = vsel %vm1746, %v1731, 0
        %1753 = vmatprep.subr.mxu0 0.0
        %1754 = vmatpush1.msra.mxu0 0.0
        %1755 = vmatprep.subr.mxu0 0.0
        %1756 = vmatpush1.msra.mxu0 0.0
        %1757 = vmatprep.subr.mxu0 0.0
        %1758 = vmatpush1.msra.mxu0 0.0
        %1759 = vmatprep.subr.mxu0 0.0
        %1760 = vmatpush1.msra.mxu0 0.0
        %1761 = vmatprep.subr.mxu0 0.0
        %1762 = vmatpush1.msra.mxu0 0.0
        %1763 = vmatprep.subr.mxu0 0.0
        %1764 = vmatpush1.msra.mxu0 0.0
        %1765 = vmatprep.subr.mxu0 0.0
        %1766 = vmatpush1.msra.mxu0 0.0
        %1767 = vmatprep.subr.mxu0 0.0
        %1768 = vmatpush1.msra.mxu0 0.0
        %1769 = vmatprep.subr.mxu0 0.0
        %1770 = vmatpush1.msra.mxu0 0.0
        %1771 = vmatprep.subr.mxu0 0.0
        %1772 = vmatpush1.msra.mxu0 0.0
        %1773 = vmatprep.subr.mxu0 0.0
        %1774 = vmatpush1.msra.mxu0 0.0
        %1775 = vmatprep.subr.mxu0 0.0
        %1776 = vmatpush1.msra.mxu0 0.0
        %1777 = vmatprep.subr.mxu0 0.0
        %1778 = vmatpush1.msra.mxu0 0.0
        %1779 = vmatprep.subr.mxu0 0.0
        %1780 = vmatpush1.msra.mxu0 0.0
        %1781 = vmatprep.subr.mxu0 %v1379
        %1782 = vmatpush1.msra.mxu0 %v1378
        %1783 = vmatprep.subr.mxu0 %v1243
        %1784 = vmatpush1.msra.mxu0 %v1242
        %1785 = vmatprep.subr.mxu0 0.0
        %1786 = vmatpush2.msra.mxu0 0.0
        %1787 = vmatprep.subr.mxu0 0.0
        %1788 = vmatpush2.msra.mxu0 0.0
        %1789 = vmatprep.subr.mxu0 0.0
        %1790 = vmatpush2.msra.mxu0 0.0
        %1791 = vmatprep.subr.mxu0 0.0
        %1792 = vmatpush2.msra.mxu0 0.0
        %1793 = vmatprep.subr.mxu0 0.0
        %1794 = vmatpush2.msra.mxu0 0.0
        %1795 = vmatprep.subr.mxu0 0.0
        %1796 = vmatpush2.msra.mxu0 0.0
        %1797 = vmatprep.subr.mxu0 0.0
        %1798 = vmatpush2.msra.mxu0 0.0
        %1799 = vmatprep.subr.mxu0 0.0
        %1800 = vmatpush2.msra.mxu0 0.0
        %1801 = vmatprep.subr.mxu0 0.0
        %1802 = vmatpush2.msra.mxu0 0.0
        %1803 = vmatprep.subr.mxu0 0.0
        %1804 = vmatpush2.msra.mxu0 0.0
        %1805 = vmatprep.subr.mxu0 0.0
        %1806 = vmatpush2.msra.mxu0 0.0
        %1807 = vmatprep.subr.mxu0 0.0
        %1808 = vmatpush2.msra.mxu0 0.0
        %1809 = vmatprep.subr.mxu0 0.0
        %1810 = vmatpush2.msra.mxu0 0.0
        %1811 = vmatprep.subr.mxu0 0.0
        %1812 = vmatpush2.msra.mxu0 0.0
        %1813 = vmatprep.subr.mxu0 0.0
        %1814 = vmatpush2.msra.mxu0 0.0
        %1815 = vmatprep.subr.mxu0 0.0
        %1816 = vmatpush2.msra.mxu0 0.0
        %1817 = vmatprep.mubr.f32.mxu0 0.0
        %1818 = vmatmul.mubr.f32.gmra.mxu0 %v1748
        %v1819 = vpop.f32.mrf.mxu0
        %v1820 = vadd.f32 %v1706, %v1819
        %v1821 = vpop.f32.mrf.mxu0
        %v1822 = vadd.f32 %v1707, %v1821
        %1823 = vmatprep.mubr.f32.mxu0 0.0
        %1824 = vmatmul.mubr.f32.gmra.mxu0 %v1751
        %v1825 = vpop.f32.mrf.mxu0
        %v1826 = vadd.f32 %v1706, %v1825
        %v1827 = vpop.f32.mrf.mxu0
        %v1828 = vadd.f32 %v1707, %v1827
        %1829 = vdwg.mxu0
        %1830 = vmatprep.subr.mxu0 0.0
        %1831 = vmatpush1.msra.mxu0 0.0
        %1832 = vmatprep.subr.mxu0 0.0
        %1833 = vmatpush1.msra.mxu0 0.0
        %1834 = vmatprep.subr.mxu0 0.0
        %1835 = vmatpush1.msra.mxu0 0.0
        %1836 = vmatprep.subr.mxu0 0.0
        %1837 = vmatpush1.msra.mxu0 0.0
        %1838 = vmatprep.subr.mxu0 0.0
        %1839 = vmatpush1.msra.mxu0 0.0
        %1840 = vmatprep.subr.mxu0 0.0
        %1841 = vmatpush1.msra.mxu0 0.0
        %1842 = vmatprep.subr.mxu0 0.0
        %1843 = vmatpush1.msra.mxu0 0.0
        %1844 = vmatprep.subr.mxu0 0.0
        %1845 = vmatpush1.msra.mxu0 0.0
        %1846 = vmatprep.subr.mxu0 0.0
        %1847 = vmatpush1.msra.mxu0 0.0
        %1848 = vmatprep.subr.mxu0 0.0
        %1849 = vmatpush1.msra.mxu0 0.0
        %1850 = vmatprep.subr.mxu0 0.0
        %1851 = vmatpush1.msra.mxu0 0.0
        %1852 = vmatprep.subr.mxu0 0.0
        %1853 = vmatpush1.msra.mxu0 0.0
        %1854 = vmatprep.subr.mxu0 0.0
        %1855 = vmatpush1.msra.mxu0 0.0
        %1856 = vmatprep.subr.mxu0 0.0
        %1857 = vmatpush1.msra.mxu0 0.0
        %1858 = vmatprep.subr.mxu0 %v1381
        %1859 = vmatpush1.msra.mxu0 %v1380
        %1860 = vmatprep.subr.mxu0 %v1245
        %1861 = vmatpush1.msra.mxu0 %v1244
        %1862 = vmatprep.subr.mxu0 0.0
        %1863 = vmatpush2.msra.mxu0 0.0
        %1864 = vmatprep.subr.mxu0 0.0
        %1865 = vmatpush2.msra.mxu0 0.0
        %1866 = vmatprep.subr.mxu0 0.0
        %1867 = vmatpush2.msra.mxu0 0.0
        %1868 = vmatprep.subr.mxu0 0.0
        %1869 = vmatpush2.msra.mxu0 0.0
        %1870 = vmatprep.subr.mxu0 0.0
        %1871 = vmatpush2.msra.mxu0 0.0
        %1872 = vmatprep.subr.mxu0 0.0
        %1873 = vmatpush2.msra.mxu0 0.0
        %1874 = vmatprep.subr.mxu0 0.0
        %1875 = vmatpush2.msra.mxu0 0.0
        %1876 = vmatprep.subr.mxu0 0.0
        %1877 = vmatpush2.msra.mxu0 0.0
        %1878 = vmatprep.subr.mxu0 0.0
        %1879 = vmatpush2.msra.mxu0 0.0
        %1880 = vmatprep.subr.mxu0 0.0
        %1881 = vmatpush2.msra.mxu0 0.0
        %1882 = vmatprep.subr.mxu0 0.0
        %1883 = vmatpush2.msra.mxu0 0.0
        %1884 = vmatprep.subr.mxu0 0.0
        %1885 = vmatpush2.msra.mxu0 0.0
        %1886 = vmatprep.subr.mxu0 0.0
        %1887 = vmatpush2.msra.mxu0 0.0
        %1888 = vmatprep.subr.mxu0 0.0
        %1889 = vmatpush2.msra.mxu0 0.0
        %1890 = vmatprep.subr.mxu0 0.0
        %1891 = vmatpush2.msra.mxu0 0.0
        %1892 = vmatprep.subr.mxu0 0.0
        %1893 = vmatpush2.msra.mxu0 0.0
        %1894 = vmatprep.mubr.f32.mxu0 0.0
        %1895 = vmatmul.mubr.f32.gmra.mxu0 %v1748
        %v1896 = vpop.f32.mrf.mxu0
        %v1897 = vadd.f32 %v1708, %v1896
        %v1898 = vpop.f32.mrf.mxu0
        %v1899 = vadd.f32 %v1709, %v1898
        %1900 = vmatprep.mubr.f32.mxu0 0.0
        %1901 = vmatmul.mubr.f32.gmra.mxu0 %v1751
        %v1902 = vpop.f32.mrf.mxu0
        %v1903 = vadd.f32 %v1708, %v1902
        %v1904 = vpop.f32.mrf.mxu0
        %v1905 = vadd.f32 %v1709, %v1904
        %1906 = vdwg.mxu0
        %1907 = vmatprep.subr.mxu0 0.0
        %1908 = vmatpush1.msra.mxu0 0.0
        %1909 = vmatprep.subr.mxu0 0.0
        %1910 = vmatpush1.msra.mxu0 0.0
        %1911 = vmatprep.subr.mxu0 0.0
        %1912 = vmatpush1.msra.mxu0 0.0
        %1913 = vmatprep.subr.mxu0 0.0
        %1914 = vmatpush1.msra.mxu0 0.0
        %1915 = vmatprep.subr.mxu0 0.0
        %1916 = vmatpush1.msra.mxu0 0.0
        %1917 = vmatprep.subr.mxu0 0.0
        %1918 = vmatpush1.msra.mxu0 0.0
        %1919 = vmatprep.subr.mxu0 0.0
        %1920 = vmatpush1.msra.mxu0 0.0
        %1921 = vmatprep.subr.mxu0 0.0
        %1922 = vmatpush1.msra.mxu0 0.0
        %1923 = vmatprep.subr.mxu0 0.0
        %1924 = vmatpush1.msra.mxu0 0.0
        %1925 = vmatprep.subr.mxu0 0.0
        %1926 = vmatpush1.msra.mxu0 0.0
        %1927 = vmatprep.subr.mxu0 0.0
        %1928 = vmatpush1.msra.mxu0 0.0
        %1929 = vmatprep.subr.mxu0 0.0
        %1930 = vmatpush1.msra.mxu0 0.0
        %1931 = vmatprep.subr.mxu0 0.0
        %1932 = vmatpush1.msra.mxu0 0.0
        %1933 = vmatprep.subr.mxu0 0.0
        %1934 = vmatpush1.msra.mxu0 0.0
        %1935 = vmatprep.subr.mxu0 %v1383
        %1936 = vmatpush1.msra.mxu0 %v1382
        %1937 = vmatprep.subr.mxu0 %v1247
        %1938 = vmatpush1.msra.mxu0 %v1246
        %1939 = vmatprep.subr.mxu0 0.0
        %1940 = vmatpush2.msra.mxu0 0.0
        %1941 = vmatprep.subr.mxu0 0.0
        %1942 = vmatpush2.msra.mxu0 0.0
        %1943 = vmatprep.subr.mxu0 0.0
        %1944 = vmatpush2.msra.mxu0 0.0
        %1945 = vmatprep.subr.mxu0 0.0
        %1946 = vmatpush2.msra.mxu0 0.0
        %1947 = vmatprep.subr.mxu0 0.0
        %1948 = vmatpush2.msra.mxu0 0.0
        %1949 = vmatprep.subr.mxu0 0.0
        %1950 = vmatpush2.msra.mxu0 0.0
        %1951 = vmatprep.subr.mxu0 0.0
        %1952 = vmatpush2.msra.mxu0 0.0
        %1953 = vmatprep.subr.mxu0 0.0
        %1954 = vmatpush2.msra.mxu0 0.0
        %1955 = vmatprep.subr.mxu0 0.0
        %1956 = vmatpush2.msra.mxu0 0.0
        %1957 = vmatprep.subr.mxu0 0.0
        %1958 = vmatpush2.msra.mxu0 0.0
        %1959 = vmatprep.subr.mxu0 0.0
        %1960 = vmatpush2.msra.mxu0 0.0
        %1961 = vmatprep.subr.mxu0 0.0
        %1962 = vmatpush2.msra.mxu0 0.0
        %1963 = vmatprep.subr.mxu0 0.0
        %1964 = vmatpush2.msra.mxu0 0.0
        %1965 = vmatprep.subr.mxu0 0.0
        %1966 = vmatpush2.msra.mxu0 0.0
        %1967 = vmatprep.subr.mxu0 0.0
        %1968 = vmatpush2.msra.mxu0 0.0
        %1969 = vmatprep.subr.mxu0 0.0
        %1970 = vmatpush2.msra.mxu0 0.0
        %1971 = vmatprep.mubr.f32.mxu0 0.0
        %1972 = vmatmul.mubr.f32.gmra.mxu0 %v1748
        %v1973 = vpop.f32.mrf.mxu0
        %v1974 = vadd.f32 %v1710, %v1973
        %v1975 = vpop.f32.mrf.mxu0
        %v1976 = vadd.f32 %v1711, %v1975
        %1977 = vmatprep.mubr.f32.mxu0 0.0
        %1978 = vmatmul.mubr.f32.gmra.mxu0 %v1751
        %v1979 = vpop.f32.mrf.mxu0
        %v1980 = vadd.f32 %v1710, %v1979
        %v1981 = vpop.f32.mrf.mxu0
        %v1982 = vadd.f32 %v1711, %v1981
        %1983 = vdwg.mxu0
        %1984 = vmatprep.subr.mxu0 0.0
        %1985 = vmatpush1.msra.mxu0 0.0
        %1986 = vmatprep.subr.mxu0 0.0
        %1987 = vmatpush1.msra.mxu0 0.0
        %1988 = vmatprep.subr.mxu0 0.0
        %1989 = vmatpush1.msra.mxu0 0.0
        %1990 = vmatprep.subr.mxu0 0.0
        %1991 = vmatpush1.msra.mxu0 0.0
        %1992 = vmatprep.subr.mxu0 0.0
        %1993 = vmatpush1.msra.mxu0 0.0
        %1994 = vmatprep.subr.mxu0 0.0
        %1995 = vmatpush1.msra.mxu0 0.0
        %1996 = vmatprep.subr.mxu0 0.0
        %1997 = vmatpush1.msra.mxu0 0.0
        %1998 = vmatprep.subr.mxu0 0.0
        %1999 = vmatpush1.msra.mxu0 0.0
        %2000 = vmatprep.subr.mxu0 0.0
        %2001 = vmatpush1.msra.mxu0 0.0
        %2002 = vmatprep.subr.mxu0 0.0
        %2003 = vmatpush1.msra.mxu0 0.0
        %2004 = vmatprep.subr.mxu0 0.0
        %2005 = vmatpush1.msra.mxu0 0.0
        %2006 = vmatprep.subr.mxu0 0.0
        %2007 = vmatpush1.msra.mxu0 0.0
        %2008 = vmatprep.subr.mxu0 0.0
        %2009 = vmatpush1.msra.mxu0 0.0
        %2010 = vmatprep.subr.mxu0 0.0
        %2011 = vmatpush1.msra.mxu0 0.0
        %2012 = vmatprep.subr.mxu0 %v1385
        %2013 = vmatpush1.msra.mxu0 %v1384
        %2014 = vmatprep.subr.mxu0 %v1249
        %2015 = vmatpush1.msra.mxu0 %v1248
        %2016 = vmatprep.subr.mxu0 0.0
        %2017 = vmatpush2.msra.mxu0 0.0
        %2018 = vmatprep.subr.mxu0 0.0
        %2019 = vmatpush2.msra.mxu0 0.0
        %2020 = vmatprep.subr.mxu0 0.0
        %2021 = vmatpush2.msra.mxu0 0.0
        %2022 = vmatprep.subr.mxu0 0.0
        %2023 = vmatpush2.msra.mxu0 0.0
        %2024 = vmatprep.subr.mxu0 0.0
        %2025 = vmatpush2.msra.mxu0 0.0
        %2026 = vmatprep.subr.mxu0 0.0
        %2027 = vmatpush2.msra.mxu0 0.0
        %2028 = vmatprep.subr.mxu0 0.0
        %2029 = vmatpush2.msra.mxu0 0.0
        %2030 = vmatprep.subr.mxu0 0.0
        %2031 = vmatpush2.msra.mxu0 0.0
        %2032 = vmatprep.subr.mxu0 0.0
        %2033 = vmatpush2.msra.mxu0 0.0
        %2034 = vmatprep.subr.mxu0 0.0
        %2035 = vmatpush2.msra.mxu0 0.0
        %2036 = vmatprep.subr.mxu0 0.0
        %2037 = vmatpush2.msra.mxu0 0.0
        %2038 = vmatprep.subr.mxu0 0.0
        %2039 = vmatpush2.msra.mxu0 0.0
        %2040 = vmatprep.subr.mxu0 0.0
        %2041 = vmatpush2.msra.mxu0 0.0
        %2042 = vmatprep.subr.mxu0 0.0
        %2043 = vmatpush2.msra.mxu0 0.0
        %2044 = vmatprep.subr.mxu0 0.0
        %2045 = vmatpush2.msra.mxu0 0.0
        %2046 = vmatprep.subr.mxu0 0.0
        %2047 = vmatpush2.msra.mxu0 0.0
        %2048 = vmatprep.mubr.f32.mxu0 0.0
        %2049 = vmatmul.mubr.f32.gmra.mxu0 %v1748
        %v2050 = vpop.f32.mrf.mxu0
        %v2051 = vadd.f32 %v1712, %v2050
        %v2052 = vpop.f32.mrf.mxu0
        %v2053 = vadd.f32 %v1713, %v2052
        %2054 = vmatprep.mubr.f32.mxu0 0.0
        %2055 = vmatmul.mubr.f32.gmra.mxu0 %v1751
        %v2056 = vpop.f32.mrf.mxu0
        %v2057 = vadd.f32 %v1712, %v2056
        %v2058 = vpop.f32.mrf.mxu0
        %v2059 = vadd.f32 %v1713, %v2058
        %2060 = vdwg.mxu0
        %2061 = vmatprep.subr.mxu0 0.0
        %2062 = vmatpush1.msra.mxu0 0.0
        %2063 = vmatprep.subr.mxu0 0.0
        %2064 = vmatpush1.msra.mxu0 0.0
        %2065 = vmatprep.subr.mxu0 0.0
        %2066 = vmatpush1.msra.mxu0 0.0
        %2067 = vmatprep.subr.mxu0 0.0
        %2068 = vmatpush1.msra.mxu0 0.0
        %2069 = vmatprep.subr.mxu0 0.0
        %2070 = vmatpush1.msra.mxu0 0.0
        %2071 = vmatprep.subr.mxu0 0.0
        %2072 = vmatpush1.msra.mxu0 0.0
        %2073 = vmatprep.subr.mxu0 0.0
        %2074 = vmatpush1.msra.mxu0 0.0
        %2075 = vmatprep.subr.mxu0 0.0
        %2076 = vmatpush1.msra.mxu0 0.0
        %2077 = vmatprep.subr.mxu0 0.0
        %2078 = vmatpush1.msra.mxu0 0.0
        %2079 = vmatprep.subr.mxu0 0.0
        %2080 = vmatpush1.msra.mxu0 0.0
        %2081 = vmatprep.subr.mxu0 0.0
        %2082 = vmatpush1.msra.mxu0 0.0
        %2083 = vmatprep.subr.mxu0 0.0
        %2084 = vmatpush1.msra.mxu0 0.0
        %2085 = vmatprep.subr.mxu0 0.0
        %2086 = vmatpush1.msra.mxu0 0.0
        %2087 = vmatprep.subr.mxu0 0.0
        %2088 = vmatpush1.msra.mxu0 0.0
        %2089 = vmatprep.subr.mxu0 %v1651
        %2090 = vmatpush1.msra.mxu0 %v1650
        %2091 = vmatprep.subr.mxu0 %v1515
        %2092 = vmatpush1.msra.mxu0 %v1514
        %2093 = vmatprep.subr.mxu0 0.0
        %2094 = vmatpush2.msra.mxu0 0.0
        %2095 = vmatprep.subr.mxu0 0.0
        %2096 = vmatpush2.msra.mxu0 0.0
        %2097 = vmatprep.subr.mxu0 0.0
        %2098 = vmatpush2.msra.mxu0 0.0
        %2099 = vmatprep.subr.mxu0 0.0
        %2100 = vmatpush2.msra.mxu0 0.0
        %2101 = vmatprep.subr.mxu0 0.0
        %2102 = vmatpush2.msra.mxu0 0.0
        %2103 = vmatprep.subr.mxu0 0.0
        %2104 = vmatpush2.msra.mxu0 0.0
        %2105 = vmatprep.subr.mxu0 0.0
        %2106 = vmatpush2.msra.mxu0 0.0
        %2107 = vmatprep.subr.mxu0 0.0
        %2108 = vmatpush2.msra.mxu0 0.0
        %2109 = vmatprep.subr.mxu0 0.0
        %2110 = vmatpush2.msra.mxu0 0.0
        %2111 = vmatprep.subr.mxu0 0.0
        %2112 = vmatpush2.msra.mxu0 0.0
        %2113 = vmatprep.subr.mxu0 0.0
        %2114 = vmatpush2.msra.mxu0 0.0
        %2115 = vmatprep.subr.mxu0 0.0
        %2116 = vmatpush2.msra.mxu0 0.0
        %2117 = vmatprep.subr.mxu0 0.0
        %2118 = vmatpush2.msra.mxu0 0.0
        %2119 = vmatprep.subr.mxu0 0.0
        %2120 = vmatpush2.msra.mxu0 0.0
        %2121 = vmatprep.subr.mxu0 0.0
        %2122 = vmatpush2.msra.mxu0 0.0
        %2123 = vmatprep.subr.mxu0 0.0
        %2124 = vmatpush2.msra.mxu0 0.0
        %2125 = vmatprep.mubr.f32.mxu0 0.0
        %2126 = vmatmul.mubr.f32.gmra.mxu0 %v1748
        %v2127 = vpop.f32.mrf.mxu0
        %v2128 = vadd.f32 %v1706, %v2127
        %v2129 = vpop.f32.mrf.mxu0
        %v2130 = vadd.f32 %v1707, %v2129
        %2131 = vmatprep.mubr.f32.mxu0 0.0
        %2132 = vmatmul.mubr.f32.gmra.mxu0 %v1751
        %v2133 = vpop.f32.mrf.mxu0
        %v2134 = vadd.f32 %v1706, %v2133
        %v2135 = vpop.f32.mrf.mxu0
        %v2136 = vadd.f32 %v1707, %v2135
        %2137 = vdwg.mxu0
        %2138 = vmatprep.subr.mxu0 0.0
        %2139 = vmatpush1.msra.mxu0 0.0
        %2140 = vmatprep.subr.mxu0 0.0
        %2141 = vmatpush1.msra.mxu0 0.0
        %2142 = vmatprep.subr.mxu0 0.0
        %2143 = vmatpush1.msra.mxu0 0.0
        %2144 = vmatprep.subr.mxu0 0.0
        %2145 = vmatpush1.msra.mxu0 0.0
        %2146 = vmatprep.subr.mxu0 0.0
        %2147 = vmatpush1.msra.mxu0 0.0
        %2148 = vmatprep.subr.mxu0 0.0
        %2149 = vmatpush1.msra.mxu0 0.0
        %2150 = vmatprep.subr.mxu0 0.0
        %2151 = vmatpush1.msra.mxu0 0.0
        %2152 = vmatprep.subr.mxu0 0.0
        %2153 = vmatpush1.msra.mxu0 0.0
        %2154 = vmatprep.subr.mxu0 0.0
        %2155 = vmatpush1.msra.mxu0 0.0
        %2156 = vmatprep.subr.mxu0 0.0
        %2157 = vmatpush1.msra.mxu0 0.0
        %2158 = vmatprep.subr.mxu0 0.0
        %2159 = vmatpush1.msra.mxu0 0.0
        %2160 = vmatprep.subr.mxu0 0.0
        %2161 = vmatpush1.msra.mxu0 0.0
        %2162 = vmatprep.subr.mxu0 0.0
        %2163 = vmatpush1.msra.mxu0 0.0
        %2164 = vmatprep.subr.mxu0 0.0
        %2165 = vmatpush1.msra.mxu0 0.0
        %2166 = vmatprep.subr.mxu0 %v1653
        %2167 = vmatpush1.msra.mxu0 %v1652
        %2168 = vmatprep.subr.mxu0 %v1517
        %2169 = vmatpush1.msra.mxu0 %v1516
        %2170 = vmatprep.subr.mxu0 0.0
        %2171 = vmatpush2.msra.mxu0 0.0
        %2172 = vmatprep.subr.mxu0 0.0
        %2173 = vmatpush2.msra.mxu0 0.0
        %2174 = vmatprep.subr.mxu0 0.0
        %2175 = vmatpush2.msra.mxu0 0.0
        %2176 = vmatprep.subr.mxu0 0.0
        %2177 = vmatpush2.msra.mxu0 0.0
        %2178 = vmatprep.subr.mxu0 0.0
        %2179 = vmatpush2.msra.mxu0 0.0
        %2180 = vmatprep.subr.mxu0 0.0
        %2181 = vmatpush2.msra.mxu0 0.0
        %2182 = vmatprep.subr.mxu0 0.0
        %2183 = vmatpush2.msra.mxu0 0.0
        %2184 = vmatprep.subr.mxu0 0.0
        %2185 = vmatpush2.msra.mxu0 0.0
        %2186 = vmatprep.subr.mxu0 0.0
        %2187 = vmatpush2.msra.mxu0 0.0
        %2188 = vmatprep.subr.mxu0 0.0
        %2189 = vmatpush2.msra.mxu0 0.0
        %2190 = vmatprep.subr.mxu0 0.0
        %2191 = vmatpush2.msra.mxu0 0.0
        %2192 = vmatprep.subr.mxu0 0.0
        %2193 = vmatpush2.msra.mxu0 0.0
        %2194 = vmatprep.subr.mxu0 0.0
        %2195 = vmatpush2.msra.mxu0 0.0
        %2196 = vmatprep.subr.mxu0 0.0
        %2197 = vmatpush2.msra.mxu0 0.0
        %2198 = vmatprep.subr.mxu0 0.0
        %2199 = vmatpush2.msra.mxu0 0.0
        %2200 = vmatprep.subr.mxu0 0.0
        %2201 = vmatpush2.msra.mxu0 0.0
        %2202 = vmatprep.mubr.f32.mxu0 0.0
        %2203 = vmatmul.mubr.f32.gmra.mxu0 %v1748
        %v2204 = vpop.f32.mrf.mxu0
        %v2205 = vadd.f32 %v1708, %v2204
        %v2206 = vpop.f32.mrf.mxu0
        %v2207 = vadd.f32 %v1709, %v2206
        %2208 = vmatprep.mubr.f32.mxu0 0.0
        %2209 = vmatmul.mubr.f32.gmra.mxu0 %v1751
        %v2210 = vpop.f32.mrf.mxu0
        %v2211 = vadd.f32 %v1708, %v2210
        %v2212 = vpop.f32.mrf.mxu0
        %v2213 = vadd.f32 %v1709, %v2212
        %2214 = vdwg.mxu0
        %2215 = vmatprep.subr.mxu0 0.0
        %2216 = vmatpush1.msra.mxu0 0.0
        %2217 = vmatprep.subr.mxu0 0.0
        %2218 = vmatpush1.msra.mxu0 0.0
        %2219 = vmatprep.subr.mxu0 0.0
        %2220 = vmatpush1.msra.mxu0 0.0
        %2221 = vmatprep.subr.mxu0 0.0
        %2222 = vmatpush1.msra.mxu0 0.0
        %2223 = vmatprep.subr.mxu0 0.0
        %2224 = vmatpush1.msra.mxu0 0.0
        %2225 = vmatprep.subr.mxu0 0.0
        %2226 = vmatpush1.msra.mxu0 0.0
        %2227 = vmatprep.subr.mxu0 0.0
        %2228 = vmatpush1.msra.mxu0 0.0
        %2229 = vmatprep.subr.mxu0 0.0
        %2230 = vmatpush1.msra.mxu0 0.0
        %2231 = vmatprep.subr.mxu0 0.0
        %2232 = vmatpush1.msra.mxu0 0.0
        %2233 = vmatprep.subr.mxu0 0.0
        %2234 = vmatpush1.msra.mxu0 0.0
        %2235 = vmatprep.subr.mxu0 0.0
        %2236 = vmatpush1.msra.mxu0 0.0
        %2237 = vmatprep.subr.mxu0 0.0
        %2238 = vmatpush1.msra.mxu0 0.0
        %2239 = vmatprep.subr.mxu0 0.0
        %2240 = vmatpush1.msra.mxu0 0.0
        %2241 = vmatprep.subr.mxu0 0.0
        %2242 = vmatpush1.msra.mxu0 0.0
        %2243 = vmatprep.subr.mxu0 %v1655
        %2244 = vmatpush1.msra.mxu0 %v1654
        %2245 = vmatprep.subr.mxu0 %v1519
        %2246 = vmatpush1.msra.mxu0 %v1518
        %2247 = vmatprep.subr.mxu0 0.0
        %2248 = vmatpush2.msra.mxu0 0.0
        %2249 = vmatprep.subr.mxu0 0.0
        %2250 = vmatpush2.msra.mxu0 0.0
        %2251 = vmatprep.subr.mxu0 0.0
        %2252 = vmatpush2.msra.mxu0 0.0
        %2253 = vmatprep.subr.mxu0 0.0
        %2254 = vmatpush2.msra.mxu0 0.0
        %2255 = vmatprep.subr.mxu0 0.0
        %2256 = vmatpush2.msra.mxu0 0.0
        %2257 = vmatprep.subr.mxu0 0.0
        %2258 = vmatpush2.msra.mxu0 0.0
        %2259 = vmatprep.subr.mxu0 0.0
        %2260 = vmatpush2.msra.mxu0 0.0
        %2261 = vmatprep.subr.mxu0 0.0
        %2262 = vmatpush2.msra.mxu0 0.0
        %2263 = vmatprep.subr.mxu0 0.0
        %2264 = vmatpush2.msra.mxu0 0.0
        %2265 = vmatprep.subr.mxu0 0.0
        %2266 = vmatpush2.msra.mxu0 0.0
        %2267 = vmatprep.subr.mxu0 0.0
        %2268 = vmatpush2.msra.mxu0 0.0
        %2269 = vmatprep.subr.mxu0 0.0
        %2270 = vmatpush2.msra.mxu0 0.0
        %2271 = vmatprep.subr.mxu0 0.0
        %2272 = vmatpush2.msra.mxu0 0.0
        %2273 = vmatprep.subr.mxu0 0.0
        %2274 = vmatpush2.msra.mxu0 0.0
        %2275 = vmatprep.subr.mxu0 0.0
        %2276 = vmatpush2.msra.mxu0 0.0
        %2277 = vmatprep.subr.mxu0 0.0
        %2278 = vmatpush2.msra.mxu0 0.0
        %2279 = vmatprep.mubr.f32.mxu0 0.0
        %2280 = vmatmul.mubr.f32.gmra.mxu0 %v1748
        %v2281 = vpop.f32.mrf.mxu0
        %v2282 = vadd.f32 %v1710, %v2281
        %v2283 = vpop.f32.mrf.mxu0
        %v2284 = vadd.f32 %v1711, %v2283
        %2285 = vmatprep.mubr.f32.mxu0 0.0
        %2286 = vmatmul.mubr.f32.gmra.mxu0 %v1751
        %v2287 = vpop.f32.mrf.mxu0
        %v2288 = vadd.f32 %v1710, %v2287
        %v2289 = vpop.f32.mrf.mxu0
        %v2290 = vadd.f32 %v1711, %v2289
        %2291 = vdwg.mxu0
        %2292 = vmatprep.subr.mxu0 0.0
        %2293 = vmatpush1.msra.mxu0 0.0
        %2294 = vmatprep.subr.mxu0 0.0
        %2295 = vmatpush1.msra.mxu0 0.0
        %2296 = vmatprep.subr.mxu0 0.0
        %2297 = vmatpush1.msra.mxu0 0.0
        %2298 = vmatprep.subr.mxu0 0.0
        %2299 = vmatpush1.msra.mxu0 0.0
        %2300 = vmatprep.subr.mxu0 0.0
        %2301 = vmatpush1.msra.mxu0 0.0
        %2302 = vmatprep.subr.mxu0 0.0
        %2303 = vmatpush1.msra.mxu0 0.0
        %2304 = vmatprep.subr.mxu0 0.0
        %2305 = vmatpush1.msra.mxu0 0.0
        %2306 = vmatprep.subr.mxu0 0.0
        %2307 = vmatpush1.msra.mxu0 0.0
        %2308 = vmatprep.subr.mxu0 0.0
        %2309 = vmatpush1.msra.mxu0 0.0
        %2310 = vmatprep.subr.mxu0 0.0
        %2311 = vmatpush1.msra.mxu0 0.0
        %2312 = vmatprep.subr.mxu0 0.0
        %2313 = vmatpush1.msra.mxu0 0.0
        %2314 = vmatprep.subr.mxu0 0.0
        %2315 = vmatpush1.msra.mxu0 0.0
        %2316 = vmatprep.subr.mxu0 0.0
        %2317 = vmatpush1.msra.mxu0 0.0
        %2318 = vmatprep.subr.mxu0 0.0
        %2319 = vmatpush1.msra.mxu0 0.0
        %2320 = vmatprep.subr.mxu0 %v1657
        %2321 = vmatpush1.msra.mxu0 %v1656
        %2322 = vmatprep.subr.mxu0 %v1521
        %2323 = vmatpush1.msra.mxu0 %v1520
        %2324 = vmatprep.subr.mxu0 0.0
        %2325 = vmatpush2.msra.mxu0 0.0
        %2326 = vmatprep.subr.mxu0 0.0
        %2327 = vmatpush2.msra.mxu0 0.0
        %2328 = vmatprep.subr.mxu0 0.0
        %2329 = vmatpush2.msra.mxu0 0.0
        %2330 = vmatprep.subr.mxu0 0.0
        %2331 = vmatpush2.msra.mxu0 0.0
        %2332 = vmatprep.subr.mxu0 0.0
        %2333 = vmatpush2.msra.mxu0 0.0
        %2334 = vmatprep.subr.mxu0 0.0
        %2335 = vmatpush2.msra.mxu0 0.0
        %2336 = vmatprep.subr.mxu0 0.0
        %2337 = vmatpush2.msra.mxu0 0.0
        %2338 = vmatprep.subr.mxu0 0.0
        %2339 = vmatpush2.msra.mxu0 0.0
        %2340 = vmatprep.subr.mxu0 0.0
        %2341 = vmatpush2.msra.mxu0 0.0
        %2342 = vmatprep.subr.mxu0 0.0
        %2343 = vmatpush2.msra.mxu0 0.0
        %2344 = vmatprep.subr.mxu0 0.0
        %2345 = vmatpush2.msra.mxu0 0.0
        %2346 = vmatprep.subr.mxu0 0.0
        %2347 = vmatpush2.msra.mxu0 0.0
        %2348 = vmatprep.subr.mxu0 0.0
        %2349 = vmatpush2.msra.mxu0 0.0
        %2350 = vmatprep.subr.mxu0 0.0
        %2351 = vmatpush2.msra.mxu0 0.0
        %2352 = vmatprep.subr.mxu0 0.0
        %2353 = vmatpush2.msra.mxu0 0.0
        %2354 = vmatprep.subr.mxu0 0.0
        %2355 = vmatpush2.msra.mxu0 0.0
        %2356 = vmatprep.mubr.f32.mxu0 0.0
        %2357 = vmatmul.mubr.f32.gmra.mxu0 %v1748
        %v2358 = vpop.f32.mrf.mxu0
        %v2359 = vadd.f32 %v1712, %v2358
        %v2360 = vpop.f32.mrf.mxu0
        %v2361 = vadd.f32 %v1713, %v2360
        %2362 = vmatprep.mubr.f32.mxu0 0.0
        %2363 = vmatmul.mubr.f32.gmra.mxu0 %v1751
        %v2364 = vpop.f32.mrf.mxu0
        %v2365 = vadd.f32 %v1712, %v2364
        %v2366 = vpop.f32.mrf.mxu0
        %v2367 = vadd.f32 %v1713, %v2366
        %2368 = vdwg.mxu0
        %v2369 = vcombine.low %v1820, %v1897
        %v2370 = vcombine.high %v1820, %v1897
        %v2372 = vunpack.c.l.s4 1983009808
        %v2373 = vunpack.c.0.s8 %v2372
        %v2374 = vlaneseq
        %v2375 = vshrl.u32 %v2374, 7
        %v2376 = vsub.s32 %v2373, %v2375
        %v2377 = vrot.slane %v2369, %v2376
        %v2379 = vunpack.c.l.s4 1983009808
        %v2380 = vunpack.c.0.s8 %v2379
        %v2381 = vlaneseq
        %v2382 = vshrl.u32 %v2381, 7
        %v2383 = vsub.s32 %v2380, %v2382
        %v2384 = vrot.slane %v2370, %v2383
        %v2385 = vcombine.low %v1822, %v1899
        %v2386 = vcombine.high %v1822, %v1899
        %v2388 = vunpack.c.l.s4 1983009808
        %v2389 = vunpack.c.0.s8 %v2388
        %v2390 = vlaneseq
        %v2391 = vshrl.u32 %v2390, 7
        %v2392 = vsub.s32 %v2389, %v2391
        %v2393 = vrot.slane %v2385, %v2392
        %v2395 = vunpack.c.l.s4 1983009808
        %v2396 = vunpack.c.0.s8 %v2395
        %v2397 = vlaneseq
        %v2398 = vshrl.u32 %v2397, 7
        %v2399 = vsub.s32 %v2396, %v2398
        %v2400 = vrot.slane %v2386, %v2399
        %v2401 = vcombine.low %v1974, %v2051
        %v2402 = vcombine.high %v1974, %v2051
        %v2404 = vunpack.c.l.s4 1983009808
        %v2405 = vunpack.c.0.s8 %v2404
        %v2406 = vlaneseq
        %v2407 = vshrl.u32 %v2406, 7
        %v2408 = vsub.s32 %v2405, %v2407
        %v2409 = vrot.slane %v2401, %v2408
        %v2411 = vunpack.c.l.s4 1983009808
        %v2412 = vunpack.c.0.s8 %v2411
        %v2413 = vlaneseq
        %v2414 = vshrl.u32 %v2413, 7
        %v2415 = vsub.s32 %v2412, %v2414
        %v2416 = vrot.slane %v2402, %v2415
        %v2417 = vcombine.low %v1976, %v2053
        %v2418 = vcombine.high %v1976, %v2053
        %v2420 = vunpack.c.l.s4 1983009808
        %v2421 = vunpack.c.0.s8 %v2420
        %v2422 = vlaneseq
        %v2423 = vshrl.u32 %v2422, 7
        %v2424 = vsub.s32 %v2421, %v2423
        %v2425 = vrot.slane %v2417, %v2424
        %v2427 = vunpack.c.l.s4 1983009808
        %v2428 = vunpack.c.0.s8 %v2427
        %v2429 = vlaneseq
        %v2430 = vshrl.u32 %v2429, 7
        %v2431 = vsub.s32 %v2428, %v2430
        %v2432 = vrot.slane %v2418, %v2431
        %v2433 = vcombine.low %v2377, %v2393
        %v2434 = vcombine.high %v2377, %v2393
        %v2436 = vunpack.c.l.s4 1934713408
        %v2437 = vunpack.c.0.s8 %v2436
        %v2438 = vlaneseq
        %v2439 = vshrl.u32 %v2438, 7
        %v2440 = vsub.s32 %v2437, %v2439
        %v2441 = vrot.slane %v2433, %v2440
        %v2443 = vunpack.c.l.s4 1934713408
        %v2444 = vunpack.c.0.s8 %v2443
        %v2445 = vlaneseq
        %v2446 = vshrl.u32 %v2445, 7
        %v2447 = vsub.s32 %v2444, %v2446
        %v2448 = vrot.slane %v2434, %v2447
        %v2449 = vcombine.low %v2384, %v2400
        %v2450 = vcombine.high %v2384, %v2400
        %v2452 = vunpack.c.l.s4 1934713408
        %v2453 = vunpack.c.0.s8 %v2452
        %v2454 = vlaneseq
        %v2455 = vshrl.u32 %v2454, 7
        %v2456 = vsub.s32 %v2453, %v2455
        %v2457 = vrot.slane %v2449, %v2456
        %v2459 = vunpack.c.l.s4 1934713408
        %v2460 = vunpack.c.0.s8 %v2459
        %v2461 = vlaneseq
        %v2462 = vshrl.u32 %v2461, 7
        %v2463 = vsub.s32 %v2460, %v2462
        %v2464 = vrot.slane %v2450, %v2463
        %v2465 = vcombine.low %v2409, %v2425
        %v2466 = vcombine.high %v2409, %v2425
        %v2468 = vunpack.c.l.s4 1934713408
        %v2469 = vunpack.c.0.s8 %v2468
        %v2470 = vlaneseq
        %v2471 = vshrl.u32 %v2470, 7
        %v2472 = vsub.s32 %v2469, %v2471
        %v2473 = vrot.slane %v2465, %v2472
        %v2475 = vunpack.c.l.s4 1934713408
        %v2476 = vunpack.c.0.s8 %v2475
        %v2477 = vlaneseq
        %v2478 = vshrl.u32 %v2477, 7
        %v2479 = vsub.s32 %v2476, %v2478
        %v2480 = vrot.slane %v2466, %v2479
        %v2481 = vcombine.low %v2416, %v2432
        %v2482 = vcombine.high %v2416, %v2432
        %v2484 = vunpack.c.l.s4 1934713408
        %v2485 = vunpack.c.0.s8 %v2484
        %v2486 = vlaneseq
        %v2487 = vshrl.u32 %v2486, 7
        %v2488 = vsub.s32 %v2485, %v2487
        %v2489 = vrot.slane %v2481, %v2488
        %v2491 = vunpack.c.l.s4 1934713408
        %v2492 = vunpack.c.0.s8 %v2491
        %v2493 = vlaneseq
        %v2494 = vshrl.u32 %v2493, 7
        %v2495 = vsub.s32 %v2492, %v2494
        %v2496 = vrot.slane %v2482, %v2495
        %v2497 = vcombine.low %v2441, %v2473
        %v2498 = vcombine.high %v2441, %v2473
        %v2499 = vcombine.low %v2448, %v2480
        %v2500 = vcombine.high %v2448, %v2480
        %v2501 = vcombine.low %v2457, %v2489
        %v2502 = vcombine.high %v2457, %v2489
        %v2503 = vcombine.low %v2464, %v2496
        %v2504 = vcombine.high %v2464, %v2496
        %v2505 = vcombine.low %v2128, %v2205
        %v2506 = vcombine.high %v2128, %v2205
        %v2508 = vunpack.c.l.s4 1983009808
        %v2509 = vunpack.c.0.s8 %v2508
        %v2510 = vlaneseq
        %v2511 = vshrl.u32 %v2510, 7
        %v2512 = vsub.s32 %v2509, %v2511
        %v2513 = vrot.slane %v2505, %v2512
        %v2515 = vunpack.c.l.s4 1983009808
        %v2516 = vunpack.c.0.s8 %v2515
        %v2517 = vlaneseq
        %v2518 = vshrl.u32 %v2517, 7
        %v2519 = vsub.s32 %v2516, %v2518
        %v2520 = vrot.slane %v2506, %v2519
        %v2521 = vcombine.low %v2130, %v2207
        %v2522 = vcombine.high %v2130, %v2207
        %v2524 = vunpack.c.l.s4 1983009808
        %v2525 = vunpack.c.0.s8 %v2524
        %v2526 = vlaneseq
        %v2527 = vshrl.u32 %v2526, 7
        %v2528 = vsub.s32 %v2525, %v2527
        %v2529 = vrot.slane %v2521, %v2528
        %v2531 = vunpack.c.l.s4 1983009808
        %v2532 = vunpack.c.0.s8 %v2531
        %v2533 = vlaneseq
        %v2534 = vshrl.u32 %v2533, 7
        %v2535 = vsub.s32 %v2532, %v2534
        %v2536 = vrot.slane %v2522, %v2535
        %v2537 = vcombine.low %v2282, %v2359
        %v2538 = vcombine.high %v2282, %v2359
        %v2540 = vunpack.c.l.s4 1983009808
        %v2541 = vunpack.c.0.s8 %v2540
        %v2542 = vlaneseq
        %v2543 = vshrl.u32 %v2542, 7
        %v2544 = vsub.s32 %v2541, %v2543
        %v2545 = vrot.slane %v2537, %v2544
        %v2547 = vunpack.c.l.s4 1983009808
        %v2548 = vunpack.c.0.s8 %v2547
        %v2549 = vlaneseq
        %v2550 = vshrl.u32 %v2549, 7
        %v2551 = vsub.s32 %v2548, %v2550
        %v2552 = vrot.slane %v2538, %v2551
        %v2553 = vcombine.low %v2284, %v2361
        %v2554 = vcombine.high %v2284, %v2361
        %v2556 = vunpack.c.l.s4 1983009808
        %v2557 = vunpack.c.0.s8 %v2556
        %v2558 = vlaneseq
        %v2559 = vshrl.u32 %v2558, 7
        %v2560 = vsub.s32 %v2557, %v2559
        %v2561 = vrot.slane %v2553, %v2560
        %v2563 = vunpack.c.l.s4 1983009808
        %v2564 = vunpack.c.0.s8 %v2563
        %v2565 = vlaneseq
        %v2566 = vshrl.u32 %v2565, 7
        %v2567 = vsub.s32 %v2564, %v2566
        %v2568 = vrot.slane %v2554, %v2567
        %v2569 = vcombine.low %v2513, %v2529
        %v2570 = vcombine.high %v2513, %v2529
        %v2572 = vunpack.c.l.s4 1934713408
        %v2573 = vunpack.c.0.s8 %v2572
        %v2574 = vlaneseq
        %v2575 = vshrl.u32 %v2574, 7
        %v2576 = vsub.s32 %v2573, %v2575
        %v2577 = vrot.slane %v2569, %v2576
        %v2579 = vunpack.c.l.s4 1934713408
        %v2580 = vunpack.c.0.s8 %v2579
        %v2581 = vlaneseq
        %v2582 = vshrl.u32 %v2581, 7
        %v2583 = vsub.s32 %v2580, %v2582
        %v2584 = vrot.slane %v2570, %v2583
        %v2585 = vcombine.low %v2520, %v2536
        %v2586 = vcombine.high %v2520, %v2536
        %v2588 = vunpack.c.l.s4 1934713408
        %v2589 = vunpack.c.0.s8 %v2588
        %v2590 = vlaneseq
        %v2591 = vshrl.u32 %v2590, 7
        %v2592 = vsub.s32 %v2589, %v2591
        %v2593 = vrot.slane %v2585, %v2592
        %v2595 = vunpack.c.l.s4 1934713408
        %v2596 = vunpack.c.0.s8 %v2595
        %v2597 = vlaneseq
        %v2598 = vshrl.u32 %v2597, 7
        %v2599 = vsub.s32 %v2596, %v2598
        %v2600 = vrot.slane %v2586, %v2599
        %v2601 = vcombine.low %v2545, %v2561
        %v2602 = vcombine.high %v2545, %v2561
        %v2604 = vunpack.c.l.s4 1934713408
        %v2605 = vunpack.c.0.s8 %v2604
        %v2606 = vlaneseq
        %v2607 = vshrl.u32 %v2606, 7
        %v2608 = vsub.s32 %v2605, %v2607
        %v2609 = vrot.slane %v2601, %v2608
        %v2611 = vunpack.c.l.s4 1934713408
        %v2612 = vunpack.c.0.s8 %v2611
        %v2613 = vlaneseq
        %v2614 = vshrl.u32 %v2613, 7
        %v2615 = vsub.s32 %v2612, %v2614
        %v2616 = vrot.slane %v2602, %v2615
        %v2617 = vcombine.low %v2552, %v2568
        %v2618 = vcombine.high %v2552, %v2568
        %v2620 = vunpack.c.l.s4 1934713408
        %v2621 = vunpack.c.0.s8 %v2620
        %v2622 = vlaneseq
        %v2623 = vshrl.u32 %v2622, 7
        %v2624 = vsub.s32 %v2621, %v2623
        %v2625 = vrot.slane %v2617, %v2624
        %v2627 = vunpack.c.l.s4 1934713408
        %v2628 = vunpack.c.0.s8 %v2627
        %v2629 = vlaneseq
        %v2630 = vshrl.u32 %v2629, 7
        %v2631 = vsub.s32 %v2628, %v2630
        %v2632 = vrot.slane %v2618, %v2631
        %v2633 = vcombine.low %v2577, %v2609
        %v2634 = vcombine.high %v2577, %v2609
        %v2635 = vcombine.low %v2584, %v2616
        %v2636 = vcombine.high %v2584, %v2616
        %v2637 = vcombine.low %v2593, %v2625
        %v2638 = vcombine.high %v2593, %v2625
        %v2639 = vcombine.low %v2600, %v2632
        %v2640 = vcombine.high %v2600, %v2632
        %v2641 = vcombine.low %v1826, %v1903
        %v2642 = vcombine.high %v1826, %v1903
        %v2644 = vunpack.c.l.s4 1983009808
        %v2645 = vunpack.c.0.s8 %v2644
        %v2646 = vlaneseq
        %v2647 = vshrl.u32 %v2646, 7
        %v2648 = vsub.s32 %v2645, %v2647
        %v2649 = vrot.slane %v2641, %v2648
        %v2651 = vunpack.c.l.s4 1983009808
        %v2652 = vunpack.c.0.s8 %v2651
        %v2653 = vlaneseq
        %v2654 = vshrl.u32 %v2653, 7
        %v2655 = vsub.s32 %v2652, %v2654
        %v2656 = vrot.slane %v2642, %v2655
        %v2657 = vcombine.low %v1828, %v1905
        %v2658 = vcombine.high %v1828, %v1905
        %v2660 = vunpack.c.l.s4 1983009808
        %v2661 = vunpack.c.0.s8 %v2660
        %v2662 = vlaneseq
        %v2663 = vshrl.u32 %v2662, 7
        %v2664 = vsub.s32 %v2661, %v2663
        %v2665 = vrot.slane %v2657, %v2664
        %v2667 = vunpack.c.l.s4 1983009808
        %v2668 = vunpack.c.0.s8 %v2667
        %v2669 = vlaneseq
        %v2670 = vshrl.u32 %v2669, 7
        %v2671 = vsub.s32 %v2668, %v2670
        %v2672 = vrot.slane %v2658, %v2671
        %v2673 = vcombine.low %v1980, %v2057
        %v2674 = vcombine.high %v1980, %v2057
        %v2676 = vunpack.c.l.s4 1983009808
        %v2677 = vunpack.c.0.s8 %v2676
        %v2678 = vlaneseq
        %v2679 = vshrl.u32 %v2678, 7
        %v2680 = vsub.s32 %v2677, %v2679
        %v2681 = vrot.slane %v2673, %v2680
        %v2683 = vunpack.c.l.s4 1983009808
        %v2684 = vunpack.c.0.s8 %v2683
        %v2685 = vlaneseq
        %v2686 = vshrl.u32 %v2685, 7
        %v2687 = vsub.s32 %v2684, %v2686
        %v2688 = vrot.slane %v2674, %v2687
        %v2689 = vcombine.low %v1982, %v2059
        %v2690 = vcombine.high %v1982, %v2059
        %v2692 = vunpack.c.l.s4 1983009808
        %v2693 = vunpack.c.0.s8 %v2692
        %v2694 = vlaneseq
        %v2695 = vshrl.u32 %v2694, 7
        %v2696 = vsub.s32 %v2693, %v2695
        %v2697 = vrot.slane %v2689, %v2696
        %v2699 = vunpack.c.l.s4 1983009808
        %v2700 = vunpack.c.0.s8 %v2699
        %v2701 = vlaneseq
        %v2702 = vshrl.u32 %v2701, 7
        %v2703 = vsub.s32 %v2700, %v2702
        %v2704 = vrot.slane %v2690, %v2703
        %v2705 = vcombine.low %v2649, %v2665
        %v2706 = vcombine.high %v2649, %v2665
        %v2708 = vunpack.c.l.s4 1934713408
        %v2709 = vunpack.c.0.s8 %v2708
        %v2710 = vlaneseq
        %v2711 = vshrl.u32 %v2710, 7
        %v2712 = vsub.s32 %v2709, %v2711
        %v2713 = vrot.slane %v2705, %v2712
        %v2715 = vunpack.c.l.s4 1934713408
        %v2716 = vunpack.c.0.s8 %v2715
        %v2717 = vlaneseq
        %v2718 = vshrl.u32 %v2717, 7
        %v2719 = vsub.s32 %v2716, %v2718
        %v2720 = vrot.slane %v2706, %v2719
        %v2721 = vcombine.low %v2656, %v2672
        %v2722 = vcombine.high %v2656, %v2672
        %v2724 = vunpack.c.l.s4 1934713408
        %v2725 = vunpack.c.0.s8 %v2724
        %v2726 = vlaneseq
        %v2727 = vshrl.u32 %v2726, 7
        %v2728 = vsub.s32 %v2725, %v2727
        %v2729 = vrot.slane %v2721, %v2728
        %v2731 = vunpack.c.l.s4 1934713408
        %v2732 = vunpack.c.0.s8 %v2731
        %v2733 = vlaneseq
        %v2734 = vshrl.u32 %v2733, 7
        %v2735 = vsub.s32 %v2732, %v2734
        %v2736 = vrot.slane %v2722, %v2735
        %v2737 = vcombine.low %v2681, %v2697
        %v2738 = vcombine.high %v2681, %v2697
        %v2740 = vunpack.c.l.s4 1934713408
        %v2741 = vunpack.c.0.s8 %v2740
        %v2742 = vlaneseq
        %v2743 = vshrl.u32 %v2742, 7
        %v2744 = vsub.s32 %v2741, %v2743
        %v2745 = vrot.slane %v2737, %v2744
        %v2747 = vunpack.c.l.s4 1934713408
        %v2748 = vunpack.c.0.s8 %v2747
        %v2749 = vlaneseq
        %v2750 = vshrl.u32 %v2749, 7
        %v2751 = vsub.s32 %v2748, %v2750
        %v2752 = vrot.slane %v2738, %v2751
        %v2753 = vcombine.low %v2688, %v2704
        %v2754 = vcombine.high %v2688, %v2704
        %v2756 = vunpack.c.l.s4 1934713408
        %v2757 = vunpack.c.0.s8 %v2756
        %v2758 = vlaneseq
        %v2759 = vshrl.u32 %v2758, 7
        %v2760 = vsub.s32 %v2757, %v2759
        %v2761 = vrot.slane %v2753, %v2760
        %v2763 = vunpack.c.l.s4 1934713408
        %v2764 = vunpack.c.0.s8 %v2763
        %v2765 = vlaneseq
        %v2766 = vshrl.u32 %v2765, 7
        %v2767 = vsub.s32 %v2764, %v2766
        %v2768 = vrot.slane %v2754, %v2767
        %v2769 = vcombine.low %v2713, %v2745
        %v2770 = vcombine.high %v2713, %v2745
        %v2771 = vcombine.low %v2720, %v2752
        %v2772 = vcombine.high %v2720, %v2752
        %v2773 = vcombine.low %v2729, %v2761
        %v2774 = vcombine.high %v2729, %v2761
        %v2775 = vcombine.low %v2736, %v2768
        %v2776 = vcombine.high %v2736, %v2768
        %v2777 = vcombine.low %v2134, %v2211
        %v2778 = vcombine.high %v2134, %v2211
        %v2780 = vunpack.c.l.s4 1983009808
        %v2781 = vunpack.c.0.s8 %v2780
        %v2782 = vlaneseq
        %v2783 = vshrl.u32 %v2782, 7
        %v2784 = vsub.s32 %v2781, %v2783
        %v2785 = vrot.slane %v2777, %v2784
        %v2787 = vunpack.c.l.s4 1983009808
        %v2788 = vunpack.c.0.s8 %v2787
        %v2789 = vlaneseq
        %v2790 = vshrl.u32 %v2789, 7
        %v2791 = vsub.s32 %v2788, %v2790
        %v2792 = vrot.slane %v2778, %v2791
        %v2793 = vcombine.low %v2136, %v2213
        %v2794 = vcombine.high %v2136, %v2213
        %v2796 = vunpack.c.l.s4 1983009808
        %v2797 = vunpack.c.0.s8 %v2796
        %v2798 = vlaneseq
        %v2799 = vshrl.u32 %v2798, 7
        %v2800 = vsub.s32 %v2797, %v2799
        %v2801 = vrot.slane %v2793, %v2800
        %v2803 = vunpack.c.l.s4 1983009808
        %v2804 = vunpack.c.0.s8 %v2803
        %v2805 = vlaneseq
        %v2806 = vshrl.u32 %v2805, 7
        %v2807 = vsub.s32 %v2804, %v2806
        %v2808 = vrot.slane %v2794, %v2807
        %v2809 = vcombine.low %v2288, %v2365
        %v2810 = vcombine.high %v2288, %v2365
        %v2812 = vunpack.c.l.s4 1983009808
        %v2813 = vunpack.c.0.s8 %v2812
        %v2814 = vlaneseq
        %v2815 = vshrl.u32 %v2814, 7
        %v2816 = vsub.s32 %v2813, %v2815
        %v2817 = vrot.slane %v2809, %v2816
        %v2819 = vunpack.c.l.s4 1983009808
        %v2820 = vunpack.c.0.s8 %v2819
        %v2821 = vlaneseq
        %v2822 = vshrl.u32 %v2821, 7
        %v2823 = vsub.s32 %v2820, %v2822
        %v2824 = vrot.slane %v2810, %v2823
        %v2825 = vcombine.low %v2290, %v2367
        %v2826 = vcombine.high %v2290, %v2367
        %v2828 = vunpack.c.l.s4 1983009808
        %v2829 = vunpack.c.0.s8 %v2828
        %v2830 = vlaneseq
        %v2831 = vshrl.u32 %v2830, 7
        %v2832 = vsub.s32 %v2829, %v2831
        %v2833 = vrot.slane %v2825, %v2832
        %v2835 = vunpack.c.l.s4 1983009808
        %v2836 = vunpack.c.0.s8 %v2835
        %v2837 = vlaneseq
        %v2838 = vshrl.u32 %v2837, 7
        %v2839 = vsub.s32 %v2836, %v2838
        %v2840 = vrot.slane %v2826, %v2839
        %v2841 = vcombine.low %v2785, %v2801
        %v2842 = vcombine.high %v2785, %v2801
        %v2844 = vunpack.c.l.s4 1934713408
        %v2845 = vunpack.c.0.s8 %v2844
        %v2846 = vlaneseq
        %v2847 = vshrl.u32 %v2846, 7
        %v2848 = vsub.s32 %v2845, %v2847
        %v2849 = vrot.slane %v2841, %v2848
        %v2851 = vunpack.c.l.s4 1934713408
        %v2852 = vunpack.c.0.s8 %v2851
        %v2853 = vlaneseq
        %v2854 = vshrl.u32 %v2853, 7
        %v2855 = vsub.s32 %v2852, %v2854
        %v2856 = vrot.slane %v2842, %v2855
        %v2857 = vcombine.low %v2792, %v2808
        %v2858 = vcombine.high %v2792, %v2808
        %v2860 = vunpack.c.l.s4 1934713408
        %v2861 = vunpack.c.0.s8 %v2860
        %v2862 = vlaneseq
        %v2863 = vshrl.u32 %v2862, 7
        %v2864 = vsub.s32 %v2861, %v2863
        %v2865 = vrot.slane %v2857, %v2864
        %v2867 = vunpack.c.l.s4 1934713408
        %v2868 = vunpack.c.0.s8 %v2867
        %v2869 = vlaneseq
        %v2870 = vshrl.u32 %v2869, 7
        %v2871 = vsub.s32 %v2868, %v2870
        %v2872 = vrot.slane %v2858, %v2871
        %v2873 = vcombine.low %v2817, %v2833
        %v2874 = vcombine.high %v2817, %v2833
        %v2876 = vunpack.c.l.s4 1934713408
        %v2877 = vunpack.c.0.s8 %v2876
        %v2878 = vlaneseq
        %v2879 = vshrl.u32 %v2878, 7
        %v2880 = vsub.s32 %v2877, %v2879
        %v2881 = vrot.slane %v2873, %v2880
        %v2883 = vunpack.c.l.s4 1934713408
        %v2884 = vunpack.c.0.s8 %v2883
        %v2885 = vlaneseq
        %v2886 = vshrl.u32 %v2885, 7
        %v2887 = vsub.s32 %v2884, %v2886
        %v2888 = vrot.slane %v2874, %v2887
        %v2889 = vcombine.low %v2824, %v2840
        %v2890 = vcombine.high %v2824, %v2840
        %v2892 = vunpack.c.l.s4 1934713408
        %v2893 = vunpack.c.0.s8 %v2892
        %v2894 = vlaneseq
        %v2895 = vshrl.u32 %v2894, 7
        %v2896 = vsub.s32 %v2893, %v2895
        %v2897 = vrot.slane %v2889, %v2896
        %v2899 = vunpack.c.l.s4 1934713408
        %v2900 = vunpack.c.0.s8 %v2899
        %v2901 = vlaneseq
        %v2902 = vshrl.u32 %v2901, 7
        %v2903 = vsub.s32 %v2900, %v2902
        %v2904 = vrot.slane %v2890, %v2903
        %v2905 = vcombine.low %v2849, %v2881
        %v2906 = vcombine.high %v2849, %v2881
        %v2907 = vcombine.low %v2856, %v2888
        %v2908 = vcombine.high %v2856, %v2888
        %v2909 = vcombine.low %v2865, %v2897
        %v2910 = vcombine.high %v2865, %v2897
        %v2911 = vcombine.low %v2872, %v2904
        %v2912 = vcombine.high %v2872, %v2904
        %v2913 = vcombine.low %v2497, %v2499
        %v2914 = vcombine.high %v2497, %v2499
        %v2916 = vunpack.c.l.s4 1983009808
        %v2917 = vunpack.c.0.s8 %v2916
        %v2918 = vlaneseq
        %v2919 = vshrl.u32 %v2918, 7
        %v2920 = vsub.s32 %v2917, %v2919
        %v2921 = vrot.slane %v2913, %v2920
        %v2923 = vunpack.c.l.s4 1983009808
        %v2924 = vunpack.c.0.s8 %v2923
        %v2925 = vlaneseq
        %v2926 = vshrl.u32 %v2925, 7
        %v2927 = vsub.s32 %v2924, %v2926
        %v2928 = vrot.slane %v2914, %v2927
        %v2929 = vcombine.low %v2498, %v2500
        %v2930 = vcombine.high %v2498, %v2500
        %v2932 = vunpack.c.l.s4 1983009808
        %v2933 = vunpack.c.0.s8 %v2932
        %v2934 = vlaneseq
        %v2935 = vshrl.u32 %v2934, 7
        %v2936 = vsub.s32 %v2933, %v2935
        %v2937 = vrot.slane %v2929, %v2936
        %v2939 = vunpack.c.l.s4 1983009808
        %v2940 = vunpack.c.0.s8 %v2939
        %v2941 = vlaneseq
        %v2942 = vshrl.u32 %v2941, 7
        %v2943 = vsub.s32 %v2940, %v2942
        %v2944 = vrot.slane %v2930, %v2943
        %v2945 = vcombine.low %v2501, %v2503
        %v2946 = vcombine.high %v2501, %v2503
        %v2948 = vunpack.c.l.s4 1983009808
        %v2949 = vunpack.c.0.s8 %v2948
        %v2950 = vlaneseq
        %v2951 = vshrl.u32 %v2950, 7
        %v2952 = vsub.s32 %v2949, %v2951
        %v2953 = vrot.slane %v2945, %v2952
        %v2955 = vunpack.c.l.s4 1983009808
        %v2956 = vunpack.c.0.s8 %v2955
        %v2957 = vlaneseq
        %v2958 = vshrl.u32 %v2957, 7
        %v2959 = vsub.s32 %v2956, %v2958
        %v2960 = vrot.slane %v2946, %v2959
        %v2961 = vcombine.low %v2502, %v2504
        %v2962 = vcombine.high %v2502, %v2504
        %v2964 = vunpack.c.l.s4 1983009808
        %v2965 = vunpack.c.0.s8 %v2964
        %v2966 = vlaneseq
        %v2967 = vshrl.u32 %v2966, 7
        %v2968 = vsub.s32 %v2965, %v2967
        %v2969 = vrot.slane %v2961, %v2968
        %v2971 = vunpack.c.l.s4 1983009808
        %v2972 = vunpack.c.0.s8 %v2971
        %v2973 = vlaneseq
        %v2974 = vshrl.u32 %v2973, 7
        %v2975 = vsub.s32 %v2972, %v2974
        %v2976 = vrot.slane %v2962, %v2975
        %v2977 = vcombine.low %v2921, %v2937
        %v2978 = vcombine.high %v2921, %v2937
        %v2980 = vunpack.c.l.s4 1934713408
        %v2981 = vunpack.c.0.s8 %v2980
        %v2982 = vlaneseq
        %v2983 = vshrl.u32 %v2982, 7
        %v2984 = vsub.s32 %v2981, %v2983
        %v2985 = vrot.slane %v2977, %v2984
        %v2987 = vunpack.c.l.s4 1934713408
        %v2988 = vunpack.c.0.s8 %v2987
        %v2989 = vlaneseq
        %v2990 = vshrl.u32 %v2989, 7
        %v2991 = vsub.s32 %v2988, %v2990
        %v2992 = vrot.slane %v2978, %v2991
        %v2993 = vcombine.low %v2928, %v2944
        %v2994 = vcombine.high %v2928, %v2944
        %v2996 = vunpack.c.l.s4 1934713408
        %v2997 = vunpack.c.0.s8 %v2996
        %v2998 = vlaneseq
        %v2999 = vshrl.u32 %v2998, 7
        %v3000 = vsub.s32 %v2997, %v2999
        %v3001 = vrot.slane %v2993, %v3000
        %v3003 = vunpack.c.l.s4 1934713408
        %v3004 = vunpack.c.0.s8 %v3003
        %v3005 = vlaneseq
        %v3006 = vshrl.u32 %v3005, 7
        %v3007 = vsub.s32 %v3004, %v3006
        %v3008 = vrot.slane %v2994, %v3007
        %v3009 = vcombine.low %v2953, %v2969
        %v3010 = vcombine.high %v2953, %v2969
        %v3012 = vunpack.c.l.s4 1934713408
        %v3013 = vunpack.c.0.s8 %v3012
        %v3014 = vlaneseq
        %v3015 = vshrl.u32 %v3014, 7
        %v3016 = vsub.s32 %v3013, %v3015
        %v3017 = vrot.slane %v3009, %v3016
        %v3019 = vunpack.c.l.s4 1934713408
        %v3020 = vunpack.c.0.s8 %v3019
        %v3021 = vlaneseq
        %v3022 = vshrl.u32 %v3021, 7
        %v3023 = vsub.s32 %v3020, %v3022
        %v3024 = vrot.slane %v3010, %v3023
        %v3025 = vcombine.low %v2960, %v2976
        %v3026 = vcombine.high %v2960, %v2976
        %v3028 = vunpack.c.l.s4 1934713408
        %v3029 = vunpack.c.0.s8 %v3028
        %v3030 = vlaneseq
        %v3031 = vshrl.u32 %v3030, 7
        %v3032 = vsub.s32 %v3029, %v3031
        %v3033 = vrot.slane %v3025, %v3032
        %v3035 = vunpack.c.l.s4 1934713408
        %v3036 = vunpack.c.0.s8 %v3035
        %v3037 = vlaneseq
        %v3038 = vshrl.u32 %v3037, 7
        %v3039 = vsub.s32 %v3036, %v3038
        %v3040 = vrot.slane %v3026, %v3039
        %v3041 = vcombine.low %v2985, %v3017
        %v3042 = vcombine.high %v2985, %v3017
        %v3043 = vcombine.low %v2992, %v3024
        %v3044 = vcombine.high %v2992, %v3024
        %v3045 = vcombine.low %v3001, %v3033
        %v3046 = vcombine.high %v3001, %v3033
        %v3047 = vcombine.low %v3008, %v3040
        %v3048 = vcombine.high %v3008, %v3040
        %v3049 = vcombine.low %v2769, %v2771
        %v3050 = vcombine.high %v2769, %v2771
        %v3052 = vunpack.c.l.s4 1983009808
        %v3053 = vunpack.c.0.s8 %v3052
        %v3054 = vlaneseq
        %v3055 = vshrl.u32 %v3054, 7
        %v3056 = vsub.s32 %v3053, %v3055
        %v3057 = vrot.slane %v3049, %v3056
        %v3059 = vunpack.c.l.s4 1983009808
        %v3060 = vunpack.c.0.s8 %v3059
        %v3061 = vlaneseq
        %v3062 = vshrl.u32 %v3061, 7
        %v3063 = vsub.s32 %v3060, %v3062
        %v3064 = vrot.slane %v3050, %v3063
        %v3065 = vcombine.low %v2770, %v2772
        %v3066 = vcombine.high %v2770, %v2772
        %v3068 = vunpack.c.l.s4 1983009808
        %v3069 = vunpack.c.0.s8 %v3068
        %v3070 = vlaneseq
        %v3071 = vshrl.u32 %v3070, 7
        %v3072 = vsub.s32 %v3069, %v3071
        %v3073 = vrot.slane %v3065, %v3072
        %v3075 = vunpack.c.l.s4 1983009808
        %v3076 = vunpack.c.0.s8 %v3075
        %v3077 = vlaneseq
        %v3078 = vshrl.u32 %v3077, 7
        %v3079 = vsub.s32 %v3076, %v3078
        %v3080 = vrot.slane %v3066, %v3079
        %v3081 = vcombine.low %v2773, %v2775
        %v3082 = vcombine.high %v2773, %v2775
        %v3084 = vunpack.c.l.s4 1983009808
        %v3085 = vunpack.c.0.s8 %v3084
        %v3086 = vlaneseq
        %v3087 = vshrl.u32 %v3086, 7
        %v3088 = vsub.s32 %v3085, %v3087
        %v3089 = vrot.slane %v3081, %v3088
        %v3091 = vunpack.c.l.s4 1983009808
        %v3092 = vunpack.c.0.s8 %v3091
        %v3093 = vlaneseq
        %v3094 = vshrl.u32 %v3093, 7
        %v3095 = vsub.s32 %v3092, %v3094
        %v3096 = vrot.slane %v3082, %v3095
        %v3097 = vcombine.low %v2774, %v2776
        %v3098 = vcombine.high %v2774, %v2776
        %v3100 = vunpack.c.l.s4 1983009808
        %v3101 = vunpack.c.0.s8 %v3100
        %v3102 = vlaneseq
        %v3103 = vshrl.u32 %v3102, 7
        %v3104 = vsub.s32 %v3101, %v3103
        %v3105 = vrot.slane %v3097, %v3104
        %v3107 = vunpack.c.l.s4 1983009808
        %v3108 = vunpack.c.0.s8 %v3107
        %v3109 = vlaneseq
        %v3110 = vshrl.u32 %v3109, 7
        %v3111 = vsub.s32 %v3108, %v3110
        %v3112 = vrot.slane %v3098, %v3111
        %v3113 = vcombine.low %v3057, %v3073
        %v3114 = vcombine.high %v3057, %v3073
        %v3116 = vunpack.c.l.s4 1934713408
        %v3117 = vunpack.c.0.s8 %v3116
        %v3118 = vlaneseq
        %v3119 = vshrl.u32 %v3118, 7
        %v3120 = vsub.s32 %v3117, %v3119
        %v3121 = vrot.slane %v3113, %v3120
        %v3123 = vunpack.c.l.s4 1934713408
        %v3124 = vunpack.c.0.s8 %v3123
        %v3125 = vlaneseq
        %v3126 = vshrl.u32 %v3125, 7
        %v3127 = vsub.s32 %v3124, %v3126
        %v3128 = vrot.slane %v3114, %v3127
        %v3129 = vcombine.low %v3064, %v3080
        %v3130 = vcombine.high %v3064, %v3080
        %v3132 = vunpack.c.l.s4 1934713408
        %v3133 = vunpack.c.0.s8 %v3132
        %v3134 = vlaneseq
        %v3135 = vshrl.u32 %v3134, 7
        %v3136 = vsub.s32 %v3133, %v3135
        %v3137 = vrot.slane %v3129, %v3136
        %v3139 = vunpack.c.l.s4 1934713408
        %v3140 = vunpack.c.0.s8 %v3139
        %v3141 = vlaneseq
        %v3142 = vshrl.u32 %v3141, 7
        %v3143 = vsub.s32 %v3140, %v3142
        %v3144 = vrot.slane %v3130, %v3143
        %v3145 = vcombine.low %v3089, %v3105
        %v3146 = vcombine.high %v3089, %v3105
        %v3148 = vunpack.c.l.s4 1934713408
        %v3149 = vunpack.c.0.s8 %v3148
        %v3150 = vlaneseq
        %v3151 = vshrl.u32 %v3150, 7
        %v3152 = vsub.s32 %v3149, %v3151
        %v3153 = vrot.slane %v3145, %v3152
        %v3155 = vunpack.c.l.s4 1934713408
        %v3156 = vunpack.c.0.s8 %v3155
        %v3157 = vlaneseq
        %v3158 = vshrl.u32 %v3157, 7
        %v3159 = vsub.s32 %v3156, %v3158
        %v3160 = vrot.slane %v3146, %v3159
        %v3161 = vcombine.low %v3096, %v3112
        %v3162 = vcombine.high %v3096, %v3112
        %v3164 = vunpack.c.l.s4 1934713408
        %v3165 = vunpack.c.0.s8 %v3164
        %v3166 = vlaneseq
        %v3167 = vshrl.u32 %v3166, 7
        %v3168 = vsub.s32 %v3165, %v3167
        %v3169 = vrot.slane %v3161, %v3168
        %v3171 = vunpack.c.l.s4 1934713408
        %v3172 = vunpack.c.0.s8 %v3171
        %v3173 = vlaneseq
        %v3174 = vshrl.u32 %v3173, 7
        %v3175 = vsub.s32 %v3172, %v3174
        %v3176 = vrot.slane %v3162, %v3175
        %v3177 = vcombine.low %v3121, %v3153
        %v3178 = vcombine.high %v3121, %v3153
        %v3179 = vcombine.low %v3128, %v3160
        %v3180 = vcombine.high %v3128, %v3160
        %v3181 = vcombine.low %v3137, %v3169
        %v3182 = vcombine.high %v3137, %v3169
        %v3183 = vcombine.low %v3144, %v3176
        %v3184 = vcombine.high %v3144, %v3176
        %v3185 = vcombine.low %v2633, %v2635
        %v3186 = vcombine.high %v2633, %v2635
        %v3188 = vunpack.c.l.s4 1983009808
        %v3189 = vunpack.c.0.s8 %v3188
        %v3190 = vlaneseq
        %v3191 = vshrl.u32 %v3190, 7
        %v3192 = vsub.s32 %v3189, %v3191
        %v3193 = vrot.slane %v3185, %v3192
        %v3195 = vunpack.c.l.s4 1983009808
        %v3196 = vunpack.c.0.s8 %v3195
        %v3197 = vlaneseq
        %v3198 = vshrl.u32 %v3197, 7
        %v3199 = vsub.s32 %v3196, %v3198
        %v3200 = vrot.slane %v3186, %v3199
        %v3201 = vcombine.low %v2634, %v2636
        %v3202 = vcombine.high %v2634, %v2636
        %v3204 = vunpack.c.l.s4 1983009808
        %v3205 = vunpack.c.0.s8 %v3204
        %v3206 = vlaneseq
        %v3207 = vshrl.u32 %v3206, 7
        %v3208 = vsub.s32 %v3205, %v3207
        %v3209 = vrot.slane %v3201, %v3208
        %v3211 = vunpack.c.l.s4 1983009808
        %v3212 = vunpack.c.0.s8 %v3211
        %v3213 = vlaneseq
        %v3214 = vshrl.u32 %v3213, 7
        %v3215 = vsub.s32 %v3212, %v3214
        %v3216 = vrot.slane %v3202, %v3215
        %v3217 = vcombine.low %v2637, %v2639
        %v3218 = vcombine.high %v2637, %v2639
        %v3220 = vunpack.c.l.s4 1983009808
        %v3221 = vunpack.c.0.s8 %v3220
        %v3222 = vlaneseq
        %v3223 = vshrl.u32 %v3222, 7
        %v3224 = vsub.s32 %v3221, %v3223
        %v3225 = vrot.slane %v3217, %v3224
        %v3227 = vunpack.c.l.s4 1983009808
        %v3228 = vunpack.c.0.s8 %v3227
        %v3229 = vlaneseq
        %v3230 = vshrl.u32 %v3229, 7
        %v3231 = vsub.s32 %v3228, %v3230
        %v3232 = vrot.slane %v3218, %v3231
        %v3233 = vcombine.low %v2638, %v2640
        %v3234 = vcombine.high %v2638, %v2640
        %v3236 = vunpack.c.l.s4 1983009808
        %v3237 = vunpack.c.0.s8 %v3236
        %v3238 = vlaneseq
        %v3239 = vshrl.u32 %v3238, 7
        %v3240 = vsub.s32 %v3237, %v3239
        %v3241 = vrot.slane %v3233, %v3240
        %v3243 = vunpack.c.l.s4 1983009808
        %v3244 = vunpack.c.0.s8 %v3243
        %v3245 = vlaneseq
        %v3246 = vshrl.u32 %v3245, 7
        %v3247 = vsub.s32 %v3244, %v3246
        %v3248 = vrot.slane %v3234, %v3247
        %v3249 = vcombine.low %v3193, %v3209
        %v3250 = vcombine.high %v3193, %v3209
        %v3252 = vunpack.c.l.s4 1934713408
        %v3253 = vunpack.c.0.s8 %v3252
        %v3254 = vlaneseq
        %v3255 = vshrl.u32 %v3254, 7
        %v3256 = vsub.s32 %v3253, %v3255
        %v3257 = vrot.slane %v3249, %v3256
        %v3259 = vunpack.c.l.s4 1934713408
        %v3260 = vunpack.c.0.s8 %v3259
        %v3261 = vlaneseq
        %v3262 = vshrl.u32 %v3261, 7
        %v3263 = vsub.s32 %v3260, %v3262
        %v3264 = vrot.slane %v3250, %v3263
        %v3265 = vcombine.low %v3200, %v3216
        %v3266 = vcombine.high %v3200, %v3216
        %v3268 = vunpack.c.l.s4 1934713408
        %v3269 = vunpack.c.0.s8 %v3268
        %v3270 = vlaneseq
        %v3271 = vshrl.u32 %v3270, 7
        %v3272 = vsub.s32 %v3269, %v3271
        %v3273 = vrot.slane %v3265, %v3272
        %v3275 = vunpack.c.l.s4 1934713408
        %v3276 = vunpack.c.0.s8 %v3275
        %v3277 = vlaneseq
        %v3278 = vshrl.u32 %v3277, 7
        %v3279 = vsub.s32 %v3276, %v3278
        %v3280 = vrot.slane %v3266, %v3279
        %v3281 = vcombine.low %v3225, %v3241
        %v3282 = vcombine.high %v3225, %v3241
        %v3284 = vunpack.c.l.s4 1934713408
        %v3285 = vunpack.c.0.s8 %v3284
        %v3286 = vlaneseq
        %v3287 = vshrl.u32 %v3286, 7
        %v3288 = vsub.s32 %v3285, %v3287
        %v3289 = vrot.slane %v3281, %v3288
        %v3291 = vunpack.c.l.s4 1934713408
        %v3292 = vunpack.c.0.s8 %v3291
        %v3293 = vlaneseq
        %v3294 = vshrl.u32 %v3293, 7
        %v3295 = vsub.s32 %v3292, %v3294
        %v3296 = vrot.slane %v3282, %v3295
        %v3297 = vcombine.low %v3232, %v3248
        %v3298 = vcombine.high %v3232, %v3248
        %v3300 = vunpack.c.l.s4 1934713408
        %v3301 = vunpack.c.0.s8 %v3300
        %v3302 = vlaneseq
        %v3303 = vshrl.u32 %v3302, 7
        %v3304 = vsub.s32 %v3301, %v3303
        %v3305 = vrot.slane %v3297, %v3304
        %v3307 = vunpack.c.l.s4 1934713408
        %v3308 = vunpack.c.0.s8 %v3307
        %v3309 = vlaneseq
        %v3310 = vshrl.u32 %v3309, 7
        %v3311 = vsub.s32 %v3308, %v3310
        %v3312 = vrot.slane %v3298, %v3311
        %v3313 = vcombine.low %v3257, %v3289
        %v3314 = vcombine.high %v3257, %v3289
        %v3315 = vcombine.low %v3264, %v3296
        %v3316 = vcombine.high %v3264, %v3296
        %v3317 = vcombine.low %v3273, %v3305
        %v3318 = vcombine.high %v3273, %v3305
        %v3319 = vcombine.low %v3280, %v3312
        %v3320 = vcombine.high %v3280, %v3312
        %v3321 = vcombine.low %v2905, %v2907
        %v3322 = vcombine.high %v2905, %v2907
        %v3324 = vunpack.c.l.s4 1983009808
        %v3325 = vunpack.c.0.s8 %v3324
        %v3326 = vlaneseq
        %v3327 = vshrl.u32 %v3326, 7
        %v3328 = vsub.s32 %v3325, %v3327
        %v3329 = vrot.slane %v3321, %v3328
        %v3331 = vunpack.c.l.s4 1983009808
        %v3332 = vunpack.c.0.s8 %v3331
        %v3333 = vlaneseq
        %v3334 = vshrl.u32 %v3333, 7
        %v3335 = vsub.s32 %v3332, %v3334
        %v3336 = vrot.slane %v3322, %v3335
        %v3337 = vcombine.low %v2906, %v2908
        %v3338 = vcombine.high %v2906, %v2908
        %v3340 = vunpack.c.l.s4 1983009808
        %v3341 = vunpack.c.0.s8 %v3340
        %v3342 = vlaneseq
        %v3343 = vshrl.u32 %v3342, 7
        %v3344 = vsub.s32 %v3341, %v3343
        %v3345 = vrot.slane %v3337, %v3344
        %v3347 = vunpack.c.l.s4 1983009808
        %v3348 = vunpack.c.0.s8 %v3347
        %v3349 = vlaneseq
        %v3350 = vshrl.u32 %v3349, 7
        %v3351 = vsub.s32 %v3348, %v3350
        %v3352 = vrot.slane %v3338, %v3351
        %v3353 = vcombine.low %v2909, %v2911
        %v3354 = vcombine.high %v2909, %v2911
        %v3356 = vunpack.c.l.s4 1983009808
        %v3357 = vunpack.c.0.s8 %v3356
        %v3358 = vlaneseq
        %v3359 = vshrl.u32 %v3358, 7
        %v3360 = vsub.s32 %v3357, %v3359
        %v3361 = vrot.slane %v3353, %v3360
        %v3363 = vunpack.c.l.s4 1983009808
        %v3364 = vunpack.c.0.s8 %v3363
        %v3365 = vlaneseq
        %v3366 = vshrl.u32 %v3365, 7
        %v3367 = vsub.s32 %v3364, %v3366
        %v3368 = vrot.slane %v3354, %v3367
        %v3369 = vcombine.low %v2910, %v2912
        %v3370 = vcombine.high %v2910, %v2912
        %v3372 = vunpack.c.l.s4 1983009808
        %v3373 = vunpack.c.0.s8 %v3372
        %v3374 = vlaneseq
        %v3375 = vshrl.u32 %v3374, 7
        %v3376 = vsub.s32 %v3373, %v3375
        %v3377 = vrot.slane %v3369, %v3376
        %v3379 = vunpack.c.l.s4 1983009808
        %v3380 = vunpack.c.0.s8 %v3379
        %v3381 = vlaneseq
        %v3382 = vshrl.u32 %v3381, 7
        %v3383 = vsub.s32 %v3380, %v3382
        %v3384 = vrot.slane %v3370, %v3383
        %v3385 = vcombine.low %v3329, %v3345
        %v3386 = vcombine.high %v3329, %v3345
        %v3388 = vunpack.c.l.s4 1934713408
        %v3389 = vunpack.c.0.s8 %v3388
        %v3390 = vlaneseq
        %v3391 = vshrl.u32 %v3390, 7
        %v3392 = vsub.s32 %v3389, %v3391
        %v3393 = vrot.slane %v3385, %v3392
        %v3395 = vunpack.c.l.s4 1934713408
        %v3396 = vunpack.c.0.s8 %v3395
        %v3397 = vlaneseq
        %v3398 = vshrl.u32 %v3397, 7
        %v3399 = vsub.s32 %v3396, %v3398
        %v3400 = vrot.slane %v3386, %v3399
        %v3401 = vcombine.low %v3336, %v3352
        %v3402 = vcombine.high %v3336, %v3352
        %v3404 = vunpack.c.l.s4 1934713408
        %v3405 = vunpack.c.0.s8 %v3404
        %v3406 = vlaneseq
        %v3407 = vshrl.u32 %v3406, 7
        %v3408 = vsub.s32 %v3405, %v3407
        %v3409 = vrot.slane %v3401, %v3408
        %v3411 = vunpack.c.l.s4 1934713408
        %v3412 = vunpack.c.0.s8 %v3411
        %v3413 = vlaneseq
        %v3414 = vshrl.u32 %v3413, 7
        %v3415 = vsub.s32 %v3412, %v3414
        %v3416 = vrot.slane %v3402, %v3415
        %v3417 = vcombine.low %v3361, %v3377
        %v3418 = vcombine.high %v3361, %v3377
        %v3420 = vunpack.c.l.s4 1934713408
        %v3421 = vunpack.c.0.s8 %v3420
        %v3422 = vlaneseq
        %v3423 = vshrl.u32 %v3422, 7
        %v3424 = vsub.s32 %v3421, %v3423
        %v3425 = vrot.slane %v3417, %v3424
        %v3427 = vunpack.c.l.s4 1934713408
        %v3428 = vunpack.c.0.s8 %v3427
        %v3429 = vlaneseq
        %v3430 = vshrl.u32 %v3429, 7
        %v3431 = vsub.s32 %v3428, %v3430
        %v3432 = vrot.slane %v3418, %v3431
        %v3433 = vcombine.low %v3368, %v3384
        %v3434 = vcombine.high %v3368, %v3384
        %v3436 = vunpack.c.l.s4 1934713408
        %v3437 = vunpack.c.0.s8 %v3436
        %v3438 = vlaneseq
        %v3439 = vshrl.u32 %v3438, 7
        %v3440 = vsub.s32 %v3437, %v3439
        %v3441 = vrot.slane %v3433, %v3440
        %v3443 = vunpack.c.l.s4 1934713408
        %v3444 = vunpack.c.0.s8 %v3443
        %v3445 = vlaneseq
        %v3446 = vshrl.u32 %v3445, 7
        %v3447 = vsub.s32 %v3444, %v3446
        %v3448 = vrot.slane %v3434, %v3447
        %v3449 = vcombine.low %v3393, %v3425
        %v3450 = vcombine.high %v3393, %v3425
        %v3451 = vcombine.low %v3400, %v3432
        %v3452 = vcombine.high %v3400, %v3432
        %v3453 = vcombine.low %v3409, %v3441
        %v3454 = vcombine.high %v3409, %v3441
        %v3455 = vcombine.low %v3416, %v3448
        %v3456 = vcombine.high %v3416, %v3448
        %v3457 = vld [vmem:[%s3] sm:$0xff]
        %v3458 = vld [vmem:[%s3 + $0x8] sm:$0xff]
        %v3459 = vadd.f32 %v3041, %v3457
        %v3460 = vadd.f32 %v3177, %v3458
        %v3461 = vadd.f32 %v3042, %v3457
        %v3462 = vadd.f32 %v3178, %v3458
        %v3463 = vadd.f32 %v3043, %v3457
        %v3464 = vadd.f32 %v3179, %v3458
        %v3465 = vadd.f32 %v3044, %v3457
        %v3466 = vadd.f32 %v3180, %v3458
        %v3467 = vadd.f32 %v3045, %v3457
        %v3468 = vadd.f32 %v3181, %v3458
        %v3469 = vadd.f32 %v3046, %v3457
        %v3470 = vadd.f32 %v3182, %v3458
        %v3471 = vadd.f32 %v3047, %v3457
        %v3472 = vadd.f32 %v3183, %v3458
        %v3473 = vadd.f32 %v3048, %v3457
        %v3474 = vadd.f32 %v3184, %v3458
        %v3475 = vadd.f32 %v3313, %v3457
        %v3476 = vadd.f32 %v3449, %v3458
        %v3477 = vadd.f32 %v3314, %v3457
        %v3478 = vadd.f32 %v3450, %v3458
        %v3479 = vadd.f32 %v3315, %v3457
        %v3480 = vadd.f32 %v3451, %v3458
        %v3481 = vadd.f32 %v3316, %v3457
        %v3482 = vadd.f32 %v3452, %v3458
        %v3483 = vadd.f32 %v3317, %v3457
        %v3484 = vadd.f32 %v3453, %v3458
        %v3485 = vadd.f32 %v3318, %v3457
        %v3486 = vadd.f32 %v3454, %v3458
        %v3487 = vadd.f32 %v3319, %v3457
        %v3488 = vadd.f32 %v3455, %v3458
        %v3489 = vadd.f32 %v3320, %v3457
        %v3490 = vadd.f32 %v3456, %v3458
        %v3491 = vmax.f32 %v3459, 0.0
        %v3492 = vmax.f32 %v3460, 0.0
        %v3493 = vmax.f32 %v3461, 0.0
        %v3494 = vmax.f32 %v3462, 0.0
        %v3495 = vmax.f32 %v3463, 0.0
        %v3496 = vmax.f32 %v3464, 0.0
        %v3497 = vmax.f32 %v3465, 0.0
        %v3498 = vmax.f32 %v3466, 0.0
        %v3499 = vmax.f32 %v3467, 0.0
        %v3500 = vmax.f32 %v3468, 0.0
        %v3501 = vmax.f32 %v3469, 0.0
        %v3502 = vmax.f32 %v3470, 0.0
        %v3503 = vmax.f32 %v3471, 0.0
        %v3504 = vmax.f32 %v3472, 0.0
        %v3505 = vmax.f32 %v3473, 0.0
        %v3506 = vmax.f32 %v3474, 0.0
        %v3507 = vmax.f32 %v3475, 0.0
        %v3508 = vmax.f32 %v3476, 0.0
        %v3509 = vmax.f32 %v3477, 0.0
        %v3510 = vmax.f32 %v3478, 0.0
        %v3511 = vmax.f32 %v3479, 0.0
        %v3512 = vmax.f32 %v3480, 0.0
        %v3513 = vmax.f32 %v3481, 0.0
        %v3514 = vmax.f32 %v3482, 0.0
        %v3515 = vmax.f32 %v3483, 0.0
        %v3516 = vmax.f32 %v3484, 0.0
        %v3517 = vmax.f32 %v3485, 0.0
        %v3518 = vmax.f32 %v3486, 0.0
        %v3519 = vmax.f32 %v3487, 0.0
        %v3520 = vmax.f32 %v3488, 0.0
        %v3521 = vmax.f32 %v3489, 0.0
        %v3522 = vmax.f32 %v3490, 0.0
        %3523 = vst [vmem:[#allocation2] sm:$0xf] 0
        %3524 = vst [vmem:[#allocation2 + $0x4] sm:$0xf] 0
        %3525 = vst [vmem:[#allocation2 + $0x8] sm:$0xf] 0
        %3526 = vst [vmem:[#allocation2 + $0xc] sm:$0xf] 0
        %3527 = vst [vmem:[#allocation2 + $0x10] sm:$0xf] 0
        %3528 = vst [vmem:[#allocation2 + $0x14] sm:$0xf] 0
        %3529 = vst [vmem:[#allocation2 + $0x18] sm:$0xf] 0
        %3530 = vst [vmem:[#allocation2 + $0x1c] sm:$0xf] 0
        %s3531 = scalar_lea.vmem [#allocation2], 160
        %3532 = vst [vmem:[%s3531] sm:$0xf] 0
        %3533 = vst [vmem:[%s3531 + $0x4] sm:$0xf] 0
        %3534 = vst [vmem:[%s3531 + $0x8] sm:$0xf] 0
        %3535 = vst [vmem:[%s3531 + $0xc] sm:$0xf] 0
        %3536 = vst [vmem:[%s3531 + $0x10] sm:$0xf] 0
        %3537 = vst [vmem:[%s3531 + $0x14] sm:$0xf] 0
        %3538 = vst [vmem:[%s3531 + $0x18] sm:$0xf] 0
        %3539 = vst [vmem:[%s3531 + $0x1c] sm:$0xf] 0
        %v3540 = vpack.c.bf16 %v3492, %v3491
        %v3541 = vpack.c.bf16 %v3494, %v3493
        %v3542 = vpack.c.bf16 %v3496, %v3495
        %v3543 = vpack.c.bf16 %v3498, %v3497
        %v3544 = vpack.c.bf16 %v3500, %v3499
        %v3545 = vpack.c.bf16 %v3502, %v3501
        %v3546 = vpack.c.bf16 %v3504, %v3503
        %v3547 = vpack.c.bf16 %v3506, %v3505
        %v3548 = vpack.c.bf16 %v3508, %v3507
        %v3549 = vpack.c.bf16 %v3510, %v3509
        %v3550 = vpack.c.bf16 %v3512, %v3511
        %v3551 = vpack.c.bf16 %v3514, %v3513
        %v3552 = vpack.c.bf16 %v3516, %v3515
        %v3553 = vpack.c.bf16 %v3518, %v3517
        %v3554 = vpack.c.bf16 %v3520, %v3519
        %v3555 = vpack.c.bf16 %v3522, %v3521
        %v3572 = vunpack.c.l.b16 %v3540
        %v3573 = vunpack.c.h.b16 %v3540
        %v3574 = vunpack.c.l.b16 %v3541
        %v3575 = vunpack.c.h.b16 %v3541
        %v3576 = vunpack.c.l.b16 %v3542
        %v3577 = vunpack.c.h.b16 %v3542
        %v3578 = vunpack.c.l.b16 %v3543
        %v3579 = vunpack.c.h.b16 %v3543
        %v3580 = vunpack.c.l.b16 %v3544
        %v3581 = vunpack.c.h.b16 %v3544
        %v3582 = vunpack.c.l.b16 %v3545
        %v3583 = vunpack.c.h.b16 %v3545
        %v3584 = vunpack.c.l.b16 %v3546
        %v3585 = vunpack.c.h.b16 %v3546
        %v3586 = vunpack.c.l.b16 %v3547
        %v3587 = vunpack.c.h.b16 %v3547
        %v3588 = vunpack.c.l.b16 %v3548
        %v3589 = vunpack.c.h.b16 %v3548
        %v3590 = vunpack.c.l.b16 %v3549
        %v3591 = vunpack.c.h.b16 %v3549
        %v3592 = vunpack.c.l.b16 %v3550
        %v3593 = vunpack.c.h.b16 %v3550
        %v3594 = vunpack.c.l.b16 %v3551
        %v3595 = vunpack.c.h.b16 %v3551
        %v3596 = vunpack.c.l.b16 %v3552
        %v3597 = vunpack.c.h.b16 %v3552
        %v3598 = vunpack.c.l.b16 %v3553
        %v3599 = vunpack.c.h.b16 %v3553
        %v3600 = vunpack.c.l.b16 %v3554
        %v3601 = vunpack.c.h.b16 %v3554
        %v3602 = vunpack.c.l.b16 %v3555
        %v3603 = vunpack.c.h.b16 %v3555
        %v3604 = vpack.c.b16 %v3572, %v3572
        %v3605 = vpack.c.b16 %v3573, %v3573
        %v3606 = vpack.c.b16 %v3574, %v3574
        %v3607 = vpack.c.b16 %v3575, %v3575
        %v3608 = vpack.c.b16 %v3576, %v3576
        %v3609 = vpack.c.b16 %v3577, %v3577
        %v3610 = vpack.c.b16 %v3578, %v3578
        %v3611 = vpack.c.b16 %v3579, %v3579
        %v3612 = vpack.c.b16 %v3580, %v3580
        %v3613 = vpack.c.b16 %v3581, %v3581
        %v3614 = vpack.c.b16 %v3582, %v3582
        %v3615 = vpack.c.b16 %v3583, %v3583
        %v3616 = vpack.c.b16 %v3584, %v3584
        %v3617 = vpack.c.b16 %v3585, %v3585
        %v3618 = vpack.c.b16 %v3586, %v3586
        %v3619 = vpack.c.b16 %v3587, %v3587
        %v3620 = vpack.c.b16 %v3588, %v3588
        %v3621 = vpack.c.b16 %v3589, %v3589
        %v3622 = vpack.c.b16 %v3590, %v3590
        %v3623 = vpack.c.b16 %v3591, %v3591
        %v3624 = vpack.c.b16 %v3592, %v3592
        %v3625 = vpack.c.b16 %v3593, %v3593
        %v3626 = vpack.c.b16 %v3594, %v3594
        %v3627 = vpack.c.b16 %v3595, %v3595
        %v3628 = vpack.c.b16 %v3596, %v3596
        %v3629 = vpack.c.b16 %v3597, %v3597
        %v3630 = vpack.c.b16 %v3598, %v3598
        %v3631 = vpack.c.b16 %v3599, %v3599
        %v3632 = vpack.c.b16 %v3600, %v3600
        %v3633 = vpack.c.b16 %v3601, %v3601
        %v3634 = vpack.c.b16 %v3602, %v3602
        %v3635 = vpack.c.b16 %v3603, %v3603
        %s3668 = scalar_lea.vmem [#allocation2], 32
        %3669 = vst [vmem:[%s3668] sm:$0xf] %v3604
        %3670 = vst [vmem:[%s3668 + $0x4] sm:$0xf] %v3605
        %3671 = vst [vmem:[%s3668 + $0x8] sm:$0xf] %v3606
        %3672 = vst [vmem:[%s3668 + $0xc] sm:$0xf] %v3607
        %3673 = vst [vmem:[%s3668 + $0x10] sm:$0xf] %v3608
        %3674 = vst [vmem:[%s3668 + $0x14] sm:$0xf] %v3609
        %3675 = vst [vmem:[%s3668 + $0x18] sm:$0xf] %v3610
        %3676 = vst [vmem:[%s3668 + $0x1c] sm:$0xf] %v3611
        %3677 = vst [vmem:[%s3668 + $0x20] sm:$0xf] %v3612
        %3678 = vst [vmem:[%s3668 + $0x24] sm:$0xf] %v3613
        %3679 = vst [vmem:[%s3668 + $0x28] sm:$0xf] %v3614
        %3680 = vst [vmem:[%s3668 + $0x2c] sm:$0xf] %v3615
        %3681 = vst [vmem:[%s3668 + $0x30] sm:$0xf] %v3616
        %3682 = vst [vmem:[%s3668 + $0x34] sm:$0xf] %v3617
        %3683 = vst [vmem:[%s3668 + $0x38] sm:$0xf] %v3618
        %3684 = vst [vmem:[%s3668 + $0x3c] sm:$0xf] %v3619
        %3685 = vst [vmem:[%s3668 + $0x40] sm:$0xf] %v3620
        %3686 = vst [vmem:[%s3668 + $0x44] sm:$0xf] %v3621
        %3687 = vst [vmem:[%s3668 + $0x48] sm:$0xf] %v3622
        %3688 = vst [vmem:[%s3668 + $0x4c] sm:$0xf] %v3623
        %3689 = vst [vmem:[%s3668 + $0x50] sm:$0xf] %v3624
        %3690 = vst [vmem:[%s3668 + $0x54] sm:$0xf] %v3625
        %3691 = vst [vmem:[%s3668 + $0x58] sm:$0xf] %v3626
        %3692 = vst [vmem:[%s3668 + $0x5c] sm:$0xf] %v3627
        %3693 = vst [vmem:[%s3668 + $0x60] sm:$0xf] %v3628
        %3694 = vst [vmem:[%s3668 + $0x64] sm:$0xf] %v3629
        %3695 = vst [vmem:[%s3668 + $0x68] sm:$0xf] %v3630
        %3696 = vst [vmem:[%s3668 + $0x6c] sm:$0xf] %v3631
        %3697 = vst [vmem:[%s3668 + $0x70] sm:$0xf] %v3632
        %3698 = vst [vmem:[%s3668 + $0x74] sm:$0xf] %v3633
        %3699 = vst [vmem:[%s3668 + $0x78] sm:$0xf] %v3634
        %3700 = vst [vmem:[%s3668 + $0x7c] sm:$0xf] %v3635
        %v3701 = vld [vmem:[#allocation2] sm:$0xf]
        %v3702 = vld [vmem:[#allocation2 + $0x4] sm:$0xf]
        %v3703 = vld [vmem:[#allocation2 + $0x8] sm:$0xf]
        %v3704 = vld [vmem:[#allocation2 + $0xc] sm:$0xf]
        %v3705 = vld [vmem:[#allocation2 + $0x10] sm:$0xf]
        %v3706 = vld [vmem:[#allocation2 + $0x14] sm:$0xf]
        %v3707 = vld [vmem:[#allocation2 + $0x18] sm:$0xf]
        %v3708 = vld [vmem:[#allocation2 + $0x1c] sm:$0xf]
        %v3709 = vld [vmem:[#allocation2 + $0x20] sm:$0xf]
        %v3710 = vld [vmem:[#allocation2 + $0x24] sm:$0xf]
        %v3711 = vld [vmem:[#allocation2 + $0x28] sm:$0xf]
        %v3712 = vld [vmem:[#allocation2 + $0x2c] sm:$0xf]
        %v3713 = vld [vmem:[#allocation2 + $0x30] sm:$0xf]
        %v3714 = vld [vmem:[#allocation2 + $0x34] sm:$0xf]
        %v3715 = vld [vmem:[#allocation2 + $0x38] sm:$0xf]
        %v3716 = vld [vmem:[#allocation2 + $0x3c] sm:$0xf]
        %v3717 = vld [vmem:[#allocation2 + $0x40] sm:$0xf]
        %v3718 = vld [vmem:[#allocation2 + $0x44] sm:$0xf]
        %v3719 = vld [vmem:[#allocation2 + $0x48] sm:$0xf]
        %v3720 = vld [vmem:[#allocation2 + $0x4c] sm:$0xf]
        %v3721 = vld [vmem:[#allocation2 + $0x50] sm:$0xf]
        %v3722 = vld [vmem:[#allocation2 + $0x54] sm:$0xf]
        %v3723 = vld [vmem:[#allocation2 + $0x58] sm:$0xf]
        %v3724 = vld [vmem:[#allocation2 + $0x5c] sm:$0xf]
        %v3725 = vld [vmem:[#allocation2 + $0x60] sm:$0xf]
        %v3726 = vld [vmem:[#allocation2 + $0x64] sm:$0xf]
        %v3727 = vld [vmem:[#allocation2 + $0x68] sm:$0xf]
        %v3728 = vld [vmem:[#allocation2 + $0x6c] sm:$0xf]
        %v3729 = vld [vmem:[#allocation2 + $0x70] sm:$0xf]
        %v3730 = vld [vmem:[#allocation2 + $0x74] sm:$0xf]
        %v3731 = vld [vmem:[#allocation2 + $0x78] sm:$0xf]
        %v3732 = vld [vmem:[#allocation2 + $0x7c] sm:$0xf]
        %v3733 = vld [vmem:[%s4] sm:$0xf]
        %v3734 = vld [vmem:[%s4 + $0x4] sm:$0xf]
        %v3735 = vld [vmem:[%s4 + $0x8] sm:$0xf]
        %v3736 = vld [vmem:[%s4 + $0xc] sm:$0xf]
        %v3737 = vld [vmem:[%s4 + $0x10] sm:$0xf]
        %v3738 = vld [vmem:[%s4 + $0x14] sm:$0xf]
        %v3739 = vld [vmem:[%s4 + $0x18] sm:$0xf]
        %v3740 = vld [vmem:[%s4 + $0x1c] sm:$0xf]
        %v3741 = vld [vmem:[%s4 + $0x20] sm:$0xf]
        %v3742 = vld [vmem:[%s4 + $0x24] sm:$0xf]
        %v3743 = vld [vmem:[%s4 + $0x28] sm:$0xf]
        %v3744 = vld [vmem:[%s4 + $0x2c] sm:$0xf]
        %v3745 = vld [vmem:[%s4 + $0x30] sm:$0xf]
        %v3746 = vld [vmem:[%s4 + $0x34] sm:$0xf]
        %v3747 = vld [vmem:[%s4 + $0x38] sm:$0xf]
        %v3748 = vld [vmem:[%s4 + $0x3c] sm:$0xf]
        %s3749 = scalar_lea.vmem [#allocation2], 8
        %v3750 = vld [vmem:[%s3749] sm:$0xf]
        %v3751 = vld [vmem:[%s3749 + $0x4] sm:$0xf]
        %v3752 = vld [vmem:[%s3749 + $0x8] sm:$0xf]
        %v3753 = vld [vmem:[%s3749 + $0xc] sm:$0xf]
        %v3754 = vld [vmem:[%s3749 + $0x10] sm:$0xf]
        %v3755 = vld [vmem:[%s3749 + $0x14] sm:$0xf]
        %v3756 = vld [vmem:[%s3749 + $0x18] sm:$0xf]
        %v3757 = vld [vmem:[%s3749 + $0x1c] sm:$0xf]
        %v3758 = vld [vmem:[%s3749 + $0x20] sm:$0xf]
        %v3759 = vld [vmem:[%s3749 + $0x24] sm:$0xf]
        %v3760 = vld [vmem:[%s3749 + $0x28] sm:$0xf]
        %v3761 = vld [vmem:[%s3749 + $0x2c] sm:$0xf]
        %v3762 = vld [vmem:[%s3749 + $0x30] sm:$0xf]
        %v3763 = vld [vmem:[%s3749 + $0x34] sm:$0xf]
        %v3764 = vld [vmem:[%s3749 + $0x38] sm:$0xf]
        %v3765 = vld [vmem:[%s3749 + $0x3c] sm:$0xf]
        %v3766 = vld [vmem:[%s3749 + $0x40] sm:$0xf]
        %v3767 = vld [vmem:[%s3749 + $0x44] sm:$0xf]
        %v3768 = vld [vmem:[%s3749 + $0x48] sm:$0xf]
        %v3769 = vld [vmem:[%s3749 + $0x4c] sm:$0xf]
        %v3770 = vld [vmem:[%s3749 + $0x50] sm:$0xf]
        %v3771 = vld [vmem:[%s3749 + $0x54] sm:$0xf]
        %v3772 = vld [vmem:[%s3749 + $0x58] sm:$0xf]
        %v3773 = vld [vmem:[%s3749 + $0x5c] sm:$0xf]
        %v3774 = vld [vmem:[%s3749 + $0x60] sm:$0xf]
        %v3775 = vld [vmem:[%s3749 + $0x64] sm:$0xf]
        %v3776 = vld [vmem:[%s3749 + $0x68] sm:$0xf]
        %v3777 = vld [vmem:[%s3749 + $0x6c] sm:$0xf]
        %v3778 = vld [vmem:[%s3749 + $0x70] sm:$0xf]
        %v3779 = vld [vmem:[%s3749 + $0x74] sm:$0xf]
        %v3780 = vld [vmem:[%s3749 + $0x78] sm:$0xf]
        %v3781 = vld [vmem:[%s3749 + $0x7c] sm:$0xf]
        %s3782 = scalar_lea.vmem %s4, 64
        %v3783 = vld [vmem:[%s3782] sm:$0xf]
        %v3784 = vld [vmem:[%s3782 + $0x4] sm:$0xf]
        %v3785 = vld [vmem:[%s3782 + $0x8] sm:$0xf]
        %v3786 = vld [vmem:[%s3782 + $0xc] sm:$0xf]
        %v3787 = vld [vmem:[%s3782 + $0x10] sm:$0xf]
        %v3788 = vld [vmem:[%s3782 + $0x14] sm:$0xf]
        %v3789 = vld [vmem:[%s3782 + $0x18] sm:$0xf]
        %v3790 = vld [vmem:[%s3782 + $0x1c] sm:$0xf]
        %v3791 = vld [vmem:[%s3782 + $0x20] sm:$0xf]
        %v3792 = vld [vmem:[%s3782 + $0x24] sm:$0xf]
        %v3793 = vld [vmem:[%s3782 + $0x28] sm:$0xf]
        %v3794 = vld [vmem:[%s3782 + $0x2c] sm:$0xf]
        %v3795 = vld [vmem:[%s3782 + $0x30] sm:$0xf]
        %v3796 = vld [vmem:[%s3782 + $0x34] sm:$0xf]
        %v3797 = vld [vmem:[%s3782 + $0x38] sm:$0xf]
        %v3798 = vld [vmem:[%s3782 + $0x3c] sm:$0xf]
        %v3831 = vunpack.c.l.b16 %v3750
        %v3832 = vunpack.c.l.b16 %v3751
        %v3833 = vunpack.c.l.b16 %v3752
        %v3834 = vunpack.c.l.b16 %v3753
        %v3835 = vunpack.c.l.b16 %v3754
        %v3836 = vunpack.c.l.b16 %v3755
        %v3837 = vunpack.c.l.b16 %v3756
        %v3838 = vunpack.c.l.b16 %v3757
        %v3839 = vunpack.c.l.b16 %v3758
        %v3840 = vunpack.c.l.b16 %v3759
        %v3841 = vunpack.c.l.b16 %v3760
        %v3842 = vunpack.c.l.b16 %v3761
        %v3843 = vunpack.c.l.b16 %v3762
        %v3844 = vunpack.c.l.b16 %v3763
        %v3845 = vunpack.c.l.b16 %v3764
        %v3846 = vunpack.c.l.b16 %v3765
        %v3847 = vunpack.c.l.b16 %v3766
        %v3848 = vunpack.c.l.b16 %v3767
        %v3849 = vunpack.c.l.b16 %v3768
        %v3850 = vunpack.c.l.b16 %v3769
        %v3851 = vunpack.c.l.b16 %v3770
        %v3852 = vunpack.c.l.b16 %v3771
        %v3853 = vunpack.c.l.b16 %v3772
        %v3854 = vunpack.c.l.b16 %v3773
        %v3855 = vunpack.c.l.b16 %v3774
        %v3856 = vunpack.c.l.b16 %v3775
        %v3857 = vunpack.c.l.b16 %v3776
        %v3858 = vunpack.c.l.b16 %v3777
        %v3859 = vunpack.c.l.b16 %v3778
        %v3860 = vunpack.c.l.b16 %v3779
        %v3861 = vunpack.c.l.b16 %v3780
        %v3862 = vunpack.c.l.b16 %v3781
        %v3863 = vpack.c.b16 %v3832, %v3831
        %v3864 = vpack.c.b16 %v3834, %v3833
        %v3865 = vpack.c.b16 %v3836, %v3835
        %v3866 = vpack.c.b16 %v3838, %v3837
        %v3867 = vpack.c.b16 %v3840, %v3839
        %v3868 = vpack.c.b16 %v3842, %v3841
        %v3869 = vpack.c.b16 %v3844, %v3843
        %v3870 = vpack.c.b16 %v3846, %v3845
        %v3871 = vpack.c.b16 %v3848, %v3847
        %v3872 = vpack.c.b16 %v3850, %v3849
        %v3873 = vpack.c.b16 %v3852, %v3851
        %v3874 = vpack.c.b16 %v3854, %v3853
        %v3875 = vpack.c.b16 %v3856, %v3855
        %v3876 = vpack.c.b16 %v3858, %v3857
        %v3877 = vpack.c.b16 %v3860, %v3859
        %v3878 = vpack.c.b16 %v3862, %v3861
        %v3911 = vunpack.c.l.b16 %v3783
        %v3912 = vunpack.c.l.b16 %v3784
        %v3913 = vunpack.c.l.b16 %v3785
        %v3914 = vunpack.c.l.b16 %v3786
        %v3915 = vunpack.c.l.b16 %v3787
        %v3916 = vunpack.c.l.b16 %v3788
        %v3917 = vunpack.c.l.b16 %v3789
        %v3918 = vunpack.c.l.b16 %v3790
        %v3919 = vunpack.c.l.b16 %v3791
        %v3920 = vunpack.c.l.b16 %v3792
        %v3921 = vunpack.c.l.b16 %v3793
        %v3922 = vunpack.c.l.b16 %v3794
        %v3923 = vunpack.c.l.b16 %v3795
        %v3924 = vunpack.c.l.b16 %v3796
        %v3925 = vunpack.c.l.b16 %v3797
        %v3926 = vunpack.c.l.b16 %v3798
        %v3927 = vpack.c.b16 %v3912, %v3911
        %v3928 = vpack.c.b16 %v3914, %v3913
        %v3929 = vpack.c.b16 %v3916, %v3915
        %v3930 = vpack.c.b16 %v3918, %v3917
        %v3931 = vpack.c.b16 %v3920, %v3919
        %v3932 = vpack.c.b16 %v3922, %v3921
        %v3933 = vpack.c.b16 %v3924, %v3923
        %v3934 = vpack.c.b16 %v3926, %v3925
        %3943 = vmatprep.subr.bf16.mxu0 0
        %3944 = vmatpush1.bf16.msra.mxu0 %v3934
        %3945 = vmatprep.subr.bf16.mxu0 0
        %3946 = vmatpush1.bf16.msra.mxu0 %v3933
        %3947 = vmatprep.subr.bf16.mxu0 0
        %3948 = vmatpush1.bf16.msra.mxu0 %v3932
        %3949 = vmatprep.subr.bf16.mxu0 0
        %3950 = vmatpush1.bf16.msra.mxu0 %v3931
        %3951 = vmatprep.subr.bf16.mxu0 0
        %3952 = vmatpush1.bf16.msra.mxu0 %v3930
        %3953 = vmatprep.subr.bf16.mxu0 0
        %3954 = vmatpush1.bf16.msra.mxu0 %v3929
        %3955 = vmatprep.subr.bf16.mxu0 0
        %3956 = vmatpush1.bf16.msra.mxu0 %v3928
        %3957 = vmatprep.subr.bf16.mxu0 0
        %3958 = vmatpush1.bf16.msra.mxu0 %v3927
        %3959 = vmatprep.subr.bf16.mxu0 0
        %3960 = vmatpush2.bf16.msra.mxu0 0
        %3961 = vmatprep.subr.bf16.mxu0 0
        %3962 = vmatpush2.bf16.msra.mxu0 0
        %3963 = vmatprep.subr.bf16.mxu0 0
        %3964 = vmatpush2.bf16.msra.mxu0 0
        %3965 = vmatprep.subr.bf16.mxu0 0
        %3966 = vmatpush2.bf16.msra.mxu0 0
        %3967 = vmatprep.subr.bf16.mxu0 0
        %3968 = vmatpush2.bf16.msra.mxu0 0
        %3969 = vmatprep.subr.bf16.mxu0 0
        %3970 = vmatpush2.bf16.msra.mxu0 0
        %3971 = vmatprep.subr.bf16.mxu0 0
        %3972 = vmatpush2.bf16.msra.mxu0 0
        %3973 = vmatprep.subr.bf16.mxu0 0
        %3974 = vmatpush2.bf16.msra.mxu0 0
        %3975 = vmatprep.mubr.bf16.mxu0 0
        %3976 = vmatmul.mubr.bf16.gmra.mxu0 %v3863
        %v3977 = vpop.f32.mrf.mxu0
        %v3978 = vadd.f32 0.0, %v3977
        %v3979 = vpop.f32.mrf.mxu0
        %v3980 = vpop.f32.mrf.mxu0
        %v3981 = vadd.f32 0.0, %v3980
        %v3982 = vpop.f32.mrf.mxu0
        %3983 = vmatprep.mubr.bf16.mxu0 0
        %3984 = vmatmul.mubr.bf16.gmra.mxu0 %v3864
        %v3985 = vpop.f32.mrf.mxu0
        %v3986 = vadd.f32 0.0, %v3985
        %v3987 = vpop.f32.mrf.mxu0
        %v3988 = vpop.f32.mrf.mxu0
        %v3989 = vadd.f32 0.0, %v3988
        %v3990 = vpop.f32.mrf.mxu0
        %3991 = vmatprep.mubr.bf16.mxu0 0
        %3992 = vmatmul.mubr.bf16.gmra.mxu0 %v3865
        %v3993 = vpop.f32.mrf.mxu0
        %v3994 = vadd.f32 0.0, %v3993
        %v3995 = vpop.f32.mrf.mxu0
        %v3996 = vpop.f32.mrf.mxu0
        %v3997 = vadd.f32 0.0, %v3996
        %v3998 = vpop.f32.mrf.mxu0
        %3999 = vmatprep.mubr.bf16.mxu0 0
        %4000 = vmatmul.mubr.bf16.gmra.mxu0 %v3866
        %v4001 = vpop.f32.mrf.mxu0
        %v4002 = vadd.f32 0.0, %v4001
        %v4003 = vpop.f32.mrf.mxu0
        %v4004 = vpop.f32.mrf.mxu0
        %v4005 = vadd.f32 0.0, %v4004
        %v4006 = vpop.f32.mrf.mxu0
        %4007 = vmatprep.mubr.bf16.mxu0 0
        %4008 = vmatmul.mubr.bf16.gmra.mxu0 %v3867
        %v4009 = vpop.f32.mrf.mxu0
        %v4010 = vadd.f32 0.0, %v4009
        %v4011 = vpop.f32.mrf.mxu0
        %v4012 = vpop.f32.mrf.mxu0
        %v4013 = vadd.f32 0.0, %v4012
        %v4014 = vpop.f32.mrf.mxu0
        %4015 = vmatprep.mubr.bf16.mxu0 0
        %4016 = vmatmul.mubr.bf16.gmra.mxu0 %v3868
        %v4017 = vpop.f32.mrf.mxu0
        %v4018 = vadd.f32 0.0, %v4017
        %v4019 = vpop.f32.mrf.mxu0
        %v4020 = vpop.f32.mrf.mxu0
        %v4021 = vadd.f32 0.0, %v4020
        %v4022 = vpop.f32.mrf.mxu0
        %4023 = vmatprep.mubr.bf16.mxu0 0
        %4024 = vmatmul.mubr.bf16.gmra.mxu0 %v3869
        %v4025 = vpop.f32.mrf.mxu0
        %v4026 = vadd.f32 0.0, %v4025
        %v4027 = vpop.f32.mrf.mxu0
        %v4028 = vpop.f32.mrf.mxu0
        %v4029 = vadd.f32 0.0, %v4028
        %v4030 = vpop.f32.mrf.mxu0
        %4031 = vmatprep.mubr.bf16.mxu0 0
        %4032 = vmatmul.mubr.bf16.gmra.mxu0 %v3870
        %v4033 = vpop.f32.mrf.mxu0
        %v4034 = vadd.f32 0.0, %v4033
        %v4035 = vpop.f32.mrf.mxu0
        %v4036 = vpop.f32.mrf.mxu0
        %v4037 = vadd.f32 0.0, %v4036
        %v4038 = vpop.f32.mrf.mxu0
        %4039 = vmatprep.mubr.bf16.mxu0 0
        %4040 = vmatmul.mubr.bf16.gmra.mxu0 %v3871
        %v4041 = vpop.f32.mrf.mxu0
        %v4042 = vadd.f32 0.0, %v4041
        %v4043 = vpop.f32.mrf.mxu0
        %v4044 = vpop.f32.mrf.mxu0
        %v4045 = vadd.f32 0.0, %v4044
        %v4046 = vpop.f32.mrf.mxu0
        %4047 = vmatprep.mubr.bf16.mxu0 0
        %4048 = vmatmul.mubr.bf16.gmra.mxu0 %v3872
        %v4049 = vpop.f32.mrf.mxu0
        %v4050 = vadd.f32 0.0, %v4049
        %v4051 = vpop.f32.mrf.mxu0
        %v4052 = vpop.f32.mrf.mxu0
        %v4053 = vadd.f32 0.0, %v4052
        %v4054 = vpop.f32.mrf.mxu0
        %4055 = vmatprep.mubr.bf16.mxu0 0
        %4056 = vmatmul.mubr.bf16.gmra.mxu0 %v3873
        %v4057 = vpop.f32.mrf.mxu0
        %v4058 = vadd.f32 0.0, %v4057
        %v4059 = vpop.f32.mrf.mxu0
        %v4060 = vpop.f32.mrf.mxu0
        %v4061 = vadd.f32 0.0, %v4060
        %v4062 = vpop.f32.mrf.mxu0
        %4063 = vmatprep.mubr.bf16.mxu0 0
        %4064 = vmatmul.mubr.bf16.gmra.mxu0 %v3874
        %v4065 = vpop.f32.mrf.mxu0
        %v4066 = vadd.f32 0.0, %v4065
        %v4067 = vpop.f32.mrf.mxu0
        %v4068 = vpop.f32.mrf.mxu0
        %v4069 = vadd.f32 0.0, %v4068
        %v4070 = vpop.f32.mrf.mxu0
        %4071 = vmatprep.mubr.bf16.mxu0 0
        %4072 = vmatmul.mubr.bf16.gmra.mxu0 %v3875
        %v4073 = vpop.f32.mrf.mxu0
        %v4074 = vadd.f32 0.0, %v4073
        %v4075 = vpop.f32.mrf.mxu0
        %v4076 = vpop.f32.mrf.mxu0
        %v4077 = vadd.f32 0.0, %v4076
        %v4078 = vpop.f32.mrf.mxu0
        %4079 = vmatprep.mubr.bf16.mxu0 0
        %4080 = vmatmul.mubr.bf16.gmra.mxu0 %v3876
        %v4081 = vpop.f32.mrf.mxu0
        %v4082 = vadd.f32 0.0, %v4081
        %v4083 = vpop.f32.mrf.mxu0
        %v4084 = vpop.f32.mrf.mxu0
        %v4085 = vadd.f32 0.0, %v4084
        %v4086 = vpop.f32.mrf.mxu0
        %4087 = vmatprep.mubr.bf16.mxu0 0
        %4088 = vmatmul.mubr.bf16.gmra.mxu0 %v3877
        %v4089 = vpop.f32.mrf.mxu0
        %v4090 = vadd.f32 0.0, %v4089
        %v4091 = vpop.f32.mrf.mxu0
        %v4092 = vpop.f32.mrf.mxu0
        %v4093 = vadd.f32 0.0, %v4092
        %v4094 = vpop.f32.mrf.mxu0
        %4095 = vmatprep.mubr.bf16.mxu0 0
        %4096 = vmatmul.mubr.bf16.gmra.mxu0 %v3878
        %v4097 = vpop.f32.mrf.mxu0
        %v4098 = vadd.f32 0.0, %v4097
        %v4099 = vpop.f32.mrf.mxu0
        %v4100 = vpop.f32.mrf.mxu0
        %v4101 = vadd.f32 0.0, %v4100
        %v4102 = vpop.f32.mrf.mxu0
        %4103 = vdwg.mxu0
        %v4136 = vunpack.c.l.b16 %v3701
        %v4137 = vunpack.c.l.b16 %v3702
        %v4138 = vunpack.c.l.b16 %v3703
        %v4139 = vunpack.c.l.b16 %v3704
        %v4140 = vunpack.c.l.b16 %v3705
        %v4141 = vunpack.c.l.b16 %v3706
        %v4142 = vunpack.c.l.b16 %v3707
        %v4143 = vunpack.c.l.b16 %v3708
        %v4144 = vunpack.c.l.b16 %v3709
        %v4145 = vunpack.c.l.b16 %v3710
        %v4146 = vunpack.c.l.b16 %v3711
        %v4147 = vunpack.c.l.b16 %v3712
        %v4148 = vunpack.c.l.b16 %v3713
        %v4149 = vunpack.c.l.b16 %v3714
        %v4150 = vunpack.c.l.b16 %v3715
        %v4151 = vunpack.c.l.b16 %v3716
        %v4152 = vunpack.c.l.b16 %v3717
        %v4153 = vunpack.c.l.b16 %v3718
        %v4154 = vunpack.c.l.b16 %v3719
        %v4155 = vunpack.c.l.b16 %v3720
        %v4156 = vunpack.c.l.b16 %v3721
        %v4157 = vunpack.c.l.b16 %v3722
        %v4158 = vunpack.c.l.b16 %v3723
        %v4159 = vunpack.c.l.b16 %v3724
        %v4160 = vunpack.c.l.b16 %v3725
        %v4161 = vunpack.c.l.b16 %v3726
        %v4162 = vunpack.c.l.b16 %v3727
        %v4163 = vunpack.c.l.b16 %v3728
        %v4164 = vunpack.c.l.b16 %v3729
        %v4165 = vunpack.c.l.b16 %v3730
        %v4166 = vunpack.c.l.b16 %v3731
        %v4167 = vunpack.c.l.b16 %v3732
        %v4168 = vpack.c.b16 %v4137, %v4136
        %v4169 = vpack.c.b16 %v4139, %v4138
        %v4170 = vpack.c.b16 %v4141, %v4140
        %v4171 = vpack.c.b16 %v4143, %v4142
        %v4172 = vpack.c.b16 %v4145, %v4144
        %v4173 = vpack.c.b16 %v4147, %v4146
        %v4174 = vpack.c.b16 %v4149, %v4148
        %v4175 = vpack.c.b16 %v4151, %v4150
        %v4176 = vpack.c.b16 %v4153, %v4152
        %v4177 = vpack.c.b16 %v4155, %v4154
        %v4178 = vpack.c.b16 %v4157, %v4156
        %v4179 = vpack.c.b16 %v4159, %v4158
        %v4180 = vpack.c.b16 %v4161, %v4160
        %v4181 = vpack.c.b16 %v4163, %v4162
        %v4182 = vpack.c.b16 %v4165, %v4164
        %v4183 = vpack.c.b16 %v4167, %v4166
        %v4216 = vunpack.c.l.b16 %v3733
        %v4217 = vunpack.c.l.b16 %v3734
        %v4218 = vunpack.c.l.b16 %v3735
        %v4219 = vunpack.c.l.b16 %v3736
        %v4220 = vunpack.c.l.b16 %v3737
        %v4221 = vunpack.c.l.b16 %v3738
        %v4222 = vunpack.c.l.b16 %v3739
        %v4223 = vunpack.c.l.b16 %v3740
        %v4224 = vunpack.c.l.b16 %v3741
        %v4225 = vunpack.c.l.b16 %v3742
        %v4226 = vunpack.c.l.b16 %v3743
        %v4227 = vunpack.c.l.b16 %v3744
        %v4228 = vunpack.c.l.b16 %v3745
        %v4229 = vunpack.c.l.b16 %v3746
        %v4230 = vunpack.c.l.b16 %v3747
        %v4231 = vunpack.c.l.b16 %v3748
        %v4232 = vpack.c.b16 %v4217, %v4216
        %v4233 = vpack.c.b16 %v4219, %v4218
        %v4234 = vpack.c.b16 %v4221, %v4220
        %v4235 = vpack.c.b16 %v4223, %v4222
        %v4236 = vpack.c.b16 %v4225, %v4224
        %v4237 = vpack.c.b16 %v4227, %v4226
        %v4238 = vpack.c.b16 %v4229, %v4228
        %v4239 = vpack.c.b16 %v4231, %v4230
        %4248 = vmatprep.subr.bf16.mxu0 0
        %4249 = vmatpush1.bf16.msra.mxu0 %v4239
        %4250 = vmatprep.subr.bf16.mxu0 0
        %4251 = vmatpush1.bf16.msra.mxu0 %v4238
        %4252 = vmatprep.subr.bf16.mxu0 0
        %4253 = vmatpush1.bf16.msra.mxu0 %v4237
        %4254 = vmatprep.subr.bf16.mxu0 0
        %4255 = vmatpush1.bf16.msra.mxu0 %v4236
        %4256 = vmatprep.subr.bf16.mxu0 0
        %4257 = vmatpush1.bf16.msra.mxu0 %v4235
        %4258 = vmatprep.subr.bf16.mxu0 0
        %4259 = vmatpush1.bf16.msra.mxu0 %v4234
        %4260 = vmatprep.subr.bf16.mxu0 0
        %4261 = vmatpush1.bf16.msra.mxu0 %v4233
        %4262 = vmatprep.subr.bf16.mxu0 0
        %4263 = vmatpush1.bf16.msra.mxu0 %v4232
        %4264 = vmatprep.subr.bf16.mxu0 0
        %4265 = vmatpush2.bf16.msra.mxu0 0
        %4266 = vmatprep.subr.bf16.mxu0 0
        %4267 = vmatpush2.bf16.msra.mxu0 0
        %4268 = vmatprep.subr.bf16.mxu0 0
        %4269 = vmatpush2.bf16.msra.mxu0 0
        %4270 = vmatprep.subr.bf16.mxu0 0
        %4271 = vmatpush2.bf16.msra.mxu0 0
        %4272 = vmatprep.subr.bf16.mxu0 0
        %4273 = vmatpush2.bf16.msra.mxu0 0
        %4274 = vmatprep.subr.bf16.mxu0 0
        %4275 = vmatpush2.bf16.msra.mxu0 0
        %4276 = vmatprep.subr.bf16.mxu0 0
        %4277 = vmatpush2.bf16.msra.mxu0 0
        %4278 = vmatprep.subr.bf16.mxu0 0
        %4279 = vmatpush2.bf16.msra.mxu0 0
        %4280 = vmatprep.mubr.bf16.mxu0 0
        %4281 = vmatmul.mubr.bf16.gmra.mxu0 %v4168
        %v4282 = vpop.f32.mrf.mxu0
        %v4283 = vadd.f32 %v3978, %v4282
        %v4284 = vpop.f32.mrf.mxu0
        %v4285 = vpop.f32.mrf.mxu0
        %v4286 = vadd.f32 %v3981, %v4285
        %v4287 = vpop.f32.mrf.mxu0
        %4288 = vmatprep.mubr.bf16.mxu0 0
        %4289 = vmatmul.mubr.bf16.gmra.mxu0 %v4169
        %v4290 = vpop.f32.mrf.mxu0
        %v4291 = vadd.f32 %v3986, %v4290
        %v4292 = vpop.f32.mrf.mxu0
        %v4293 = vpop.f32.mrf.mxu0
        %v4294 = vadd.f32 %v3989, %v4293
        %v4295 = vpop.f32.mrf.mxu0
        %4296 = vmatprep.mubr.bf16.mxu0 0
        %4297 = vmatmul.mubr.bf16.gmra.mxu0 %v4170
        %v4298 = vpop.f32.mrf.mxu0
        %v4299 = vadd.f32 %v3994, %v4298
        %v4300 = vpop.f32.mrf.mxu0
        %v4301 = vpop.f32.mrf.mxu0
        %v4302 = vadd.f32 %v3997, %v4301
        %v4303 = vpop.f32.mrf.mxu0
        %4304 = vmatprep.mubr.bf16.mxu0 0
        %4305 = vmatmul.mubr.bf16.gmra.mxu0 %v4171
        %v4306 = vpop.f32.mrf.mxu0
        %v4307 = vadd.f32 %v4002, %v4306
        %v4308 = vpop.f32.mrf.mxu0
        %v4309 = vpop.f32.mrf.mxu0
        %v4310 = vadd.f32 %v4005, %v4309
        %v4311 = vpop.f32.mrf.mxu0
        %4312 = vmatprep.mubr.bf16.mxu0 0
        %4313 = vmatmul.mubr.bf16.gmra.mxu0 %v4172
        %v4314 = vpop.f32.mrf.mxu0
        %v4315 = vadd.f32 %v4010, %v4314
        %v4316 = vpop.f32.mrf.mxu0
        %v4317 = vpop.f32.mrf.mxu0
        %v4318 = vadd.f32 %v4013, %v4317
        %v4319 = vpop.f32.mrf.mxu0
        %4320 = vmatprep.mubr.bf16.mxu0 0
        %4321 = vmatmul.mubr.bf16.gmra.mxu0 %v4173
        %v4322 = vpop.f32.mrf.mxu0
        %v4323 = vadd.f32 %v4018, %v4322
        %v4324 = vpop.f32.mrf.mxu0
        %v4325 = vpop.f32.mrf.mxu0
        %v4326 = vadd.f32 %v4021, %v4325
        %v4327 = vpop.f32.mrf.mxu0
        %4328 = vmatprep.mubr.bf16.mxu0 0
        %4329 = vmatmul.mubr.bf16.gmra.mxu0 %v4174
        %v4330 = vpop.f32.mrf.mxu0
        %v4331 = vadd.f32 %v4026, %v4330
        %v4332 = vpop.f32.mrf.mxu0
        %v4333 = vpop.f32.mrf.mxu0
        %v4334 = vadd.f32 %v4029, %v4333
        %v4335 = vpop.f32.mrf.mxu0
        %4336 = vmatprep.mubr.bf16.mxu0 0
        %4337 = vmatmul.mubr.bf16.gmra.mxu0 %v4175
        %v4338 = vpop.f32.mrf.mxu0
        %v4339 = vadd.f32 %v4034, %v4338
        %v4340 = vpop.f32.mrf.mxu0
        %v4341 = vpop.f32.mrf.mxu0
        %v4342 = vadd.f32 %v4037, %v4341
        %v4343 = vpop.f32.mrf.mxu0
        %4344 = vmatprep.mubr.bf16.mxu0 0
        %4345 = vmatmul.mubr.bf16.gmra.mxu0 %v4176
        %v4346 = vpop.f32.mrf.mxu0
        %v4347 = vadd.f32 %v4042, %v4346
        %v4348 = vpop.f32.mrf.mxu0
        %v4349 = vpop.f32.mrf.mxu0
        %v4350 = vadd.f32 %v4045, %v4349
        %v4351 = vpop.f32.mrf.mxu0
        %4352 = vmatprep.mubr.bf16.mxu0 0
        %4353 = vmatmul.mubr.bf16.gmra.mxu0 %v4177
        %v4354 = vpop.f32.mrf.mxu0
        %v4355 = vadd.f32 %v4050, %v4354
        %v4356 = vpop.f32.mrf.mxu0
        %v4357 = vpop.f32.mrf.mxu0
        %v4358 = vadd.f32 %v4053, %v4357
        %v4359 = vpop.f32.mrf.mxu0
        %4360 = vmatprep.mubr.bf16.mxu0 0
        %4361 = vmatmul.mubr.bf16.gmra.mxu0 %v4178
        %v4362 = vpop.f32.mrf.mxu0
        %v4363 = vadd.f32 %v4058, %v4362
        %v4364 = vpop.f32.mrf.mxu0
        %v4365 = vpop.f32.mrf.mxu0
        %v4366 = vadd.f32 %v4061, %v4365
        %v4367 = vpop.f32.mrf.mxu0
        %4368 = vmatprep.mubr.bf16.mxu0 0
        %4369 = vmatmul.mubr.bf16.gmra.mxu0 %v4179
        %v4370 = vpop.f32.mrf.mxu0
        %v4371 = vadd.f32 %v4066, %v4370
        %v4372 = vpop.f32.mrf.mxu0
        %v4373 = vpop.f32.mrf.mxu0
        %v4374 = vadd.f32 %v4069, %v4373
        %v4375 = vpop.f32.mrf.mxu0
        %4376 = vmatprep.mubr.bf16.mxu0 0
        %4377 = vmatmul.mubr.bf16.gmra.mxu0 %v4180
        %v4378 = vpop.f32.mrf.mxu0
        %v4379 = vadd.f32 %v4074, %v4378
        %v4380 = vpop.f32.mrf.mxu0
        %v4381 = vpop.f32.mrf.mxu0
        %v4382 = vadd.f32 %v4077, %v4381
        %v4383 = vpop.f32.mrf.mxu0
        %4384 = vmatprep.mubr.bf16.mxu0 0
        %4385 = vmatmul.mubr.bf16.gmra.mxu0 %v4181
        %v4386 = vpop.f32.mrf.mxu0
        %v4387 = vadd.f32 %v4082, %v4386
        %v4388 = vpop.f32.mrf.mxu0
        %v4389 = vpop.f32.mrf.mxu0
        %v4390 = vadd.f32 %v4085, %v4389
        %v4391 = vpop.f32.mrf.mxu0
        %4392 = vmatprep.mubr.bf16.mxu0 0
        %4393 = vmatmul.mubr.bf16.gmra.mxu0 %v4182
        %v4394 = vpop.f32.mrf.mxu0
        %v4395 = vadd.f32 %v4090, %v4394
        %v4396 = vpop.f32.mrf.mxu0
        %v4397 = vpop.f32.mrf.mxu0
        %v4398 = vadd.f32 %v4093, %v4397
        %v4399 = vpop.f32.mrf.mxu0
        %4400 = vmatprep.mubr.bf16.mxu0 0
        %4401 = vmatmul.mubr.bf16.gmra.mxu0 %v4183
        %v4402 = vpop.f32.mrf.mxu0
        %v4403 = vadd.f32 %v4098, %v4402
        %v4404 = vpop.f32.mrf.mxu0
        %v4405 = vpop.f32.mrf.mxu0
        %v4406 = vadd.f32 %v4101, %v4405
        %v4407 = vpop.f32.mrf.mxu0
        %4408 = vdwg.mxu0
        %s4409 = scalar_lea.vmem [#allocation2], 16
        %v4410 = vld [vmem:[%s4409] sm:$0xf]
        %v4411 = vld [vmem:[%s4409 + $0x4] sm:$0xf]
        %v4412 = vld [vmem:[%s4409 + $0x8] sm:$0xf]
        %v4413 = vld [vmem:[%s4409 + $0xc] sm:$0xf]
        %v4414 = vld [vmem:[%s4409 + $0x10] sm:$0xf]
        %v4415 = vld [vmem:[%s4409 + $0x14] sm:$0xf]
        %v4416 = vld [vmem:[%s4409 + $0x18] sm:$0xf]
        %v4417 = vld [vmem:[%s4409 + $0x1c] sm:$0xf]
        %v4418 = vld [vmem:[%s4409 + $0x20] sm:$0xf]
        %v4419 = vld [vmem:[%s4409 + $0x24] sm:$0xf]
        %v4420 = vld [vmem:[%s4409 + $0x28] sm:$0xf]
        %v4421 = vld [vmem:[%s4409 + $0x2c] sm:$0xf]
        %v4422 = vld [vmem:[%s4409 + $0x30] sm:$0xf]
        %v4423 = vld [vmem:[%s4409 + $0x34] sm:$0xf]
        %v4424 = vld [vmem:[%s4409 + $0x38] sm:$0xf]
        %v4425 = vld [vmem:[%s4409 + $0x3c] sm:$0xf]
        %v4426 = vld [vmem:[%s4409 + $0x40] sm:$0xf]
        %v4427 = vld [vmem:[%s4409 + $0x44] sm:$0xf]
        %v4428 = vld [vmem:[%s4409 + $0x48] sm:$0xf]
        %v4429 = vld [vmem:[%s4409 + $0x4c] sm:$0xf]
        %v4430 = vld [vmem:[%s4409 + $0x50] sm:$0xf]
        %v4431 = vld [vmem:[%s4409 + $0x54] sm:$0xf]
        %v4432 = vld [vmem:[%s4409 + $0x58] sm:$0xf]
        %v4433 = vld [vmem:[%s4409 + $0x5c] sm:$0xf]
        %v4434 = vld [vmem:[%s4409 + $0x60] sm:$0xf]
        %v4435 = vld [vmem:[%s4409 + $0x64] sm:$0xf]
        %v4436 = vld [vmem:[%s4409 + $0x68] sm:$0xf]
        %v4437 = vld [vmem:[%s4409 + $0x6c] sm:$0xf]
        %v4438 = vld [vmem:[%s4409 + $0x70] sm:$0xf]
        %v4439 = vld [vmem:[%s4409 + $0x74] sm:$0xf]
        %v4440 = vld [vmem:[%s4409 + $0x78] sm:$0xf]
        %v4441 = vld [vmem:[%s4409 + $0x7c] sm:$0xf]
        %s4442 = scalar_lea.vmem %s4, 128
        %v4443 = vld [vmem:[%s4442] sm:$0xf]
        %v4444 = vld [vmem:[%s4442 + $0x4] sm:$0xf]
        %v4445 = vld [vmem:[%s4442 + $0x8] sm:$0xf]
        %v4446 = vld [vmem:[%s4442 + $0xc] sm:$0xf]
        %v4447 = vld [vmem:[%s4442 + $0x10] sm:$0xf]
        %v4448 = vld [vmem:[%s4442 + $0x14] sm:$0xf]
        %v4449 = vld [vmem:[%s4442 + $0x18] sm:$0xf]
        %v4450 = vld [vmem:[%s4442 + $0x1c] sm:$0xf]
        %v4451 = vld [vmem:[%s4442 + $0x20] sm:$0xf]
        %v4452 = vld [vmem:[%s4442 + $0x24] sm:$0xf]
        %v4453 = vld [vmem:[%s4442 + $0x28] sm:$0xf]
        %v4454 = vld [vmem:[%s4442 + $0x2c] sm:$0xf]
        %v4455 = vld [vmem:[%s4442 + $0x30] sm:$0xf]
        %v4456 = vld [vmem:[%s4442 + $0x34] sm:$0xf]
        %v4457 = vld [vmem:[%s4442 + $0x38] sm:$0xf]
        %v4458 = vld [vmem:[%s4442 + $0x3c] sm:$0xf]
        %v4491 = vunpack.c.l.b16 %v4410
        %v4492 = vunpack.c.l.b16 %v4411
        %v4493 = vunpack.c.l.b16 %v4412
        %v4494 = vunpack.c.l.b16 %v4413
        %v4495 = vunpack.c.l.b16 %v4414
        %v4496 = vunpack.c.l.b16 %v4415
        %v4497 = vunpack.c.l.b16 %v4416
        %v4498 = vunpack.c.l.b16 %v4417
        %v4499 = vunpack.c.l.b16 %v4418
        %v4500 = vunpack.c.l.b16 %v4419
        %v4501 = vunpack.c.l.b16 %v4420
        %v4502 = vunpack.c.l.b16 %v4421
        %v4503 = vunpack.c.l.b16 %v4422
        %v4504 = vunpack.c.l.b16 %v4423
        %v4505 = vunpack.c.l.b16 %v4424
        %v4506 = vunpack.c.l.b16 %v4425
        %v4507 = vunpack.c.l.b16 %v4426
        %v4508 = vunpack.c.l.b16 %v4427
        %v4509 = vunpack.c.l.b16 %v4428
        %v4510 = vunpack.c.l.b16 %v4429
        %v4511 = vunpack.c.l.b16 %v4430
        %v4512 = vunpack.c.l.b16 %v4431
        %v4513 = vunpack.c.l.b16 %v4432
        %v4514 = vunpack.c.l.b16 %v4433
        %v4515 = vunpack.c.l.b16 %v4434
        %v4516 = vunpack.c.l.b16 %v4435
        %v4517 = vunpack.c.l.b16 %v4436
        %v4518 = vunpack.c.l.b16 %v4437
        %v4519 = vunpack.c.l.b16 %v4438
        %v4520 = vunpack.c.l.b16 %v4439
        %v4521 = vunpack.c.l.b16 %v4440
        %v4522 = vunpack.c.l.b16 %v4441
        %v4523 = vpack.c.b16 %v4492, %v4491
        %v4524 = vpack.c.b16 %v4494, %v4493
        %v4525 = vpack.c.b16 %v4496, %v4495
        %v4526 = vpack.c.b16 %v4498, %v4497
        %v4527 = vpack.c.b16 %v4500, %v4499
        %v4528 = vpack.c.b16 %v4502, %v4501
        %v4529 = vpack.c.b16 %v4504, %v4503
        %v4530 = vpack.c.b16 %v4506, %v4505
        %v4531 = vpack.c.b16 %v4508, %v4507
        %v4532 = vpack.c.b16 %v4510, %v4509
        %v4533 = vpack.c.b16 %v4512, %v4511
        %v4534 = vpack.c.b16 %v4514, %v4513
        %v4535 = vpack.c.b16 %v4516, %v4515
        %v4536 = vpack.c.b16 %v4518, %v4517
        %v4537 = vpack.c.b16 %v4520, %v4519
        %v4538 = vpack.c.b16 %v4522, %v4521
        %v4571 = vunpack.c.l.b16 %v4443
        %v4572 = vunpack.c.l.b16 %v4444
        %v4573 = vunpack.c.l.b16 %v4445
        %v4574 = vunpack.c.l.b16 %v4446
        %v4575 = vunpack.c.l.b16 %v4447
        %v4576 = vunpack.c.l.b16 %v4448
        %v4577 = vunpack.c.l.b16 %v4449
        %v4578 = vunpack.c.l.b16 %v4450
        %v4579 = vunpack.c.l.b16 %v4451
        %v4580 = vunpack.c.l.b16 %v4452
        %v4581 = vunpack.c.l.b16 %v4453
        %v4582 = vunpack.c.l.b16 %v4454
        %v4583 = vunpack.c.l.b16 %v4455
        %v4584 = vunpack.c.l.b16 %v4456
        %v4585 = vunpack.c.l.b16 %v4457
        %v4586 = vunpack.c.l.b16 %v4458
        %v4587 = vpack.c.b16 %v4572, %v4571
        %v4588 = vpack.c.b16 %v4574, %v4573
        %v4589 = vpack.c.b16 %v4576, %v4575
        %v4590 = vpack.c.b16 %v4578, %v4577
        %v4591 = vpack.c.b16 %v4580, %v4579
        %v4592 = vpack.c.b16 %v4582, %v4581
        %v4593 = vpack.c.b16 %v4584, %v4583
        %v4594 = vpack.c.b16 %v4586, %v4585
        %4603 = vmatprep.subr.bf16.mxu0 0
        %4604 = vmatpush1.bf16.msra.mxu0 %v4594
        %4605 = vmatprep.subr.bf16.mxu0 0
        %4606 = vmatpush1.bf16.msra.mxu0 %v4593
        %4607 = vmatprep.subr.bf16.mxu0 0
        %4608 = vmatpush1.bf16.msra.mxu0 %v4592
        %4609 = vmatprep.subr.bf16.mxu0 0
        %4610 = vmatpush1.bf16.msra.mxu0 %v4591
        %4611 = vmatprep.subr.bf16.mxu0 0
        %4612 = vmatpush1.bf16.msra.mxu0 %v4590
        %4613 = vmatprep.subr.bf16.mxu0 0
        %4614 = vmatpush1.bf16.msra.mxu0 %v4589
        %4615 = vmatprep.subr.bf16.mxu0 0
        %4616 = vmatpush1.bf16.msra.mxu0 %v4588
        %4617 = vmatprep.subr.bf16.mxu0 0
        %4618 = vmatpush1.bf16.msra.mxu0 %v4587
        %4619 = vmatprep.subr.bf16.mxu0 0
        %4620 = vmatpush2.bf16.msra.mxu0 0
        %4621 = vmatprep.subr.bf16.mxu0 0
        %4622 = vmatpush2.bf16.msra.mxu0 0
        %4623 = vmatprep.subr.bf16.mxu0 0
        %4624 = vmatpush2.bf16.msra.mxu0 0
        %4625 = vmatprep.subr.bf16.mxu0 0
        %4626 = vmatpush2.bf16.msra.mxu0 0
        %4627 = vmatprep.subr.bf16.mxu0 0
        %4628 = vmatpush2.bf16.msra.mxu0 0
        %4629 = vmatprep.subr.bf16.mxu0 0
        %4630 = vmatpush2.bf16.msra.mxu0 0
        %4631 = vmatprep.subr.bf16.mxu0 0
        %4632 = vmatpush2.bf16.msra.mxu0 0
        %4633 = vmatprep.subr.bf16.mxu0 0
        %4634 = vmatpush2.bf16.msra.mxu0 0
        %4635 = vmatprep.mubr.bf16.mxu0 0
        %4636 = vmatmul.mubr.bf16.gmra.mxu0 %v4523
        %v4637 = vpop.f32.mrf.mxu0
        %v4638 = vadd.f32 0.0, %v4637
        %v4639 = vpop.f32.mrf.mxu0
        %v4640 = vpop.f32.mrf.mxu0
        %v4641 = vadd.f32 0.0, %v4640
        %v4642 = vpop.f32.mrf.mxu0
        %4643 = vmatprep.mubr.bf16.mxu0 0
        %4644 = vmatmul.mubr.bf16.gmra.mxu0 %v4524
        %v4645 = vpop.f32.mrf.mxu0
        %v4646 = vadd.f32 0.0, %v4645
        %v4647 = vpop.f32.mrf.mxu0
        %v4648 = vpop.f32.mrf.mxu0
        %v4649 = vadd.f32 0.0, %v4648
        %v4650 = vpop.f32.mrf.mxu0
        %4651 = vmatprep.mubr.bf16.mxu0 0
        %4652 = vmatmul.mubr.bf16.gmra.mxu0 %v4525
        %v4653 = vpop.f32.mrf.mxu0
        %v4654 = vadd.f32 0.0, %v4653
        %v4655 = vpop.f32.mrf.mxu0
        %v4656 = vpop.f32.mrf.mxu0
        %v4657 = vadd.f32 0.0, %v4656
        %v4658 = vpop.f32.mrf.mxu0
        %4659 = vmatprep.mubr.bf16.mxu0 0
        %4660 = vmatmul.mubr.bf16.gmra.mxu0 %v4526
        %v4661 = vpop.f32.mrf.mxu0
        %v4662 = vadd.f32 0.0, %v4661
        %v4663 = vpop.f32.mrf.mxu0
        %v4664 = vpop.f32.mrf.mxu0
        %v4665 = vadd.f32 0.0, %v4664
        %v4666 = vpop.f32.mrf.mxu0
        %4667 = vmatprep.mubr.bf16.mxu0 0
        %4668 = vmatmul.mubr.bf16.gmra.mxu0 %v4527
        %v4669 = vpop.f32.mrf.mxu0
        %v4670 = vadd.f32 0.0, %v4669
        %v4671 = vpop.f32.mrf.mxu0
        %v4672 = vpop.f32.mrf.mxu0
        %v4673 = vadd.f32 0.0, %v4672
        %v4674 = vpop.f32.mrf.mxu0
        %4675 = vmatprep.mubr.bf16.mxu0 0
        %4676 = vmatmul.mubr.bf16.gmra.mxu0 %v4528
        %v4677 = vpop.f32.mrf.mxu0
        %v4678 = vadd.f32 0.0, %v4677
        %v4679 = vpop.f32.mrf.mxu0
        %v4680 = vpop.f32.mrf.mxu0
        %v4681 = vadd.f32 0.0, %v4680
        %v4682 = vpop.f32.mrf.mxu0
        %4683 = vmatprep.mubr.bf16.mxu0 0
        %4684 = vmatmul.mubr.bf16.gmra.mxu0 %v4529
        %v4685 = vpop.f32.mrf.mxu0
        %v4686 = vadd.f32 0.0, %v4685
        %v4687 = vpop.f32.mrf.mxu0
        %v4688 = vpop.f32.mrf.mxu0
        %v4689 = vadd.f32 0.0, %v4688
        %v4690 = vpop.f32.mrf.mxu0
        %4691 = vmatprep.mubr.bf16.mxu0 0
        %4692 = vmatmul.mubr.bf16.gmra.mxu0 %v4530
        %v4693 = vpop.f32.mrf.mxu0
        %v4694 = vadd.f32 0.0, %v4693
        %v4695 = vpop.f32.mrf.mxu0
        %v4696 = vpop.f32.mrf.mxu0
        %v4697 = vadd.f32 0.0, %v4696
        %v4698 = vpop.f32.mrf.mxu0
        %4699 = vmatprep.mubr.bf16.mxu0 0
        %4700 = vmatmul.mubr.bf16.gmra.mxu0 %v4531
        %v4701 = vpop.f32.mrf.mxu0
        %v4702 = vadd.f32 0.0, %v4701
        %v4703 = vpop.f32.mrf.mxu0
        %v4704 = vpop.f32.mrf.mxu0
        %v4705 = vadd.f32 0.0, %v4704
        %v4706 = vpop.f32.mrf.mxu0
        %4707 = vmatprep.mubr.bf16.mxu0 0
        %4708 = vmatmul.mubr.bf16.gmra.mxu0 %v4532
        %v4709 = vpop.f32.mrf.mxu0
        %v4710 = vadd.f32 0.0, %v4709
        %v4711 = vpop.f32.mrf.mxu0
        %v4712 = vpop.f32.mrf.mxu0
        %v4713 = vadd.f32 0.0, %v4712
        %v4714 = vpop.f32.mrf.mxu0
        %4715 = vmatprep.mubr.bf16.mxu0 0
        %4716 = vmatmul.mubr.bf16.gmra.mxu0 %v4533
        %v4717 = vpop.f32.mrf.mxu0
        %v4718 = vadd.f32 0.0, %v4717
        %v4719 = vpop.f32.mrf.mxu0
        %v4720 = vpop.f32.mrf.mxu0
        %v4721 = vadd.f32 0.0, %v4720
        %v4722 = vpop.f32.mrf.mxu0
        %4723 = vmatprep.mubr.bf16.mxu0 0
        %4724 = vmatmul.mubr.bf16.gmra.mxu0 %v4534
        %v4725 = vpop.f32.mrf.mxu0
        %v4726 = vadd.f32 0.0, %v4725
        %v4727 = vpop.f32.mrf.mxu0
        %v4728 = vpop.f32.mrf.mxu0
        %v4729 = vadd.f32 0.0, %v4728
        %v4730 = vpop.f32.mrf.mxu0
        %4731 = vmatprep.mubr.bf16.mxu0 0
        %4732 = vmatmul.mubr.bf16.gmra.mxu0 %v4535
        %v4733 = vpop.f32.mrf.mxu0
        %v4734 = vadd.f32 0.0, %v4733
        %v4735 = vpop.f32.mrf.mxu0
        %v4736 = vpop.f32.mrf.mxu0
        %v4737 = vadd.f32 0.0, %v4736
        %v4738 = vpop.f32.mrf.mxu0
        %4739 = vmatprep.mubr.bf16.mxu0 0
        %4740 = vmatmul.mubr.bf16.gmra.mxu0 %v4536
        %v4741 = vpop.f32.mrf.mxu0
        %v4742 = vadd.f32 0.0, %v4741
        %v4743 = vpop.f32.mrf.mxu0
        %v4744 = vpop.f32.mrf.mxu0
        %v4745 = vadd.f32 0.0, %v4744
        %v4746 = vpop.f32.mrf.mxu0
        %4747 = vmatprep.mubr.bf16.mxu0 0
        %4748 = vmatmul.mubr.bf16.gmra.mxu0 %v4537
        %v4749 = vpop.f32.mrf.mxu0
        %v4750 = vadd.f32 0.0, %v4749
        %v4751 = vpop.f32.mrf.mxu0
        %v4752 = vpop.f32.mrf.mxu0
        %v4753 = vadd.f32 0.0, %v4752
        %v4754 = vpop.f32.mrf.mxu0
        %4755 = vmatprep.mubr.bf16.mxu0 0
        %4756 = vmatmul.mubr.bf16.gmra.mxu0 %v4538
        %v4757 = vpop.f32.mrf.mxu0
        %v4758 = vadd.f32 0.0, %v4757
        %v4759 = vpop.f32.mrf.mxu0
        %v4760 = vpop.f32.mrf.mxu0
        %v4761 = vadd.f32 0.0, %v4760
        %v4762 = vpop.f32.mrf.mxu0
        %4763 = vdwg.mxu0
        %v4764 = vadd.f32 %v4283, %v4638
        %v4765 = vadd.f32 %v4286, %v4641
        %v4766 = vadd.f32 %v4291, %v4646
        %v4767 = vadd.f32 %v4294, %v4649
        %v4768 = vadd.f32 %v4299, %v4654
        %v4769 = vadd.f32 %v4302, %v4657
        %v4770 = vadd.f32 %v4307, %v4662
        %v4771 = vadd.f32 %v4310, %v4665
        %v4772 = vadd.f32 %v4315, %v4670
        %v4773 = vadd.f32 %v4318, %v4673
        %v4774 = vadd.f32 %v4323, %v4678
        %v4775 = vadd.f32 %v4326, %v4681
        %v4776 = vadd.f32 %v4331, %v4686
        %v4777 = vadd.f32 %v4334, %v4689
        %v4778 = vadd.f32 %v4339, %v4694
        %v4779 = vadd.f32 %v4342, %v4697
        %v4780 = vadd.f32 %v4347, %v4702
        %v4781 = vadd.f32 %v4350, %v4705
        %v4782 = vadd.f32 %v4355, %v4710
        %v4783 = vadd.f32 %v4358, %v4713
        %v4784 = vadd.f32 %v4363, %v4718
        %v4785 = vadd.f32 %v4366, %v4721
        %v4786 = vadd.f32 %v4371, %v4726
        %v4787 = vadd.f32 %v4374, %v4729
        %v4788 = vadd.f32 %v4379, %v4734
        %v4789 = vadd.f32 %v4382, %v4737
        %v4790 = vadd.f32 %v4387, %v4742
        %v4791 = vadd.f32 %v4390, %v4745
        %v4792 = vadd.f32 %v4395, %v4750
        %v4793 = vadd.f32 %v4398, %v4753
        %v4794 = vadd.f32 %v4403, %v4758
        %v4795 = vadd.f32 %v4406, %v4761
        %s4796 = scalar_lea.vmem [#allocation2], 24
        %v4797 = vld [vmem:[%s4796] sm:$0xf]
        %v4798 = vld [vmem:[%s4796 + $0x4] sm:$0xf]
        %v4799 = vld [vmem:[%s4796 + $0x8] sm:$0xf]
        %v4800 = vld [vmem:[%s4796 + $0xc] sm:$0xf]
        %v4801 = vld [vmem:[%s4796 + $0x10] sm:$0xf]
        %v4802 = vld [vmem:[%s4796 + $0x14] sm:$0xf]
        %v4803 = vld [vmem:[%s4796 + $0x18] sm:$0xf]
        %v4804 = vld [vmem:[%s4796 + $0x1c] sm:$0xf]
        %v4805 = vld [vmem:[%s4796 + $0x20] sm:$0xf]
        %v4806 = vld [vmem:[%s4796 + $0x24] sm:$0xf]
        %v4807 = vld [vmem:[%s4796 + $0x28] sm:$0xf]
        %v4808 = vld [vmem:[%s4796 + $0x2c] sm:$0xf]
        %v4809 = vld [vmem:[%s4796 + $0x30] sm:$0xf]
        %v4810 = vld [vmem:[%s4796 + $0x34] sm:$0xf]
        %v4811 = vld [vmem:[%s4796 + $0x38] sm:$0xf]
        %v4812 = vld [vmem:[%s4796 + $0x3c] sm:$0xf]
        %v4813 = vld [vmem:[%s4796 + $0x40] sm:$0xf]
        %v4814 = vld [vmem:[%s4796 + $0x44] sm:$0xf]
        %v4815 = vld [vmem:[%s4796 + $0x48] sm:$0xf]
        %v4816 = vld [vmem:[%s4796 + $0x4c] sm:$0xf]
        %v4817 = vld [vmem:[%s4796 + $0x50] sm:$0xf]
        %v4818 = vld [vmem:[%s4796 + $0x54] sm:$0xf]
        %v4819 = vld [vmem:[%s4796 + $0x58] sm:$0xf]
        %v4820 = vld [vmem:[%s4796 + $0x5c] sm:$0xf]
        %v4821 = vld [vmem:[%s4796 + $0x60] sm:$0xf]
        %v4822 = vld [vmem:[%s4796 + $0x64] sm:$0xf]
        %v4823 = vld [vmem:[%s4796 + $0x68] sm:$0xf]
        %v4824 = vld [vmem:[%s4796 + $0x6c] sm:$0xf]
        %v4825 = vld [vmem:[%s4796 + $0x70] sm:$0xf]
        %v4826 = vld [vmem:[%s4796 + $0x74] sm:$0xf]
        %v4827 = vld [vmem:[%s4796 + $0x78] sm:$0xf]
        %v4828 = vld [vmem:[%s4796 + $0x7c] sm:$0xf]
        %s4829 = scalar_lea.vmem %s4, 192
        %v4830 = vld [vmem:[%s4829] sm:$0xf]
        %v4831 = vld [vmem:[%s4829 + $0x4] sm:$0xf]
        %v4832 = vld [vmem:[%s4829 + $0x8] sm:$0xf]
        %v4833 = vld [vmem:[%s4829 + $0xc] sm:$0xf]
        %v4834 = vld [vmem:[%s4829 + $0x10] sm:$0xf]
        %v4835 = vld [vmem:[%s4829 + $0x14] sm:$0xf]
        %v4836 = vld [vmem:[%s4829 + $0x18] sm:$0xf]
        %v4837 = vld [vmem:[%s4829 + $0x1c] sm:$0xf]
        %v4838 = vld [vmem:[%s4829 + $0x20] sm:$0xf]
        %v4839 = vld [vmem:[%s4829 + $0x24] sm:$0xf]
        %v4840 = vld [vmem:[%s4829 + $0x28] sm:$0xf]
        %v4841 = vld [vmem:[%s4829 + $0x2c] sm:$0xf]
        %v4842 = vld [vmem:[%s4829 + $0x30] sm:$0xf]
        %v4843 = vld [vmem:[%s4829 + $0x34] sm:$0xf]
        %v4844 = vld [vmem:[%s4829 + $0x38] sm:$0xf]
        %v4845 = vld [vmem:[%s4829 + $0x3c] sm:$0xf]
        %v4878 = vunpack.c.l.b16 %v4797
        %v4879 = vunpack.c.l.b16 %v4798
        %v4880 = vunpack.c.l.b16 %v4799
        %v4881 = vunpack.c.l.b16 %v4800
        %v4882 = vunpack.c.l.b16 %v4801
        %v4883 = vunpack.c.l.b16 %v4802
        %v4884 = vunpack.c.l.b16 %v4803
        %v4885 = vunpack.c.l.b16 %v4804
        %v4886 = vunpack.c.l.b16 %v4805
        %v4887 = vunpack.c.l.b16 %v4806
        %v4888 = vunpack.c.l.b16 %v4807
        %v4889 = vunpack.c.l.b16 %v4808
        %v4890 = vunpack.c.l.b16 %v4809
        %v4891 = vunpack.c.l.b16 %v4810
        %v4892 = vunpack.c.l.b16 %v4811
        %v4893 = vunpack.c.l.b16 %v4812
        %v4894 = vunpack.c.l.b16 %v4813
        %v4895 = vunpack.c.l.b16 %v4814
        %v4896 = vunpack.c.l.b16 %v4815
        %v4897 = vunpack.c.l.b16 %v4816
        %v4898 = vunpack.c.l.b16 %v4817
        %v4899 = vunpack.c.l.b16 %v4818
        %v4900 = vunpack.c.l.b16 %v4819
        %v4901 = vunpack.c.l.b16 %v4820
        %v4902 = vunpack.c.l.b16 %v4821
        %v4903 = vunpack.c.l.b16 %v4822
        %v4904 = vunpack.c.l.b16 %v4823
        %v4905 = vunpack.c.l.b16 %v4824
        %v4906 = vunpack.c.l.b16 %v4825
        %v4907 = vunpack.c.l.b16 %v4826
        %v4908 = vunpack.c.l.b16 %v4827
        %v4909 = vunpack.c.l.b16 %v4828
        %v4910 = vpack.c.b16 %v4879, %v4878
        %v4911 = vpack.c.b16 %v4881, %v4880
        %v4912 = vpack.c.b16 %v4883, %v4882
        %v4913 = vpack.c.b16 %v4885, %v4884
        %v4914 = vpack.c.b16 %v4887, %v4886
        %v4915 = vpack.c.b16 %v4889, %v4888
        %v4916 = vpack.c.b16 %v4891, %v4890
        %v4917 = vpack.c.b16 %v4893, %v4892
        %v4918 = vpack.c.b16 %v4895, %v4894
        %v4919 = vpack.c.b16 %v4897, %v4896
        %v4920 = vpack.c.b16 %v4899, %v4898
        %v4921 = vpack.c.b16 %v4901, %v4900
        %v4922 = vpack.c.b16 %v4903, %v4902
        %v4923 = vpack.c.b16 %v4905, %v4904
        %v4924 = vpack.c.b16 %v4907, %v4906
        %v4925 = vpack.c.b16 %v4909, %v4908
        %v4958 = vunpack.c.l.b16 %v4830
        %v4959 = vunpack.c.l.b16 %v4831
        %v4960 = vunpack.c.l.b16 %v4832
        %v4961 = vunpack.c.l.b16 %v4833
        %v4962 = vunpack.c.l.b16 %v4834
        %v4963 = vunpack.c.l.b16 %v4835
        %v4964 = vunpack.c.l.b16 %v4836
        %v4965 = vunpack.c.l.b16 %v4837
        %v4966 = vunpack.c.l.b16 %v4838
        %v4967 = vunpack.c.l.b16 %v4839
        %v4968 = vunpack.c.l.b16 %v4840
        %v4969 = vunpack.c.l.b16 %v4841
        %v4970 = vunpack.c.l.b16 %v4842
        %v4971 = vunpack.c.l.b16 %v4843
        %v4972 = vunpack.c.l.b16 %v4844
        %v4973 = vunpack.c.l.b16 %v4845
        %v4974 = vpack.c.b16 %v4959, %v4958
        %v4975 = vpack.c.b16 %v4961, %v4960
        %v4976 = vpack.c.b16 %v4963, %v4962
        %v4977 = vpack.c.b16 %v4965, %v4964
        %v4978 = vpack.c.b16 %v4967, %v4966
        %v4979 = vpack.c.b16 %v4969, %v4968
        %v4980 = vpack.c.b16 %v4971, %v4970
        %v4981 = vpack.c.b16 %v4973, %v4972
        %4990 = vmatprep.subr.bf16.mxu0 0
        %4991 = vmatpush1.bf16.msra.mxu0 %v4981
        %4992 = vmatprep.subr.bf16.mxu0 0
        %4993 = vmatpush1.bf16.msra.mxu0 %v4980
        %4994 = vmatprep.subr.bf16.mxu0 0
        %4995 = vmatpush1.bf16.msra.mxu0 %v4979
        %4996 = vmatprep.subr.bf16.mxu0 0
        %4997 = vmatpush1.bf16.msra.mxu0 %v4978
        %4998 = vmatprep.subr.bf16.mxu0 0
        %4999 = vmatpush1.bf16.msra.mxu0 %v4977
        %5000 = vmatprep.subr.bf16.mxu0 0
        %5001 = vmatpush1.bf16.msra.mxu0 %v4976
        %5002 = vmatprep.subr.bf16.mxu0 0
        %5003 = vmatpush1.bf16.msra.mxu0 %v4975
        %5004 = vmatprep.subr.bf16.mxu0 0
        %5005 = vmatpush1.bf16.msra.mxu0 %v4974
        %5006 = vmatprep.subr.bf16.mxu0 0
        %5007 = vmatpush2.bf16.msra.mxu0 0
        %5008 = vmatprep.subr.bf16.mxu0 0
        %5009 = vmatpush2.bf16.msra.mxu0 0
        %5010 = vmatprep.subr.bf16.mxu0 0
        %5011 = vmatpush2.bf16.msra.mxu0 0
        %5012 = vmatprep.subr.bf16.mxu0 0
        %5013 = vmatpush2.bf16.msra.mxu0 0
        %5014 = vmatprep.subr.bf16.mxu0 0
        %5015 = vmatpush2.bf16.msra.mxu0 0
        %5016 = vmatprep.subr.bf16.mxu0 0
        %5017 = vmatpush2.bf16.msra.mxu0 0
        %5018 = vmatprep.subr.bf16.mxu0 0
        %5019 = vmatpush2.bf16.msra.mxu0 0
        %5020 = vmatprep.subr.bf16.mxu0 0
        %5021 = vmatpush2.bf16.msra.mxu0 0
        %5022 = vmatprep.mubr.bf16.mxu0 0
        %5023 = vmatmul.mubr.bf16.gmra.mxu0 %v4910
        %v5024 = vpop.f32.mrf.mxu0
        %v5025 = vadd.f32 0.0, %v5024
        %v5026 = vpop.f32.mrf.mxu0
        %v5027 = vpop.f32.mrf.mxu0
        %v5028 = vadd.f32 0.0, %v5027
        %v5029 = vpop.f32.mrf.mxu0
        %5030 = vmatprep.mubr.bf16.mxu0 0
        %5031 = vmatmul.mubr.bf16.gmra.mxu0 %v4911
        %v5032 = vpop.f32.mrf.mxu0
        %v5033 = vadd.f32 0.0, %v5032
        %v5034 = vpop.f32.mrf.mxu0
        %v5035 = vpop.f32.mrf.mxu0
        %v5036 = vadd.f32 0.0, %v5035
        %v5037 = vpop.f32.mrf.mxu0
        %5038 = vmatprep.mubr.bf16.mxu0 0
        %5039 = vmatmul.mubr.bf16.gmra.mxu0 %v4912
        %v5040 = vpop.f32.mrf.mxu0
        %v5041 = vadd.f32 0.0, %v5040
        %v5042 = vpop.f32.mrf.mxu0
        %v5043 = vpop.f32.mrf.mxu0
        %v5044 = vadd.f32 0.0, %v5043
        %v5045 = vpop.f32.mrf.mxu0
        %5046 = vmatprep.mubr.bf16.mxu0 0
        %5047 = vmatmul.mubr.bf16.gmra.mxu0 %v4913
        %v5048 = vpop.f32.mrf.mxu0
        %v5049 = vadd.f32 0.0, %v5048
        %v5050 = vpop.f32.mrf.mxu0
        %v5051 = vpop.f32.mrf.mxu0
        %v5052 = vadd.f32 0.0, %v5051
        %v5053 = vpop.f32.mrf.mxu0
        %5054 = vmatprep.mubr.bf16.mxu0 0
        %5055 = vmatmul.mubr.bf16.gmra.mxu0 %v4914
        %v5056 = vpop.f32.mrf.mxu0
        %v5057 = vadd.f32 0.0, %v5056
        %v5058 = vpop.f32.mrf.mxu0
        %v5059 = vpop.f32.mrf.mxu0
        %v5060 = vadd.f32 0.0, %v5059
        %v5061 = vpop.f32.mrf.mxu0
        %5062 = vmatprep.mubr.bf16.mxu0 0
        %5063 = vmatmul.mubr.bf16.gmra.mxu0 %v4915
        %v5064 = vpop.f32.mrf.mxu0
        %v5065 = vadd.f32 0.0, %v5064
        %v5066 = vpop.f32.mrf.mxu0
        %v5067 = vpop.f32.mrf.mxu0
        %v5068 = vadd.f32 0.0, %v5067
        %v5069 = vpop.f32.mrf.mxu0
        %5070 = vmatprep.mubr.bf16.mxu0 0
        %5071 = vmatmul.mubr.bf16.gmra.mxu0 %v4916
        %v5072 = vpop.f32.mrf.mxu0
        %v5073 = vadd.f32 0.0, %v5072
        %v5074 = vpop.f32.mrf.mxu0
        %v5075 = vpop.f32.mrf.mxu0
        %v5076 = vadd.f32 0.0, %v5075
        %v5077 = vpop.f32.mrf.mxu0
        %5078 = vmatprep.mubr.bf16.mxu0 0
        %5079 = vmatmul.mubr.bf16.gmra.mxu0 %v4917
        %v5080 = vpop.f32.mrf.mxu0
        %v5081 = vadd.f32 0.0, %v5080
        %v5082 = vpop.f32.mrf.mxu0
        %v5083 = vpop.f32.mrf.mxu0
        %v5084 = vadd.f32 0.0, %v5083
        %v5085 = vpop.f32.mrf.mxu0
        %5086 = vmatprep.mubr.bf16.mxu0 0
        %5087 = vmatmul.mubr.bf16.gmra.mxu0 %v4918
        %v5088 = vpop.f32.mrf.mxu0
        %v5089 = vadd.f32 0.0, %v5088
        %v5090 = vpop.f32.mrf.mxu0
        %v5091 = vpop.f32.mrf.mxu0
        %v5092 = vadd.f32 0.0, %v5091
        %v5093 = vpop.f32.mrf.mxu0
        %5094 = vmatprep.mubr.bf16.mxu0 0
        %5095 = vmatmul.mubr.bf16.gmra.mxu0 %v4919
        %v5096 = vpop.f32.mrf.mxu0
        %v5097 = vadd.f32 0.0, %v5096
        %v5098 = vpop.f32.mrf.mxu0
        %v5099 = vpop.f32.mrf.mxu0
        %v5100 = vadd.f32 0.0, %v5099
        %v5101 = vpop.f32.mrf.mxu0
        %5102 = vmatprep.mubr.bf16.mxu0 0
        %5103 = vmatmul.mubr.bf16.gmra.mxu0 %v4920
        %v5104 = vpop.f32.mrf.mxu0
        %v5105 = vadd.f32 0.0, %v5104
        %v5106 = vpop.f32.mrf.mxu0
        %v5107 = vpop.f32.mrf.mxu0
        %v5108 = vadd.f32 0.0, %v5107
        %v5109 = vpop.f32.mrf.mxu0
        %5110 = vmatprep.mubr.bf16.mxu0 0
        %5111 = vmatmul.mubr.bf16.gmra.mxu0 %v4921
        %v5112 = vpop.f32.mrf.mxu0
        %v5113 = vadd.f32 0.0, %v5112
        %v5114 = vpop.f32.mrf.mxu0
        %v5115 = vpop.f32.mrf.mxu0
        %v5116 = vadd.f32 0.0, %v5115
        %v5117 = vpop.f32.mrf.mxu0
        %5118 = vmatprep.mubr.bf16.mxu0 0
        %5119 = vmatmul.mubr.bf16.gmra.mxu0 %v4922
        %v5120 = vpop.f32.mrf.mxu0
        %v5121 = vadd.f32 0.0, %v5120
        %v5122 = vpop.f32.mrf.mxu0
        %v5123 = vpop.f32.mrf.mxu0
        %v5124 = vadd.f32 0.0, %v5123
        %v5125 = vpop.f32.mrf.mxu0
        %5126 = vmatprep.mubr.bf16.mxu0 0
        %5127 = vmatmul.mubr.bf16.gmra.mxu0 %v4923
        %v5128 = vpop.f32.mrf.mxu0
        %v5129 = vadd.f32 0.0, %v5128
        %v5130 = vpop.f32.mrf.mxu0
        %v5131 = vpop.f32.mrf.mxu0
        %v5132 = vadd.f32 0.0, %v5131
        %v5133 = vpop.f32.mrf.mxu0
        %5134 = vmatprep.mubr.bf16.mxu0 0
        %5135 = vmatmul.mubr.bf16.gmra.mxu0 %v4924
        %v5136 = vpop.f32.mrf.mxu0
        %v5137 = vadd.f32 0.0, %v5136
        %v5138 = vpop.f32.mrf.mxu0
        %v5139 = vpop.f32.mrf.mxu0
        %v5140 = vadd.f32 0.0, %v5139
        %v5141 = vpop.f32.mrf.mxu0
        %5142 = vmatprep.mubr.bf16.mxu0 0
        %5143 = vmatmul.mubr.bf16.gmra.mxu0 %v4925
        %v5144 = vpop.f32.mrf.mxu0
        %v5145 = vadd.f32 0.0, %v5144
        %v5146 = vpop.f32.mrf.mxu0
        %v5147 = vpop.f32.mrf.mxu0
        %v5148 = vadd.f32 0.0, %v5147
        %v5149 = vpop.f32.mrf.mxu0
        %5150 = vdwg.mxu0
        %v5151 = vadd.f32 %v4764, %v5025
        %v5152 = vadd.f32 %v4765, %v5028
        %v5153 = vadd.f32 %v4766, %v5033
        %v5154 = vadd.f32 %v4767, %v5036
        %v5155 = vadd.f32 %v4768, %v5041
        %v5156 = vadd.f32 %v4769, %v5044
        %v5157 = vadd.f32 %v4770, %v5049
        %v5158 = vadd.f32 %v4771, %v5052
        %v5159 = vadd.f32 %v4772, %v5057
        %v5160 = vadd.f32 %v4773, %v5060
        %v5161 = vadd.f32 %v4774, %v5065
        %v5162 = vadd.f32 %v4775, %v5068
        %v5163 = vadd.f32 %v4776, %v5073
        %v5164 = vadd.f32 %v4777, %v5076
        %v5165 = vadd.f32 %v4778, %v5081
        %v5166 = vadd.f32 %v4779, %v5084
        %v5167 = vadd.f32 %v4780, %v5089
        %v5168 = vadd.f32 %v4781, %v5092
        %v5169 = vadd.f32 %v4782, %v5097
        %v5170 = vadd.f32 %v4783, %v5100
        %v5171 = vadd.f32 %v4784, %v5105
        %v5172 = vadd.f32 %v4785, %v5108
        %v5173 = vadd.f32 %v4786, %v5113
        %v5174 = vadd.f32 %v4787, %v5116
        %v5175 = vadd.f32 %v4788, %v5121
        %v5176 = vadd.f32 %v4789, %v5124
        %v5177 = vadd.f32 %v4790, %v5129
        %v5178 = vadd.f32 %v4791, %v5132
        %v5179 = vadd.f32 %v4792, %v5137
        %v5180 = vadd.f32 %v4793, %v5140
        %v5181 = vadd.f32 %v4794, %v5145
        %v5182 = vadd.f32 %v4795, %v5148
        %v5183 = vld [vmem:[%s3668] sm:$0xf]
        %v5184 = vld [vmem:[%s3668 + $0x4] sm:$0xf]
        %v5185 = vld [vmem:[%s3668 + $0x8] sm:$0xf]
        %v5186 = vld [vmem:[%s3668 + $0xc] sm:$0xf]
        %v5187 = vld [vmem:[%s3668 + $0x10] sm:$0xf]
        %v5188 = vld [vmem:[%s3668 + $0x14] sm:$0xf]
        %v5189 = vld [vmem:[%s3668 + $0x18] sm:$0xf]
        %v5190 = vld [vmem:[%s3668 + $0x1c] sm:$0xf]
        %v5191 = vld [vmem:[%s3668 + $0x20] sm:$0xf]
        %v5192 = vld [vmem:[%s3668 + $0x24] sm:$0xf]
        %v5193 = vld [vmem:[%s3668 + $0x28] sm:$0xf]
        %v5194 = vld [vmem:[%s3668 + $0x2c] sm:$0xf]
        %v5195 = vld [vmem:[%s3668 + $0x30] sm:$0xf]
        %v5196 = vld [vmem:[%s3668 + $0x34] sm:$0xf]
        %v5197 = vld [vmem:[%s3668 + $0x38] sm:$0xf]
        %v5198 = vld [vmem:[%s3668 + $0x3c] sm:$0xf]
        %v5199 = vld [vmem:[%s3668 + $0x40] sm:$0xf]
        %v5200 = vld [vmem:[%s3668 + $0x44] sm:$0xf]
        %v5201 = vld [vmem:[%s3668 + $0x48] sm:$0xf]
        %v5202 = vld [vmem:[%s3668 + $0x4c] sm:$0xf]
        %v5203 = vld [vmem:[%s3668 + $0x50] sm:$0xf]
        %v5204 = vld [vmem:[%s3668 + $0x54] sm:$0xf]
        %v5205 = vld [vmem:[%s3668 + $0x58] sm:$0xf]
        %v5206 = vld [vmem:[%s3668 + $0x5c] sm:$0xf]
        %v5207 = vld [vmem:[%s3668 + $0x60] sm:$0xf]
        %v5208 = vld [vmem:[%s3668 + $0x64] sm:$0xf]
        %v5209 = vld [vmem:[%s3668 + $0x68] sm:$0xf]
        %v5210 = vld [vmem:[%s3668 + $0x6c] sm:$0xf]
        %v5211 = vld [vmem:[%s3668 + $0x70] sm:$0xf]
        %v5212 = vld [vmem:[%s3668 + $0x74] sm:$0xf]
        %v5213 = vld [vmem:[%s3668 + $0x78] sm:$0xf]
        %v5214 = vld [vmem:[%s3668 + $0x7c] sm:$0xf]
        %s5215 = scalar_lea.vmem %s4, 256
        %v5216 = vld [vmem:[%s5215] sm:$0xf]
        %v5217 = vld [vmem:[%s5215 + $0x4] sm:$0xf]
        %v5218 = vld [vmem:[%s5215 + $0x8] sm:$0xf]
        %v5219 = vld [vmem:[%s5215 + $0xc] sm:$0xf]
        %v5220 = vld [vmem:[%s5215 + $0x10] sm:$0xf]
        %v5221 = vld [vmem:[%s5215 + $0x14] sm:$0xf]
        %v5222 = vld [vmem:[%s5215 + $0x18] sm:$0xf]
        %v5223 = vld [vmem:[%s5215 + $0x1c] sm:$0xf]
        %v5224 = vld [vmem:[%s5215 + $0x20] sm:$0xf]
        %v5225 = vld [vmem:[%s5215 + $0x24] sm:$0xf]
        %v5226 = vld [vmem:[%s5215 + $0x28] sm:$0xf]
        %v5227 = vld [vmem:[%s5215 + $0x2c] sm:$0xf]
        %v5228 = vld [vmem:[%s5215 + $0x30] sm:$0xf]
        %v5229 = vld [vmem:[%s5215 + $0x34] sm:$0xf]
        %v5230 = vld [vmem:[%s5215 + $0x38] sm:$0xf]
        %v5231 = vld [vmem:[%s5215 + $0x3c] sm:$0xf]
        %v5264 = vunpack.c.l.b16 %v5183
        %v5265 = vunpack.c.l.b16 %v5184
        %v5266 = vunpack.c.l.b16 %v5185
        %v5267 = vunpack.c.l.b16 %v5186
        %v5268 = vunpack.c.l.b16 %v5187
        %v5269 = vunpack.c.l.b16 %v5188
        %v5270 = vunpack.c.l.b16 %v5189
        %v5271 = vunpack.c.l.b16 %v5190
        %v5272 = vunpack.c.l.b16 %v5191
        %v5273 = vunpack.c.l.b16 %v5192
        %v5274 = vunpack.c.l.b16 %v5193
        %v5275 = vunpack.c.l.b16 %v5194
        %v5276 = vunpack.c.l.b16 %v5195
        %v5277 = vunpack.c.l.b16 %v5196
        %v5278 = vunpack.c.l.b16 %v5197
        %v5279 = vunpack.c.l.b16 %v5198
        %v5280 = vunpack.c.l.b16 %v5199
        %v5281 = vunpack.c.l.b16 %v5200
        %v5282 = vunpack.c.l.b16 %v5201
        %v5283 = vunpack.c.l.b16 %v5202
        %v5284 = vunpack.c.l.b16 %v5203
        %v5285 = vunpack.c.l.b16 %v5204
        %v5286 = vunpack.c.l.b16 %v5205
        %v5287 = vunpack.c.l.b16 %v5206
        %v5288 = vunpack.c.l.b16 %v5207
        %v5289 = vunpack.c.l.b16 %v5208
        %v5290 = vunpack.c.l.b16 %v5209
        %v5291 = vunpack.c.l.b16 %v5210
        %v5292 = vunpack.c.l.b16 %v5211
        %v5293 = vunpack.c.l.b16 %v5212
        %v5294 = vunpack.c.l.b16 %v5213
        %v5295 = vunpack.c.l.b16 %v5214
        %v5296 = vpack.c.b16 %v5265, %v5264
        %v5297 = vpack.c.b16 %v5267, %v5266
        %v5298 = vpack.c.b16 %v5269, %v5268
        %v5299 = vpack.c.b16 %v5271, %v5270
        %v5300 = vpack.c.b16 %v5273, %v5272
        %v5301 = vpack.c.b16 %v5275, %v5274
        %v5302 = vpack.c.b16 %v5277, %v5276
        %v5303 = vpack.c.b16 %v5279, %v5278
        %v5304 = vpack.c.b16 %v5281, %v5280
        %v5305 = vpack.c.b16 %v5283, %v5282
        %v5306 = vpack.c.b16 %v5285, %v5284
        %v5307 = vpack.c.b16 %v5287, %v5286
        %v5308 = vpack.c.b16 %v5289, %v5288
        %v5309 = vpack.c.b16 %v5291, %v5290
        %v5310 = vpack.c.b16 %v5293, %v5292
        %v5311 = vpack.c.b16 %v5295, %v5294
        %v5344 = vunpack.c.l.b16 %v5216
        %v5345 = vunpack.c.l.b16 %v5217
        %v5346 = vunpack.c.l.b16 %v5218
        %v5347 = vunpack.c.l.b16 %v5219
        %v5348 = vunpack.c.l.b16 %v5220
        %v5349 = vunpack.c.l.b16 %v5221
        %v5350 = vunpack.c.l.b16 %v5222
        %v5351 = vunpack.c.l.b16 %v5223
        %v5352 = vunpack.c.l.b16 %v5224
        %v5353 = vunpack.c.l.b16 %v5225
        %v5354 = vunpack.c.l.b16 %v5226
        %v5355 = vunpack.c.l.b16 %v5227
        %v5356 = vunpack.c.l.b16 %v5228
        %v5357 = vunpack.c.l.b16 %v5229
        %v5358 = vunpack.c.l.b16 %v5230
        %v5359 = vunpack.c.l.b16 %v5231
        %v5360 = vpack.c.b16 %v5345, %v5344
        %v5361 = vpack.c.b16 %v5347, %v5346
        %v5362 = vpack.c.b16 %v5349, %v5348
        %v5363 = vpack.c.b16 %v5351, %v5350
        %v5364 = vpack.c.b16 %v5353, %v5352
        %v5365 = vpack.c.b16 %v5355, %v5354
        %v5366 = vpack.c.b16 %v5357, %v5356
        %v5367 = vpack.c.b16 %v5359, %v5358
        %5376 = vmatprep.subr.bf16.mxu0 0
        %5377 = vmatpush1.bf16.msra.mxu0 %v5367
        %5378 = vmatprep.subr.bf16.mxu0 0
        %5379 = vmatpush1.bf16.msra.mxu0 %v5366
        %5380 = vmatprep.subr.bf16.mxu0 0
        %5381 = vmatpush1.bf16.msra.mxu0 %v5365
        %5382 = vmatprep.subr.bf16.mxu0 0
        %5383 = vmatpush1.bf16.msra.mxu0 %v5364
        %5384 = vmatprep.subr.bf16.mxu0 0
        %5385 = vmatpush1.bf16.msra.mxu0 %v5363
        %5386 = vmatprep.subr.bf16.mxu0 0
        %5387 = vmatpush1.bf16.msra.mxu0 %v5362
        %5388 = vmatprep.subr.bf16.mxu0 0
        %5389 = vmatpush1.bf16.msra.mxu0 %v5361
        %5390 = vmatprep.subr.bf16.mxu0 0
        %5391 = vmatpush1.bf16.msra.mxu0 %v5360
        %5392 = vmatprep.subr.bf16.mxu0 0
        %5393 = vmatpush2.bf16.msra.mxu0 0
        %5394 = vmatprep.subr.bf16.mxu0 0
        %5395 = vmatpush2.bf16.msra.mxu0 0
        %5396 = vmatprep.subr.bf16.mxu0 0
        %5397 = vmatpush2.bf16.msra.mxu0 0
        %5398 = vmatprep.subr.bf16.mxu0 0
        %5399 = vmatpush2.bf16.msra.mxu0 0
        %5400 = vmatprep.subr.bf16.mxu0 0
        %5401 = vmatpush2.bf16.msra.mxu0 0
        %5402 = vmatprep.subr.bf16.mxu0 0
        %5403 = vmatpush2.bf16.msra.mxu0 0
        %5404 = vmatprep.subr.bf16.mxu0 0
        %5405 = vmatpush2.bf16.msra.mxu0 0
        %5406 = vmatprep.subr.bf16.mxu0 0
        %5407 = vmatpush2.bf16.msra.mxu0 0
        %5408 = vmatprep.mubr.bf16.mxu0 0
        %5409 = vmatmul.mubr.bf16.gmra.mxu0 %v5296
        %v5410 = vpop.f32.mrf.mxu0
        %v5411 = vadd.f32 0.0, %v5410
        %v5412 = vpop.f32.mrf.mxu0
        %v5413 = vpop.f32.mrf.mxu0
        %v5414 = vadd.f32 0.0, %v5413
        %v5415 = vpop.f32.mrf.mxu0
        %5416 = vmatprep.mubr.bf16.mxu0 0
        %5417 = vmatmul.mubr.bf16.gmra.mxu0 %v5297
        %v5418 = vpop.f32.mrf.mxu0
        %v5419 = vadd.f32 0.0, %v5418
        %v5420 = vpop.f32.mrf.mxu0
        %v5421 = vpop.f32.mrf.mxu0
        %v5422 = vadd.f32 0.0, %v5421
        %v5423 = vpop.f32.mrf.mxu0
        %5424 = vmatprep.mubr.bf16.mxu0 0
        %5425 = vmatmul.mubr.bf16.gmra.mxu0 %v5298
        %v5426 = vpop.f32.mrf.mxu0
        %v5427 = vadd.f32 0.0, %v5426
        %v5428 = vpop.f32.mrf.mxu0
        %v5429 = vpop.f32.mrf.mxu0
        %v5430 = vadd.f32 0.0, %v5429
        %v5431 = vpop.f32.mrf.mxu0
        %5432 = vmatprep.mubr.bf16.mxu0 0
        %5433 = vmatmul.mubr.bf16.gmra.mxu0 %v5299
        %v5434 = vpop.f32.mrf.mxu0
        %v5435 = vadd.f32 0.0, %v5434
        %v5436 = vpop.f32.mrf.mxu0
        %v5437 = vpop.f32.mrf.mxu0
        %v5438 = vadd.f32 0.0, %v5437
        %v5439 = vpop.f32.mrf.mxu0
        %5440 = vmatprep.mubr.bf16.mxu0 0
        %5441 = vmatmul.mubr.bf16.gmra.mxu0 %v5300
        %v5442 = vpop.f32.mrf.mxu0
        %v5443 = vadd.f32 0.0, %v5442
        %v5444 = vpop.f32.mrf.mxu0
        %v5445 = vpop.f32.mrf.mxu0
        %v5446 = vadd.f32 0.0, %v5445
        %v5447 = vpop.f32.mrf.mxu0
        %5448 = vmatprep.mubr.bf16.mxu0 0
        %5449 = vmatmul.mubr.bf16.gmra.mxu0 %v5301
        %v5450 = vpop.f32.mrf.mxu0
        %v5451 = vadd.f32 0.0, %v5450
        %v5452 = vpop.f32.mrf.mxu0
        %v5453 = vpop.f32.mrf.mxu0
        %v5454 = vadd.f32 0.0, %v5453
        %v5455 = vpop.f32.mrf.mxu0
        %5456 = vmatprep.mubr.bf16.mxu0 0
        %5457 = vmatmul.mubr.bf16.gmra.mxu0 %v5302
        %v5458 = vpop.f32.mrf.mxu0
        %v5459 = vadd.f32 0.0, %v5458
        %v5460 = vpop.f32.mrf.mxu0
        %v5461 = vpop.f32.mrf.mxu0
        %v5462 = vadd.f32 0.0, %v5461
        %v5463 = vpop.f32.mrf.mxu0
        %5464 = vmatprep.mubr.bf16.mxu0 0
        %5465 = vmatmul.mubr.bf16.gmra.mxu0 %v5303
        %v5466 = vpop.f32.mrf.mxu0
        %v5467 = vadd.f32 0.0, %v5466
        %v5468 = vpop.f32.mrf.mxu0
        %v5469 = vpop.f32.mrf.mxu0
        %v5470 = vadd.f32 0.0, %v5469
        %v5471 = vpop.f32.mrf.mxu0
        %5472 = vmatprep.mubr.bf16.mxu0 0
        %5473 = vmatmul.mubr.bf16.gmra.mxu0 %v5304
        %v5474 = vpop.f32.mrf.mxu0
        %v5475 = vadd.f32 0.0, %v5474
        %v5476 = vpop.f32.mrf.mxu0
        %v5477 = vpop.f32.mrf.mxu0
        %v5478 = vadd.f32 0.0, %v5477
        %v5479 = vpop.f32.mrf.mxu0
        %5480 = vmatprep.mubr.bf16.mxu0 0
        %5481 = vmatmul.mubr.bf16.gmra.mxu0 %v5305
        %v5482 = vpop.f32.mrf.mxu0
        %v5483 = vadd.f32 0.0, %v5482
        %v5484 = vpop.f32.mrf.mxu0
        %v5485 = vpop.f32.mrf.mxu0
        %v5486 = vadd.f32 0.0, %v5485
        %v5487 = vpop.f32.mrf.mxu0
        %5488 = vmatprep.mubr.bf16.mxu0 0
        %5489 = vmatmul.mubr.bf16.gmra.mxu0 %v5306
        %v5490 = vpop.f32.mrf.mxu0
        %v5491 = vadd.f32 0.0, %v5490
        %v5492 = vpop.f32.mrf.mxu0
        %v5493 = vpop.f32.mrf.mxu0
        %v5494 = vadd.f32 0.0, %v5493
        %v5495 = vpop.f32.mrf.mxu0
        %5496 = vmatprep.mubr.bf16.mxu0 0
        %5497 = vmatmul.mubr.bf16.gmra.mxu0 %v5307
        %v5498 = vpop.f32.mrf.mxu0
        %v5499 = vadd.f32 0.0, %v5498
        %v5500 = vpop.f32.mrf.mxu0
        %v5501 = vpop.f32.mrf.mxu0
        %v5502 = vadd.f32 0.0, %v5501
        %v5503 = vpop.f32.mrf.mxu0
        %5504 = vmatprep.mubr.bf16.mxu0 0
        %5505 = vmatmul.mubr.bf16.gmra.mxu0 %v5308
        %v5506 = vpop.f32.mrf.mxu0
        %v5507 = vadd.f32 0.0, %v5506
        %v5508 = vpop.f32.mrf.mxu0
        %v5509 = vpop.f32.mrf.mxu0
        %v5510 = vadd.f32 0.0, %v5509
        %v5511 = vpop.f32.mrf.mxu0
        %5512 = vmatprep.mubr.bf16.mxu0 0
        %5513 = vmatmul.mubr.bf16.gmra.mxu0 %v5309
        %v5514 = vpop.f32.mrf.mxu0
        %v5515 = vadd.f32 0.0, %v5514
        %v5516 = vpop.f32.mrf.mxu0
        %v5517 = vpop.f32.mrf.mxu0
        %v5518 = vadd.f32 0.0, %v5517
        %v5519 = vpop.f32.mrf.mxu0
        %5520 = vmatprep.mubr.bf16.mxu0 0
        %5521 = vmatmul.mubr.bf16.gmra.mxu0 %v5310
        %v5522 = vpop.f32.mrf.mxu0
        %v5523 = vadd.f32 0.0, %v5522
        %v5524 = vpop.f32.mrf.mxu0
        %v5525 = vpop.f32.mrf.mxu0
        %v5526 = vadd.f32 0.0, %v5525
        %v5527 = vpop.f32.mrf.mxu0
        %5528 = vmatprep.mubr.bf16.mxu0 0
        %5529 = vmatmul.mubr.bf16.gmra.mxu0 %v5311
        %v5530 = vpop.f32.mrf.mxu0
        %v5531 = vadd.f32 0.0, %v5530
        %v5532 = vpop.f32.mrf.mxu0
        %v5533 = vpop.f32.mrf.mxu0
        %v5534 = vadd.f32 0.0, %v5533
        %v5535 = vpop.f32.mrf.mxu0
        %5536 = vdwg.mxu0
        %v5537 = vadd.f32 %v5151, %v5411
        %v5538 = vadd.f32 %v5152, %v5414
        %v5539 = vadd.f32 %v5153, %v5419
        %v5540 = vadd.f32 %v5154, %v5422
        %v5541 = vadd.f32 %v5155, %v5427
        %v5542 = vadd.f32 %v5156, %v5430
        %v5543 = vadd.f32 %v5157, %v5435
        %v5544 = vadd.f32 %v5158, %v5438
        %v5545 = vadd.f32 %v5159, %v5443
        %v5546 = vadd.f32 %v5160, %v5446
        %v5547 = vadd.f32 %v5161, %v5451
        %v5548 = vadd.f32 %v5162, %v5454
        %v5549 = vadd.f32 %v5163, %v5459
        %v5550 = vadd.f32 %v5164, %v5462
        %v5551 = vadd.f32 %v5165, %v5467
        %v5552 = vadd.f32 %v5166, %v5470
        %v5553 = vadd.f32 %v5167, %v5475
        %v5554 = vadd.f32 %v5168, %v5478
        %v5555 = vadd.f32 %v5169, %v5483
        %v5556 = vadd.f32 %v5170, %v5486
        %v5557 = vadd.f32 %v5171, %v5491
        %v5558 = vadd.f32 %v5172, %v5494
        %v5559 = vadd.f32 %v5173, %v5499
        %v5560 = vadd.f32 %v5174, %v5502
        %v5561 = vadd.f32 %v5175, %v5507
        %v5562 = vadd.f32 %v5176, %v5510
        %v5563 = vadd.f32 %v5177, %v5515
        %v5564 = vadd.f32 %v5178, %v5518
        %v5565 = vadd.f32 %v5179, %v5523
        %v5566 = vadd.f32 %v5180, %v5526
        %v5567 = vadd.f32 %v5181, %v5531
        %v5568 = vadd.f32 %v5182, %v5534
        %s5569 = scalar_lea.vmem [#allocation2], 40
        %v5570 = vld [vmem:[%s5569] sm:$0xf]
        %v5571 = vld [vmem:[%s5569 + $0x4] sm:$0xf]
        %v5572 = vld [vmem:[%s5569 + $0x8] sm:$0xf]
        %v5573 = vld [vmem:[%s5569 + $0xc] sm:$0xf]
        %v5574 = vld [vmem:[%s5569 + $0x10] sm:$0xf]
        %v5575 = vld [vmem:[%s5569 + $0x14] sm:$0xf]
        %v5576 = vld [vmem:[%s5569 + $0x18] sm:$0xf]
        %v5577 = vld [vmem:[%s5569 + $0x1c] sm:$0xf]
        %v5578 = vld [vmem:[%s5569 + $0x20] sm:$0xf]
        %v5579 = vld [vmem:[%s5569 + $0x24] sm:$0xf]
        %v5580 = vld [vmem:[%s5569 + $0x28] sm:$0xf]
        %v5581 = vld [vmem:[%s5569 + $0x2c] sm:$0xf]
        %v5582 = vld [vmem:[%s5569 + $0x30] sm:$0xf]
        %v5583 = vld [vmem:[%s5569 + $0x34] sm:$0xf]
        %v5584 = vld [vmem:[%s5569 + $0x38] sm:$0xf]
        %v5585 = vld [vmem:[%s5569 + $0x3c] sm:$0xf]
        %v5586 = vld [vmem:[%s5569 + $0x40] sm:$0xf]
        %v5587 = vld [vmem:[%s5569 + $0x44] sm:$0xf]
        %v5588 = vld [vmem:[%s5569 + $0x48] sm:$0xf]
        %v5589 = vld [vmem:[%s5569 + $0x4c] sm:$0xf]
        %v5590 = vld [vmem:[%s5569 + $0x50] sm:$0xf]
        %v5591 = vld [vmem:[%s5569 + $0x54] sm:$0xf]
        %v5592 = vld [vmem:[%s5569 + $0x58] sm:$0xf]
        %v5593 = vld [vmem:[%s5569 + $0x5c] sm:$0xf]
        %v5594 = vld [vmem:[%s5569 + $0x60] sm:$0xf]
        %v5595 = vld [vmem:[%s5569 + $0x64] sm:$0xf]
        %v5596 = vld [vmem:[%s5569 + $0x68] sm:$0xf]
        %v5597 = vld [vmem:[%s5569 + $0x6c] sm:$0xf]
        %v5598 = vld [vmem:[%s5569 + $0x70] sm:$0xf]
        %v5599 = vld [vmem:[%s5569 + $0x74] sm:$0xf]
        %v5600 = vld [vmem:[%s5569 + $0x78] sm:$0xf]
        %v5601 = vld [vmem:[%s5569 + $0x7c] sm:$0xf]
        %s5602 = scalar_lea.vmem %s4, 320
        %v5603 = vld [vmem:[%s5602] sm:$0xf]
        %v5604 = vld [vmem:[%s5602 + $0x4] sm:$0xf]
        %v5605 = vld [vmem:[%s5602 + $0x8] sm:$0xf]
        %v5606 = vld [vmem:[%s5602 + $0xc] sm:$0xf]
        %v5607 = vld [vmem:[%s5602 + $0x10] sm:$0xf]
        %v5608 = vld [vmem:[%s5602 + $0x14] sm:$0xf]
        %v5609 = vld [vmem:[%s5602 + $0x18] sm:$0xf]
        %v5610 = vld [vmem:[%s5602 + $0x1c] sm:$0xf]
        %v5611 = vld [vmem:[%s5602 + $0x20] sm:$0xf]
        %v5612 = vld [vmem:[%s5602 + $0x24] sm:$0xf]
        %v5613 = vld [vmem:[%s5602 + $0x28] sm:$0xf]
        %v5614 = vld [vmem:[%s5602 + $0x2c] sm:$0xf]
        %v5615 = vld [vmem:[%s5602 + $0x30] sm:$0xf]
        %v5616 = vld [vmem:[%s5602 + $0x34] sm:$0xf]
        %v5617 = vld [vmem:[%s5602 + $0x38] sm:$0xf]
        %v5618 = vld [vmem:[%s5602 + $0x3c] sm:$0xf]
        %v5651 = vunpack.c.l.b16 %v5570
        %v5652 = vunpack.c.l.b16 %v5571
        %v5653 = vunpack.c.l.b16 %v5572
        %v5654 = vunpack.c.l.b16 %v5573
        %v5655 = vunpack.c.l.b16 %v5574
        %v5656 = vunpack.c.l.b16 %v5575
        %v5657 = vunpack.c.l.b16 %v5576
        %v5658 = vunpack.c.l.b16 %v5577
        %v5659 = vunpack.c.l.b16 %v5578
        %v5660 = vunpack.c.l.b16 %v5579
        %v5661 = vunpack.c.l.b16 %v5580
        %v5662 = vunpack.c.l.b16 %v5581
        %v5663 = vunpack.c.l.b16 %v5582
        %v5664 = vunpack.c.l.b16 %v5583
        %v5665 = vunpack.c.l.b16 %v5584
        %v5666 = vunpack.c.l.b16 %v5585
        %v5667 = vunpack.c.l.b16 %v5586
        %v5668 = vunpack.c.l.b16 %v5587
        %v5669 = vunpack.c.l.b16 %v5588
        %v5670 = vunpack.c.l.b16 %v5589
        %v5671 = vunpack.c.l.b16 %v5590
        %v5672 = vunpack.c.l.b16 %v5591
        %v5673 = vunpack.c.l.b16 %v5592
        %v5674 = vunpack.c.l.b16 %v5593
        %v5675 = vunpack.c.l.b16 %v5594
        %v5676 = vunpack.c.l.b16 %v5595
        %v5677 = vunpack.c.l.b16 %v5596
        %v5678 = vunpack.c.l.b16 %v5597
        %v5679 = vunpack.c.l.b16 %v5598
        %v5680 = vunpack.c.l.b16 %v5599
        %v5681 = vunpack.c.l.b16 %v5600
        %v5682 = vunpack.c.l.b16 %v5601
        %v5683 = vpack.c.b16 %v5652, %v5651
        %v5684 = vpack.c.b16 %v5654, %v5653
        %v5685 = vpack.c.b16 %v5656, %v5655
        %v5686 = vpack.c.b16 %v5658, %v5657
        %v5687 = vpack.c.b16 %v5660, %v5659
        %v5688 = vpack.c.b16 %v5662, %v5661
        %v5689 = vpack.c.b16 %v5664, %v5663
        %v5690 = vpack.c.b16 %v5666, %v5665
        %v5691 = vpack.c.b16 %v5668, %v5667
        %v5692 = vpack.c.b16 %v5670, %v5669
        %v5693 = vpack.c.b16 %v5672, %v5671
        %v5694 = vpack.c.b16 %v5674, %v5673
        %v5695 = vpack.c.b16 %v5676, %v5675
        %v5696 = vpack.c.b16 %v5678, %v5677
        %v5697 = vpack.c.b16 %v5680, %v5679
        %v5698 = vpack.c.b16 %v5682, %v5681
        %v5731 = vunpack.c.l.b16 %v5603
        %v5732 = vunpack.c.l.b16 %v5604
        %v5733 = vunpack.c.l.b16 %v5605
        %v5734 = vunpack.c.l.b16 %v5606
        %v5735 = vunpack.c.l.b16 %v5607
        %v5736 = vunpack.c.l.b16 %v5608
        %v5737 = vunpack.c.l.b16 %v5609
        %v5738 = vunpack.c.l.b16 %v5610
        %v5739 = vunpack.c.l.b16 %v5611
        %v5740 = vunpack.c.l.b16 %v5612
        %v5741 = vunpack.c.l.b16 %v5613
        %v5742 = vunpack.c.l.b16 %v5614
        %v5743 = vunpack.c.l.b16 %v5615
        %v5744 = vunpack.c.l.b16 %v5616
        %v5745 = vunpack.c.l.b16 %v5617
        %v5746 = vunpack.c.l.b16 %v5618
        %v5747 = vpack.c.b16 %v5732, %v5731
        %v5748 = vpack.c.b16 %v5734, %v5733
        %v5749 = vpack.c.b16 %v5736, %v5735
        %v5750 = vpack.c.b16 %v5738, %v5737
        %v5751 = vpack.c.b16 %v5740, %v5739
        %v5752 = vpack.c.b16 %v5742, %v5741
        %v5753 = vpack.c.b16 %v5744, %v5743
        %v5754 = vpack.c.b16 %v5746, %v5745
        %5763 = vmatprep.subr.bf16.mxu0 0
        %5764 = vmatpush1.bf16.msra.mxu0 %v5754
        %5765 = vmatprep.subr.bf16.mxu0 0
        %5766 = vmatpush1.bf16.msra.mxu0 %v5753
        %5767 = vmatprep.subr.bf16.mxu0 0
        %5768 = vmatpush1.bf16.msra.mxu0 %v5752
        %5769 = vmatprep.subr.bf16.mxu0 0
        %5770 = vmatpush1.bf16.msra.mxu0 %v5751
        %5771 = vmatprep.subr.bf16.mxu0 0
        %5772 = vmatpush1.bf16.msra.mxu0 %v5750
        %5773 = vmatprep.subr.bf16.mxu0 0
        %5774 = vmatpush1.bf16.msra.mxu0 %v5749
        %5775 = vmatprep.subr.bf16.mxu0 0
        %5776 = vmatpush1.bf16.msra.mxu0 %v5748
        %5777 = vmatprep.subr.bf16.mxu0 0
        %5778 = vmatpush1.bf16.msra.mxu0 %v5747
        %5779 = vmatprep.subr.bf16.mxu0 0
        %5780 = vmatpush2.bf16.msra.mxu0 0
        %5781 = vmatprep.subr.bf16.mxu0 0
        %5782 = vmatpush2.bf16.msra.mxu0 0
        %5783 = vmatprep.subr.bf16.mxu0 0
        %5784 = vmatpush2.bf16.msra.mxu0 0
        %5785 = vmatprep.subr.bf16.mxu0 0
        %5786 = vmatpush2.bf16.msra.mxu0 0
        %5787 = vmatprep.subr.bf16.mxu0 0
        %5788 = vmatpush2.bf16.msra.mxu0 0
        %5789 = vmatprep.subr.bf16.mxu0 0
        %5790 = vmatpush2.bf16.msra.mxu0 0
        %5791 = vmatprep.subr.bf16.mxu0 0
        %5792 = vmatpush2.bf16.msra.mxu0 0
        %5793 = vmatprep.subr.bf16.mxu0 0
        %5794 = vmatpush2.bf16.msra.mxu0 0
        %5795 = vmatprep.mubr.bf16.mxu0 0
        %5796 = vmatmul.mubr.bf16.gmra.mxu0 %v5683
        %v5797 = vpop.f32.mrf.mxu0
        %v5798 = vadd.f32 0.0, %v5797
        %v5799 = vpop.f32.mrf.mxu0
        %v5800 = vpop.f32.mrf.mxu0
        %v5801 = vadd.f32 0.0, %v5800
        %v5802 = vpop.f32.mrf.mxu0
        %5803 = vmatprep.mubr.bf16.mxu0 0
        %5804 = vmatmul.mubr.bf16.gmra.mxu0 %v5684
        %v5805 = vpop.f32.mrf.mxu0
        %v5806 = vadd.f32 0.0, %v5805
        %v5807 = vpop.f32.mrf.mxu0
        %v5808 = vpop.f32.mrf.mxu0
        %v5809 = vadd.f32 0.0, %v5808
        %v5810 = vpop.f32.mrf.mxu0
        %5811 = vmatprep.mubr.bf16.mxu0 0
        %5812 = vmatmul.mubr.bf16.gmra.mxu0 %v5685
        %v5813 = vpop.f32.mrf.mxu0
        %v5814 = vadd.f32 0.0, %v5813
        %v5815 = vpop.f32.mrf.mxu0
        %v5816 = vpop.f32.mrf.mxu0
        %v5817 = vadd.f32 0.0, %v5816
        %v5818 = vpop.f32.mrf.mxu0
        %5819 = vmatprep.mubr.bf16.mxu0 0
        %5820 = vmatmul.mubr.bf16.gmra.mxu0 %v5686
        %v5821 = vpop.f32.mrf.mxu0
        %v5822 = vadd.f32 0.0, %v5821
        %v5823 = vpop.f32.mrf.mxu0
        %v5824 = vpop.f32.mrf.mxu0
        %v5825 = vadd.f32 0.0, %v5824
        %v5826 = vpop.f32.mrf.mxu0
        %5827 = vmatprep.mubr.bf16.mxu0 0
        %5828 = vmatmul.mubr.bf16.gmra.mxu0 %v5687
        %v5829 = vpop.f32.mrf.mxu0
        %v5830 = vadd.f32 0.0, %v5829
        %v5831 = vpop.f32.mrf.mxu0
        %v5832 = vpop.f32.mrf.mxu0
        %v5833 = vadd.f32 0.0, %v5832
        %v5834 = vpop.f32.mrf.mxu0
        %5835 = vmatprep.mubr.bf16.mxu0 0
        %5836 = vmatmul.mubr.bf16.gmra.mxu0 %v5688
        %v5837 = vpop.f32.mrf.mxu0
        %v5838 = vadd.f32 0.0, %v5837
        %v5839 = vpop.f32.mrf.mxu0
        %v5840 = vpop.f32.mrf.mxu0
        %v5841 = vadd.f32 0.0, %v5840
        %v5842 = vpop.f32.mrf.mxu0
        %5843 = vmatprep.mubr.bf16.mxu0 0
        %5844 = vmatmul.mubr.bf16.gmra.mxu0 %v5689
        %v5845 = vpop.f32.mrf.mxu0
        %v5846 = vadd.f32 0.0, %v5845
        %v5847 = vpop.f32.mrf.mxu0
        %v5848 = vpop.f32.mrf.mxu0
        %v5849 = vadd.f32 0.0, %v5848
        %v5850 = vpop.f32.mrf.mxu0
        %5851 = vmatprep.mubr.bf16.mxu0 0
        %5852 = vmatmul.mubr.bf16.gmra.mxu0 %v5690
        %v5853 = vpop.f32.mrf.mxu0
        %v5854 = vadd.f32 0.0, %v5853
        %v5855 = vpop.f32.mrf.mxu0
        %v5856 = vpop.f32.mrf.mxu0
        %v5857 = vadd.f32 0.0, %v5856
        %v5858 = vpop.f32.mrf.mxu0
        %5859 = vmatprep.mubr.bf16.mxu0 0
        %5860 = vmatmul.mubr.bf16.gmra.mxu0 %v5691
        %v5861 = vpop.f32.mrf.mxu0
        %v5862 = vadd.f32 0.0, %v5861
        %v5863 = vpop.f32.mrf.mxu0
        %v5864 = vpop.f32.mrf.mxu0
        %v5865 = vadd.f32 0.0, %v5864
        %v5866 = vpop.f32.mrf.mxu0
        %5867 = vmatprep.mubr.bf16.mxu0 0
        %5868 = vmatmul.mubr.bf16.gmra.mxu0 %v5692
        %v5869 = vpop.f32.mrf.mxu0
        %v5870 = vadd.f32 0.0, %v5869
        %v5871 = vpop.f32.mrf.mxu0
        %v5872 = vpop.f32.mrf.mxu0
        %v5873 = vadd.f32 0.0, %v5872
        %v5874 = vpop.f32.mrf.mxu0
        %5875 = vmatprep.mubr.bf16.mxu0 0
        %5876 = vmatmul.mubr.bf16.gmra.mxu0 %v5693
        %v5877 = vpop.f32.mrf.mxu0
        %v5878 = vadd.f32 0.0, %v5877
        %v5879 = vpop.f32.mrf.mxu0
        %v5880 = vpop.f32.mrf.mxu0
        %v5881 = vadd.f32 0.0, %v5880
        %v5882 = vpop.f32.mrf.mxu0
        %5883 = vmatprep.mubr.bf16.mxu0 0
        %5884 = vmatmul.mubr.bf16.gmra.mxu0 %v5694
        %v5885 = vpop.f32.mrf.mxu0
        %v5886 = vadd.f32 0.0, %v5885
        %v5887 = vpop.f32.mrf.mxu0
        %v5888 = vpop.f32.mrf.mxu0
        %v5889 = vadd.f32 0.0, %v5888
        %v5890 = vpop.f32.mrf.mxu0
        %5891 = vmatprep.mubr.bf16.mxu0 0
        %5892 = vmatmul.mubr.bf16.gmra.mxu0 %v5695
        %v5893 = vpop.f32.mrf.mxu0
        %v5894 = vadd.f32 0.0, %v5893
        %v5895 = vpop.f32.mrf.mxu0
        %v5896 = vpop.f32.mrf.mxu0
        %v5897 = vadd.f32 0.0, %v5896
        %v5898 = vpop.f32.mrf.mxu0
        %5899 = vmatprep.mubr.bf16.mxu0 0
        %5900 = vmatmul.mubr.bf16.gmra.mxu0 %v5696
        %v5901 = vpop.f32.mrf.mxu0
        %v5902 = vadd.f32 0.0, %v5901
        %v5903 = vpop.f32.mrf.mxu0
        %v5904 = vpop.f32.mrf.mxu0
        %v5905 = vadd.f32 0.0, %v5904
        %v5906 = vpop.f32.mrf.mxu0
        %5907 = vmatprep.mubr.bf16.mxu0 0
        %5908 = vmatmul.mubr.bf16.gmra.mxu0 %v5697
        %v5909 = vpop.f32.mrf.mxu0
        %v5910 = vadd.f32 0.0, %v5909
        %v5911 = vpop.f32.mrf.mxu0
        %v5912 = vpop.f32.mrf.mxu0
        %v5913 = vadd.f32 0.0, %v5912
        %v5914 = vpop.f32.mrf.mxu0
        %5915 = vmatprep.mubr.bf16.mxu0 0
        %5916 = vmatmul.mubr.bf16.gmra.mxu0 %v5698
        %v5917 = vpop.f32.mrf.mxu0
        %v5918 = vadd.f32 0.0, %v5917
        %v5919 = vpop.f32.mrf.mxu0
        %v5920 = vpop.f32.mrf.mxu0
        %v5921 = vadd.f32 0.0, %v5920
        %v5922 = vpop.f32.mrf.mxu0
        %5923 = vdwg.mxu0
        %v5924 = vadd.f32 %v5537, %v5798
        %v5925 = vadd.f32 %v5538, %v5801
        %v5926 = vadd.f32 %v5539, %v5806
        %v5927 = vadd.f32 %v5540, %v5809
        %v5928 = vadd.f32 %v5541, %v5814
        %v5929 = vadd.f32 %v5542, %v5817
        %v5930 = vadd.f32 %v5543, %v5822
        %v5931 = vadd.f32 %v5544, %v5825
        %v5932 = vadd.f32 %v5545, %v5830
        %v5933 = vadd.f32 %v5546, %v5833
        %v5934 = vadd.f32 %v5547, %v5838
        %v5935 = vadd.f32 %v5548, %v5841
        %v5936 = vadd.f32 %v5549, %v5846
        %v5937 = vadd.f32 %v5550, %v5849
        %v5938 = vadd.f32 %v5551, %v5854
        %v5939 = vadd.f32 %v5552, %v5857
        %v5940 = vadd.f32 %v5553, %v5862
        %v5941 = vadd.f32 %v5554, %v5865
        %v5942 = vadd.f32 %v5555, %v5870
        %v5943 = vadd.f32 %v5556, %v5873
        %v5944 = vadd.f32 %v5557, %v5878
        %v5945 = vadd.f32 %v5558, %v5881
        %v5946 = vadd.f32 %v5559, %v5886
        %v5947 = vadd.f32 %v5560, %v5889
        %v5948 = vadd.f32 %v5561, %v5894
        %v5949 = vadd.f32 %v5562, %v5897
        %v5950 = vadd.f32 %v5563, %v5902
        %v5951 = vadd.f32 %v5564, %v5905
        %v5952 = vadd.f32 %v5565, %v5910
        %v5953 = vadd.f32 %v5566, %v5913
        %v5954 = vadd.f32 %v5567, %v5918
        %v5955 = vadd.f32 %v5568, %v5921
        %s5956 = scalar_lea.vmem [#allocation2], 48
        %v5957 = vld [vmem:[%s5956] sm:$0xf]
        %v5958 = vld [vmem:[%s5956 + $0x4] sm:$0xf]
        %v5959 = vld [vmem:[%s5956 + $0x8] sm:$0xf]
        %v5960 = vld [vmem:[%s5956 + $0xc] sm:$0xf]
        %v5961 = vld [vmem:[%s5956 + $0x10] sm:$0xf]
        %v5962 = vld [vmem:[%s5956 + $0x14] sm:$0xf]
        %v5963 = vld [vmem:[%s5956 + $0x18] sm:$0xf]
        %v5964 = vld [vmem:[%s5956 + $0x1c] sm:$0xf]
        %v5965 = vld [vmem:[%s5956 + $0x20] sm:$0xf]
        %v5966 = vld [vmem:[%s5956 + $0x24] sm:$0xf]
        %v5967 = vld [vmem:[%s5956 + $0x28] sm:$0xf]
        %v5968 = vld [vmem:[%s5956 + $0x2c] sm:$0xf]
        %v5969 = vld [vmem:[%s5956 + $0x30] sm:$0xf]
        %v5970 = vld [vmem:[%s5956 + $0x34] sm:$0xf]
        %v5971 = vld [vmem:[%s5956 + $0x38] sm:$0xf]
        %v5972 = vld [vmem:[%s5956 + $0x3c] sm:$0xf]
        %v5973 = vld [vmem:[%s5956 + $0x40] sm:$0xf]
        %v5974 = vld [vmem:[%s5956 + $0x44] sm:$0xf]
        %v5975 = vld [vmem:[%s5956 + $0x48] sm:$0xf]
        %v5976 = vld [vmem:[%s5956 + $0x4c] sm:$0xf]
        %v5977 = vld [vmem:[%s5956 + $0x50] sm:$0xf]
        %v5978 = vld [vmem:[%s5956 + $0x54] sm:$0xf]
        %v5979 = vld [vmem:[%s5956 + $0x58] sm:$0xf]
        %v5980 = vld [vmem:[%s5956 + $0x5c] sm:$0xf]
        %v5981 = vld [vmem:[%s5956 + $0x60] sm:$0xf]
        %v5982 = vld [vmem:[%s5956 + $0x64] sm:$0xf]
        %v5983 = vld [vmem:[%s5956 + $0x68] sm:$0xf]
        %v5984 = vld [vmem:[%s5956 + $0x6c] sm:$0xf]
        %v5985 = vld [vmem:[%s5956 + $0x70] sm:$0xf]
        %v5986 = vld [vmem:[%s5956 + $0x74] sm:$0xf]
        %v5987 = vld [vmem:[%s5956 + $0x78] sm:$0xf]
        %v5988 = vld [vmem:[%s5956 + $0x7c] sm:$0xf]
        %s5989 = scalar_lea.vmem %s4, 384
        %v5990 = vld [vmem:[%s5989] sm:$0xf]
        %v5991 = vld [vmem:[%s5989 + $0x4] sm:$0xf]
        %v5992 = vld [vmem:[%s5989 + $0x8] sm:$0xf]
        %v5993 = vld [vmem:[%s5989 + $0xc] sm:$0xf]
        %v5994 = vld [vmem:[%s5989 + $0x10] sm:$0xf]
        %v5995 = vld [vmem:[%s5989 + $0x14] sm:$0xf]
        %v5996 = vld [vmem:[%s5989 + $0x18] sm:$0xf]
        %v5997 = vld [vmem:[%s5989 + $0x1c] sm:$0xf]
        %v5998 = vld [vmem:[%s5989 + $0x20] sm:$0xf]
        %v5999 = vld [vmem:[%s5989 + $0x24] sm:$0xf]
        %v6000 = vld [vmem:[%s5989 + $0x28] sm:$0xf]
        %v6001 = vld [vmem:[%s5989 + $0x2c] sm:$0xf]
        %v6002 = vld [vmem:[%s5989 + $0x30] sm:$0xf]
        %v6003 = vld [vmem:[%s5989 + $0x34] sm:$0xf]
        %v6004 = vld [vmem:[%s5989 + $0x38] sm:$0xf]
        %v6005 = vld [vmem:[%s5989 + $0x3c] sm:$0xf]
        %v6038 = vunpack.c.l.b16 %v5957
        %v6039 = vunpack.c.l.b16 %v5958
        %v6040 = vunpack.c.l.b16 %v5959
        %v6041 = vunpack.c.l.b16 %v5960
        %v6042 = vunpack.c.l.b16 %v5961
        %v6043 = vunpack.c.l.b16 %v5962
        %v6044 = vunpack.c.l.b16 %v5963
        %v6045 = vunpack.c.l.b16 %v5964
        %v6046 = vunpack.c.l.b16 %v5965
        %v6047 = vunpack.c.l.b16 %v5966
        %v6048 = vunpack.c.l.b16 %v5967
        %v6049 = vunpack.c.l.b16 %v5968
        %v6050 = vunpack.c.l.b16 %v5969
        %v6051 = vunpack.c.l.b16 %v5970
        %v6052 = vunpack.c.l.b16 %v5971
        %v6053 = vunpack.c.l.b16 %v5972
        %v6054 = vunpack.c.l.b16 %v5973
        %v6055 = vunpack.c.l.b16 %v5974
        %v6056 = vunpack.c.l.b16 %v5975
        %v6057 = vunpack.c.l.b16 %v5976
        %v6058 = vunpack.c.l.b16 %v5977
        %v6059 = vunpack.c.l.b16 %v5978
        %v6060 = vunpack.c.l.b16 %v5979
        %v6061 = vunpack.c.l.b16 %v5980
        %v6062 = vunpack.c.l.b16 %v5981
        %v6063 = vunpack.c.l.b16 %v5982
        %v6064 = vunpack.c.l.b16 %v5983
        %v6065 = vunpack.c.l.b16 %v5984
        %v6066 = vunpack.c.l.b16 %v5985
        %v6067 = vunpack.c.l.b16 %v5986
        %v6068 = vunpack.c.l.b16 %v5987
        %v6069 = vunpack.c.l.b16 %v5988
        %v6070 = vpack.c.b16 %v6039, %v6038
        %v6071 = vpack.c.b16 %v6041, %v6040
        %v6072 = vpack.c.b16 %v6043, %v6042
        %v6073 = vpack.c.b16 %v6045, %v6044
        %v6074 = vpack.c.b16 %v6047, %v6046
        %v6075 = vpack.c.b16 %v6049, %v6048
        %v6076 = vpack.c.b16 %v6051, %v6050
        %v6077 = vpack.c.b16 %v6053, %v6052
        %v6078 = vpack.c.b16 %v6055, %v6054
        %v6079 = vpack.c.b16 %v6057, %v6056
        %v6080 = vpack.c.b16 %v6059, %v6058
        %v6081 = vpack.c.b16 %v6061, %v6060
        %v6082 = vpack.c.b16 %v6063, %v6062
        %v6083 = vpack.c.b16 %v6065, %v6064
        %v6084 = vpack.c.b16 %v6067, %v6066
        %v6085 = vpack.c.b16 %v6069, %v6068
        %v6118 = vunpack.c.l.b16 %v5990
        %v6119 = vunpack.c.l.b16 %v5991
        %v6120 = vunpack.c.l.b16 %v5992
        %v6121 = vunpack.c.l.b16 %v5993
        %v6122 = vunpack.c.l.b16 %v5994
        %v6123 = vunpack.c.l.b16 %v5995
        %v6124 = vunpack.c.l.b16 %v5996
        %v6125 = vunpack.c.l.b16 %v5997
        %v6126 = vunpack.c.l.b16 %v5998
        %v6127 = vunpack.c.l.b16 %v5999
        %v6128 = vunpack.c.l.b16 %v6000
        %v6129 = vunpack.c.l.b16 %v6001
        %v6130 = vunpack.c.l.b16 %v6002
        %v6131 = vunpack.c.l.b16 %v6003
        %v6132 = vunpack.c.l.b16 %v6004
        %v6133 = vunpack.c.l.b16 %v6005
        %v6134 = vpack.c.b16 %v6119, %v6118
        %v6135 = vpack.c.b16 %v6121, %v6120
        %v6136 = vpack.c.b16 %v6123, %v6122
        %v6137 = vpack.c.b16 %v6125, %v6124
        %v6138 = vpack.c.b16 %v6127, %v6126
        %v6139 = vpack.c.b16 %v6129, %v6128
        %v6140 = vpack.c.b16 %v6131, %v6130
        %v6141 = vpack.c.b16 %v6133, %v6132
        %6150 = vmatprep.subr.bf16.mxu0 0
        %6151 = vmatpush1.bf16.msra.mxu0 %v6141
        %6152 = vmatprep.subr.bf16.mxu0 0
        %6153 = vmatpush1.bf16.msra.mxu0 %v6140
        %6154 = vmatprep.subr.bf16.mxu0 0
        %6155 = vmatpush1.bf16.msra.mxu0 %v6139
        %6156 = vmatprep.subr.bf16.mxu0 0
        %6157 = vmatpush1.bf16.msra.mxu0 %v6138
        %6158 = vmatprep.subr.bf16.mxu0 0
        %6159 = vmatpush1.bf16.msra.mxu0 %v6137
        %6160 = vmatprep.subr.bf16.mxu0 0
        %6161 = vmatpush1.bf16.msra.mxu0 %v6136
        %6162 = vmatprep.subr.bf16.mxu0 0
        %6163 = vmatpush1.bf16.msra.mxu0 %v6135
        %6164 = vmatprep.subr.bf16.mxu0 0
        %6165 = vmatpush1.bf16.msra.mxu0 %v6134
        %6166 = vmatprep.subr.bf16.mxu0 0
        %6167 = vmatpush2.bf16.msra.mxu0 0
        %6168 = vmatprep.subr.bf16.mxu0 0
        %6169 = vmatpush2.bf16.msra.mxu0 0
        %6170 = vmatprep.subr.bf16.mxu0 0
        %6171 = vmatpush2.bf16.msra.mxu0 0
        %6172 = vmatprep.subr.bf16.mxu0 0
        %6173 = vmatpush2.bf16.msra.mxu0 0
        %6174 = vmatprep.subr.bf16.mxu0 0
        %6175 = vmatpush2.bf16.msra.mxu0 0
        %6176 = vmatprep.subr.bf16.mxu0 0
        %6177 = vmatpush2.bf16.msra.mxu0 0
        %6178 = vmatprep.subr.bf16.mxu0 0
        %6179 = vmatpush2.bf16.msra.mxu0 0
        %6180 = vmatprep.subr.bf16.mxu0 0
        %6181 = vmatpush2.bf16.msra.mxu0 0
        %6182 = vmatprep.mubr.bf16.mxu0 0
        %6183 = vmatmul.mubr.bf16.gmra.mxu0 %v6070
        %v6184 = vpop.f32.mrf.mxu0
        %v6185 = vadd.f32 0.0, %v6184
        %v6186 = vpop.f32.mrf.mxu0
        %v6187 = vpop.f32.mrf.mxu0
        %v6188 = vadd.f32 0.0, %v6187
        %v6189 = vpop.f32.mrf.mxu0
        %6190 = vmatprep.mubr.bf16.mxu0 0
        %6191 = vmatmul.mubr.bf16.gmra.mxu0 %v6071
        %v6192 = vpop.f32.mrf.mxu0
        %v6193 = vadd.f32 0.0, %v6192
        %v6194 = vpop.f32.mrf.mxu0
        %v6195 = vpop.f32.mrf.mxu0
        %v6196 = vadd.f32 0.0, %v6195
        %v6197 = vpop.f32.mrf.mxu0
        %6198 = vmatprep.mubr.bf16.mxu0 0
        %6199 = vmatmul.mubr.bf16.gmra.mxu0 %v6072
        %v6200 = vpop.f32.mrf.mxu0
        %v6201 = vadd.f32 0.0, %v6200
        %v6202 = vpop.f32.mrf.mxu0
        %v6203 = vpop.f32.mrf.mxu0
        %v6204 = vadd.f32 0.0, %v6203
        %v6205 = vpop.f32.mrf.mxu0
        %6206 = vmatprep.mubr.bf16.mxu0 0
        %6207 = vmatmul.mubr.bf16.gmra.mxu0 %v6073
        %v6208 = vpop.f32.mrf.mxu0
        %v6209 = vadd.f32 0.0, %v6208
        %v6210 = vpop.f32.mrf.mxu0
        %v6211 = vpop.f32.mrf.mxu0
        %v6212 = vadd.f32 0.0, %v6211
        %v6213 = vpop.f32.mrf.mxu0
        %6214 = vmatprep.mubr.bf16.mxu0 0
        %6215 = vmatmul.mubr.bf16.gmra.mxu0 %v6074
        %v6216 = vpop.f32.mrf.mxu0
        %v6217 = vadd.f32 0.0, %v6216
        %v6218 = vpop.f32.mrf.mxu0
        %v6219 = vpop.f32.mrf.mxu0
        %v6220 = vadd.f32 0.0, %v6219
        %v6221 = vpop.f32.mrf.mxu0
        %6222 = vmatprep.mubr.bf16.mxu0 0
        %6223 = vmatmul.mubr.bf16.gmra.mxu0 %v6075
        %v6224 = vpop.f32.mrf.mxu0
        %v6225 = vadd.f32 0.0, %v6224
        %v6226 = vpop.f32.mrf.mxu0
        %v6227 = vpop.f32.mrf.mxu0
        %v6228 = vadd.f32 0.0, %v6227
        %v6229 = vpop.f32.mrf.mxu0
        %6230 = vmatprep.mubr.bf16.mxu0 0
        %6231 = vmatmul.mubr.bf16.gmra.mxu0 %v6076
        %v6232 = vpop.f32.mrf.mxu0
        %v6233 = vadd.f32 0.0, %v6232
        %v6234 = vpop.f32.mrf.mxu0
        %v6235 = vpop.f32.mrf.mxu0
        %v6236 = vadd.f32 0.0, %v6235
        %v6237 = vpop.f32.mrf.mxu0
        %6238 = vmatprep.mubr.bf16.mxu0 0
        %6239 = vmatmul.mubr.bf16.gmra.mxu0 %v6077
        %v6240 = vpop.f32.mrf.mxu0
        %v6241 = vadd.f32 0.0, %v6240
        %v6242 = vpop.f32.mrf.mxu0
        %v6243 = vpop.f32.mrf.mxu0
        %v6244 = vadd.f32 0.0, %v6243
        %v6245 = vpop.f32.mrf.mxu0
        %6246 = vmatprep.mubr.bf16.mxu0 0
        %6247 = vmatmul.mubr.bf16.gmra.mxu0 %v6078
        %v6248 = vpop.f32.mrf.mxu0
        %v6249 = vadd.f32 0.0, %v6248
        %v6250 = vpop.f32.mrf.mxu0
        %v6251 = vpop.f32.mrf.mxu0
        %v6252 = vadd.f32 0.0, %v6251
        %v6253 = vpop.f32.mrf.mxu0
        %6254 = vmatprep.mubr.bf16.mxu0 0
        %6255 = vmatmul.mubr.bf16.gmra.mxu0 %v6079
        %v6256 = vpop.f32.mrf.mxu0
        %v6257 = vadd.f32 0.0, %v6256
        %v6258 = vpop.f32.mrf.mxu0
        %v6259 = vpop.f32.mrf.mxu0
        %v6260 = vadd.f32 0.0, %v6259
        %v6261 = vpop.f32.mrf.mxu0
        %6262 = vmatprep.mubr.bf16.mxu0 0
        %6263 = vmatmul.mubr.bf16.gmra.mxu0 %v6080
        %v6264 = vpop.f32.mrf.mxu0
        %v6265 = vadd.f32 0.0, %v6264
        %v6266 = vpop.f32.mrf.mxu0
        %v6267 = vpop.f32.mrf.mxu0
        %v6268 = vadd.f32 0.0, %v6267
        %v6269 = vpop.f32.mrf.mxu0
        %6270 = vmatprep.mubr.bf16.mxu0 0
        %6271 = vmatmul.mubr.bf16.gmra.mxu0 %v6081
        %v6272 = vpop.f32.mrf.mxu0
        %v6273 = vadd.f32 0.0, %v6272
        %v6274 = vpop.f32.mrf.mxu0
        %v6275 = vpop.f32.mrf.mxu0
        %v6276 = vadd.f32 0.0, %v6275
        %v6277 = vpop.f32.mrf.mxu0
        %6278 = vmatprep.mubr.bf16.mxu0 0
        %6279 = vmatmul.mubr.bf16.gmra.mxu0 %v6082
        %v6280 = vpop.f32.mrf.mxu0
        %v6281 = vadd.f32 0.0, %v6280
        %v6282 = vpop.f32.mrf.mxu0
        %v6283 = vpop.f32.mrf.mxu0
        %v6284 = vadd.f32 0.0, %v6283
        %v6285 = vpop.f32.mrf.mxu0
        %6286 = vmatprep.mubr.bf16.mxu0 0
        %6287 = vmatmul.mubr.bf16.gmra.mxu0 %v6083
        %v6288 = vpop.f32.mrf.mxu0
        %v6289 = vadd.f32 0.0, %v6288
        %v6290 = vpop.f32.mrf.mxu0
        %v6291 = vpop.f32.mrf.mxu0
        %v6292 = vadd.f32 0.0, %v6291
        %v6293 = vpop.f32.mrf.mxu0
        %6294 = vmatprep.mubr.bf16.mxu0 0
        %6295 = vmatmul.mubr.bf16.gmra.mxu0 %v6084
        %v6296 = vpop.f32.mrf.mxu0
        %v6297 = vadd.f32 0.0, %v6296
        %v6298 = vpop.f32.mrf.mxu0
        %v6299 = vpop.f32.mrf.mxu0
        %v6300 = vadd.f32 0.0, %v6299
        %v6301 = vpop.f32.mrf.mxu0
        %6302 = vmatprep.mubr.bf16.mxu0 0
        %6303 = vmatmul.mubr.bf16.gmra.mxu0 %v6085
        %v6304 = vpop.f32.mrf.mxu0
        %v6305 = vadd.f32 0.0, %v6304
        %v6306 = vpop.f32.mrf.mxu0
        %v6307 = vpop.f32.mrf.mxu0
        %v6308 = vadd.f32 0.0, %v6307
        %v6309 = vpop.f32.mrf.mxu0
        %6310 = vdwg.mxu0
        %v6311 = vadd.f32 %v5924, %v6185
        %v6312 = vadd.f32 %v5925, %v6188
        %v6313 = vadd.f32 %v5926, %v6193
        %v6314 = vadd.f32 %v5927, %v6196
        %v6315 = vadd.f32 %v5928, %v6201
        %v6316 = vadd.f32 %v5929, %v6204
        %v6317 = vadd.f32 %v5930, %v6209
        %v6318 = vadd.f32 %v5931, %v6212
        %v6319 = vadd.f32 %v5932, %v6217
        %v6320 = vadd.f32 %v5933, %v6220
        %v6321 = vadd.f32 %v5934, %v6225
        %v6322 = vadd.f32 %v5935, %v6228
        %v6323 = vadd.f32 %v5936, %v6233
        %v6324 = vadd.f32 %v5937, %v6236
        %v6325 = vadd.f32 %v5938, %v6241
        %v6326 = vadd.f32 %v5939, %v6244
        %v6327 = vadd.f32 %v5940, %v6249
        %v6328 = vadd.f32 %v5941, %v6252
        %v6329 = vadd.f32 %v5942, %v6257
        %v6330 = vadd.f32 %v5943, %v6260
        %v6331 = vadd.f32 %v5944, %v6265
        %v6332 = vadd.f32 %v5945, %v6268
        %v6333 = vadd.f32 %v5946, %v6273
        %v6334 = vadd.f32 %v5947, %v6276
        %v6335 = vadd.f32 %v5948, %v6281
        %v6336 = vadd.f32 %v5949, %v6284
        %v6337 = vadd.f32 %v5950, %v6289
        %v6338 = vadd.f32 %v5951, %v6292
        %v6339 = vadd.f32 %v5952, %v6297
        %v6340 = vadd.f32 %v5953, %v6300
        %v6341 = vadd.f32 %v5954, %v6305
        %v6342 = vadd.f32 %v5955, %v6308
        %s6343 = scalar_lea.vmem [#allocation2], 56
        %v6344 = vld [vmem:[%s6343] sm:$0xf]
        %v6345 = vld [vmem:[%s6343 + $0x4] sm:$0xf]
        %v6346 = vld [vmem:[%s6343 + $0x8] sm:$0xf]
        %v6347 = vld [vmem:[%s6343 + $0xc] sm:$0xf]
        %v6348 = vld [vmem:[%s6343 + $0x10] sm:$0xf]
        %v6349 = vld [vmem:[%s6343 + $0x14] sm:$0xf]
        %v6350 = vld [vmem:[%s6343 + $0x18] sm:$0xf]
        %v6351 = vld [vmem:[%s6343 + $0x1c] sm:$0xf]
        %v6352 = vld [vmem:[%s6343 + $0x20] sm:$0xf]
        %v6353 = vld [vmem:[%s6343 + $0x24] sm:$0xf]
        %v6354 = vld [vmem:[%s6343 + $0x28] sm:$0xf]
        %v6355 = vld [vmem:[%s6343 + $0x2c] sm:$0xf]
        %v6356 = vld [vmem:[%s6343 + $0x30] sm:$0xf]
        %v6357 = vld [vmem:[%s6343 + $0x34] sm:$0xf]
        %v6358 = vld [vmem:[%s6343 + $0x38] sm:$0xf]
        %v6359 = vld [vmem:[%s6343 + $0x3c] sm:$0xf]
        %v6360 = vld [vmem:[%s6343 + $0x40] sm:$0xf]
        %v6361 = vld [vmem:[%s6343 + $0x44] sm:$0xf]
        %v6362 = vld [vmem:[%s6343 + $0x48] sm:$0xf]
        %v6363 = vld [vmem:[%s6343 + $0x4c] sm:$0xf]
        %v6364 = vld [vmem:[%s6343 + $0x50] sm:$0xf]
        %v6365 = vld [vmem:[%s6343 + $0x54] sm:$0xf]
        %v6366 = vld [vmem:[%s6343 + $0x58] sm:$0xf]
        %v6367 = vld [vmem:[%s6343 + $0x5c] sm:$0xf]
        %v6368 = vld [vmem:[%s6343 + $0x60] sm:$0xf]
        %v6369 = vld [vmem:[%s6343 + $0x64] sm:$0xf]
        %v6370 = vld [vmem:[%s6343 + $0x68] sm:$0xf]
        %v6371 = vld [vmem:[%s6343 + $0x6c] sm:$0xf]
        %v6372 = vld [vmem:[%s6343 + $0x70] sm:$0xf]
        %v6373 = vld [vmem:[%s6343 + $0x74] sm:$0xf]
        %v6374 = vld [vmem:[%s6343 + $0x78] sm:$0xf]
        %v6375 = vld [vmem:[%s6343 + $0x7c] sm:$0xf]
        %s6376 = scalar_lea.vmem %s4, 448
        %v6377 = vld [vmem:[%s6376] sm:$0xf]
        %v6378 = vld [vmem:[%s6376 + $0x4] sm:$0xf]
        %v6379 = vld [vmem:[%s6376 + $0x8] sm:$0xf]
        %v6380 = vld [vmem:[%s6376 + $0xc] sm:$0xf]
        %v6381 = vld [vmem:[%s6376 + $0x10] sm:$0xf]
        %v6382 = vld [vmem:[%s6376 + $0x14] sm:$0xf]
        %v6383 = vld [vmem:[%s6376 + $0x18] sm:$0xf]
        %v6384 = vld [vmem:[%s6376 + $0x1c] sm:$0xf]
        %v6385 = vld [vmem:[%s6376 + $0x20] sm:$0xf]
        %v6386 = vld [vmem:[%s6376 + $0x24] sm:$0xf]
        %v6387 = vld [vmem:[%s6376 + $0x28] sm:$0xf]
        %v6388 = vld [vmem:[%s6376 + $0x2c] sm:$0xf]
        %v6389 = vld [vmem:[%s6376 + $0x30] sm:$0xf]
        %v6390 = vld [vmem:[%s6376 + $0x34] sm:$0xf]
        %v6391 = vld [vmem:[%s6376 + $0x38] sm:$0xf]
        %v6392 = vld [vmem:[%s6376 + $0x3c] sm:$0xf]
        %v6425 = vunpack.c.l.b16 %v6344
        %v6426 = vunpack.c.l.b16 %v6345
        %v6427 = vunpack.c.l.b16 %v6346
        %v6428 = vunpack.c.l.b16 %v6347
        %v6429 = vunpack.c.l.b16 %v6348
        %v6430 = vunpack.c.l.b16 %v6349
        %v6431 = vunpack.c.l.b16 %v6350
        %v6432 = vunpack.c.l.b16 %v6351
        %v6433 = vunpack.c.l.b16 %v6352
        %v6434 = vunpack.c.l.b16 %v6353
        %v6435 = vunpack.c.l.b16 %v6354
        %v6436 = vunpack.c.l.b16 %v6355
        %v6437 = vunpack.c.l.b16 %v6356
        %v6438 = vunpack.c.l.b16 %v6357
        %v6439 = vunpack.c.l.b16 %v6358
        %v6440 = vunpack.c.l.b16 %v6359
        %v6441 = vunpack.c.l.b16 %v6360
        %v6442 = vunpack.c.l.b16 %v6361
        %v6443 = vunpack.c.l.b16 %v6362
        %v6444 = vunpack.c.l.b16 %v6363
        %v6445 = vunpack.c.l.b16 %v6364
        %v6446 = vunpack.c.l.b16 %v6365
        %v6447 = vunpack.c.l.b16 %v6366
        %v6448 = vunpack.c.l.b16 %v6367
        %v6449 = vunpack.c.l.b16 %v6368
        %v6450 = vunpack.c.l.b16 %v6369
        %v6451 = vunpack.c.l.b16 %v6370
        %v6452 = vunpack.c.l.b16 %v6371
        %v6453 = vunpack.c.l.b16 %v6372
        %v6454 = vunpack.c.l.b16 %v6373
        %v6455 = vunpack.c.l.b16 %v6374
        %v6456 = vunpack.c.l.b16 %v6375
        %v6457 = vpack.c.b16 %v6426, %v6425
        %v6458 = vpack.c.b16 %v6428, %v6427
        %v6459 = vpack.c.b16 %v6430, %v6429
        %v6460 = vpack.c.b16 %v6432, %v6431
        %v6461 = vpack.c.b16 %v6434, %v6433
        %v6462 = vpack.c.b16 %v6436, %v6435
        %v6463 = vpack.c.b16 %v6438, %v6437
        %v6464 = vpack.c.b16 %v6440, %v6439
        %v6465 = vpack.c.b16 %v6442, %v6441
        %v6466 = vpack.c.b16 %v6444, %v6443
        %v6467 = vpack.c.b16 %v6446, %v6445
        %v6468 = vpack.c.b16 %v6448, %v6447
        %v6469 = vpack.c.b16 %v6450, %v6449
        %v6470 = vpack.c.b16 %v6452, %v6451
        %v6471 = vpack.c.b16 %v6454, %v6453
        %v6472 = vpack.c.b16 %v6456, %v6455
        %v6505 = vunpack.c.l.b16 %v6377
        %v6506 = vunpack.c.l.b16 %v6378
        %v6507 = vunpack.c.l.b16 %v6379
        %v6508 = vunpack.c.l.b16 %v6380
        %v6509 = vunpack.c.l.b16 %v6381
        %v6510 = vunpack.c.l.b16 %v6382
        %v6511 = vunpack.c.l.b16 %v6383
        %v6512 = vunpack.c.l.b16 %v6384
        %v6513 = vunpack.c.l.b16 %v6385
        %v6514 = vunpack.c.l.b16 %v6386
        %v6515 = vunpack.c.l.b16 %v6387
        %v6516 = vunpack.c.l.b16 %v6388
        %v6517 = vunpack.c.l.b16 %v6389
        %v6518 = vunpack.c.l.b16 %v6390
        %v6519 = vunpack.c.l.b16 %v6391
        %v6520 = vunpack.c.l.b16 %v6392
        %v6521 = vpack.c.b16 %v6506, %v6505
        %v6522 = vpack.c.b16 %v6508, %v6507
        %v6523 = vpack.c.b16 %v6510, %v6509
        %v6524 = vpack.c.b16 %v6512, %v6511
        %v6525 = vpack.c.b16 %v6514, %v6513
        %v6526 = vpack.c.b16 %v6516, %v6515
        %v6527 = vpack.c.b16 %v6518, %v6517
        %v6528 = vpack.c.b16 %v6520, %v6519
        %6537 = vmatprep.subr.bf16.mxu0 0
        %6538 = vmatpush1.bf16.msra.mxu0 %v6528
        %6539 = vmatprep.subr.bf16.mxu0 0
        %6540 = vmatpush1.bf16.msra.mxu0 %v6527
        %6541 = vmatprep.subr.bf16.mxu0 0
        %6542 = vmatpush1.bf16.msra.mxu0 %v6526
        %6543 = vmatprep.subr.bf16.mxu0 0
        %6544 = vmatpush1.bf16.msra.mxu0 %v6525
        %6545 = vmatprep.subr.bf16.mxu0 0
        %6546 = vmatpush1.bf16.msra.mxu0 %v6524
        %6547 = vmatprep.subr.bf16.mxu0 0
        %6548 = vmatpush1.bf16.msra.mxu0 %v6523
        %6549 = vmatprep.subr.bf16.mxu0 0
        %6550 = vmatpush1.bf16.msra.mxu0 %v6522
        %6551 = vmatprep.subr.bf16.mxu0 0
        %6552 = vmatpush1.bf16.msra.mxu0 %v6521
        %6553 = vmatprep.subr.bf16.mxu0 0
        %6554 = vmatpush2.bf16.msra.mxu0 0
        %6555 = vmatprep.subr.bf16.mxu0 0
        %6556 = vmatpush2.bf16.msra.mxu0 0
        %6557 = vmatprep.subr.bf16.mxu0 0
        %6558 = vmatpush2.bf16.msra.mxu0 0
        %6559 = vmatprep.subr.bf16.mxu0 0
        %6560 = vmatpush2.bf16.msra.mxu0 0
        %6561 = vmatprep.subr.bf16.mxu0 0
        %6562 = vmatpush2.bf16.msra.mxu0 0
        %6563 = vmatprep.subr.bf16.mxu0 0
        %6564 = vmatpush2.bf16.msra.mxu0 0
        %6565 = vmatprep.subr.bf16.mxu0 0
        %6566 = vmatpush2.bf16.msra.mxu0 0
        %6567 = vmatprep.subr.bf16.mxu0 0
        %6568 = vmatpush2.bf16.msra.mxu0 0
        %6569 = vmatprep.mubr.bf16.mxu0 0
        %6570 = vmatmul.mubr.bf16.gmra.mxu0 %v6457
        %v6571 = vpop.f32.mrf.mxu0
        %v6572 = vadd.f32 0.0, %v6571
        %v6573 = vpop.f32.mrf.mxu0
        %v6574 = vpop.f32.mrf.mxu0
        %v6575 = vadd.f32 0.0, %v6574
        %v6576 = vpop.f32.mrf.mxu0
        %6577 = vmatprep.mubr.bf16.mxu0 0
        %6578 = vmatmul.mubr.bf16.gmra.mxu0 %v6458
        %v6579 = vpop.f32.mrf.mxu0
        %v6580 = vadd.f32 0.0, %v6579
        %v6581 = vpop.f32.mrf.mxu0
        %v6582 = vpop.f32.mrf.mxu0
        %v6583 = vadd.f32 0.0, %v6582
        %v6584 = vpop.f32.mrf.mxu0
        %6585 = vmatprep.mubr.bf16.mxu0 0
        %6586 = vmatmul.mubr.bf16.gmra.mxu0 %v6459
        %v6587 = vpop.f32.mrf.mxu0
        %v6588 = vadd.f32 0.0, %v6587
        %v6589 = vpop.f32.mrf.mxu0
        %v6590 = vpop.f32.mrf.mxu0
        %v6591 = vadd.f32 0.0, %v6590
        %v6592 = vpop.f32.mrf.mxu0
        %6593 = vmatprep.mubr.bf16.mxu0 0
        %6594 = vmatmul.mubr.bf16.gmra.mxu0 %v6460
        %v6595 = vpop.f32.mrf.mxu0
        %v6596 = vadd.f32 0.0, %v6595
        %v6597 = vpop.f32.mrf.mxu0
        %v6598 = vpop.f32.mrf.mxu0
        %v6599 = vadd.f32 0.0, %v6598
        %v6600 = vpop.f32.mrf.mxu0
        %6601 = vmatprep.mubr.bf16.mxu0 0
        %6602 = vmatmul.mubr.bf16.gmra.mxu0 %v6461
        %v6603 = vpop.f32.mrf.mxu0
        %v6604 = vadd.f32 0.0, %v6603
        %v6605 = vpop.f32.mrf.mxu0
        %v6606 = vpop.f32.mrf.mxu0
        %v6607 = vadd.f32 0.0, %v6606
        %v6608 = vpop.f32.mrf.mxu0
        %6609 = vmatprep.mubr.bf16.mxu0 0
        %6610 = vmatmul.mubr.bf16.gmra.mxu0 %v6462
        %v6611 = vpop.f32.mrf.mxu0
        %v6612 = vadd.f32 0.0, %v6611
        %v6613 = vpop.f32.mrf.mxu0
        %v6614 = vpop.f32.mrf.mxu0
        %v6615 = vadd.f32 0.0, %v6614
        %v6616 = vpop.f32.mrf.mxu0
        %6617 = vmatprep.mubr.bf16.mxu0 0
        %6618 = vmatmul.mubr.bf16.gmra.mxu0 %v6463
        %v6619 = vpop.f32.mrf.mxu0
        %v6620 = vadd.f32 0.0, %v6619
        %v6621 = vpop.f32.mrf.mxu0
        %v6622 = vpop.f32.mrf.mxu0
        %v6623 = vadd.f32 0.0, %v6622
        %v6624 = vpop.f32.mrf.mxu0
        %6625 = vmatprep.mubr.bf16.mxu0 0
        %6626 = vmatmul.mubr.bf16.gmra.mxu0 %v6464
        %v6627 = vpop.f32.mrf.mxu0
        %v6628 = vadd.f32 0.0, %v6627
        %v6629 = vpop.f32.mrf.mxu0
        %v6630 = vpop.f32.mrf.mxu0
        %v6631 = vadd.f32 0.0, %v6630
        %v6632 = vpop.f32.mrf.mxu0
        %6633 = vmatprep.mubr.bf16.mxu0 0
        %6634 = vmatmul.mubr.bf16.gmra.mxu0 %v6465
        %v6635 = vpop.f32.mrf.mxu0
        %v6636 = vadd.f32 0.0, %v6635
        %v6637 = vpop.f32.mrf.mxu0
        %v6638 = vpop.f32.mrf.mxu0
        %v6639 = vadd.f32 0.0, %v6638
        %v6640 = vpop.f32.mrf.mxu0
        %6641 = vmatprep.mubr.bf16.mxu0 0
        %6642 = vmatmul.mubr.bf16.gmra.mxu0 %v6466
        %v6643 = vpop.f32.mrf.mxu0
        %v6644 = vadd.f32 0.0, %v6643
        %v6645 = vpop.f32.mrf.mxu0
        %v6646 = vpop.f32.mrf.mxu0
        %v6647 = vadd.f32 0.0, %v6646
        %v6648 = vpop.f32.mrf.mxu0
        %6649 = vmatprep.mubr.bf16.mxu0 0
        %6650 = vmatmul.mubr.bf16.gmra.mxu0 %v6467
        %v6651 = vpop.f32.mrf.mxu0
        %v6652 = vadd.f32 0.0, %v6651
        %v6653 = vpop.f32.mrf.mxu0
        %v6654 = vpop.f32.mrf.mxu0
        %v6655 = vadd.f32 0.0, %v6654
        %v6656 = vpop.f32.mrf.mxu0
        %6657 = vmatprep.mubr.bf16.mxu0 0
        %6658 = vmatmul.mubr.bf16.gmra.mxu0 %v6468
        %v6659 = vpop.f32.mrf.mxu0
        %v6660 = vadd.f32 0.0, %v6659
        %v6661 = vpop.f32.mrf.mxu0
        %v6662 = vpop.f32.mrf.mxu0
        %v6663 = vadd.f32 0.0, %v6662
        %v6664 = vpop.f32.mrf.mxu0
        %6665 = vmatprep.mubr.bf16.mxu0 0
        %6666 = vmatmul.mubr.bf16.gmra.mxu0 %v6469
        %v6667 = vpop.f32.mrf.mxu0
        %v6668 = vadd.f32 0.0, %v6667
        %v6669 = vpop.f32.mrf.mxu0
        %v6670 = vpop.f32.mrf.mxu0
        %v6671 = vadd.f32 0.0, %v6670
        %v6672 = vpop.f32.mrf.mxu0
        %6673 = vmatprep.mubr.bf16.mxu0 0
        %6674 = vmatmul.mubr.bf16.gmra.mxu0 %v6470
        %v6675 = vpop.f32.mrf.mxu0
        %v6676 = vadd.f32 0.0, %v6675
        %v6677 = vpop.f32.mrf.mxu0
        %v6678 = vpop.f32.mrf.mxu0
        %v6679 = vadd.f32 0.0, %v6678
        %v6680 = vpop.f32.mrf.mxu0
        %6681 = vmatprep.mubr.bf16.mxu0 0
        %6682 = vmatmul.mubr.bf16.gmra.mxu0 %v6471
        %v6683 = vpop.f32.mrf.mxu0
        %v6684 = vadd.f32 0.0, %v6683
        %v6685 = vpop.f32.mrf.mxu0
        %v6686 = vpop.f32.mrf.mxu0
        %v6687 = vadd.f32 0.0, %v6686
        %v6688 = vpop.f32.mrf.mxu0
        %6689 = vmatprep.mubr.bf16.mxu0 0
        %6690 = vmatmul.mubr.bf16.gmra.mxu0 %v6472
        %v6691 = vpop.f32.mrf.mxu0
        %v6692 = vadd.f32 0.0, %v6691
        %v6693 = vpop.f32.mrf.mxu0
        %v6694 = vpop.f32.mrf.mxu0
        %v6695 = vadd.f32 0.0, %v6694
        %v6696 = vpop.f32.mrf.mxu0
        %6697 = vdwg.mxu0
        %v6698 = vadd.f32 %v6311, %v6572
        %v6699 = vadd.f32 %v6312, %v6575
        %v6700 = vadd.f32 %v6313, %v6580
        %v6701 = vadd.f32 %v6314, %v6583
        %v6702 = vadd.f32 %v6315, %v6588
        %v6703 = vadd.f32 %v6316, %v6591
        %v6704 = vadd.f32 %v6317, %v6596
        %v6705 = vadd.f32 %v6318, %v6599
        %v6706 = vadd.f32 %v6319, %v6604
        %v6707 = vadd.f32 %v6320, %v6607
        %v6708 = vadd.f32 %v6321, %v6612
        %v6709 = vadd.f32 %v6322, %v6615
        %v6710 = vadd.f32 %v6323, %v6620
        %v6711 = vadd.f32 %v6324, %v6623
        %v6712 = vadd.f32 %v6325, %v6628
        %v6713 = vadd.f32 %v6326, %v6631
        %v6714 = vadd.f32 %v6327, %v6636
        %v6715 = vadd.f32 %v6328, %v6639
        %v6716 = vadd.f32 %v6329, %v6644
        %v6717 = vadd.f32 %v6330, %v6647
        %v6718 = vadd.f32 %v6331, %v6652
        %v6719 = vadd.f32 %v6332, %v6655
        %v6720 = vadd.f32 %v6333, %v6660
        %v6721 = vadd.f32 %v6334, %v6663
        %v6722 = vadd.f32 %v6335, %v6668
        %v6723 = vadd.f32 %v6336, %v6671
        %v6724 = vadd.f32 %v6337, %v6676
        %v6725 = vadd.f32 %v6338, %v6679
        %v6726 = vadd.f32 %v6339, %v6684
        %v6727 = vadd.f32 %v6340, %v6687
        %v6728 = vadd.f32 %v6341, %v6692
        %v6729 = vadd.f32 %v6342, %v6695
        %s6730 = scalar_lea.vmem [#allocation2], 64
        %v6731 = vld [vmem:[%s6730] sm:$0xf]
        %v6732 = vld [vmem:[%s6730 + $0x4] sm:$0xf]
        %v6733 = vld [vmem:[%s6730 + $0x8] sm:$0xf]
        %v6734 = vld [vmem:[%s6730 + $0xc] sm:$0xf]
        %v6735 = vld [vmem:[%s6730 + $0x10] sm:$0xf]
        %v6736 = vld [vmem:[%s6730 + $0x14] sm:$0xf]
        %v6737 = vld [vmem:[%s6730 + $0x18] sm:$0xf]
        %v6738 = vld [vmem:[%s6730 + $0x1c] sm:$0xf]
        %v6739 = vld [vmem:[%s6730 + $0x20] sm:$0xf]
        %v6740 = vld [vmem:[%s6730 + $0x24] sm:$0xf]
        %v6741 = vld [vmem:[%s6730 + $0x28] sm:$0xf]
        %v6742 = vld [vmem:[%s6730 + $0x2c] sm:$0xf]
        %v6743 = vld [vmem:[%s6730 + $0x30] sm:$0xf]
        %v6744 = vld [vmem:[%s6730 + $0x34] sm:$0xf]
        %v6745 = vld [vmem:[%s6730 + $0x38] sm:$0xf]
        %v6746 = vld [vmem:[%s6730 + $0x3c] sm:$0xf]
        %v6747 = vld [vmem:[%s6730 + $0x40] sm:$0xf]
        %v6748 = vld [vmem:[%s6730 + $0x44] sm:$0xf]
        %v6749 = vld [vmem:[%s6730 + $0x48] sm:$0xf]
        %v6750 = vld [vmem:[%s6730 + $0x4c] sm:$0xf]
        %v6751 = vld [vmem:[%s6730 + $0x50] sm:$0xf]
        %v6752 = vld [vmem:[%s6730 + $0x54] sm:$0xf]
        %v6753 = vld [vmem:[%s6730 + $0x58] sm:$0xf]
        %v6754 = vld [vmem:[%s6730 + $0x5c] sm:$0xf]
        %v6755 = vld [vmem:[%s6730 + $0x60] sm:$0xf]
        %v6756 = vld [vmem:[%s6730 + $0x64] sm:$0xf]
        %v6757 = vld [vmem:[%s6730 + $0x68] sm:$0xf]
        %v6758 = vld [vmem:[%s6730 + $0x6c] sm:$0xf]
        %v6759 = vld [vmem:[%s6730 + $0x70] sm:$0xf]
        %v6760 = vld [vmem:[%s6730 + $0x74] sm:$0xf]
        %v6761 = vld [vmem:[%s6730 + $0x78] sm:$0xf]
        %v6762 = vld [vmem:[%s6730 + $0x7c] sm:$0xf]
        %s6763 = scalar_lea.vmem %s4, 512
        %v6764 = vld [vmem:[%s6763] sm:$0xf]
        %v6765 = vld [vmem:[%s6763 + $0x4] sm:$0xf]
        %v6766 = vld [vmem:[%s6763 + $0x8] sm:$0xf]
        %v6767 = vld [vmem:[%s6763 + $0xc] sm:$0xf]
        %v6768 = vld [vmem:[%s6763 + $0x10] sm:$0xf]
        %v6769 = vld [vmem:[%s6763 + $0x14] sm:$0xf]
        %v6770 = vld [vmem:[%s6763 + $0x18] sm:$0xf]
        %v6771 = vld [vmem:[%s6763 + $0x1c] sm:$0xf]
        %v6772 = vld [vmem:[%s6763 + $0x20] sm:$0xf]
        %v6773 = vld [vmem:[%s6763 + $0x24] sm:$0xf]
        %v6774 = vld [vmem:[%s6763 + $0x28] sm:$0xf]
        %v6775 = vld [vmem:[%s6763 + $0x2c] sm:$0xf]
        %v6776 = vld [vmem:[%s6763 + $0x30] sm:$0xf]
        %v6777 = vld [vmem:[%s6763 + $0x34] sm:$0xf]
        %v6778 = vld [vmem:[%s6763 + $0x38] sm:$0xf]
        %v6779 = vld [vmem:[%s6763 + $0x3c] sm:$0xf]
        %v6812 = vunpack.c.l.b16 %v6731
        %v6813 = vunpack.c.l.b16 %v6732
        %v6814 = vunpack.c.l.b16 %v6733
        %v6815 = vunpack.c.l.b16 %v6734
        %v6816 = vunpack.c.l.b16 %v6735
        %v6817 = vunpack.c.l.b16 %v6736
        %v6818 = vunpack.c.l.b16 %v6737
        %v6819 = vunpack.c.l.b16 %v6738
        %v6820 = vunpack.c.l.b16 %v6739
        %v6821 = vunpack.c.l.b16 %v6740
        %v6822 = vunpack.c.l.b16 %v6741
        %v6823 = vunpack.c.l.b16 %v6742
        %v6824 = vunpack.c.l.b16 %v6743
        %v6825 = vunpack.c.l.b16 %v6744
        %v6826 = vunpack.c.l.b16 %v6745
        %v6827 = vunpack.c.l.b16 %v6746
        %v6828 = vunpack.c.l.b16 %v6747
        %v6829 = vunpack.c.l.b16 %v6748
        %v6830 = vunpack.c.l.b16 %v6749
        %v6831 = vunpack.c.l.b16 %v6750
        %v6832 = vunpack.c.l.b16 %v6751
        %v6833 = vunpack.c.l.b16 %v6752
        %v6834 = vunpack.c.l.b16 %v6753
        %v6835 = vunpack.c.l.b16 %v6754
        %v6836 = vunpack.c.l.b16 %v6755
        %v6837 = vunpack.c.l.b16 %v6756
        %v6838 = vunpack.c.l.b16 %v6757
        %v6839 = vunpack.c.l.b16 %v6758
        %v6840 = vunpack.c.l.b16 %v6759
        %v6841 = vunpack.c.l.b16 %v6760
        %v6842 = vunpack.c.l.b16 %v6761
        %v6843 = vunpack.c.l.b16 %v6762
        %v6844 = vpack.c.b16 %v6813, %v6812
        %v6845 = vpack.c.b16 %v6815, %v6814
        %v6846 = vpack.c.b16 %v6817, %v6816
        %v6847 = vpack.c.b16 %v6819, %v6818
        %v6848 = vpack.c.b16 %v6821, %v6820
        %v6849 = vpack.c.b16 %v6823, %v6822
        %v6850 = vpack.c.b16 %v6825, %v6824
        %v6851 = vpack.c.b16 %v6827, %v6826
        %v6852 = vpack.c.b16 %v6829, %v6828
        %v6853 = vpack.c.b16 %v6831, %v6830
        %v6854 = vpack.c.b16 %v6833, %v6832
        %v6855 = vpack.c.b16 %v6835, %v6834
        %v6856 = vpack.c.b16 %v6837, %v6836
        %v6857 = vpack.c.b16 %v6839, %v6838
        %v6858 = vpack.c.b16 %v6841, %v6840
        %v6859 = vpack.c.b16 %v6843, %v6842
        %v6892 = vunpack.c.l.b16 %v6764
        %v6893 = vunpack.c.l.b16 %v6765
        %v6894 = vunpack.c.l.b16 %v6766
        %v6895 = vunpack.c.l.b16 %v6767
        %v6896 = vunpack.c.l.b16 %v6768
        %v6897 = vunpack.c.l.b16 %v6769
        %v6898 = vunpack.c.l.b16 %v6770
        %v6899 = vunpack.c.l.b16 %v6771
        %v6900 = vunpack.c.l.b16 %v6772
        %v6901 = vunpack.c.l.b16 %v6773
        %v6902 = vunpack.c.l.b16 %v6774
        %v6903 = vunpack.c.l.b16 %v6775
        %v6904 = vunpack.c.l.b16 %v6776
        %v6905 = vunpack.c.l.b16 %v6777
        %v6906 = vunpack.c.l.b16 %v6778
        %v6907 = vunpack.c.l.b16 %v6779
        %v6908 = vpack.c.b16 %v6893, %v6892
        %v6909 = vpack.c.b16 %v6895, %v6894
        %v6910 = vpack.c.b16 %v6897, %v6896
        %v6911 = vpack.c.b16 %v6899, %v6898
        %v6912 = vpack.c.b16 %v6901, %v6900
        %v6913 = vpack.c.b16 %v6903, %v6902
        %v6914 = vpack.c.b16 %v6905, %v6904
        %v6915 = vpack.c.b16 %v6907, %v6906
        %6924 = vmatprep.subr.bf16.mxu0 0
        %6925 = vmatpush1.bf16.msra.mxu0 %v6915
        %6926 = vmatprep.subr.bf16.mxu0 0
        %6927 = vmatpush1.bf16.msra.mxu0 %v6914
        %6928 = vmatprep.subr.bf16.mxu0 0
        %6929 = vmatpush1.bf16.msra.mxu0 %v6913
        %6930 = vmatprep.subr.bf16.mxu0 0
        %6931 = vmatpush1.bf16.msra.mxu0 %v6912
        %6932 = vmatprep.subr.bf16.mxu0 0
        %6933 = vmatpush1.bf16.msra.mxu0 %v6911
        %6934 = vmatprep.subr.bf16.mxu0 0
        %6935 = vmatpush1.bf16.msra.mxu0 %v6910
        %6936 = vmatprep.subr.bf16.mxu0 0
        %6937 = vmatpush1.bf16.msra.mxu0 %v6909
        %6938 = vmatprep.subr.bf16.mxu0 0
        %6939 = vmatpush1.bf16.msra.mxu0 %v6908
        %6940 = vmatprep.subr.bf16.mxu0 0
        %6941 = vmatpush2.bf16.msra.mxu0 0
        %6942 = vmatprep.subr.bf16.mxu0 0
        %6943 = vmatpush2.bf16.msra.mxu0 0
        %6944 = vmatprep.subr.bf16.mxu0 0
        %6945 = vmatpush2.bf16.msra.mxu0 0
        %6946 = vmatprep.subr.bf16.mxu0 0
        %6947 = vmatpush2.bf16.msra.mxu0 0
        %6948 = vmatprep.subr.bf16.mxu0 0
        %6949 = vmatpush2.bf16.msra.mxu0 0
        %6950 = vmatprep.subr.bf16.mxu0 0
        %6951 = vmatpush2.bf16.msra.mxu0 0
        %6952 = vmatprep.subr.bf16.mxu0 0
        %6953 = vmatpush2.bf16.msra.mxu0 0
        %6954 = vmatprep.subr.bf16.mxu0 0
        %6955 = vmatpush2.bf16.msra.mxu0 0
        %6956 = vmatprep.mubr.bf16.mxu0 0
        %6957 = vmatmul.mubr.bf16.gmra.mxu0 %v6844
        %v6958 = vpop.f32.mrf.mxu0
        %v6959 = vadd.f32 0.0, %v6958
        %v6960 = vpop.f32.mrf.mxu0
        %v6961 = vpop.f32.mrf.mxu0
        %v6962 = vadd.f32 0.0, %v6961
        %v6963 = vpop.f32.mrf.mxu0
        %6964 = vmatprep.mubr.bf16.mxu0 0
        %6965 = vmatmul.mubr.bf16.gmra.mxu0 %v6845
        %v6966 = vpop.f32.mrf.mxu0
        %v6967 = vadd.f32 0.0, %v6966
        %v6968 = vpop.f32.mrf.mxu0
        %v6969 = vpop.f32.mrf.mxu0
        %v6970 = vadd.f32 0.0, %v6969
        %v6971 = vpop.f32.mrf.mxu0
        %6972 = vmatprep.mubr.bf16.mxu0 0
        %6973 = vmatmul.mubr.bf16.gmra.mxu0 %v6846
        %v6974 = vpop.f32.mrf.mxu0
        %v6975 = vadd.f32 0.0, %v6974
        %v6976 = vpop.f32.mrf.mxu0
        %v6977 = vpop.f32.mrf.mxu0
        %v6978 = vadd.f32 0.0, %v6977
        %v6979 = vpop.f32.mrf.mxu0
        %6980 = vmatprep.mubr.bf16.mxu0 0
        %6981 = vmatmul.mubr.bf16.gmra.mxu0 %v6847
        %v6982 = vpop.f32.mrf.mxu0
        %v6983 = vadd.f32 0.0, %v6982
        %v6984 = vpop.f32.mrf.mxu0
        %v6985 = vpop.f32.mrf.mxu0
        %v6986 = vadd.f32 0.0, %v6985
        %v6987 = vpop.f32.mrf.mxu0
        %6988 = vmatprep.mubr.bf16.mxu0 0
        %6989 = vmatmul.mubr.bf16.gmra.mxu0 %v6848
        %v6990 = vpop.f32.mrf.mxu0
        %v6991 = vadd.f32 0.0, %v6990
        %v6992 = vpop.f32.mrf.mxu0
        %v6993 = vpop.f32.mrf.mxu0
        %v6994 = vadd.f32 0.0, %v6993
        %v6995 = vpop.f32.mrf.mxu0
        %6996 = vmatprep.mubr.bf16.mxu0 0
        %6997 = vmatmul.mubr.bf16.gmra.mxu0 %v6849
        %v6998 = vpop.f32.mrf.mxu0
        %v6999 = vadd.f32 0.0, %v6998
        %v7000 = vpop.f32.mrf.mxu0
        %v7001 = vpop.f32.mrf.mxu0
        %v7002 = vadd.f32 0.0, %v7001
        %v7003 = vpop.f32.mrf.mxu0
        %7004 = vmatprep.mubr.bf16.mxu0 0
        %7005 = vmatmul.mubr.bf16.gmra.mxu0 %v6850
        %v7006 = vpop.f32.mrf.mxu0
        %v7007 = vadd.f32 0.0, %v7006
        %v7008 = vpop.f32.mrf.mxu0
        %v7009 = vpop.f32.mrf.mxu0
        %v7010 = vadd.f32 0.0, %v7009
        %v7011 = vpop.f32.mrf.mxu0
        %7012 = vmatprep.mubr.bf16.mxu0 0
        %7013 = vmatmul.mubr.bf16.gmra.mxu0 %v6851
        %v7014 = vpop.f32.mrf.mxu0
        %v7015 = vadd.f32 0.0, %v7014
        %v7016 = vpop.f32.mrf.mxu0
        %v7017 = vpop.f32.mrf.mxu0
        %v7018 = vadd.f32 0.0, %v7017
        %v7019 = vpop.f32.mrf.mxu0
        %7020 = vmatprep.mubr.bf16.mxu0 0
        %7021 = vmatmul.mubr.bf16.gmra.mxu0 %v6852
        %v7022 = vpop.f32.mrf.mxu0
        %v7023 = vadd.f32 0.0, %v7022
        %v7024 = vpop.f32.mrf.mxu0
        %v7025 = vpop.f32.mrf.mxu0
        %v7026 = vadd.f32 0.0, %v7025
        %v7027 = vpop.f32.mrf.mxu0
        %7028 = vmatprep.mubr.bf16.mxu0 0
        %7029 = vmatmul.mubr.bf16.gmra.mxu0 %v6853
        %v7030 = vpop.f32.mrf.mxu0
        %v7031 = vadd.f32 0.0, %v7030
        %v7032 = vpop.f32.mrf.mxu0
        %v7033 = vpop.f32.mrf.mxu0
        %v7034 = vadd.f32 0.0, %v7033
        %v7035 = vpop.f32.mrf.mxu0
        %7036 = vmatprep.mubr.bf16.mxu0 0
        %7037 = vmatmul.mubr.bf16.gmra.mxu0 %v6854
        %v7038 = vpop.f32.mrf.mxu0
        %v7039 = vadd.f32 0.0, %v7038
        %v7040 = vpop.f32.mrf.mxu0
        %v7041 = vpop.f32.mrf.mxu0
        %v7042 = vadd.f32 0.0, %v7041
        %v7043 = vpop.f32.mrf.mxu0
        %7044 = vmatprep.mubr.bf16.mxu0 0
        %7045 = vmatmul.mubr.bf16.gmra.mxu0 %v6855
        %v7046 = vpop.f32.mrf.mxu0
        %v7047 = vadd.f32 0.0, %v7046
        %v7048 = vpop.f32.mrf.mxu0
        %v7049 = vpop.f32.mrf.mxu0
        %v7050 = vadd.f32 0.0, %v7049
        %v7051 = vpop.f32.mrf.mxu0
        %7052 = vmatprep.mubr.bf16.mxu0 0
        %7053 = vmatmul.mubr.bf16.gmra.mxu0 %v6856
        %v7054 = vpop.f32.mrf.mxu0
        %v7055 = vadd.f32 0.0, %v7054
        %v7056 = vpop.f32.mrf.mxu0
        %v7057 = vpop.f32.mrf.mxu0
        %v7058 = vadd.f32 0.0, %v7057
        %v7059 = vpop.f32.mrf.mxu0
        %7060 = vmatprep.mubr.bf16.mxu0 0
        %7061 = vmatmul.mubr.bf16.gmra.mxu0 %v6857
        %v7062 = vpop.f32.mrf.mxu0
        %v7063 = vadd.f32 0.0, %v7062
        %v7064 = vpop.f32.mrf.mxu0
        %v7065 = vpop.f32.mrf.mxu0
        %v7066 = vadd.f32 0.0, %v7065
        %v7067 = vpop.f32.mrf.mxu0
        %7068 = vmatprep.mubr.bf16.mxu0 0
        %7069 = vmatmul.mubr.bf16.gmra.mxu0 %v6858
        %v7070 = vpop.f32.mrf.mxu0
        %v7071 = vadd.f32 0.0, %v7070
        %v7072 = vpop.f32.mrf.mxu0
        %v7073 = vpop.f32.mrf.mxu0
        %v7074 = vadd.f32 0.0, %v7073
        %v7075 = vpop.f32.mrf.mxu0
        %7076 = vmatprep.mubr.bf16.mxu0 0
        %7077 = vmatmul.mubr.bf16.gmra.mxu0 %v6859
        %v7078 = vpop.f32.mrf.mxu0
        %v7079 = vadd.f32 0.0, %v7078
        %v7080 = vpop.f32.mrf.mxu0
        %v7081 = vpop.f32.mrf.mxu0
        %v7082 = vadd.f32 0.0, %v7081
        %v7083 = vpop.f32.mrf.mxu0
        %7084 = vdwg.mxu0
        %v7085 = vadd.f32 %v6698, %v6959
        %v7086 = vadd.f32 %v6699, %v6962
        %v7087 = vadd.f32 %v6700, %v6967
        %v7088 = vadd.f32 %v6701, %v6970
        %v7089 = vadd.f32 %v6702, %v6975
        %v7090 = vadd.f32 %v6703, %v6978
        %v7091 = vadd.f32 %v6704, %v6983
        %v7092 = vadd.f32 %v6705, %v6986
        %v7093 = vadd.f32 %v6706, %v6991
        %v7094 = vadd.f32 %v6707, %v6994
        %v7095 = vadd.f32 %v6708, %v6999
        %v7096 = vadd.f32 %v6709, %v7002
        %v7097 = vadd.f32 %v6710, %v7007
        %v7098 = vadd.f32 %v6711, %v7010
        %v7099 = vadd.f32 %v6712, %v7015
        %v7100 = vadd.f32 %v6713, %v7018
        %v7101 = vadd.f32 %v6714, %v7023
        %v7102 = vadd.f32 %v6715, %v7026
        %v7103 = vadd.f32 %v6716, %v7031
        %v7104 = vadd.f32 %v6717, %v7034
        %v7105 = vadd.f32 %v6718, %v7039
        %v7106 = vadd.f32 %v6719, %v7042
        %v7107 = vadd.f32 %v6720, %v7047
        %v7108 = vadd.f32 %v6721, %v7050
        %v7109 = vadd.f32 %v6722, %v7055
        %v7110 = vadd.f32 %v6723, %v7058
        %v7111 = vadd.f32 %v6724, %v7063
        %v7112 = vadd.f32 %v6725, %v7066
        %v7113 = vadd.f32 %v6726, %v7071
        %v7114 = vadd.f32 %v6727, %v7074
        %v7115 = vadd.f32 %v6728, %v7079
        %v7116 = vadd.f32 %v6729, %v7082
        %v7117 = vld [vmem:[%s5] sm:$0x1]
        %v7119 = vlaneseq
        %v7120 = vshrl.u32 %v7119, 7
        %v7121 = vsub.s32 0, %v7120
        %v7122 = vrot.slane %v7117, %v7121
        %v7124 = vadd.f32 %v7085, %v7122
        %v7125 = vadd.f32 %v7086, %v7122
        %v7126 = vadd.f32 %v7087, %v7122
        %v7127 = vadd.f32 %v7088, %v7122
        %v7128 = vadd.f32 %v7089, %v7122
        %v7129 = vadd.f32 %v7090, %v7122
        %v7130 = vadd.f32 %v7091, %v7122
        %v7131 = vadd.f32 %v7092, %v7122
        %v7132 = vadd.f32 %v7093, %v7122
        %v7133 = vadd.f32 %v7094, %v7122
        %v7134 = vadd.f32 %v7095, %v7122
        %v7135 = vadd.f32 %v7096, %v7122
        %v7136 = vadd.f32 %v7097, %v7122
        %v7137 = vadd.f32 %v7098, %v7122
        %v7138 = vadd.f32 %v7099, %v7122
        %v7139 = vadd.f32 %v7100, %v7122
        %v7140 = vadd.f32 %v7101, %v7122
        %v7141 = vadd.f32 %v7102, %v7122
        %v7142 = vadd.f32 %v7103, %v7122
        %v7143 = vadd.f32 %v7104, %v7122
        %v7144 = vadd.f32 %v7105, %v7122
        %v7145 = vadd.f32 %v7106, %v7122
        %v7146 = vadd.f32 %v7107, %v7122
        %v7147 = vadd.f32 %v7108, %v7122
        %v7148 = vadd.f32 %v7109, %v7122
        %v7149 = vadd.f32 %v7110, %v7122
        %v7150 = vadd.f32 %v7111, %v7122
        %v7151 = vadd.f32 %v7112, %v7122
        %v7152 = vadd.f32 %v7113, %v7122
        %v7153 = vadd.f32 %v7114, %v7122
        %v7154 = vadd.f32 %v7115, %v7122
        %v7155 = vadd.f32 %v7116, %v7122
        %v7156 = vmax.f32 %v7124, 0.0
        %v7157 = vmax.f32 %v7125, 0.0
        %v7158 = vmax.f32 %v7126, 0.0
        %v7159 = vmax.f32 %v7127, 0.0
        %v7160 = vmax.f32 %v7128, 0.0
        %v7161 = vmax.f32 %v7129, 0.0
        %v7162 = vmax.f32 %v7130, 0.0
        %v7163 = vmax.f32 %v7131, 0.0
        %v7164 = vmax.f32 %v7132, 0.0
        %v7165 = vmax.f32 %v7133, 0.0
        %v7166 = vmax.f32 %v7134, 0.0
        %v7167 = vmax.f32 %v7135, 0.0
        %v7168 = vmax.f32 %v7136, 0.0
        %v7169 = vmax.f32 %v7137, 0.0
        %v7170 = vmax.f32 %v7138, 0.0
        %v7171 = vmax.f32 %v7139, 0.0
        %v7172 = vmax.f32 %v7140, 0.0
        %v7173 = vmax.f32 %v7141, 0.0
        %v7174 = vmax.f32 %v7142, 0.0
        %v7175 = vmax.f32 %v7143, 0.0
        %v7176 = vmax.f32 %v7144, 0.0
        %v7177 = vmax.f32 %v7145, 0.0
        %v7178 = vmax.f32 %v7146, 0.0
        %v7179 = vmax.f32 %v7147, 0.0
        %v7180 = vmax.f32 %v7148, 0.0
        %v7181 = vmax.f32 %v7149, 0.0
        %v7182 = vmax.f32 %v7150, 0.0
        %v7183 = vmax.f32 %v7151, 0.0
        %v7184 = vmax.f32 %v7152, 0.0
        %v7185 = vmax.f32 %v7153, 0.0
        %v7186 = vmax.f32 %v7154, 0.0
        %v7187 = vmax.f32 %v7155, 0.0
        %v7188 = vld [vmem:[%s6] sm:$0x3]
        %v7189 = vld [vmem:[%s7] sm:$0x1]
        %v7191 = vlaneseq
        %v7192 = vshrl.u32 %v7191, 7
        %v7193 = vsub.s32 0, %v7192
        %v7194 = vrot.slane %v7189, %v7193
        %v7197 = vsel %vm403, %v7188, 0
        %7199 = vmatprep.subr.bf16.mxu0 0
        %7200 = vmatpush1.bf16.msra.mxu0 0
        %7201 = vmatprep.subr.bf16.mxu0 0
        %7202 = vmatpush1.bf16.msra.mxu0 0
        %7203 = vmatprep.subr.bf16.mxu0 0
        %7204 = vmatpush1.bf16.msra.mxu0 0
        %7205 = vmatprep.subr.bf16.mxu0 0
        %7206 = vmatpush1.bf16.msra.mxu0 0
        %7207 = vmatprep.subr.bf16.mxu0 0
        %7208 = vmatpush1.bf16.msra.mxu0 0
        %7209 = vmatprep.subr.bf16.mxu0 0
        %7210 = vmatpush1.bf16.msra.mxu0 0
        %7211 = vmatprep.subr.bf16.mxu0 0
        %7212 = vmatpush1.bf16.msra.mxu0 0
        %7213 = vmatprep.subr.bf16.mxu0 0
        %7214 = vmatpush1.bf16.msra.mxu0 %v7197
        %7215 = vmatprep.subr.bf16.mxu0 0
        %7216 = vmatpush2.bf16.msra.mxu0 0
        %7217 = vmatprep.subr.bf16.mxu0 0
        %7218 = vmatpush2.bf16.msra.mxu0 0
        %7219 = vmatprep.subr.bf16.mxu0 0
        %7220 = vmatpush2.bf16.msra.mxu0 0
        %7221 = vmatprep.subr.bf16.mxu0 0
        %7222 = vmatpush2.bf16.msra.mxu0 0
        %7223 = vmatprep.subr.bf16.mxu0 0
        %7224 = vmatpush2.bf16.msra.mxu0 0
        %7225 = vmatprep.subr.bf16.mxu0 0
        %7226 = vmatpush2.bf16.msra.mxu0 0
        %7227 = vmatprep.subr.bf16.mxu0 0
        %7228 = vmatpush2.bf16.msra.mxu0 0
        %7229 = vmatprep.subr.bf16.mxu0 0
        %7230 = vmatpush2.bf16.msra.mxu0 0
        %7231 = vmatprep.mubr.bf16.mxu0 0
        %7232 = vmatmul.mubr.bf16.gmra.mxu0 %v356
        %v7233 = vpop.f32.mrf.mxu0
        %v7234 = vadd.f32 %v7194, %v7233
        %v7235 = vpop.f32.mrf.mxu0
        %v7236 = vpop.f32.mrf.mxu0
        %v7237 = vadd.f32 %v7194, %v7236
        %v7238 = vpop.f32.mrf.mxu0
        %7239 = vmatprep.mubr.bf16.mxu0 0
        %7240 = vmatmul.mubr.bf16.gmra.mxu0 %v359
        %v7241 = vpop.f32.mrf.mxu0
        %v7242 = vadd.f32 %v7194, %v7241
        %v7243 = vpop.f32.mrf.mxu0
        %v7244 = vpop.f32.mrf.mxu0
        %v7245 = vadd.f32 %v7194, %v7244
        %v7246 = vpop.f32.mrf.mxu0
        %7247 = vmatprep.mubr.bf16.mxu0 0
        %7248 = vmatmul.mubr.bf16.gmra.mxu0 %v362
        %v7249 = vpop.f32.mrf.mxu0
        %v7250 = vadd.f32 %v7194, %v7249
        %v7251 = vpop.f32.mrf.mxu0
        %v7252 = vpop.f32.mrf.mxu0
        %v7253 = vadd.f32 %v7194, %v7252
        %v7254 = vpop.f32.mrf.mxu0
        %7255 = vmatprep.mubr.bf16.mxu0 0
        %7256 = vmatmul.mubr.bf16.gmra.mxu0 %v365
        %v7257 = vpop.f32.mrf.mxu0
        %v7258 = vadd.f32 %v7194, %v7257
        %v7259 = vpop.f32.mrf.mxu0
        %v7260 = vpop.f32.mrf.mxu0
        %v7261 = vadd.f32 %v7194, %v7260
        %v7262 = vpop.f32.mrf.mxu0
        %7263 = vmatprep.mubr.bf16.mxu0 0
        %7264 = vmatmul.mubr.bf16.gmra.mxu0 %v368
        %v7265 = vpop.f32.mrf.mxu0
        %v7266 = vadd.f32 %v7194, %v7265
        %v7267 = vpop.f32.mrf.mxu0
        %v7268 = vpop.f32.mrf.mxu0
        %v7269 = vadd.f32 %v7194, %v7268
        %v7270 = vpop.f32.mrf.mxu0
        %7271 = vmatprep.mubr.bf16.mxu0 0
        %7272 = vmatmul.mubr.bf16.gmra.mxu0 %v371
        %v7273 = vpop.f32.mrf.mxu0
        %v7274 = vadd.f32 %v7194, %v7273
        %v7275 = vpop.f32.mrf.mxu0
        %v7276 = vpop.f32.mrf.mxu0
        %v7277 = vadd.f32 %v7194, %v7276
        %v7278 = vpop.f32.mrf.mxu0
        %7279 = vmatprep.mubr.bf16.mxu0 0
        %7280 = vmatmul.mubr.bf16.gmra.mxu0 %v374
        %v7281 = vpop.f32.mrf.mxu0
        %v7282 = vadd.f32 %v7194, %v7281
        %v7283 = vpop.f32.mrf.mxu0
        %v7284 = vpop.f32.mrf.mxu0
        %v7285 = vadd.f32 %v7194, %v7284
        %v7286 = vpop.f32.mrf.mxu0
        %7287 = vmatprep.mubr.bf16.mxu0 0
        %7288 = vmatmul.mubr.bf16.gmra.mxu0 %v377
        %v7289 = vpop.f32.mrf.mxu0
        %v7290 = vadd.f32 %v7194, %v7289
        %v7291 = vpop.f32.mrf.mxu0
        %v7292 = vpop.f32.mrf.mxu0
        %v7293 = vadd.f32 %v7194, %v7292
        %v7294 = vpop.f32.mrf.mxu0
        %7295 = vmatprep.mubr.bf16.mxu0 0
        %7296 = vmatmul.mubr.bf16.gmra.mxu0 %v380
        %v7297 = vpop.f32.mrf.mxu0
        %v7298 = vadd.f32 %v7194, %v7297
        %v7299 = vpop.f32.mrf.mxu0
        %v7300 = vpop.f32.mrf.mxu0
        %v7301 = vadd.f32 %v7194, %v7300
        %v7302 = vpop.f32.mrf.mxu0
        %7303 = vmatprep.mubr.bf16.mxu0 0
        %7304 = vmatmul.mubr.bf16.gmra.mxu0 %v383
        %v7305 = vpop.f32.mrf.mxu0
        %v7306 = vadd.f32 %v7194, %v7305
        %v7307 = vpop.f32.mrf.mxu0
        %v7308 = vpop.f32.mrf.mxu0
        %v7309 = vadd.f32 %v7194, %v7308
        %v7310 = vpop.f32.mrf.mxu0
        %7311 = vmatprep.mubr.bf16.mxu0 0
        %7312 = vmatmul.mubr.bf16.gmra.mxu0 %v386
        %v7313 = vpop.f32.mrf.mxu0
        %v7314 = vadd.f32 %v7194, %v7313
        %v7315 = vpop.f32.mrf.mxu0
        %v7316 = vpop.f32.mrf.mxu0
        %v7317 = vadd.f32 %v7194, %v7316
        %v7318 = vpop.f32.mrf.mxu0
        %7319 = vmatprep.mubr.bf16.mxu0 0
        %7320 = vmatmul.mubr.bf16.gmra.mxu0 %v389
        %v7321 = vpop.f32.mrf.mxu0
        %v7322 = vadd.f32 %v7194, %v7321
        %v7323 = vpop.f32.mrf.mxu0
        %v7324 = vpop.f32.mrf.mxu0
        %v7325 = vadd.f32 %v7194, %v7324
        %v7326 = vpop.f32.mrf.mxu0
        %7327 = vmatprep.mubr.bf16.mxu0 0
        %7328 = vmatmul.mubr.bf16.gmra.mxu0 %v392
        %v7329 = vpop.f32.mrf.mxu0
        %v7330 = vadd.f32 %v7194, %v7329
        %v7331 = vpop.f32.mrf.mxu0
        %v7332 = vpop.f32.mrf.mxu0
        %v7333 = vadd.f32 %v7194, %v7332
        %v7334 = vpop.f32.mrf.mxu0
        %7335 = vmatprep.mubr.bf16.mxu0 0
        %7336 = vmatmul.mubr.bf16.gmra.mxu0 %v395
        %v7337 = vpop.f32.mrf.mxu0
        %v7338 = vadd.f32 %v7194, %v7337
        %v7339 = vpop.f32.mrf.mxu0
        %v7340 = vpop.f32.mrf.mxu0
        %v7341 = vadd.f32 %v7194, %v7340
        %v7342 = vpop.f32.mrf.mxu0
        %7343 = vmatprep.mubr.bf16.mxu0 0
        %7344 = vmatmul.mubr.bf16.gmra.mxu0 %v398
        %v7345 = vpop.f32.mrf.mxu0
        %v7346 = vadd.f32 %v7194, %v7345
        %v7347 = vpop.f32.mrf.mxu0
        %v7348 = vpop.f32.mrf.mxu0
        %v7349 = vadd.f32 %v7194, %v7348
        %v7350 = vpop.f32.mrf.mxu0
        %7351 = vmatprep.mubr.bf16.mxu0 0
        %7352 = vmatmul.mubr.bf16.gmra.mxu0 %v401
        %v7353 = vpop.f32.mrf.mxu0
        %v7354 = vadd.f32 %v7194, %v7353
        %v7355 = vpop.f32.mrf.mxu0
        %v7356 = vpop.f32.mrf.mxu0
        %v7357 = vadd.f32 %v7194, %v7356
        %v7358 = vpop.f32.mrf.mxu0
        %7359 = vdwg.mxu0
        %v7360 = vadd.f32 %v7156, %v7234
        %v7361 = vadd.f32 %v7157, %v7237
        %v7362 = vadd.f32 %v7158, %v7242
        %v7363 = vadd.f32 %v7159, %v7245
        %v7364 = vadd.f32 %v7160, %v7250
        %v7365 = vadd.f32 %v7161, %v7253
        %v7366 = vadd.f32 %v7162, %v7258
        %v7367 = vadd.f32 %v7163, %v7261
        %v7368 = vadd.f32 %v7164, %v7266
        %v7369 = vadd.f32 %v7165, %v7269
        %v7370 = vadd.f32 %v7166, %v7274
        %v7371 = vadd.f32 %v7167, %v7277
        %v7372 = vadd.f32 %v7168, %v7282
        %v7373 = vadd.f32 %v7169, %v7285
        %v7374 = vadd.f32 %v7170, %v7290
        %v7375 = vadd.f32 %v7171, %v7293
        %v7376 = vadd.f32 %v7172, %v7298
        %v7377 = vadd.f32 %v7173, %v7301
        %v7378 = vadd.f32 %v7174, %v7306
        %v7379 = vadd.f32 %v7175, %v7309
        %v7380 = vadd.f32 %v7176, %v7314
        %v7381 = vadd.f32 %v7177, %v7317
        %v7382 = vadd.f32 %v7178, %v7322
        %v7383 = vadd.f32 %v7179, %v7325
        %v7384 = vadd.f32 %v7180, %v7330
        %v7385 = vadd.f32 %v7181, %v7333
        %v7386 = vadd.f32 %v7182, %v7338
        %v7387 = vadd.f32 %v7183, %v7341
        %v7388 = vadd.f32 %v7184, %v7346
        %v7389 = vadd.f32 %v7185, %v7349
        %v7390 = vadd.f32 %v7186, %v7354
        %v7391 = vadd.f32 %v7187, %v7357
        %v7392 = vmax.f32 %v7360, 0.0
        %v7393 = vmax.f32 %v7361, 0.0
        %v7394 = vmax.f32 %v7362, 0.0
        %v7395 = vmax.f32 %v7363, 0.0
        %v7396 = vmax.f32 %v7364, 0.0
        %v7397 = vmax.f32 %v7365, 0.0
        %v7398 = vmax.f32 %v7366, 0.0
        %v7399 = vmax.f32 %v7367, 0.0
        %v7400 = vmax.f32 %v7368, 0.0
        %v7401 = vmax.f32 %v7369, 0.0
        %v7402 = vmax.f32 %v7370, 0.0
        %v7403 = vmax.f32 %v7371, 0.0
        %v7404 = vmax.f32 %v7372, 0.0
        %v7405 = vmax.f32 %v7373, 0.0
        %v7406 = vmax.f32 %v7374, 0.0
        %v7407 = vmax.f32 %v7375, 0.0
        %v7408 = vmax.f32 %v7376, 0.0
        %v7409 = vmax.f32 %v7377, 0.0
        %v7410 = vmax.f32 %v7378, 0.0
        %v7411 = vmax.f32 %v7379, 0.0
        %v7412 = vmax.f32 %v7380, 0.0
        %v7413 = vmax.f32 %v7381, 0.0
        %v7414 = vmax.f32 %v7382, 0.0
        %v7415 = vmax.f32 %v7383, 0.0
        %v7416 = vmax.f32 %v7384, 0.0
        %v7417 = vmax.f32 %v7385, 0.0
        %v7418 = vmax.f32 %v7386, 0.0
        %v7419 = vmax.f32 %v7387, 0.0
        %v7420 = vmax.f32 %v7388, 0.0
        %v7421 = vmax.f32 %v7389, 0.0
        %v7422 = vmax.f32 %v7390, 0.0
        %v7423 = vmax.f32 %v7391, 0.0
        %7424 = vst [vmem:[%s298] sm:$0xff] %v7392
        %7425 = vst [vmem:[%s298 + $0x8] sm:$0xff] %v7393
        %7426 = vst [vmem:[%s298 + $0x10] sm:$0xff] %v7394
        %7427 = vst [vmem:[%s298 + $0x18] sm:$0xff] %v7395
        %7428 = vst [vmem:[%s298 + $0x20] sm:$0xff] %v7396
        %7429 = vst [vmem:[%s298 + $0x28] sm:$0xff] %v7397
        %7430 = vst [vmem:[%s298 + $0x30] sm:$0xff] %v7398
        %7431 = vst [vmem:[%s298 + $0x38] sm:$0xff] %v7399
        %7432 = vst [vmem:[%s298 + $0x40] sm:$0xff] %v7400
        %7433 = vst [vmem:[%s298 + $0x48] sm:$0xff] %v7401
        %7434 = vst [vmem:[%s298 + $0x50] sm:$0xff] %v7402
        %7435 = vst [vmem:[%s298 + $0x58] sm:$0xff] %v7403
        %7436 = vst [vmem:[%s298 + $0x60] sm:$0xff] %v7404
        %7437 = vst [vmem:[%s298 + $0x68] sm:$0xff] %v7405
        %7438 = vst [vmem:[%s298 + $0x70] sm:$0xff] %v7406
        %7439 = vst [vmem:[%s298 + $0x78] sm:$0xff] %v7407
        %7440 = vst [vmem:[%s298 + $0x80] sm:$0xff] %v7408
        %7441 = vst [vmem:[%s298 + $0x88] sm:$0xff] %v7409
        %7442 = vst [vmem:[%s298 + $0x90] sm:$0xff] %v7410
        %7443 = vst [vmem:[%s298 + $0x98] sm:$0xff] %v7411
        %7444 = vst [vmem:[%s298 + $0xa0] sm:$0xff] %v7412
        %7445 = vst [vmem:[%s298 + $0xa8] sm:$0xff] %v7413
        %7446 = vst [vmem:[%s298 + $0xb0] sm:$0xff] %v7414
        %7447 = vst [vmem:[%s298 + $0xb8] sm:$0xff] %v7415
        %7448 = vst [vmem:[%s298 + $0xc0] sm:$0xff] %v7416
        %7449 = vst [vmem:[%s298 + $0xc8] sm:$0xff] %v7417
        %7450 = vst [vmem:[%s298 + $0xd0] sm:$0xff] %v7418
        %7451 = vst [vmem:[%s298 + $0xd8] sm:$0xff] %v7419
        %7452 = vst [vmem:[%s298 + $0xe0] sm:$0xff] %v7420
        %7453 = vst [vmem:[%s298 + $0xe8] sm:$0xff] %v7421
        %7454 = vst [vmem:[%s298 + $0xf0] sm:$0xff] %v7422
        %7455 = vst [vmem:[%s298 + $0xf8] sm:$0xff] %v7423
        %s7456 = sand.u32 %s203, 1
        %s7457 = scalar_lea.sflag [#allocation4], %s7456
        %s7458 = sand.u32 %s203, 1
        %s7459 = smul.addr %s7458, 256
        %s7460 = scalar_lea.vmem [#allocation3], %s7459
        // Predicated region
        $region53: #{tpu_custom_call.1} parent=51 // pred_check
          %p7461 = pneg %p213
        $region54: #{tpu_custom_call.1} parent=51 // pred_check_branch
          %7463 = sbr.rel (%p7461) target = $region56
        $region55: #{tpu_custom_call.1} parent=51 // pred_region
          %s7465 = ssub.s32 4096, 4096
          %7466 = vsyncadd %s7457, %s7465
          %s7467 = smul.addr %s22, 32
          %s7468 = smul.addr %s7467, 128
          %s7469 = scalar_lea.hbm %s8, %s7468
          %s7470 = sshll.u32 %s7460, 4
          %s7471 = int_to_ptr.vmem [resolvable:$true] %s7470
          %7476 = dma.vmem_to_hbm [thread:$0]  %s7471, 4096, %s7469, %s7457, 128, 128, 8
        $region56: #{tpu_custom_call.1} parent=51 // pred_fallthru
          _
      $region52: #{tpu_custom_call.1} parent=5 // pred_fallthru
        _
      %p7477 = scmp.le.s32.totalorder 2, %s17
      // Predicated region
      $region57: #{tpu_custom_call.1} parent=5 // pred_check
        %p7478 = pneg %p7477
      $region58: #{tpu_custom_call.1} parent=5 // pred_check_branch
        %7480 = sbr.rel (%p7478) target = $region60
      $region59: #{tpu_custom_call.1} parent=5 // pred_region
        %s7481 = ssub.s32 %s17, 2
        // Predicated region
        $region61: #{tpu_custom_call.1} parent=59 // pred_check
          %p7482 = pneg %p219
        $region62: #{tpu_custom_call.1} parent=59 // pred_check_branch
          %7484 = sbr.rel (%p7482) target = $region64
        $region63: #{tpu_custom_call.1} parent=59 // pred_region
          %s7485 = sand.u32 %s204, 1
          %s7486 = scalar_lea.sflag [#allocation4], %s7485
          %s7487 = sand.u32 %s204, 1
          %s7488 = smul.addr %s7487, 256
          %s7489 = scalar_lea.vmem [#allocation3], %s7488
          %7490 = dma.done %s7486, 4096
        $region64: #{tpu_custom_call.1} parent=59 // pred_fallthru
          _
      $region60: #{tpu_custom_call.1} parent=5 // pred_fallthru
        _
    $region6: #{tpu_custom_call.1} parent=1 // loop_footer
      %s21 = sadd.s32 1, %s17
    $region7: #{tpu_custom_call.1} parent=1 // loop_footer_branch
      %16 = sbr.rel target = $region3
    $region8: #{tpu_custom_call.1} parent=1 // loop_exit
      _
    %7491 = vsyncpa [#allocation4], 1
    %s7492 = scalar_lea.sflag [#allocation4], 1
    %7493 = vsyncpa %s7492, 1

</llo_original>
